<compile_context>
chip_gen: v7x
topology: tpu7x:2x2x1
jax: 0.10.0
libtpu: 0.0.40
codegen_flags: <defaults>
</compile_context>

<pallas_src>
import functools

import jax
import jax.numpy as jnp
from jax import lax
from jax.experimental import pallas as pl
from jax.experimental.pallas import tpu as pltpu


# ------------------------------ helpers ---------------------------------------
def _round_up(x, m):
    return (x + m - 1) // m * m


def _pick_batch_block(bp):
    for cand in (64, 32, 16, 8):
        if bp % cand == 0:
            return min(cand, bp)
    return bp  # unreachable: bp is always a multiple of 8


# -------------------------- shared GRU block body ------------------------------
def _gru_block_body(x_ref, wih_ref, whh_ref, bgi_ref, bhn_ref, h_ref, gi_ref,
                    seq_ref, *, hp, tt):
    """Runs TT GRU steps for one (batch_block, time_block) tile.

    x_ref:   (bb, tt, Dl)   bf16 input block
    wih_ref: (Dl, 3*hp)     bf16   (gate-blocked, lane-aligned)
    whh_ref: (hp, 3*hp)     bf16
    bgi_ref: (1, 3*hp)      f32    b_ih with b_hh folded in for r/z gates
    bhn_ref: (1, hp)        f32    b_hn (added to gh_n inside the loop)
    h_ref:   (bb, hp)       f32    hidden carry (VMEM scratch, persists over time blocks)
    gi_ref:  (bb, tt, 3*hp) f32    scratch for the hoisted input projection
    seq_ref: (bb, tt, hp)           per-step hidden outputs (HBM block or VMEM scratch)
    """
    bb = x_ref.shape[0]
    dl = x_ref.shape[2]

    # Hoisted input projection for the whole time block: one large MXU matmul.
    x2 = x_ref[...].reshape(bb * tt, dl)                       # bf16
    gi2 = jnp.dot(x2, wih_ref[...],
                  preferred_element_type=jnp.float32) + bgi_ref[...]
    gi_ref[...] = gi2.reshape(bb, tt, 3 * hp)

    whh = whh_ref[...]
    bhn = bhn_ref[...]
    h = h_ref[...]                                             # f32 carry
    for j in range(tt):                                        # static, unrolled
        gi_t = gi_ref[:, j, :]                                 # (bb, 3*hp) f32
        gh = jnp.dot(h.astype(jnp.bfloat16), whh,
                     preferred_element_type=jnp.float32)       # (bb, 3*hp) f32
        r = jax.nn.sigmoid(gi_t[:, :hp] + gh[:, :hp])
        z = jax.nn.sigmoid(gi_t[:, hp:2 * hp] + gh[:, hp:2 * hp])
        n = jnp.tanh(gi_t[:, 2 * hp:] + r * (gh[:, 2 * hp:] + bhn))
        h = (1.0 - z) * n + z * h
        seq_ref[:, j, :] = h.astype(seq_ref.dtype)
    h_ref[...] = h


# ------------------------------ kernel bodies ----------------------------------
def gru_block_kernel(x_ref, wih_ref, whh_ref, bgi_ref, bhn_ref,
                     out_ref, h_ref, gi_ref, *, hp, tt):
    @pl.when(pl.program_id(1) == 0)            # new batch block -> h0 = zeros
    def _():
        h_ref[...] = jnp.zeros_like(h_ref)

    _gru_block_body(x_ref, wih_ref, whh_ref, bgi_ref, bhn_ref,
                    h_ref, gi_ref, out_ref, hp=hp, tt=tt)


def gru_block_fc_kernel(x_ref, wih_ref, whh_ref, bgi_ref, bhn_ref, fcw_ref, fcb_ref,
                        y_ref, h_ref, gi_ref, hs_ref, *, hp, tt):
    @pl.when(pl.program_id(1) == 0)
    def _():
        h_ref[...] = jnp.zeros_like(h_ref)

    _gru_block_body(x_ref, wih_ref, whh_ref, bgi_ref, bhn_ref,
                    h_ref, gi_ref, hs_ref, hp=hp, tt=tt)

    # Fused nn.Linear over the whole block: avoids writing the hidden seq to HBM.
    bb = hs_ref.shape[0]
    hs2 = hs_ref[...].reshape(bb * tt, hp)                     # bf16
    y2 = jnp.dot(hs2, fcw_ref[...],
                 preferred_element_type=jnp.float32) + fcb_ref[...]
    y_ref[...] = y2.reshape(bb, tt, y_ref.shape[2]).astype(y_ref.dtype)


# ------------------------------ pallas wrappers --------------------------------
def gru_layer(x_btd, wih_t, whh_t, b_gi, b_hn, *, hidden_pad, tt, bb):
    bp, tp, dl = x_btd.shape
    hp = hidden_pad
    grid = (bp // bb, tp // tt)
    kernel = functools.partial(gru_block_kernel, hp=hp, tt=tt)
    return pl.pallas_call(
        kernel,
        out_shape=jax.ShapeDtypeStruct((bp, tp, hp), jnp.bfloat16),
        grid_spec=pltpu.PrefetchScalarGridSpec(
            num_scalar_prefetch=0,
            grid=grid,
            in_specs=[
                pl.BlockSpec((bb, tt, dl), lambda b, t: (b, t, 0)),
                pl.BlockSpec((dl, 3 * hp), lambda b, t: (0, 0)),
                pl.BlockSpec((hp, 3 * hp), lambda b, t: (0, 0)),
                pl.BlockSpec((1, 3 * hp), lambda b, t: (0, 0)),
                pl.BlockSpec((1, hp), lambda b, t: (0, 0)),
            ],
            out_specs=pl.BlockSpec((bb, tt, hp), lambda b, t: (b, t, 0)),
            scratch_shapes=[
                pltpu.VMEM((bb, hp), jnp.float32),          # h carry
                pltpu.VMEM((bb, tt, 3 * hp), jnp.float32),  # hoisted gi block
            ],
        ),
        compiler_params=pltpu.CompilerParams(
            dimension_semantics=("parallel", "arbitrary"),
            vmem_limit_bytes=64 * 1024 * 1024,
        ),
    )(x_btd, wih_t, whh_t, b_gi, b_hn)


def gru_layer_fused_fc(x_btd, wih_t, whh_t, b_gi, b_hn, fc_w_t, fc_b,
                       *, hidden_pad, tt, bb, out_pad):
    bp, tp, dl = x_btd.shape
    hp = hidden_pad
    grid = (bp // bb, tp // tt)
    kernel = functools.partial(gru_block_fc_kernel, hp=hp, tt=tt)
    return pl.pallas_call(
        kernel,
        out_shape=jax.ShapeDtypeStruct((bp, tp, out_pad), jnp.float32),
        grid_spec=pltpu.PrefetchScalarGridSpec(
            num_scalar_prefetch=0,
            grid=grid,
            in_specs=[
                pl.BlockSpec((bb, tt, dl), lambda b, t: (b, t, 0)),
                pl.BlockSpec((dl, 3 * hp), lambda b, t: (0, 0)),
                pl.BlockSpec((hp, 3 * hp), lambda b, t: (0, 0)),
                pl.BlockSpec((1, 3 * hp), lambda b, t: (0, 0)),
                pl.BlockSpec((1, hp), lambda b, t: (0, 0)),
                pl.BlockSpec((hp, out_pad), lambda b, t: (0, 0)),
                pl.BlockSpec((1, out_pad), lambda b, t: (0, 0)),
            ],
            out_specs=pl.BlockSpec((bb, tt, out_pad), lambda b, t: (b, t, 0)),
            scratch_shapes=[
                pltpu.VMEM((bb, hp), jnp.float32),           # h carry
                pltpu.VMEM((bb, tt, 3 * hp), jnp.float32),   # hoisted gi block
                pltpu.VMEM((bb, tt, hp), jnp.bfloat16),      # hidden block for fused FC
            ],
        ),
        compiler_params=pltpu.CompilerParams(
            dimension_semantics=("parallel", "arbitrary"),
            vmem_limit_bytes=64 * 1024 * 1024,
        ),
    )(x_btd, wih_t, whh_t, b_gi, b_hn, fc_w_t, fc_b)


# ------------------------------- parameters ------------------------------------
def init_raw_params(key, input_dim, hidden_dim, output_dim, num_layers):
    """PyTorch-style U(-1/sqrt(H), 1/sqrt(H)) init, raw (unpadded, f32) layout."""
    params = {"layers": []}
    bound = 1.0 / float(hidden_dim) ** 0.5
    for l in range(num_layers):
        din = input_dim if l == 0 else hidden_dim
        key, k1, k2, k3, k4 = jax.random.split(key, 5)
        params["layers"].append(dict(
            wih=jax.random.uniform(k1, (3 * hidden_dim, din), jnp.float32, -bound, bound),
            whh=jax.random.uniform(k2, (3 * hidden_dim, hidden_dim), jnp.float32, -bound, bound),
            bih=jax.random.uniform(k3, (3 * hidden_dim,), jnp.float32, -bound, bound),
            bhh=jax.random.uniform(k4, (3 * hidden_dim,), jnp.float32, -bound, bound),
        ))
    key, k5, k6 = jax.random.split(key, 3)
    params["fc_w"] = jax.random.uniform(k5, (output_dim, hidden_dim), jnp.float32, -bound, bound)
    params["fc_b"] = jax.random.uniform(k6, (output_dim,), jnp.float32, -bound, bound)
    return params


def _pad_gates_t(w, d_in, d_pad, h, h_pad, dtype):
    """(3h, d_in) PyTorch [r; z; n] -> (d_pad, 3*h_pad) transposed, per-gate lane-aligned."""
    w3 = w.reshape(3, h, d_in).transpose(0, 2, 1)                       # (3, d_in, h)
    out = jnp.zeros((3, d_pad, h_pad), jnp.float32).at[:, :d_in, :h].set(w3)
    return out.transpose(1, 0, 2).reshape(d_pad, 3 * h_pad).astype(dtype)


def _pad_gate_bias(b, h, h_pad):
    b3 = b.reshape(3, h)
    out = jnp.zeros((3, h_pad), jnp.float32).at[:, :h].set(b3)
    return out.reshape(1, 3 * h_pad)


def prepare_kernel_params(raw, input_dim, hidden_dim, output_dim, num_layers, hp, op):
    """Padded, gate-blocked, bf16 weights for the Pallas kernels."""
    H = hidden_dim
    kp = {"layers": []}
    for l in range(num_layers):
        rl = raw["layers"][l]
        din = input_dim if l == 0 else hidden_dim
        d_pad = din if l == 0 else hp
        bih, bhh = rl["bih"], rl["bhh"]
        # Fold b_hh of the r/z gates into the input-side bias; keep b_hn separate
        # (it must be added to gh_n *before* the r * (.) multiply, as in PyTorch).
        b_gi = jnp.concatenate([bih[:2 * H] + bhh[:2 * H], bih[2 * H:]])
        kp["layers"].append(dict(
            wih_t=_pad_gates_t(rl["wih"], din, d_pad, H, hp, jnp.bfloat16),
            whh_t=_pad_gates_t(rl["whh"], H, hp, H, hp, jnp.bfloat16),
            b_gi=_pad_gate_bias(b_gi, H, hp),
            b_hn=jnp.zeros((1, hp), jnp.float32).at[0, :H].set(bhh[2 * H:]),
        ))
    kp["fc_w_t"] = (jnp.zeros((hp, op), jnp.float32)
                    .at[:H, :output_dim].set(raw["fc_w"].T).astype(jnp.bfloat16))
    kp["fc_b"] = jnp.zeros((1, op), jnp.float32).at[0, :output_dim].set(raw["fc_b"])
    return kp


# ------------------------------- model wrapper ---------------------------------
def gru_model_forward(x, kp, *, output_dim, num_layers, hp, op, tt=16):
    B, T, din = x.shape
    bp = _round_up(B, 8)
    bb = _pick_batch_block(bp)
    tp = _round_up(T, tt)

    # Native (B, T, D) layout throughout — no HBM transposes. bf16 matmul inputs.
    xp = jnp.zeros((bp, tp, din), jnp.bfloat16).at[:B, :T, :].set(x.astype(jnp.bfloat16))

    h = xp
    for l in range(num_layers - 1):
        p = kp["layers"][l]
        h = gru_layer(h, p["wih_t"], p["whh_t"], p["b_gi"], p["b_hn"],
                      hidden_pad=hp, tt=tt, bb=bb)
    p = kp["layers"][num_layers - 1]
    y = gru_layer_fused_fc(h, p["wih_t"], p["whh_t"], p["b_gi"], p["b_hn"],
                           kp["fc_w_t"], kp["fc_b"],
                           hidden_pad=hp, tt=tt, bb=bb, out_pad=op)
    return y[:B, :T, :output_dim]


# ---------------------------- pure-JAX reference --------------------------------
def gru_model_reference(x, raw, *, hidden_dim, output_dim, num_layers):
    """Same math and the same bf16-matmul / f32-accumulate precision policy."""
    B, T, _ = x.shape
    H = hidden_dim
    h_in = x
    for l in range(num_layers):
        rl = raw["layers"][l]
        wih_t = rl["wih"].T.astype(jnp.bfloat16)
        whh_t = rl["whh"].T.astype(jnp.bfloat16)
        bih = rl["bih"][None, :]
        bhh = rl["bhh"][None, :]
        xs = jnp.transpose(h_in, (1, 0, 2)).astype(jnp.bfloat16)      # (T, B, D)

        def step(h_prev, x_t, wih_t=wih_t, whh_t=whh_t, bih=bih, bhh=bhh):
            gi = jnp.dot(x_t, wih_t, preferred_element_type=jnp.float32) + bih
            gh = jnp.dot(h_prev.astype(jnp.bfloat16), whh_t,
                         preferred_element_type=jnp.float32) + bhh
            r = jax.nn.sigmoid(gi[:, :H] + gh[:, :H])
            z = jax.nn.sigmoid(gi[:, H:2 * H] + gh[:, H:2 * H])
            n = jnp.tanh(gi[:, 2 * H:] + r * gh[:, 2 * H:])
            h_new = (1.0 - z) * n + z * h_prev
            return h_new, h_new

        h0 = jnp.zeros((B, H), jnp.float32)
        _, hseq = lax.scan(step, h0, xs)
        h_in = jnp.transpose(hseq, (1, 0, 2))                          # (B, T, H) f32
    y = (jnp.dot(h_in.reshape(B * T, H).astype(jnp.bfloat16),
                 raw["fc_w"].T.astype(jnp.bfloat16),
                 preferred_element_type=jnp.float32) + raw["fc_b"][None, :])
    return y.reshape(B, T, output_dim)


# ------------------------------------ main --------------------------------------
if __name__ == "__main__":
    B, T = 2, 8
    input_dim, hidden_dim, output_dim, num_layers = 16, 32, 4, 2

    key = jax.random.PRNGKey(0)
    key, kx = jax.random.split(key)
    x = jax.random.normal(kx, (B, T, input_dim), jnp.float32)
    raw = init_raw_params(key, input_dim, hidden_dim, output_dim, num_layers)

    HP = _round_up(hidden_dim, 128)   # lane-aligned hidden / gate width
    OP = _round_up(output_dim, 128)   # lane-aligned FC output width
    kp = prepare_kernel_params(raw, input_dim, hidden_dim, output_dim, num_layers, HP, OP)

    y = gru_model_forward(x, kp, output_dim=output_dim, num_layers=num_layers,
                          hp=HP, op=OP, tt=16)
    y = jax.block_until_ready(y)

    y_ref = gru_model_reference(x, raw, hidden_dim=hidden_dim,
                                output_dim=output_dim, num_layers=num_layers)
    assert y.shape == (B, T, output_dim)
    max_err = jnp.max(jnp.abs(y - y_ref))
    assert jnp.allclose(y, y_ref, atol=2e-3, rtol=2e-3), f"mismatch vs reference: {max_err}"

    print("KERNEL_OK")
</pallas_src>

<mosaic_0001>
module attributes {stable_mosaic.version = 11 : i64} {
  func.func @gru_block_kernel(%arg0: i32, %arg1: i32, %arg2: memref<8x16x16xbf16, #tpu.memory_space<vmem>>, %arg3: memref<16x384xbf16, #tpu.memory_space<vmem>>, %arg4: memref<128x384xbf16, #tpu.memory_space<vmem>>, %arg5: memref<1x384xf32, #tpu.memory_space<vmem>>, %arg6: memref<1x128xf32, #tpu.memory_space<vmem>>, %arg7: memref<8x16x128xbf16, #tpu.memory_space<vmem>>, %arg8: memref<8x128xf32, #tpu.memory_space<vmem>>, %arg9: memref<8x16x384xf32, #tpu.memory_space<vmem>>) attributes {dimension_semantics = [#tpu.dimension_semantics<parallel>, #tpu.dimension_semantics<arbitrary>], iteration_bounds = array<i64: 1, 1>, scalar_prefetch = 0 : i64, scratch_operands = 2 : i64, tpu.core_type = #tpu.core_type<tc>, window_params = [{transform_indices = @transform_0, window_bounds = array<i64: 8, 16, 16>}, {pipeline_mode = #tpu.pipeline_mode<synchronous>, transform_indices = @transform_1, window_bounds = array<i64: 16, 384>}, {pipeline_mode = #tpu.pipeline_mode<synchronous>, transform_indices = @transform_2, window_bounds = array<i64: 128, 384>}, {pipeline_mode = #tpu.pipeline_mode<synchronous>, transform_indices = @transform_3, window_bounds = array<i64: 1, 384>}, {pipeline_mode = #tpu.pipeline_mode<synchronous>, transform_indices = @transform_4, window_bounds = array<i64: 1, 128>}, {transform_indices = @transform_5, window_bounds = array<i64: 8, 16, 128>}]} {
    %c0_i32 = arith.constant 0 : i32
    %0 = arith.cmpi eq, %arg1, %c0_i32 : i32
    %1 = arith.extui %0 : i1 to i32
    %c0_i32_0 = arith.constant 0 : i32
    %2 = arith.cmpi ne, %1, %c0_i32_0 : i32
    scf.if %2 {
      %cst_163 = arith.constant 0.000000e+00 : f32
      %592 = vector.broadcast %cst_163 : f32 to vector<8x128xf32>
      %c0_164 = arith.constant 0 : index
      %c0_165 = arith.constant 0 : index
      %593 = vector.load %arg8[%c0_164, %c0_165] : memref<8x128xf32, #tpu.memory_space<vmem>>, vector<8x128xf32>
      tpu.vector_store %arg8[%c0_164, %c0_165], %592 {strides = array<i32>} : memref<8x128xf32, #tpu.memory_space<vmem>>, vector<8x128xf32>,
    } else {
    }
    %c0 = arith.constant 0 : index
    %c0_1 = arith.constant 0 : index
    %c0_2 = arith.constant 0 : index
    %3 = vector.load %arg2[%c0, %c0_1, %c0_2] : memref<8x16x16xbf16, #tpu.memory_space<vmem>>, vector<8x16x16xbf16>
    %4 = vector.shape_cast %3 : vector<8x16x16xbf16> to vector<128x16xbf16>
    %c0_3 = arith.constant 0 : index
    %c0_4 = arith.constant 0 : index
    %5 = vector.load %arg3[%c0_3, %c0_4] : memref<16x384xbf16, #tpu.memory_space<vmem>>, vector<16x384xbf16>
    %cst = arith.constant dense<0.000000e+00> : vector<128x384xf32>
    %6 = tpu.matmul %4, %5, %cst {dimension_numbers = #tpu.dot_dimension_numbers<[1], [0], [0], [1], [0, 0, 1, 1], [], []>} : vector<128x16xbf16>, vector<16x384xbf16>, vector<128x384xf32> -> vector<128x384xf32>
    %c0_5 = arith.constant 0 : index
    %c0_6 = arith.constant 0 : index
    %7 = vector.load %arg5[%c0_5, %c0_6] : memref<1x384xf32, #tpu.memory_space<vmem>>, vector<1x384xf32>
    %8 = vector.broadcast %7 : vector<1x384xf32> to vector<128x384xf32>
    %9 = arith.addf %6, %8 : vector<128x384xf32>
    %10 = vector.shape_cast %9 : vector<128x384xf32> to vector<8x16x384xf32>
    %c0_7 = arith.constant 0 : index
    %c0_8 = arith.constant 0 : index
    %c0_9 = arith.constant 0 : index
    %11 = vector.load %arg9[%c0_7, %c0_8, %c0_9] : memref<8x16x384xf32, #tpu.memory_space<vmem>>, vector<8x16x384xf32>
    tpu.vector_store %arg9[%c0_7, %c0_8, %c0_9], %10 {strides = array<i32>} : memref<8x16x384xf32, #tpu.memory_space<vmem>>, vector<8x16x384xf32>,
    %c0_10 = arith.constant 0 : index
    %c0_11 = arith.constant 0 : index
    %12 = vector.load %arg4[%c0_10, %c0_11] : memref<128x384xbf16, #tpu.memory_space<vmem>>, vector<128x384xbf16>
    %c0_12 = arith.constant 0 : index
    %c0_13 = arith.constant 0 : index
    %13 = vector.load %arg6[%c0_12, %c0_13] : memref<1x128xf32, #tpu.memory_space<vmem>>, vector<1x128xf32>
    %c0_14 = arith.constant 0 : index
    %c0_15 = arith.constant 0 : index
    %14 = vector.load %arg8[%c0_14, %c0_15] : memref<8x128xf32, #tpu.memory_space<vmem>>, vector<8x128xf32>
    %c0_16 = arith.constant 0 : index
    %c0_17 = arith.constant 0 : index
    %c0_18 = arith.constant 0 : index
    %15 = vector.load %arg9[%c0_16, %c0_17, %c0_18] : memref<8x16x384xf32, #tpu.memory_space<vmem>>, vector<8x1x384xf32>
    %16 = vector.shape_cast %15 : vector<8x1x384xf32> to vector<8x384xf32>
    %17 = arith.truncf %14 : vector<8x128xf32> to vector<8x128xbf16>
    %cst_19 = arith.constant dense<0.000000e+00> : vector<8x384xf32>
    %18 = tpu.matmul %17, %12, %cst_19 {dimension_numbers = #tpu.dot_dimension_numbers<[1], [0], [0], [1], [0, 0, 1, 1], [], []>} : vector<8x128xbf16>, vector<128x384xbf16>, vector<8x384xf32> -> vector<8x384xf32>
    %19 = vector.extract_strided_slice %16 {offsets = [0, 0], sizes = [8, 128], strides = [1, 1]} : vector<8x384xf32> to vector<8x128xf32>
    %20 = vector.extract_strided_slice %18 {offsets = [0, 0], sizes = [8, 128], strides = [1, 1]} : vector<8x384xf32> to vector<8x128xf32>
    %21 = arith.addf %19, %20 : vector<8x128xf32>
    %22 = arith.negf %21 : vector<8x128xf32>
    %23 = math.exp %22 : vector<8x128xf32>
    %cst_20 = arith.constant 1.000000e+00 : f32
    %24 = vector.broadcast %cst_20 : f32 to vector<8x128xf32>
    %25 = arith.addf %24, %23 : vector<8x128xf32>
    %26 = arith.divf %24, %25 : vector<8x128xf32>
    %27 = vector.extract_strided_slice %16 {offsets = [0, 128], sizes = [8, 128], strides = [1, 1]} : vector<8x384xf32> to vector<8x128xf32>
    %28 = vector.extract_strided_slice %18 {offsets = [0, 128], sizes = [8, 128], strides = [1, 1]} : vector<8x384xf32> to vector<8x128xf32>
    %29 = arith.addf %27, %28 : vector<8x128xf32>
    %30 = arith.negf %29 : vector<8x128xf32>
    %31 = math.exp %30 : vector<8x128xf32>
    %cst_21 = arith.constant 1.000000e+00 : f32
    %32 = vector.broadcast %cst_21 : f32 to vector<8x128xf32>
    %33 = arith.addf %32, %31 : vector<8x128xf32>
    %34 = arith.divf %32, %33 : vector<8x128xf32>
    %35 = vector.extract_strided_slice %16 {offsets = [0, 256], sizes = [8, 128], strides = [1, 1]} : vector<8x384xf32> to vector<8x128xf32>
    %36 = vector.extract_strided_slice %18 {offsets = [0, 256], sizes = [8, 128], strides = [1, 1]} : vector<8x384xf32> to vector<8x128xf32>
    %37 = vector.broadcast %13 : vector<1x128xf32> to vector<8x128xf32>
    %38 = arith.addf %36, %37 : vector<8x128xf32>
    %39 = arith.mulf %26, %38 : vector<8x128xf32>
    %40 = arith.addf %35, %39 : vector<8x128xf32>
    %41 = math.tanh %40 : vector<8x128xf32>
    %cst_22 = arith.constant 1.000000e+00 : f32
    %42 = vector.broadcast %cst_22 : f32 to vector<8x128xf32>
    %43 = arith.subf %42, %34 : vector<8x128xf32>
    %44 = arith.mulf %43, %41 : vector<8x128xf32>
    %45 = arith.mulf %34, %14 : vector<8x128xf32>
    %46 = arith.addf %44, %45 : vector<8x128xf32>
    %47 = arith.truncf %46 : vector<8x128xf32> to vector<8x128xbf16>
    %c0_23 = arith.constant 0 : index
    %c0_24 = arith.constant 0 : index
    %c0_25 = arith.constant 0 : index
    %48 = vector.load %arg7[%c0_23, %c0_24, %c0_25] : memref<8x16x128xbf16, #tpu.memory_space<vmem>>, vector<8x1x128xbf16>
    %49 = vector.shape_cast %48 : vector<8x1x128xbf16> to vector<8x128xbf16>
    %50 = vector.shape_cast %47 : vector<8x128xbf16> to vector<8x1x128xbf16>
    tpu.vector_store %arg7[%c0_23, %c0_24, %c0_25], %50 {strides = array<i32>} : memref<8x16x128xbf16, #tpu.memory_space<vmem>>, vector<8x1x128xbf16>,
    %c0_26 = arith.constant 0 : index
    %c1 = arith.constant 1 : index
    %c0_27 = arith.constant 0 : index
    %51 = vector.load %arg9[%c0_26, %c1, %c0_27] : memref<8x16x384xf32, #tpu.memory_space<vmem>>, vector<8x1x384xf32>
    %52 = vector.shape_cast %51 : vector<8x1x384xf32> to vector<8x384xf32>
    %53 = arith.truncf %46 : vector<8x128xf32> to vector<8x128xbf16>
    %cst_28 = arith.constant dense<0.000000e+00> : vector<8x384xf32>
    %54 = tpu.matmul %53, %12, %cst_28 {dimension_numbers = #tpu.dot_dimension_numbers<[1], [0], [0], [1], [0, 0, 1, 1], [], []>} : vector<8x128xbf16>, vector<128x384xbf16>, vector<8x384xf32> -> vector<8x384xf32>
    %55 = vector.extract_strided_slice %52 {offsets = [0, 0], sizes = [8, 128], strides = [1, 1]} : vector<8x384xf32> to vector<8x128xf32>
    %56 = vector.extract_strided_slice %54 {offsets = [0, 0], sizes = [8, 128], strides = [1, 1]} : vector<8x384xf32> to vector<8x128xf32>
    %57 = arith.addf %55, %56 : vector<8x128xf32>
    %58 = arith.negf %57 : vector<8x128xf32>
    %59 = math.exp %58 : vector<8x128xf32>
    %cst_29 = arith.constant 1.000000e+00 : f32
    %60 = vector.broadcast %cst_29 : f32 to vector<8x128xf32>
    %61 = arith.addf %60, %59 : vector<8x128xf32>
    %62 = arith.divf %60, %61 : vector<8x128xf32>
    %63 = vector.extract_strided_slice %52 {offsets = [0, 128], sizes = [8, 128], strides = [1, 1]} : vector<8x384xf32> to vector<8x128xf32>
    %64 = vector.extract_strided_slice %54 {offsets = [0, 128], sizes = [8, 128], strides = [1, 1]} : vector<8x384xf32> to vector<8x128xf32>
    %65 = arith.addf %63, %64 : vector<8x128xf32>
    %66 = arith.negf %65 : vector<8x128xf32>
    %67 = math.exp %66 : vector<8x128xf32>
    %cst_30 = arith.constant 1.000000e+00 : f32
    %68 = vector.broadcast %cst_30 : f32 to vector<8x128xf32>
    %69 = arith.addf %68, %67 : vector<8x128xf32>
    %70 = arith.divf %68, %69 : vector<8x128xf32>
    %71 = vector.extract_strided_slice %52 {offsets = [0, 256], sizes = [8, 128], strides = [1, 1]} : vector<8x384xf32> to vector<8x128xf32>
    %72 = vector.extract_strided_slice %54 {offsets = [0, 256], sizes = [8, 128], strides = [1, 1]} : vector<8x384xf32> to vector<8x128xf32>
    %73 = vector.broadcast %13 : vector<1x128xf32> to vector<8x128xf32>
    %74 = arith.addf %72, %73 : vector<8x128xf32>
    %75 = arith.mulf %62, %74 : vector<8x128xf32>
    %76 = arith.addf %71, %75 : vector<8x128xf32>
    %77 = math.tanh %76 : vector<8x128xf32>
    %cst_31 = arith.constant 1.000000e+00 : f32
    %78 = vector.broadcast %cst_31 : f32 to vector<8x128xf32>
    %79 = arith.subf %78, %70 : vector<8x128xf32>
    %80 = arith.mulf %79, %77 : vector<8x128xf32>
    %81 = arith.mulf %70, %46 : vector<8x128xf32>
    %82 = arith.addf %80, %81 : vector<8x128xf32>
    %83 = arith.truncf %82 : vector<8x128xf32> to vector<8x128xbf16>
    %c0_32 = arith.constant 0 : index
    %c1_33 = arith.constant 1 : index
    %c0_34 = arith.constant 0 : index
    %84 = vector.load %arg7[%c0_32, %c1_33, %c0_34] : memref<8x16x128xbf16, #tpu.memory_space<vmem>>, vector<8x1x128xbf16>
    %85 = vector.shape_cast %84 : vector<8x1x128xbf16> to vector<8x128xbf16>
    %86 = vector.shape_cast %83 : vector<8x128xbf16> to vector<8x1x128xbf16>
    tpu.vector_store %arg7[%c0_32, %c1_33, %c0_34], %86 {strides = array<i32>} : memref<8x16x128xbf16, #tpu.memory_space<vmem>>, vector<8x1x128xbf16>,
    %c0_35 = arith.constant 0 : index
    %c2 = arith.constant 2 : index
    %c0_36 = arith.constant 0 : index
    %87 = vector.load %arg9[%c0_35, %c2, %c0_36] : memref<8x16x384xf32, #tpu.memory_space<vmem>>, vector<8x1x384xf32>
    %88 = vector.shape_cast %87 : vector<8x1x384xf32> to vector<8x384xf32>
    %89 = arith.truncf %82 : vector<8x128xf32> to vector<8x128xbf16>
    %cst_37 = arith.constant dense<0.000000e+00> : vector<8x384xf32>
    %90 = tpu.matmul %89, %12, %cst_37 {dimension_numbers = #tpu.dot_dimension_numbers<[1], [0], [0], [1], [0, 0, 1, 1], [], []>} : vector<8x128xbf16>, vector<128x384xbf16>, vector<8x384xf32> -> vector<8x384xf32>
    %91 = vector.extract_strided_slice %88 {offsets = [0, 0], sizes = [8, 128], strides = [1, 1]} : vector<8x384xf32> to vector<8x128xf32>
    %92 = vector.extract_strided_slice %90 {offsets = [0, 0], sizes = [8, 128], strides = [1, 1]} : vector<8x384xf32> to vector<8x128xf32>
    %93 = arith.addf %91, %92 : vector<8x128xf32>
    %94 = arith.negf %93 : vector<8x128xf32>
    %95 = math.exp %94 : vector<8x128xf32>
    %cst_38 = arith.constant 1.000000e+00 : f32
    %96 = vector.broadcast %cst_38 : f32 to vector<8x128xf32>
    %97 = arith.addf %96, %95 : vector<8x128xf32>
    %98 = arith.divf %96, %97 : vector<8x128xf32>
    %99 = vector.extract_strided_slice %88 {offsets = [0, 128], sizes = [8, 128], strides = [1, 1]} : vector<8x384xf32> to vector<8x128xf32>
    %100 = vector.extract_strided_slice %90 {offsets = [0, 128], sizes = [8, 128], strides = [1, 1]} : vector<8x384xf32> to vector<8x128xf32>
    %101 = arith.addf %99, %100 : vector<8x128xf32>
    %102 = arith.negf %101 : vector<8x128xf32>
    %103 = math.exp %102 : vector<8x128xf32>
    %cst_39 = arith.constant 1.000000e+00 : f32
    %104 = vector.broadcast %cst_39 : f32 to vector<8x128xf32>
    %105 = arith.addf %104, %103 : vector<8x128xf32>
    %106 = arith.divf %104, %105 : vector<8x128xf32>
    %107 = vector.extract_strided_slice %88 {offsets = [0, 256], sizes = [8, 128], strides = [1, 1]} : vector<8x384xf32> to vector<8x128xf32>
    %108 = vector.extract_strided_slice %90 {offsets = [0, 256], sizes = [8, 128], strides = [1, 1]} : vector<8x384xf32> to vector<8x128xf32>
    %109 = vector.broadcast %13 : vector<1x128xf32> to vector<8x128xf32>
    %110 = arith.addf %108, %109 : vector<8x128xf32>
    %111 = arith.mulf %98, %110 : vector<8x128xf32>
    %112 = arith.addf %107, %111 : vector<8x128xf32>
    %113 = math.tanh %112 : vector<8x128xf32>
    %cst_40 = arith.constant 1.000000e+00 : f32
    %114 = vector.broadcast %cst_40 : f32 to vector<8x128xf32>
    %115 = arith.subf %114, %106 : vector<8x128xf32>
    %116 = arith.mulf %115, %113 : vector<8x128xf32>
    %117 = arith.mulf %106, %82 : vector<8x128xf32>
    %118 = arith.addf %116, %117 : vector<8x128xf32>
    %119 = arith.truncf %118 : vector<8x128xf32> to vector<8x128xbf16>
    %c0_41 = arith.constant 0 : index
    %c2_42 = arith.constant 2 : index
    %c0_43 = arith.constant 0 : index
    %120 = vector.load %arg7[%c0_41, %c2_42, %c0_43] : memref<8x16x128xbf16, #tpu.memory_space<vmem>>, vector<8x1x128xbf16>
    %121 = vector.shape_cast %120 : vector<8x1x128xbf16> to vector<8x128xbf16>
    %122 = vector.shape_cast %119 : vector<8x128xbf16> to vector<8x1x128xbf16>
    tpu.vector_store %arg7[%c0_41, %c2_42, %c0_43], %122 {strides = array<i32>} : memref<8x16x128xbf16, #tpu.memory_space<vmem>>, vector<8x1x128xbf16>,
    %c0_44 = arith.constant 0 : index
    %c3 = arith.constant 3 : index
    %c0_45 = arith.constant 0 : index
    %123 = vector.load %arg9[%c0_44, %c3, %c0_45] : memref<8x16x384xf32, #tpu.memory_space<vmem>>, vector<8x1x384xf32>
    %124 = vector.shape_cast %123 : vector<8x1x384xf32> to vector<8x384xf32>
    %125 = arith.truncf %118 : vector<8x128xf32> to vector<8x128xbf16>
    %cst_46 = arith.constant dense<0.000000e+00> : vector<8x384xf32>
    %126 = tpu.matmul %125, %12, %cst_46 {dimension_numbers = #tpu.dot_dimension_numbers<[1], [0], [0], [1], [0, 0, 1, 1], [], []>} : vector<8x128xbf16>, vector<128x384xbf16>, vector<8x384xf32> -> vector<8x384xf32>
    %127 = vector.extract_strided_slice %124 {offsets = [0, 0], sizes = [8, 128], strides = [1, 1]} : vector<8x384xf32> to vector<8x128xf32>
    %128 = vector.extract_strided_slice %126 {offsets = [0, 0], sizes = [8, 128], strides = [1, 1]} : vector<8x384xf32> to vector<8x128xf32>
    %129 = arith.addf %127, %128 : vector<8x128xf32>
    %130 = arith.negf %129 : vector<8x128xf32>
    %131 = math.exp %130 : vector<8x128xf32>
    %cst_47 = arith.constant 1.000000e+00 : f32
    %132 = vector.broadcast %cst_47 : f32 to vector<8x128xf32>
    %133 = arith.addf %132, %131 : vector<8x128xf32>
    %134 = arith.divf %132, %133 : vector<8x128xf32>
    %135 = vector.extract_strided_slice %124 {offsets = [0, 128], sizes = [8, 128], strides = [1, 1]} : vector<8x384xf32> to vector<8x128xf32>
    %136 = vector.extract_strided_slice %126 {offsets = [0, 128], sizes = [8, 128], strides = [1, 1]} : vector<8x384xf32> to vector<8x128xf32>
    %137 = arith.addf %135, %136 : vector<8x128xf32>
    %138 = arith.negf %137 : vector<8x128xf32>
    %139 = math.exp %138 : vector<8x128xf32>
    %cst_48 = arith.constant 1.000000e+00 : f32
    %140 = vector.broadcast %cst_48 : f32 to vector<8x128xf32>
    %141 = arith.addf %140, %139 : vector<8x128xf32>
    %142 = arith.divf %140, %141 : vector<8x128xf32>
    %143 = vector.extract_strided_slice %124 {offsets = [0, 256], sizes = [8, 128], strides = [1, 1]} : vector<8x384xf32> to vector<8x128xf32>
    %144 = vector.extract_strided_slice %126 {offsets = [0, 256], sizes = [8, 128], strides = [1, 1]} : vector<8x384xf32> to vector<8x128xf32>
    %145 = vector.broadcast %13 : vector<1x128xf32> to vector<8x128xf32>
    %146 = arith.addf %144, %145 : vector<8x128xf32>
    %147 = arith.mulf %134, %146 : vector<8x128xf32>
    %148 = arith.addf %143, %147 : vector<8x128xf32>
    %149 = math.tanh %148 : vector<8x128xf32>
    %cst_49 = arith.constant 1.000000e+00 : f32
    %150 = vector.broadcast %cst_49 : f32 to vector<8x128xf32>
    %151 = arith.subf %150, %142 : vector<8x128xf32>
    %152 = arith.mulf %151, %149 : vector<8x128xf32>
    %153 = arith.mulf %142, %118 : vector<8x128xf32>
    %154 = arith.addf %152, %153 : vector<8x128xf32>
    %155 = arith.truncf %154 : vector<8x128xf32> to vector<8x128xbf16>
    %c0_50 = arith.constant 0 : index
    %c3_51 = arith.constant 3 : index
    %c0_52 = arith.constant 0 : index
    %156 = vector.load %arg7[%c0_50, %c3_51, %c0_52] : memref<8x16x128xbf16, #tpu.memory_space<vmem>>, vector<8x1x128xbf16>
    %157 = vector.shape_cast %156 : vector<8x1x128xbf16> to vector<8x128xbf16>
    %158 = vector.shape_cast %155 : vector<8x128xbf16> to vector<8x1x128xbf16>
    tpu.vector_store %arg7[%c0_50, %c3_51, %c0_52], %158 {strides = array<i32>} : memref<8x16x128xbf16, #tpu.memory_space<vmem>>, vector<8x1x128xbf16>,
    %c0_53 = arith.constant 0 : index
    %c4 = arith.constant 4 : index
    %c0_54 = arith.constant 0 : index
    %159 = vector.load %arg9[%c0_53, %c4, %c0_54] : memref<8x16x384xf32, #tpu.memory_space<vmem>>, vector<8x1x384xf32>
    %160 = vector.shape_cast %159 : vector<8x1x384xf32> to vector<8x384xf32>
    %161 = arith.truncf %154 : vector<8x128xf32> to vector<8x128xbf16>
    %cst_55 = arith.constant dense<0.000000e+00> : vector<8x384xf32>
    %162 = tpu.matmul %161, %12, %cst_55 {dimension_numbers = #tpu.dot_dimension_numbers<[1], [0], [0], [1], [0, 0, 1, 1], [], []>} : vector<8x128xbf16>, vector<128x384xbf16>, vector<8x384xf32> -> vector<8x384xf32>
    %163 = vector.extract_strided_slice %160 {offsets = [0, 0], sizes = [8, 128], strides = [1, 1]} : vector<8x384xf32> to vector<8x128xf32>
    %164 = vector.extract_strided_slice %162 {offsets = [0, 0], sizes = [8, 128], strides = [1, 1]} : vector<8x384xf32> to vector<8x128xf32>
    %165 = arith.addf %163, %164 : vector<8x128xf32>
    %166 = arith.negf %165 : vector<8x128xf32>
    %167 = math.exp %166 : vector<8x128xf32>
    %cst_56 = arith.constant 1.000000e+00 : f32
    %168 = vector.broadcast %cst_56 : f32 to vector<8x128xf32>
    %169 = arith.addf %168, %167 : vector<8x128xf32>
    %170 = arith.divf %168, %169 : vector<8x128xf32>
    %171 = vector.extract_strided_slice %160 {offsets = [0, 128], sizes = [8, 128], strides = [1, 1]} : vector<8x384xf32> to vector<8x128xf32>
    %172 = vector.extract_strided_slice %162 {offsets = [0, 128], sizes = [8, 128], strides = [1, 1]} : vector<8x384xf32> to vector<8x128xf32>
    %173 = arith.addf %171, %172 : vector<8x128xf32>
    %174 = arith.negf %173 : vector<8x128xf32>
    %175 = math.exp %174 : vector<8x128xf32>
    %cst_57 = arith.constant 1.000000e+00 : f32
    %176 = vector.broadcast %cst_57 : f32 to vector<8x128xf32>
    %177 = arith.addf %176, %175 : vector<8x128xf32>
    %178 = arith.divf %176, %177 : vector<8x128xf32>
    %179 = vector.extract_strided_slice %160 {offsets = [0, 256], sizes = [8, 128], strides = [1, 1]} : vector<8x384xf32> to vector<8x128xf32>
    %180 = vector.extract_strided_slice %162 {offsets = [0, 256], sizes = [8, 128], strides = [1, 1]} : vector<8x384xf32> to vector<8x128xf32>
    %181 = vector.broadcast %13 : vector<1x128xf32> to vector<8x128xf32>
    %182 = arith.addf %180, %181 : vector<8x128xf32>
    %183 = arith.mulf %170, %182 : vector<8x128xf32>
    %184 = arith.addf %179, %183 : vector<8x128xf32>
    %185 = math.tanh %184 : vector<8x128xf32>
    %cst_58 = arith.constant 1.000000e+00 : f32
    %186 = vector.broadcast %cst_58 : f32 to vector<8x128xf32>
    %187 = arith.subf %186, %178 : vector<8x128xf32>
    %188 = arith.mulf %187, %185 : vector<8x128xf32>
    %189 = arith.mulf %178, %154 : vector<8x128xf32>
    %190 = arith.addf %188, %189 : vector<8x128xf32>
    %191 = arith.truncf %190 : vector<8x128xf32> to vector<8x128xbf16>
    %c0_59 = arith.constant 0 : index
    %c4_60 = arith.constant 4 : index
    %c0_61 = arith.constant 0 : index
    %192 = vector.load %arg7[%c0_59, %c4_60, %c0_61] : memref<8x16x128xbf16, #tpu.memory_space<vmem>>, vector<8x1x128xbf16>
    %193 = vector.shape_cast %192 : vector<8x1x128xbf16> to vector<8x128xbf16>
    %194 = vector.shape_cast %191 : vector<8x128xbf16> to vector<8x1x128xbf16>
    tpu.vector_store %arg7[%c0_59, %c4_60, %c0_61], %194 {strides = array<i32>} : memref<8x16x128xbf16, #tpu.memory_space<vmem>>, vector<8x1x128xbf16>,
    %c0_62 = arith.constant 0 : index
    %c5 = arith.constant 5 : index
    %c0_63 = arith.constant 0 : index
    %195 = vector.load %arg9[%c0_62, %c5, %c0_63] : memref<8x16x384xf32, #tpu.memory_space<vmem>>, vector<8x1x384xf32>
    %196 = vector.shape_cast %195 : vector<8x1x384xf32> to vector<8x384xf32>
    %197 = arith.truncf %190 : vector<8x128xf32> to vector<8x128xbf16>
    %cst_64 = arith.constant dense<0.000000e+00> : vector<8x384xf32>
    %198 = tpu.matmul %197, %12, %cst_64 {dimension_numbers = #tpu.dot_dimension_numbers<[1], [0], [0], [1], [0, 0, 1, 1], [], []>} : vector<8x128xbf16>, vector<128x384xbf16>, vector<8x384xf32> -> vector<8x384xf32>
    %199 = vector.extract_strided_slice %196 {offsets = [0, 0], sizes = [8, 128], strides = [1, 1]} : vector<8x384xf32> to vector<8x128xf32>
    %200 = vector.extract_strided_slice %198 {offsets = [0, 0], sizes = [8, 128], strides = [1, 1]} : vector<8x384xf32> to vector<8x128xf32>
    %201 = arith.addf %199, %200 : vector<8x128xf32>
    %202 = arith.negf %201 : vector<8x128xf32>
    %203 = math.exp %202 : vector<8x128xf32>
    %cst_65 = arith.constant 1.000000e+00 : f32
    %204 = vector.broadcast %cst_65 : f32 to vector<8x128xf32>
    %205 = arith.addf %204, %203 : vector<8x128xf32>
    %206 = arith.divf %204, %205 : vector<8x128xf32>
    %207 = vector.extract_strided_slice %196 {offsets = [0, 128], sizes = [8, 128], strides = [1, 1]} : vector<8x384xf32> to vector<8x128xf32>
    %208 = vector.extract_strided_slice %198 {offsets = [0, 128], sizes = [8, 128], strides = [1, 1]} : vector<8x384xf32> to vector<8x128xf32>
    %209 = arith.addf %207, %208 : vector<8x128xf32>
    %210 = arith.negf %209 : vector<8x128xf32>
    %211 = math.exp %210 : vector<8x128xf32>
    %cst_66 = arith.constant 1.000000e+00 : f32
    %212 = vector.broadcast %cst_66 : f32 to vector<8x128xf32>
    %213 = arith.addf %212, %211 : vector<8x128xf32>
    %214 = arith.divf %212, %213 : vector<8x128xf32>
    %215 = vector.extract_strided_slice %196 {offsets = [0, 256], sizes = [8, 128], strides = [1, 1]} : vector<8x384xf32> to vector<8x128xf32>
    %216 = vector.extract_strided_slice %198 {offsets = [0, 256], sizes = [8, 128], strides = [1, 1]} : vector<8x384xf32> to vector<8x128xf32>
    %217 = vector.broadcast %13 : vector<1x128xf32> to vector<8x128xf32>
    %218 = arith.addf %216, %217 : vector<8x128xf32>
    %219 = arith.mulf %206, %218 : vector<8x128xf32>
    %220 = arith.addf %215, %219 : vector<8x128xf32>
    %221 = math.tanh %220 : vector<8x128xf32>
    %cst_67 = arith.constant 1.000000e+00 : f32
    %222 = vector.broadcast %cst_67 : f32 to vector<8x128xf32>
    %223 = arith.subf %222, %214 : vector<8x128xf32>
    %224 = arith.mulf %223, %221 : vector<8x128xf32>
    %225 = arith.mulf %214, %190 : vector<8x128xf32>
    %226 = arith.addf %224, %225 : vector<8x128xf32>
    %227 = arith.truncf %226 : vector<8x128xf32> to vector<8x128xbf16>
    %c0_68 = arith.constant 0 : index
    %c5_69 = arith.constant 5 : index
    %c0_70 = arith.constant 0 : index
    %228 = vector.load %arg7[%c0_68, %c5_69, %c0_70] : memref<8x16x128xbf16, #tpu.memory_space<vmem>>, vector<8x1x128xbf16>
    %229 = vector.shape_cast %228 : vector<8x1x128xbf16> to vector<8x128xbf16>
    %230 = vector.shape_cast %227 : vector<8x128xbf16> to vector<8x1x128xbf16>
    tpu.vector_store %arg7[%c0_68, %c5_69, %c0_70], %230 {strides = array<i32>} : memref<8x16x128xbf16, #tpu.memory_space<vmem>>, vector<8x1x128xbf16>,
    %c0_71 = arith.constant 0 : index
    %c6 = arith.constant 6 : index
    %c0_72 = arith.constant 0 : index
    %231 = vector.load %arg9[%c0_71, %c6, %c0_72] : memref<8x16x384xf32, #tpu.memory_space<vmem>>, vector<8x1x384xf32>
    %232 = vector.shape_cast %231 : vector<8x1x384xf32> to vector<8x384xf32>
    %233 = arith.truncf %226 : vector<8x128xf32> to vector<8x128xbf16>
    %cst_73 = arith.constant dense<0.000000e+00> : vector<8x384xf32>
    %234 = tpu.matmul %233, %12, %cst_73 {dimension_numbers = #tpu.dot_dimension_numbers<[1], [0], [0], [1], [0, 0, 1, 1], [], []>} : vector<8x128xbf16>, vector<128x384xbf16>, vector<8x384xf32> -> vector<8x384xf32>
    %235 = vector.extract_strided_slice %232 {offsets = [0, 0], sizes = [8, 128], strides = [1, 1]} : vector<8x384xf32> to vector<8x128xf32>
    %236 = vector.extract_strided_slice %234 {offsets = [0, 0], sizes = [8, 128], strides = [1, 1]} : vector<8x384xf32> to vector<8x128xf32>
    %237 = arith.addf %235, %236 : vector<8x128xf32>
    %238 = arith.negf %237 : vector<8x128xf32>
    %239 = math.exp %238 : vector<8x128xf32>
    %cst_74 = arith.constant 1.000000e+00 : f32
    %240 = vector.broadcast %cst_74 : f32 to vector<8x128xf32>
    %241 = arith.addf %240, %239 : vector<8x128xf32>
    %242 = arith.divf %240, %241 : vector<8x128xf32>
    %243 = vector.extract_strided_slice %232 {offsets = [0, 128], sizes = [8, 128], strides = [1, 1]} : vector<8x384xf32> to vector<8x128xf32>
    %244 = vector.extract_strided_slice %234 {offsets = [0, 128], sizes = [8, 128], strides = [1, 1]} : vector<8x384xf32> to vector<8x128xf32>
    %245 = arith.addf %243, %244 : vector<8x128xf32>
    %246 = arith.negf %245 : vector<8x128xf32>
    %247 = math.exp %246 : vector<8x128xf32>
    %cst_75 = arith.constant 1.000000e+00 : f32
    %248 = vector.broadcast %cst_75 : f32 to vector<8x128xf32>
    %249 = arith.addf %248, %247 : vector<8x128xf32>
    %250 = arith.divf %248, %249 : vector<8x128xf32>
    %251 = vector.extract_strided_slice %232 {offsets = [0, 256], sizes = [8, 128], strides = [1, 1]} : vector<8x384xf32> to vector<8x128xf32>
    %252 = vector.extract_strided_slice %234 {offsets = [0, 256], sizes = [8, 128], strides = [1, 1]} : vector<8x384xf32> to vector<8x128xf32>
    %253 = vector.broadcast %13 : vector<1x128xf32> to vector<8x128xf32>
    %254 = arith.addf %252, %253 : vector<8x128xf32>
    %255 = arith.mulf %242, %254 : vector<8x128xf32>
    %256 = arith.addf %251, %255 : vector<8x128xf32>
    %257 = math.tanh %256 : vector<8x128xf32>
    %cst_76 = arith.constant 1.000000e+00 : f32
    %258 = vector.broadcast %cst_76 : f32 to vector<8x128xf32>
    %259 = arith.subf %258, %250 : vector<8x128xf32>
    %260 = arith.mulf %259, %257 : vector<8x128xf32>
    %261 = arith.mulf %250, %226 : vector<8x128xf32>
    %262 = arith.addf %260, %261 : vector<8x128xf32>
    %263 = arith.truncf %262 : vector<8x128xf32> to vector<8x128xbf16>
    %c0_77 = arith.constant 0 : index
    %c6_78 = arith.constant 6 : index
    %c0_79 = arith.constant 0 : index
    %264 = vector.load %arg7[%c0_77, %c6_78, %c0_79] : memref<8x16x128xbf16, #tpu.memory_space<vmem>>, vector<8x1x128xbf16>
    %265 = vector.shape_cast %264 : vector<8x1x128xbf16> to vector<8x128xbf16>
    %266 = vector.shape_cast %263 : vector<8x128xbf16> to vector<8x1x128xbf16>
    tpu.vector_store %arg7[%c0_77, %c6_78, %c0_79], %266 {strides = array<i32>} : memref<8x16x128xbf16, #tpu.memory_space<vmem>>, vector<8x1x128xbf16>,
    %c0_80 = arith.constant 0 : index
    %c7 = arith.constant 7 : index
    %c0_81 = arith.constant 0 : index
    %267 = vector.load %arg9[%c0_80, %c7, %c0_81] : memref<8x16x384xf32, #tpu.memory_space<vmem>>, vector<8x1x384xf32>
    %268 = vector.shape_cast %267 : vector<8x1x384xf32> to vector<8x384xf32>
    %269 = arith.truncf %262 : vector<8x128xf32> to vector<8x128xbf16>
    %cst_82 = arith.constant dense<0.000000e+00> : vector<8x384xf32>
    %270 = tpu.matmul %269, %12, %cst_82 {dimension_numbers = #tpu.dot_dimension_numbers<[1], [0], [0], [1], [0, 0, 1, 1], [], []>} : vector<8x128xbf16>, vector<128x384xbf16>, vector<8x384xf32> -> vector<8x384xf32>
    %271 = vector.extract_strided_slice %268 {offsets = [0, 0], sizes = [8, 128], strides = [1, 1]} : vector<8x384xf32> to vector<8x128xf32>
    %272 = vector.extract_strided_slice %270 {offsets = [0, 0], sizes = [8, 128], strides = [1, 1]} : vector<8x384xf32> to vector<8x128xf32>
    %273 = arith.addf %271, %272 : vector<8x128xf32>
    %274 = arith.negf %273 : vector<8x128xf32>
    %275 = math.exp %274 : vector<8x128xf32>
    %cst_83 = arith.constant 1.000000e+00 : f32
    %276 = vector.broadcast %cst_83 : f32 to vector<8x128xf32>
    %277 = arith.addf %276, %275 : vector<8x128xf32>
    %278 = arith.divf %276, %277 : vector<8x128xf32>
    %279 = vector.extract_strided_slice %268 {offsets = [0, 128], sizes = [8, 128], strides = [1, 1]} : vector<8x384xf32> to vector<8x128xf32>
    %280 = vector.extract_strided_slice %270 {offsets = [0, 128], sizes = [8, 128], strides = [1, 1]} : vector<8x384xf32> to vector<8x128xf32>
    %281 = arith.addf %279, %280 : vector<8x128xf32>
    %282 = arith.negf %281 : vector<8x128xf32>
    %283 = math.exp %282 : vector<8x128xf32>
    %cst_84 = arith.constant 1.000000e+00 : f32
    %284 = vector.broadcast %cst_84 : f32 to vector<8x128xf32>
    %285 = arith.addf %284, %283 : vector<8x128xf32>
    %286 = arith.divf %284, %285 : vector<8x128xf32>
    %287 = vector.extract_strided_slice %268 {offsets = [0, 256], sizes = [8, 128], strides = [1, 1]} : vector<8x384xf32> to vector<8x128xf32>
    %288 = vector.extract_strided_slice %270 {offsets = [0, 256], sizes = [8, 128], strides = [1, 1]} : vector<8x384xf32> to vector<8x128xf32>
    %289 = vector.broadcast %13 : vector<1x128xf32> to vector<8x128xf32>
    %290 = arith.addf %288, %289 : vector<8x128xf32>
    %291 = arith.mulf %278, %290 : vector<8x128xf32>
    %292 = arith.addf %287, %291 : vector<8x128xf32>
    %293 = math.tanh %292 : vector<8x128xf32>
    %cst_85 = arith.constant 1.000000e+00 : f32
    %294 = vector.broadcast %cst_85 : f32 to vector<8x128xf32>
    %295 = arith.subf %294, %286 : vector<8x128xf32>
    %296 = arith.mulf %295, %293 : vector<8x128xf32>
    %297 = arith.mulf %286, %262 : vector<8x128xf32>
    %298 = arith.addf %296, %297 : vector<8x128xf32>
    %299 = arith.truncf %298 : vector<8x128xf32> to vector<8x128xbf16>
    %c0_86 = arith.constant 0 : index
    %c7_87 = arith.constant 7 : index
    %c0_88 = arith.constant 0 : index
    %300 = vector.load %arg7[%c0_86, %c7_87, %c0_88] : memref<8x16x128xbf16, #tpu.memory_space<vmem>>, vector<8x1x128xbf16>
    %301 = vector.shape_cast %300 : vector<8x1x128xbf16> to vector<8x128xbf16>
    %302 = vector.shape_cast %299 : vector<8x128xbf16> to vector<8x1x128xbf16>
    tpu.vector_store %arg7[%c0_86, %c7_87, %c0_88], %302 {strides = array<i32>} : memref<8x16x128xbf16, #tpu.memory_space<vmem>>, vector<8x1x128xbf16>,
    %c0_89 = arith.constant 0 : index
    %c8 = arith.constant 8 : index
    %c0_90 = arith.constant 0 : index
    %303 = vector.load %arg9[%c0_89, %c8, %c0_90] : memref<8x16x384xf32, #tpu.memory_space<vmem>>, vector<8x1x384xf32>
    %304 = vector.shape_cast %303 : vector<8x1x384xf32> to vector<8x384xf32>
    %305 = arith.truncf %298 : vector<8x128xf32> to vector<8x128xbf16>
    %cst_91 = arith.constant dense<0.000000e+00> : vector<8x384xf32>
    %306 = tpu.matmul %305, %12, %cst_91 {dimension_numbers = #tpu.dot_dimension_numbers<[1], [0], [0], [1], [0, 0, 1, 1], [], []>} : vector<8x128xbf16>, vector<128x384xbf16>, vector<8x384xf32> -> vector<8x384xf32>
    %307 = vector.extract_strided_slice %304 {offsets = [0, 0], sizes = [8, 128], strides = [1, 1]} : vector<8x384xf32> to vector<8x128xf32>
    %308 = vector.extract_strided_slice %306 {offsets = [0, 0], sizes = [8, 128], strides = [1, 1]} : vector<8x384xf32> to vector<8x128xf32>
    %309 = arith.addf %307, %308 : vector<8x128xf32>
    %310 = arith.negf %309 : vector<8x128xf32>
    %311 = math.exp %310 : vector<8x128xf32>
    %cst_92 = arith.constant 1.000000e+00 : f32
    %312 = vector.broadcast %cst_92 : f32 to vector<8x128xf32>
    %313 = arith.addf %312, %311 : vector<8x128xf32>
    %314 = arith.divf %312, %313 : vector<8x128xf32>
    %315 = vector.extract_strided_slice %304 {offsets = [0, 128], sizes = [8, 128], strides = [1, 1]} : vector<8x384xf32> to vector<8x128xf32>
    %316 = vector.extract_strided_slice %306 {offsets = [0, 128], sizes = [8, 128], strides = [1, 1]} : vector<8x384xf32> to vector<8x128xf32>
    %317 = arith.addf %315, %316 : vector<8x128xf32>
    %318 = arith.negf %317 : vector<8x128xf32>
    %319 = math.exp %318 : vector<8x128xf32>
    %cst_93 = arith.constant 1.000000e+00 : f32
    %320 = vector.broadcast %cst_93 : f32 to vector<8x128xf32>
    %321 = arith.addf %320, %319 : vector<8x128xf32>
    %322 = arith.divf %320, %321 : vector<8x128xf32>
    %323 = vector.extract_strided_slice %304 {offsets = [0, 256], sizes = [8, 128], strides = [1, 1]} : vector<8x384xf32> to vector<8x128xf32>
    %324 = vector.extract_strided_slice %306 {offsets = [0, 256], sizes = [8, 128], strides = [1, 1]} : vector<8x384xf32> to vector<8x128xf32>
    %325 = vector.broadcast %13 : vector<1x128xf32> to vector<8x128xf32>
    %326 = arith.addf %324, %325 : vector<8x128xf32>
    %327 = arith.mulf %314, %326 : vector<8x128xf32>
    %328 = arith.addf %323, %327 : vector<8x128xf32>
    %329 = math.tanh %328 : vector<8x128xf32>
    %cst_94 = arith.constant 1.000000e+00 : f32
    %330 = vector.broadcast %cst_94 : f32 to vector<8x128xf32>
    %331 = arith.subf %330, %322 : vector<8x128xf32>
    %332 = arith.mulf %331, %329 : vector<8x128xf32>
    %333 = arith.mulf %322, %298 : vector<8x128xf32>
    %334 = arith.addf %332, %333 : vector<8x128xf32>
    %335 = arith.truncf %334 : vector<8x128xf32> to vector<8x128xbf16>
    %c0_95 = arith.constant 0 : index
    %c8_96 = arith.constant 8 : index
    %c0_97 = arith.constant 0 : index
    %336 = vector.load %arg7[%c0_95, %c8_96, %c0_97] : memref<8x16x128xbf16, #tpu.memory_space<vmem>>, vector<8x1x128xbf16>
    %337 = vector.shape_cast %336 : vector<8x1x128xbf16> to vector<8x128xbf16>
    %338 = vector.shape_cast %335 : vector<8x128xbf16> to vector<8x1x128xbf16>
    tpu.vector_store %arg7[%c0_95, %c8_96, %c0_97], %338 {strides = array<i32>} : memref<8x16x128xbf16, #tpu.memory_space<vmem>>, vector<8x1x128xbf16>,
    %c0_98 = arith.constant 0 : index
    %c9 = arith.constant 9 : index
    %c0_99 = arith.constant 0 : index
    %339 = vector.load %arg9[%c0_98, %c9, %c0_99] : memref<8x16x384xf32, #tpu.memory_space<vmem>>, vector<8x1x384xf32>
    %340 = vector.shape_cast %339 : vector<8x1x384xf32> to vector<8x384xf32>
    %341 = arith.truncf %334 : vector<8x128xf32> to vector<8x128xbf16>
    %cst_100 = arith.constant dense<0.000000e+00> : vector<8x384xf32>
    %342 = tpu.matmul %341, %12, %cst_100 {dimension_numbers = #tpu.dot_dimension_numbers<[1], [0], [0], [1], [0, 0, 1, 1], [], []>} : vector<8x128xbf16>, vector<128x384xbf16>, vector<8x384xf32> -> vector<8x384xf32>
    %343 = vector.extract_strided_slice %340 {offsets = [0, 0], sizes = [8, 128], strides = [1, 1]} : vector<8x384xf32> to vector<8x128xf32>
    %344 = vector.extract_strided_slice %342 {offsets = [0, 0], sizes = [8, 128], strides = [1, 1]} : vector<8x384xf32> to vector<8x128xf32>
    %345 = arith.addf %343, %344 : vector<8x128xf32>
    %346 = arith.negf %345 : vector<8x128xf32>
    %347 = math.exp %346 : vector<8x128xf32>
    %cst_101 = arith.constant 1.000000e+00 : f32
    %348 = vector.broadcast %cst_101 : f32 to vector<8x128xf32>
    %349 = arith.addf %348, %347 : vector<8x128xf32>
    %350 = arith.divf %348, %349 : vector<8x128xf32>
    %351 = vector.extract_strided_slice %340 {offsets = [0, 128], sizes = [8, 128], strides = [1, 1]} : vector<8x384xf32> to vector<8x128xf32>
    %352 = vector.extract_strided_slice %342 {offsets = [0, 128], sizes = [8, 128], strides = [1, 1]} : vector<8x384xf32> to vector<8x128xf32>
    %353 = arith.addf %351, %352 : vector<8x128xf32>
    %354 = arith.negf %353 : vector<8x128xf32>
    %355 = math.exp %354 : vector<8x128xf32>
    %cst_102 = arith.constant 1.000000e+00 : f32
    %356 = vector.broadcast %cst_102 : f32 to vector<8x128xf32>
    %357 = arith.addf %356, %355 : vector<8x128xf32>
    %358 = arith.divf %356, %357 : vector<8x128xf32>
    %359 = vector.extract_strided_slice %340 {offsets = [0, 256], sizes = [8, 128], strides = [1, 1]} : vector<8x384xf32> to vector<8x128xf32>
    %360 = vector.extract_strided_slice %342 {offsets = [0, 256], sizes = [8, 128], strides = [1, 1]} : vector<8x384xf32> to vector<8x128xf32>
    %361 = vector.broadcast %13 : vector<1x128xf32> to vector<8x128xf32>
    %362 = arith.addf %360, %361 : vector<8x128xf32>
    %363 = arith.mulf %350, %362 : vector<8x128xf32>
    %364 = arith.addf %359, %363 : vector<8x128xf32>
    %365 = math.tanh %364 : vector<8x128xf32>
    %cst_103 = arith.constant 1.000000e+00 : f32
    %366 = vector.broadcast %cst_103 : f32 to vector<8x128xf32>
    %367 = arith.subf %366, %358 : vector<8x128xf32>
    %368 = arith.mulf %367, %365 : vector<8x128xf32>
    %369 = arith.mulf %358, %334 : vector<8x128xf32>
    %370 = arith.addf %368, %369 : vector<8x128xf32>
    %371 = arith.truncf %370 : vector<8x128xf32> to vector<8x128xbf16>
    %c0_104 = arith.constant 0 : index
    %c9_105 = arith.constant 9 : index
    %c0_106 = arith.constant 0 : index
    %372 = vector.load %arg7[%c0_104, %c9_105, %c0_106] : memref<8x16x128xbf16, #tpu.memory_space<vmem>>, vector<8x1x128xbf16>
    %373 = vector.shape_cast %372 : vector<8x1x128xbf16> to vector<8x128xbf16>
    %374 = vector.shape_cast %371 : vector<8x128xbf16> to vector<8x1x128xbf16>
    tpu.vector_store %arg7[%c0_104, %c9_105, %c0_106], %374 {strides = array<i32>} : memref<8x16x128xbf16, #tpu.memory_space<vmem>>, vector<8x1x128xbf16>,
    %c0_107 = arith.constant 0 : index
    %c10 = arith.constant 10 : index
    %c0_108 = arith.constant 0 : index
    %375 = vector.load %arg9[%c0_107, %c10, %c0_108] : memref<8x16x384xf32, #tpu.memory_space<vmem>>, vector<8x1x384xf32>
    %376 = vector.shape_cast %375 : vector<8x1x384xf32> to vector<8x384xf32>
    %377 = arith.truncf %370 : vector<8x128xf32> to vector<8x128xbf16>
    %cst_109 = arith.constant dense<0.000000e+00> : vector<8x384xf32>
    %378 = tpu.matmul %377, %12, %cst_109 {dimension_numbers = #tpu.dot_dimension_numbers<[1], [0], [0], [1], [0, 0, 1, 1], [], []>} : vector<8x128xbf16>, vector<128x384xbf16>, vector<8x384xf32> -> vector<8x384xf32>
    %379 = vector.extract_strided_slice %376 {offsets = [0, 0], sizes = [8, 128], strides = [1, 1]} : vector<8x384xf32> to vector<8x128xf32>
    %380 = vector.extract_strided_slice %378 {offsets = [0, 0], sizes = [8, 128], strides = [1, 1]} : vector<8x384xf32> to vector<8x128xf32>
    %381 = arith.addf %379, %380 : vector<8x128xf32>
    %382 = arith.negf %381 : vector<8x128xf32>
    %383 = math.exp %382 : vector<8x128xf32>
    %cst_110 = arith.constant 1.000000e+00 : f32
    %384 = vector.broadcast %cst_110 : f32 to vector<8x128xf32>
    %385 = arith.addf %384, %383 : vector<8x128xf32>
    %386 = arith.divf %384, %385 : vector<8x128xf32>
    %387 = vector.extract_strided_slice %376 {offsets = [0, 128], sizes = [8, 128], strides = [1, 1]} : vector<8x384xf32> to vector<8x128xf32>
    %388 = vector.extract_strided_slice %378 {offsets = [0, 128], sizes = [8, 128], strides = [1, 1]} : vector<8x384xf32> to vector<8x128xf32>
    %389 = arith.addf %387, %388 : vector<8x128xf32>
    %390 = arith.negf %389 : vector<8x128xf32>
    %391 = math.exp %390 : vector<8x128xf32>
    %cst_111 = arith.constant 1.000000e+00 : f32
    %392 = vector.broadcast %cst_111 : f32 to vector<8x128xf32>
    %393 = arith.addf %392, %391 : vector<8x128xf32>
    %394 = arith.divf %392, %393 : vector<8x128xf32>
    %395 = vector.extract_strided_slice %376 {offsets = [0, 256], sizes = [8, 128], strides = [1, 1]} : vector<8x384xf32> to vector<8x128xf32>
    %396 = vector.extract_strided_slice %378 {offsets = [0, 256], sizes = [8, 128], strides = [1, 1]} : vector<8x384xf32> to vector<8x128xf32>
    %397 = vector.broadcast %13 : vector<1x128xf32> to vector<8x128xf32>
    %398 = arith.addf %396, %397 : vector<8x128xf32>
    %399 = arith.mulf %386, %398 : vector<8x128xf32>
    %400 = arith.addf %395, %399 : vector<8x128xf32>
    %401 = math.tanh %400 : vector<8x128xf32>
    %cst_112 = arith.constant 1.000000e+00 : f32
    %402 = vector.broadcast %cst_112 : f32 to vector<8x128xf32>
    %403 = arith.subf %402, %394 : vector<8x128xf32>
    %404 = arith.mulf %403, %401 : vector<8x128xf32>
    %405 = arith.mulf %394, %370 : vector<8x128xf32>
    %406 = arith.addf %404, %405 : vector<8x128xf32>
    %407 = arith.truncf %406 : vector<8x128xf32> to vector<8x128xbf16>
    %c0_113 = arith.constant 0 : index
    %c10_114 = arith.constant 10 : index
    %c0_115 = arith.constant 0 : index
    %408 = vector.load %arg7[%c0_113, %c10_114, %c0_115] : memref<8x16x128xbf16, #tpu.memory_space<vmem>>, vector<8x1x128xbf16>
    %409 = vector.shape_cast %408 : vector<8x1x128xbf16> to vector<8x128xbf16>
    %410 = vector.shape_cast %407 : vector<8x128xbf16> to vector<8x1x128xbf16>
    tpu.vector_store %arg7[%c0_113, %c10_114, %c0_115], %410 {strides = array<i32>} : memref<8x16x128xbf16, #tpu.memory_space<vmem>>, vector<8x1x128xbf16>,
    %c0_116 = arith.constant 0 : index
    %c11 = arith.constant 11 : index
    %c0_117 = arith.constant 0 : index
    %411 = vector.load %arg9[%c0_116, %c11, %c0_117] : memref<8x16x384xf32, #tpu.memory_space<vmem>>, vector<8x1x384xf32>
    %412 = vector.shape_cast %411 : vector<8x1x384xf32> to vector<8x384xf32>
    %413 = arith.truncf %406 : vector<8x128xf32> to vector<8x128xbf16>
    %cst_118 = arith.constant dense<0.000000e+00> : vector<8x384xf32>
    %414 = tpu.matmul %413, %12, %cst_118 {dimension_numbers = #tpu.dot_dimension_numbers<[1], [0], [0], [1], [0, 0, 1, 1], [], []>} : vector<8x128xbf16>, vector<128x384xbf16>, vector<8x384xf32> -> vector<8x384xf32>
    %415 = vector.extract_strided_slice %412 {offsets = [0, 0], sizes = [8, 128], strides = [1, 1]} : vector<8x384xf32> to vector<8x128xf32>
    %416 = vector.extract_strided_slice %414 {offsets = [0, 0], sizes = [8, 128], strides = [1, 1]} : vector<8x384xf32> to vector<8x128xf32>
    %417 = arith.addf %415, %416 : vector<8x128xf32>
    %418 = arith.negf %417 : vector<8x128xf32>
    %419 = math.exp %418 : vector<8x128xf32>
    %cst_119 = arith.constant 1.000000e+00 : f32
    %420 = vector.broadcast %cst_119 : f32 to vector<8x128xf32>
    %421 = arith.addf %420, %419 : vector<8x128xf32>
    %422 = arith.divf %420, %421 : vector<8x128xf32>
    %423 = vector.extract_strided_slice %412 {offsets = [0, 128], sizes = [8, 128], strides = [1, 1]} : vector<8x384xf32> to vector<8x128xf32>
    %424 = vector.extract_strided_slice %414 {offsets = [0, 128], sizes = [8, 128], strides = [1, 1]} : vector<8x384xf32> to vector<8x128xf32>
    %425 = arith.addf %423, %424 : vector<8x128xf32>
    %426 = arith.negf %425 : vector<8x128xf32>
    %427 = math.exp %426 : vector<8x128xf32>
    %cst_120 = arith.constant 1.000000e+00 : f32
    %428 = vector.broadcast %cst_120 : f32 to vector<8x128xf32>
    %429 = arith.addf %428, %427 : vector<8x128xf32>
    %430 = arith.divf %428, %429 : vector<8x128xf32>
    %431 = vector.extract_strided_slice %412 {offsets = [0, 256], sizes = [8, 128], strides = [1, 1]} : vector<8x384xf32> to vector<8x128xf32>
    %432 = vector.extract_strided_slice %414 {offsets = [0, 256], sizes = [8, 128], strides = [1, 1]} : vector<8x384xf32> to vector<8x128xf32>
    %433 = vector.broadcast %13 : vector<1x128xf32> to vector<8x128xf32>
    %434 = arith.addf %432, %433 : vector<8x128xf32>
    %435 = arith.mulf %422, %434 : vector<8x128xf32>
    %436 = arith.addf %431, %435 : vector<8x128xf32>
    %437 = math.tanh %436 : vector<8x128xf32>
    %cst_121 = arith.constant 1.000000e+00 : f32
    %438 = vector.broadcast %cst_121 : f32 to vector<8x128xf32>
    %439 = arith.subf %438, %430 : vector<8x128xf32>
    %440 = arith.mulf %439, %437 : vector<8x128xf32>
    %441 = arith.mulf %430, %406 : vector<8x128xf32>
    %442 = arith.addf %440, %441 : vector<8x128xf32>
    %443 = arith.truncf %442 : vector<8x128xf32> to vector<8x128xbf16>
    %c0_122 = arith.constant 0 : index
    %c11_123 = arith.constant 11 : index
    %c0_124 = arith.constant 0 : index
    %444 = vector.load %arg7[%c0_122, %c11_123, %c0_124] : memref<8x16x128xbf16, #tpu.memory_space<vmem>>, vector<8x1x128xbf16>
    %445 = vector.shape_cast %444 : vector<8x1x128xbf16> to vector<8x128xbf16>
    %446 = vector.shape_cast %443 : vector<8x128xbf16> to vector<8x1x128xbf16>
    tpu.vector_store %arg7[%c0_122, %c11_123, %c0_124], %446 {strides = array<i32>} : memref<8x16x128xbf16, #tpu.memory_space<vmem>>, vector<8x1x128xbf16>,
    %c0_125 = arith.constant 0 : index
    %c12 = arith.constant 12 : index
    %c0_126 = arith.constant 0 : index
    %447 = vector.load %arg9[%c0_125, %c12, %c0_126] : memref<8x16x384xf32, #tpu.memory_space<vmem>>, vector<8x1x384xf32>
    %448 = vector.shape_cast %447 : vector<8x1x384xf32> to vector<8x384xf32>
    %449 = arith.truncf %442 : vector<8x128xf32> to vector<8x128xbf16>
    %cst_127 = arith.constant dense<0.000000e+00> : vector<8x384xf32>
    %450 = tpu.matmul %449, %12, %cst_127 {dimension_numbers = #tpu.dot_dimension_numbers<[1], [0], [0], [1], [0, 0, 1, 1], [], []>} : vector<8x128xbf16>, vector<128x384xbf16>, vector<8x384xf32> -> vector<8x384xf32>
    %451 = vector.extract_strided_slice %448 {offsets = [0, 0], sizes = [8, 128], strides = [1, 1]} : vector<8x384xf32> to vector<8x128xf32>
    %452 = vector.extract_strided_slice %450 {offsets = [0, 0], sizes = [8, 128], strides = [1, 1]} : vector<8x384xf32> to vector<8x128xf32>
    %453 = arith.addf %451, %452 : vector<8x128xf32>
    %454 = arith.negf %453 : vector<8x128xf32>
    %455 = math.exp %454 : vector<8x128xf32>
    %cst_128 = arith.constant 1.000000e+00 : f32
    %456 = vector.broadcast %cst_128 : f32 to vector<8x128xf32>
    %457 = arith.addf %456, %455 : vector<8x128xf32>
    %458 = arith.divf %456, %457 : vector<8x128xf32>
    %459 = vector.extract_strided_slice %448 {offsets = [0, 128], sizes = [8, 128], strides = [1, 1]} : vector<8x384xf32> to vector<8x128xf32>
    %460 = vector.extract_strided_slice %450 {offsets = [0, 128], sizes = [8, 128], strides = [1, 1]} : vector<8x384xf32> to vector<8x128xf32>
    %461 = arith.addf %459, %460 : vector<8x128xf32>
    %462 = arith.negf %461 : vector<8x128xf32>
    %463 = math.exp %462 : vector<8x128xf32>
    %cst_129 = arith.constant 1.000000e+00 : f32
    %464 = vector.broadcast %cst_129 : f32 to vector<8x128xf32>
    %465 = arith.addf %464, %463 : vector<8x128xf32>
    %466 = arith.divf %464, %465 : vector<8x128xf32>
    %467 = vector.extract_strided_slice %448 {offsets = [0, 256], sizes = [8, 128], strides = [1, 1]} : vector<8x384xf32> to vector<8x128xf32>
    %468 = vector.extract_strided_slice %450 {offsets = [0, 256], sizes = [8, 128], strides = [1, 1]} : vector<8x384xf32> to vector<8x128xf32>
    %469 = vector.broadcast %13 : vector<1x128xf32> to vector<8x128xf32>
    %470 = arith.addf %468, %469 : vector<8x128xf32>
    %471 = arith.mulf %458, %470 : vector<8x128xf32>
    %472 = arith.addf %467, %471 : vector<8x128xf32>
    %473 = math.tanh %472 : vector<8x128xf32>
    %cst_130 = arith.constant 1.000000e+00 : f32
    %474 = vector.broadcast %cst_130 : f32 to vector<8x128xf32>
    %475 = arith.subf %474, %466 : vector<8x128xf32>
    %476 = arith.mulf %475, %473 : vector<8x128xf32>
    %477 = arith.mulf %466, %442 : vector<8x128xf32>
    %478 = arith.addf %476, %477 : vector<8x128xf32>
    %479 = arith.truncf %478 : vector<8x128xf32> to vector<8x128xbf16>
    %c0_131 = arith.constant 0 : index
    %c12_132 = arith.constant 12 : index
    %c0_133 = arith.constant 0 : index
    %480 = vector.load %arg7[%c0_131, %c12_132, %c0_133] : memref<8x16x128xbf16, #tpu.memory_space<vmem>>, vector<8x1x128xbf16>
    %481 = vector.shape_cast %480 : vector<8x1x128xbf16> to vector<8x128xbf16>
    %482 = vector.shape_cast %479 : vector<8x128xbf16> to vector<8x1x128xbf16>
    tpu.vector_store %arg7[%c0_131, %c12_132, %c0_133], %482 {strides = array<i32>} : memref<8x16x128xbf16, #tpu.memory_space<vmem>>, vector<8x1x128xbf16>,
    %c0_134 = arith.constant 0 : index
    %c13 = arith.constant 13 : index
    %c0_135 = arith.constant 0 : index
    %483 = vector.load %arg9[%c0_134, %c13, %c0_135] : memref<8x16x384xf32, #tpu.memory_space<vmem>>, vector<8x1x384xf32>
    %484 = vector.shape_cast %483 : vector<8x1x384xf32> to vector<8x384xf32>
    %485 = arith.truncf %478 : vector<8x128xf32> to vector<8x128xbf16>
    %cst_136 = arith.constant dense<0.000000e+00> : vector<8x384xf32>
    %486 = tpu.matmul %485, %12, %cst_136 {dimension_numbers = #tpu.dot_dimension_numbers<[1], [0], [0], [1], [0, 0, 1, 1], [], []>} : vector<8x128xbf16>, vector<128x384xbf16>, vector<8x384xf32> -> vector<8x384xf32>
    %487 = vector.extract_strided_slice %484 {offsets = [0, 0], sizes = [8, 128], strides = [1, 1]} : vector<8x384xf32> to vector<8x128xf32>
    %488 = vector.extract_strided_slice %486 {offsets = [0, 0], sizes = [8, 128], strides = [1, 1]} : vector<8x384xf32> to vector<8x128xf32>
    %489 = arith.addf %487, %488 : vector<8x128xf32>
    %490 = arith.negf %489 : vector<8x128xf32>
    %491 = math.exp %490 : vector<8x128xf32>
    %cst_137 = arith.constant 1.000000e+00 : f32
    %492 = vector.broadcast %cst_137 : f32 to vector<8x128xf32>
    %493 = arith.addf %492, %491 : vector<8x128xf32>
    %494 = arith.divf %492, %493 : vector<8x128xf32>
    %495 = vector.extract_strided_slice %484 {offsets = [0, 128], sizes = [8, 128], strides = [1, 1]} : vector<8x384xf32> to vector<8x128xf32>
    %496 = vector.extract_strided_slice %486 {offsets = [0, 128], sizes = [8, 128], strides = [1, 1]} : vector<8x384xf32> to vector<8x128xf32>
    %497 = arith.addf %495, %496 : vector<8x128xf32>
    %498 = arith.negf %497 : vector<8x128xf32>
    %499 = math.exp %498 : vector<8x128xf32>
    %cst_138 = arith.constant 1.000000e+00 : f32
    %500 = vector.broadcast %cst_138 : f32 to vector<8x128xf32>
    %501 = arith.addf %500, %499 : vector<8x128xf32>
    %502 = arith.divf %500, %501 : vector<8x128xf32>
    %503 = vector.extract_strided_slice %484 {offsets = [0, 256], sizes = [8, 128], strides = [1, 1]} : vector<8x384xf32> to vector<8x128xf32>
    %504 = vector.extract_strided_slice %486 {offsets = [0, 256], sizes = [8, 128], strides = [1, 1]} : vector<8x384xf32> to vector<8x128xf32>
    %505 = vector.broadcast %13 : vector<1x128xf32> to vector<8x128xf32>
    %506 = arith.addf %504, %505 : vector<8x128xf32>
    %507 = arith.mulf %494, %506 : vector<8x128xf32>
    %508 = arith.addf %503, %507 : vector<8x128xf32>
    %509 = math.tanh %508 : vector<8x128xf32>
    %cst_139 = arith.constant 1.000000e+00 : f32
    %510 = vector.broadcast %cst_139 : f32 to vector<8x128xf32>
    %511 = arith.subf %510, %502 : vector<8x128xf32>
    %512 = arith.mulf %511, %509 : vector<8x128xf32>
    %513 = arith.mulf %502, %478 : vector<8x128xf32>
    %514 = arith.addf %512, %513 : vector<8x128xf32>
    %515 = arith.truncf %514 : vector<8x128xf32> to vector<8x128xbf16>
    %c0_140 = arith.constant 0 : index
    %c13_141 = arith.constant 13 : index
    %c0_142 = arith.constant 0 : index
    %516 = vector.load %arg7[%c0_140, %c13_141, %c0_142] : memref<8x16x128xbf16, #tpu.memory_space<vmem>>, vector<8x1x128xbf16>
    %517 = vector.shape_cast %516 : vector<8x1x128xbf16> to vector<8x128xbf16>
    %518 = vector.shape_cast %515 : vector<8x128xbf16> to vector<8x1x128xbf16>
    tpu.vector_store %arg7[%c0_140, %c13_141, %c0_142], %518 {strides = array<i32>} : memref<8x16x128xbf16, #tpu.memory_space<vmem>>, vector<8x1x128xbf16>,
    %c0_143 = arith.constant 0 : index
    %c14 = arith.constant 14 : index
    %c0_144 = arith.constant 0 : index
    %519 = vector.load %arg9[%c0_143, %c14, %c0_144] : memref<8x16x384xf32, #tpu.memory_space<vmem>>, vector<8x1x384xf32>
    %520 = vector.shape_cast %519 : vector<8x1x384xf32> to vector<8x384xf32>
    %521 = arith.truncf %514 : vector<8x128xf32> to vector<8x128xbf16>
    %cst_145 = arith.constant dense<0.000000e+00> : vector<8x384xf32>
    %522 = tpu.matmul %521, %12, %cst_145 {dimension_numbers = #tpu.dot_dimension_numbers<[1], [0], [0], [1], [0, 0, 1, 1], [], []>} : vector<8x128xbf16>, vector<128x384xbf16>, vector<8x384xf32> -> vector<8x384xf32>
    %523 = vector.extract_strided_slice %520 {offsets = [0, 0], sizes = [8, 128], strides = [1, 1]} : vector<8x384xf32> to vector<8x128xf32>
    %524 = vector.extract_strided_slice %522 {offsets = [0, 0], sizes = [8, 128], strides = [1, 1]} : vector<8x384xf32> to vector<8x128xf32>
    %525 = arith.addf %523, %524 : vector<8x128xf32>
    %526 = arith.negf %525 : vector<8x128xf32>
    %527 = math.exp %526 : vector<8x128xf32>
    %cst_146 = arith.constant 1.000000e+00 : f32
    %528 = vector.broadcast %cst_146 : f32 to vector<8x128xf32>
    %529 = arith.addf %528, %527 : vector<8x128xf32>
    %530 = arith.divf %528, %529 : vector<8x128xf32>
    %531 = vector.extract_strided_slice %520 {offsets = [0, 128], sizes = [8, 128], strides = [1, 1]} : vector<8x384xf32> to vector<8x128xf32>
    %532 = vector.extract_strided_slice %522 {offsets = [0, 128], sizes = [8, 128], strides = [1, 1]} : vector<8x384xf32> to vector<8x128xf32>
    %533 = arith.addf %531, %532 : vector<8x128xf32>
    %534 = arith.negf %533 : vector<8x128xf32>
    %535 = math.exp %534 : vector<8x128xf32>
    %cst_147 = arith.constant 1.000000e+00 : f32
    %536 = vector.broadcast %cst_147 : f32 to vector<8x128xf32>
    %537 = arith.addf %536, %535 : vector<8x128xf32>
    %538 = arith.divf %536, %537 : vector<8x128xf32>
    %539 = vector.extract_strided_slice %520 {offsets = [0, 256], sizes = [8, 128], strides = [1, 1]} : vector<8x384xf32> to vector<8x128xf32>
    %540 = vector.extract_strided_slice %522 {offsets = [0, 256], sizes = [8, 128], strides = [1, 1]} : vector<8x384xf32> to vector<8x128xf32>
    %541 = vector.broadcast %13 : vector<1x128xf32> to vector<8x128xf32>
    %542 = arith.addf %540, %541 : vector<8x128xf32>
    %543 = arith.mulf %530, %542 : vector<8x128xf32>
    %544 = arith.addf %539, %543 : vector<8x128xf32>
    %545 = math.tanh %544 : vector<8x128xf32>
    %cst_148 = arith.constant 1.000000e+00 : f32
    %546 = vector.broadcast %cst_148 : f32 to vector<8x128xf32>
    %547 = arith.subf %546, %538 : vector<8x128xf32>
    %548 = arith.mulf %547, %545 : vector<8x128xf32>
    %549 = arith.mulf %538, %514 : vector<8x128xf32>
    %550 = arith.addf %548, %549 : vector<8x128xf32>
    %551 = arith.truncf %550 : vector<8x128xf32> to vector<8x128xbf16>
    %c0_149 = arith.constant 0 : index
    %c14_150 = arith.constant 14 : index
    %c0_151 = arith.constant 0 : index
    %552 = vector.load %arg7[%c0_149, %c14_150, %c0_151] : memref<8x16x128xbf16, #tpu.memory_space<vmem>>, vector<8x1x128xbf16>
    %553 = vector.shape_cast %552 : vector<8x1x128xbf16> to vector<8x128xbf16>
    %554 = vector.shape_cast %551 : vector<8x128xbf16> to vector<8x1x128xbf16>
    tpu.vector_store %arg7[%c0_149, %c14_150, %c0_151], %554 {strides = array<i32>} : memref<8x16x128xbf16, #tpu.memory_space<vmem>>, vector<8x1x128xbf16>,
    %c0_152 = arith.constant 0 : index
    %c15 = arith.constant 15 : index
    %c0_153 = arith.constant 0 : index
    %555 = vector.load %arg9[%c0_152, %c15, %c0_153] : memref<8x16x384xf32, #tpu.memory_space<vmem>>, vector<8x1x384xf32>
    %556 = vector.shape_cast %555 : vector<8x1x384xf32> to vector<8x384xf32>
    %557 = arith.truncf %550 : vector<8x128xf32> to vector<8x128xbf16>
    %cst_154 = arith.constant dense<0.000000e+00> : vector<8x384xf32>
    %558 = tpu.matmul %557, %12, %cst_154 {dimension_numbers = #tpu.dot_dimension_numbers<[1], [0], [0], [1], [0, 0, 1, 1], [], []>} : vector<8x128xbf16>, vector<128x384xbf16>, vector<8x384xf32> -> vector<8x384xf32>
    %559 = vector.extract_strided_slice %556 {offsets = [0, 0], sizes = [8, 128], strides = [1, 1]} : vector<8x384xf32> to vector<8x128xf32>
    %560 = vector.extract_strided_slice %558 {offsets = [0, 0], sizes = [8, 128], strides = [1, 1]} : vector<8x384xf32> to vector<8x128xf32>
    %561 = arith.addf %559, %560 : vector<8x128xf32>
    %562 = arith.negf %561 : vector<8x128xf32>
    %563 = math.exp %562 : vector<8x128xf32>
    %cst_155 = arith.constant 1.000000e+00 : f32
    %564 = vector.broadcast %cst_155 : f32 to vector<8x128xf32>
    %565 = arith.addf %564, %563 : vector<8x128xf32>
    %566 = arith.divf %564, %565 : vector<8x128xf32>
    %567 = vector.extract_strided_slice %556 {offsets = [0, 128], sizes = [8, 128], strides = [1, 1]} : vector<8x384xf32> to vector<8x128xf32>
    %568 = vector.extract_strided_slice %558 {offsets = [0, 128], sizes = [8, 128], strides = [1, 1]} : vector<8x384xf32> to vector<8x128xf32>
    %569 = arith.addf %567, %568 : vector<8x128xf32>
    %570 = arith.negf %569 : vector<8x128xf32>
    %571 = math.exp %570 : vector<8x128xf32>
    %cst_156 = arith.constant 1.000000e+00 : f32
    %572 = vector.broadcast %cst_156 : f32 to vector<8x128xf32>
    %573 = arith.addf %572, %571 : vector<8x128xf32>
    %574 = arith.divf %572, %573 : vector<8x128xf32>
    %575 = vector.extract_strided_slice %556 {offsets = [0, 256], sizes = [8, 128], strides = [1, 1]} : vector<8x384xf32> to vector<8x128xf32>
    %576 = vector.extract_strided_slice %558 {offsets = [0, 256], sizes = [8, 128], strides = [1, 1]} : vector<8x384xf32> to vector<8x128xf32>
    %577 = vector.broadcast %13 : vector<1x128xf32> to vector<8x128xf32>
    %578 = arith.addf %576, %577 : vector<8x128xf32>
    %579 = arith.mulf %566, %578 : vector<8x128xf32>
    %580 = arith.addf %575, %579 : vector<8x128xf32>
    %581 = math.tanh %580 : vector<8x128xf32>
    %cst_157 = arith.constant 1.000000e+00 : f32
    %582 = vector.broadcast %cst_157 : f32 to vector<8x128xf32>
    %583 = arith.subf %582, %574 : vector<8x128xf32>
    %584 = arith.mulf %583, %581 : vector<8x128xf32>
    %585 = arith.mulf %574, %550 : vector<8x128xf32>
    %586 = arith.addf %584, %585 : vector<8x128xf32>
    %587 = arith.truncf %586 : vector<8x128xf32> to vector<8x128xbf16>
    %c0_158 = arith.constant 0 : index
    %c15_159 = arith.constant 15 : index
    %c0_160 = arith.constant 0 : index
    %588 = vector.load %arg7[%c0_158, %c15_159, %c0_160] : memref<8x16x128xbf16, #tpu.memory_space<vmem>>, vector<8x1x128xbf16>
    %589 = vector.shape_cast %588 : vector<8x1x128xbf16> to vector<8x128xbf16>
    %590 = vector.shape_cast %587 : vector<8x128xbf16> to vector<8x1x128xbf16>
    tpu.vector_store %arg7[%c0_158, %c15_159, %c0_160], %590 {strides = array<i32>} : memref<8x16x128xbf16, #tpu.memory_space<vmem>>, vector<8x1x128xbf16>,
    %c0_161 = arith.constant 0 : index
    %c0_162 = arith.constant 0 : index
    %591 = vector.load %arg8[%c0_161, %c0_162] : memref<8x128xf32, #tpu.memory_space<vmem>>, vector<8x128xf32>
    tpu.vector_store %arg8[%c0_161, %c0_162], %586 {strides = array<i32>} : memref<8x128xf32, #tpu.memory_space<vmem>>, vector<8x128xf32>,
    return
  }
  func.func @transform_0(%arg0: i32, %arg1: i32) -> (i32, i32, i32) {
    %c0_i32 = arith.constant 0 : i32
    %c0_i32_0 = arith.constant 0 : i32
    return %arg0, %arg1, %c0_i32 : i32, i32, i32
  }
  func.func @transform_1(%arg0: i32, %arg1: i32) -> (i32, i32) {
    %c0_i32 = arith.constant 0 : i32
    %c0_i32_0 = arith.constant 0 : i32
    %c0_i32_1 = arith.constant 0 : i32
    return %c0_i32, %c0_i32_0 : i32, i32
  }
  func.func @transform_2(%arg0: i32, %arg1: i32) -> (i32, i32) {
    %c0_i32 = arith.constant 0 : i32
    %c0_i32_0 = arith.constant 0 : i32
    %c0_i32_1 = arith.constant 0 : i32
    return %c0_i32, %c0_i32_0 : i32, i32
  }
  func.func @transform_3(%arg0: i32, %arg1: i32) -> (i32, i32) {
    %c0_i32 = arith.constant 0 : i32
    %c0_i32_0 = arith.constant 0 : i32
    %c0_i32_1 = arith.constant 0 : i32
    return %c0_i32, %c0_i32_0 : i32, i32
  }
  func.func @transform_4(%arg0: i32, %arg1: i32) -> (i32, i32) {
    %c0_i32 = arith.constant 0 : i32
    %c0_i32_0 = arith.constant 0 : i32
    %c0_i32_1 = arith.constant 0 : i32
    return %c0_i32, %c0_i32_0 : i32, i32
  }
  func.func @transform_5(%arg0: i32, %arg1: i32) -> (i32, i32, i32) {
    %c0_i32 = arith.constant 0 : i32
    %c0_i32_0 = arith.constant 0 : i32
    return %arg0, %arg1, %c0_i32 : i32, i32, i32
  }
}

</mosaic_0001>

<llo_original>
// kernel: tpu_custom_call.1
$region0: #{tpu_custom_call.1}
  #allocation0 [shape = 'u32[]', space=smem, size = 0x4, offset = 0x4, fixed_abs, tag = 'smem constant byte address 0x4 - core index']
  #allocation1 [shape = 'u32[144,128]{1,0:T(1,128)}', space=vmem, size = 0x12000, scoped, tag = 'internal scratch']
  #allocation2 [shape = 'f32[8,128]{1,0:T(8,128)}', space=vmem, size = 0x1000, scoped, tag = 'scratch operand']
  #allocation3 [shape = 'f32[8,16,384]{2,1,0:T(8,128)}', space=vmem, size = 0x30000, scoped, tag = 'scratch operand']
  %s0 = inlined_call_operand.hbm [shape: bf16[8,16,16], index: 0, kind: input, shape index: {}]
  %s1 = inlined_call_operand.hbm [shape: bf16[16,384], index: 1, kind: input, shape index: {}]
  %s2 = inlined_call_operand.hbm [shape: bf16[128,384], index: 2, kind: input, shape index: {}]
  %s3 = inlined_call_operand.hbm [shape: f32[1,384], index: 3, kind: input, shape index: {}]
  %s4 = inlined_call_operand.hbm [shape: f32[1,128], index: 4, kind: input, shape index: {}]
  %s5 = inlined_call_operand.hbm [shape: bf16[8,16,128], index: 5, kind: output, shape index: {}]
  %s6 = sld [smem:[#allocation0]]
  $region54: #{tpu_custom_call.1} parent=0
    _
  %s8 = ssub.s32 1, %s6
  %s9 = scalar_select 0, %s8, %s6
  $region1: #{tpu_custom_call.1} parent=0
    #allocation4 [shape = 'u8[32768]{0}', space=vmem, size = 0x8000, scoped, tag = 'input window, operand 0, single buffered']
    #allocation5 [shape = 's32[1]{0}', space=sflag, size = 0x4, scoped, tag = 'scoped memory for tpu_custom_call.1']
    #allocation6 [shape = 's32[1]{0}', space=sflag, size = 0x4, scoped, tag = 'scoped memory for tpu_custom_call.1']
    #allocation7 [shape = 'u8[12288]{0}', space=vmem, size = 0x3000, scoped, tag = 'input window, operand 1, single buffered']
    #allocation8 [shape = 's32[1]{0}', space=sflag, size = 0x4, scoped, tag = 'scoped memory for tpu_custom_call.1']
    #allocation9 [shape = 'u8[98304]{0}', space=vmem, size = 0x18000, scoped, tag = 'input window, operand 2, single buffered']
    #allocation10 [shape = 'u8[1536]{0}', space=vmem, size = 0x800, scoped, tag = 'input window, operand 3, single buffered']
    #allocation11 [shape = 's32[1]{0}', space=sflag, size = 0x4, scoped, tag = 'scoped memory for tpu_custom_call.1']
    #allocation12 [shape = 'u8[512]{0}', space=vmem, size = 0x400, scoped, tag = 'input window, operand 4, single buffered']
    #allocation13 [shape = 'u8[32768]{0}', space=vmem, size = 0x8000, scoped, tag = 'output window, operand 0, single buffered']
    %10 = vsyncpa [#allocation5], 0
    %11 = vsyncpa [#allocation8], 0
    %12 = vsyncpa [#allocation11], 0
    %13 = vsyncpa [#allocation6], 0
    // Predicated region
    $region2: #{tpu_custom_call.1} parent=1 // pred_check
      _
    $region3: #{tpu_custom_call.1} parent=1 // pred_check_branch
      %15 = sbr.rel (0) target = $region5
    $region4: #{tpu_custom_call.1} parent=1 // pred_region
      %s17 = ssub.s32 1024, 1024
      %18 = vsyncadd [#allocation5], %s17
      %s19 = sshll.u32 [#allocation4], 4
      %s20 = int_to_ptr.vmem [resolvable:$true] %s19
      %25 = dma.hbm_to_vmem [thread:$0]  %s0, 1024, %s20, [#allocation5], 64, 64, 4
    $region5: #{tpu_custom_call.1} parent=1 // pred_fallthru
      _
    // Predicated region
    $region6: #{tpu_custom_call.1} parent=1 // pred_check
      _
    $region7: #{tpu_custom_call.1} parent=1 // pred_check_branch
      %27 = sbr.rel (0) target = $region9
    $region8: #{tpu_custom_call.1} parent=1 // pred_region
      %s29 = ssub.s32 384, 384
      %30 = vsyncadd [#allocation8], %s29
      %s31 = sshll.u32 [#allocation7], 4
      %s32 = int_to_ptr.vmem [resolvable:$true] %s31
      %37 = dma.hbm_to_vmem [thread:$0]  %s1, 384, %s32, [#allocation8], 192, 192, 12
    $region9: #{tpu_custom_call.1} parent=1 // pred_fallthru
      _
    // Predicated region
    $region10: #{tpu_custom_call.1} parent=1 // pred_check
      _
    $region11: #{tpu_custom_call.1} parent=1 // pred_check_branch
      %39 = sbr.rel (0) target = $region13
    $region12: #{tpu_custom_call.1} parent=1 // pred_region
      %s41 = ssub.s32 3072, 3072
      %42 = vsyncadd [#allocation8], %s41
      %s43 = sshll.u32 [#allocation9], 4
      %s44 = int_to_ptr.vmem [resolvable:$true] %s43
      %49 = dma.hbm_to_vmem [thread:$0]  %s2, 3072, %s44, [#allocation8], 192, 192, 12
    $region13: #{tpu_custom_call.1} parent=1 // pred_fallthru
      _
    // Predicated region
    $region14: #{tpu_custom_call.1} parent=1 // pred_check
      _
    $region15: #{tpu_custom_call.1} parent=1 // pred_check_branch
      %51 = sbr.rel (0) target = $region17
    $region16: #{tpu_custom_call.1} parent=1 // pred_region
      %s53 = ssub.s32 48, 48
      %54 = vsyncadd [#allocation11], %s53
      %s56 = sshll.u32 [#allocation10], 4
      %s57 = int_to_ptr.vmem [resolvable:$true] %s56
      %59 = dma.hbm_to_vmem [thread:$0]  %s3, 48, %s57, [#allocation11]
    $region17: #{tpu_custom_call.1} parent=1 // pred_fallthru
      _
    // Predicated region
    $region18: #{tpu_custom_call.1} parent=1 // pred_check
      _
    $region19: #{tpu_custom_call.1} parent=1 // pred_check_branch
      %61 = sbr.rel (0) target = $region21
    $region20: #{tpu_custom_call.1} parent=1 // pred_region
      %s63 = ssub.s32 16, 16
      %64 = vsyncadd [#allocation11], %s63
      %s66 = sshll.u32 [#allocation12], 4
      %s67 = int_to_ptr.vmem [resolvable:$true] %s66
      %69 = dma.hbm_to_vmem [thread:$0]  %s4, 16, %s67, [#allocation11]
    $region21: #{tpu_custom_call.1} parent=1 // pred_fallthru
      _
    // Predicated region
    $region22: #{tpu_custom_call.1} parent=1 // pred_check
      _
    $region23: #{tpu_custom_call.1} parent=1 // pred_check_branch
      %71 = sbr.rel (0) target = $region25
    $region24: #{tpu_custom_call.1} parent=1 // pred_region
      %72 = dma.done [#allocation5], 1024
    $region25: #{tpu_custom_call.1} parent=1 // pred_fallthru
      _
    // Predicated region
    $region26: #{tpu_custom_call.1} parent=1 // pred_check
      _
    $region27: #{tpu_custom_call.1} parent=1 // pred_check_branch
      %74 = sbr.rel (0) target = $region29
    $region28: #{tpu_custom_call.1} parent=1 // pred_region
      %75 = dma.done [#allocation8], 384
    $region29: #{tpu_custom_call.1} parent=1 // pred_fallthru
      _
    // Predicated region
    $region30: #{tpu_custom_call.1} parent=1 // pred_check
      _
    $region31: #{tpu_custom_call.1} parent=1 // pred_check_branch
      %77 = sbr.rel (0) target = $region33
    $region32: #{tpu_custom_call.1} parent=1 // pred_region
      %78 = dma.done [#allocation8], 3072
    $region33: #{tpu_custom_call.1} parent=1 // pred_fallthru
      _
    // Predicated region
    $region34: #{tpu_custom_call.1} parent=1 // pred_check
      _
    $region35: #{tpu_custom_call.1} parent=1 // pred_check_branch
      %80 = sbr.rel (0) target = $region37
    $region36: #{tpu_custom_call.1} parent=1 // pred_region
      %81 = dma.done [#allocation11], 48
    $region37: #{tpu_custom_call.1} parent=1 // pred_fallthru
      _
    // Predicated region
    $region38: #{tpu_custom_call.1} parent=1 // pred_check
      _
    $region39: #{tpu_custom_call.1} parent=1 // pred_check_branch
      %83 = sbr.rel (0) target = $region41
    $region40: #{tpu_custom_call.1} parent=1 // pred_region
      %84 = dma.done [#allocation11], 16
    $region41: #{tpu_custom_call.1} parent=1 // pred_fallthru
      _
    %p86 = scmp.eq.s32.totalorder 0, 0
    // Predicated region
    $region42: #{tpu_custom_call.1} parent=1 // pred_check
      %p87 = pneg %p86
    $region43: #{tpu_custom_call.1} parent=1 // pred_check_branch
      %89 = sbr.rel (%p87) target = $region45
    $region44: #{tpu_custom_call.1} parent=1 // pred_region
      %90 = vst [vmem:[#allocation2] sm:$0xff] 0.0
    $region45: #{tpu_custom_call.1} parent=1 // pred_fallthru
      _
    %v91 = vld [vmem:[#allocation4] sm:$0xf]
    %v92 = vld [vmem:[#allocation4 + $0x4] sm:$0xf]
    %v93 = vld [vmem:[#allocation4 + $0x8] sm:$0xf]
    %v94 = vld [vmem:[#allocation4 + $0xc] sm:$0xf]
    %v95 = vld [vmem:[#allocation4 + $0x10] sm:$0xf]
    %v96 = vld [vmem:[#allocation4 + $0x14] sm:$0xf]
    %v97 = vld [vmem:[#allocation4 + $0x18] sm:$0xf]
    %v98 = vld [vmem:[#allocation4 + $0x1c] sm:$0xf]
    %v99 = vld [vmem:[#allocation4 + $0x20] sm:$0xf]
    %v100 = vld [vmem:[#allocation4 + $0x24] sm:$0xf]
    %v101 = vld [vmem:[#allocation4 + $0x28] sm:$0xf]
    %v102 = vld [vmem:[#allocation4 + $0x2c] sm:$0xf]
    %v103 = vld [vmem:[#allocation4 + $0x30] sm:$0xf]
    %v104 = vld [vmem:[#allocation4 + $0x34] sm:$0xf]
    %v105 = vld [vmem:[#allocation4 + $0x38] sm:$0xf]
    %v106 = vld [vmem:[#allocation4 + $0x3c] sm:$0xf]
    %v107 = vld [vmem:[#allocation7] sm:$0xff]
    %v108 = vld [vmem:[#allocation7 + $0x8] sm:$0xf]
    %v109 = vld [vmem:[#allocation7 + $0xc] sm:$0xff]
    %v110 = vld [vmem:[#allocation7 + $0x14] sm:$0xf]
    %v111 = vld [vmem:[#allocation10] sm:$0x7]
    %v113 = vlaneseq
    %v114 = vshrl.u32 %v113, 7
    %v115 = vsub.s32 0, %v114
    %v116 = vrot.slane %v111, %v115
    %v117 = vlaneseq
    %v118 = vshrl.u32 %v117, 7
    %v119 = vsub.s32 1, %v118
    %v120 = vrot.slane %v111, %v119
    %v121 = vlaneseq
    %v122 = vshrl.u32 %v121, 7
    %v123 = vsub.s32 2, %v122
    %v124 = vrot.slane %v111, %v123
    %v144 = vunpack.c.l.b16 %v91
    %v145 = vunpack.c.l.b16 %v92
    %v146 = vunpack.c.l.b16 %v93
    %v147 = vunpack.c.l.b16 %v94
    %v148 = vunpack.c.l.b16 %v95
    %v149 = vunpack.c.l.b16 %v96
    %v150 = vunpack.c.l.b16 %v97
    %v151 = vunpack.c.l.b16 %v98
    %v152 = vunpack.c.l.b16 %v99
    %v153 = vunpack.c.l.b16 %v100
    %v154 = vunpack.c.l.b16 %v101
    %v155 = vunpack.c.l.b16 %v102
    %v156 = vunpack.c.l.b16 %v103
    %v157 = vunpack.c.l.b16 %v104
    %v158 = vunpack.c.l.b16 %v105
    %v159 = vunpack.c.l.b16 %v106
    %v160 = vpack.c.b16 %v145, %v144
    %v161 = vpack.c.b16 %v147, %v146
    %v162 = vpack.c.b16 %v149, %v148
    %v163 = vpack.c.b16 %v151, %v150
    %v164 = vpack.c.b16 %v153, %v152
    %v165 = vpack.c.b16 %v155, %v154
    %v166 = vpack.c.b16 %v157, %v156
    %v167 = vpack.c.b16 %v159, %v158
    %v172 = vunpack.c.l.b16 %v107
    %v173 = vunpack.c.h.b16 %v107
    %v174 = vunpack.c.l.b16 %v108
    %v175 = vunpack.c.l.b16 %v109
    %v176 = vunpack.c.h.b16 %v109
    %v177 = vunpack.c.l.b16 %v110
    %v178 = vpack.c.b16 %v175, %v172
    %v179 = vpack.c.b16 %v176, %v173
    %v180 = vpack.c.b16 %v177, %v174
    %vm184 = vcmask 130048
    %v186 = vsel %vm184, %v160, 0
    %v189 = vsel %vm184, %v161, 0
    %v192 = vsel %vm184, %v162, 0
    %v195 = vsel %vm184, %v163, 0
    %v198 = vsel %vm184, %v164, 0
    %v201 = vsel %vm184, %v165, 0
    %v204 = vsel %vm184, %v166, 0
    %v207 = vsel %vm184, %v167, 0
    %209 = vmatprep.subr.bf16.mxu0 %v179
    %210 = vmatpush1.bf16.msra.mxu0 %v178
    %211 = vmatprep.subr.bf16.mxu0 0
    %212 = vmatpush1.bf16.msra.mxu0 0
    %213 = vmatprep.subr.bf16.mxu0 0
    %214 = vmatpush1.bf16.msra.mxu0 0
    %215 = vmatprep.subr.bf16.mxu0 0
    %216 = vmatpush1.bf16.msra.mxu0 0
    %217 = vmatprep.subr.bf16.mxu0 0
    %218 = vmatpush1.bf16.msra.mxu0 0
    %219 = vmatprep.subr.bf16.mxu0 0
    %220 = vmatpush1.bf16.msra.mxu0 0
    %221 = vmatprep.subr.bf16.mxu0 0
    %222 = vmatpush1.bf16.msra.mxu0 0
    %223 = vmatprep.subr.bf16.mxu0 0
    %224 = vmatpush1.bf16.msra.mxu0 0
    %225 = vmatprep.subr.bf16.mxu0 0
    %226 = vmatpush1.bf16.msra.mxu0 0
    %227 = vmatprep.subr.bf16.mxu0 0
    %228 = vmatpush1.bf16.msra.mxu0 0
    %229 = vmatprep.subr.bf16.mxu0 0
    %230 = vmatpush1.bf16.msra.mxu0 0
    %231 = vmatprep.subr.bf16.mxu0 0
    %232 = vmatpush1.bf16.msra.mxu0 0
    %233 = vmatprep.subr.bf16.mxu0 0
    %234 = vmatpush1.bf16.msra.mxu0 0
    %235 = vmatprep.subr.bf16.mxu0 0
    %236 = vmatpush1.bf16.msra.mxu0 0
    %237 = vmatprep.subr.bf16.mxu0 0
    %238 = vmatpush1.bf16.msra.mxu0 0
    %239 = vmatprep.subr.bf16.mxu0 0
    %240 = vmatpush1.bf16.msra.mxu0 0
    %241 = vmatprep.mubr.bf16.mxu0 0
    %242 = vmatmul.mubr.bf16.gmra.mrb[0].mxu0 %v186
    %v243 = vpop.f32.mrb[0].mxu0
    %v244 = vadd.f32 %v116, %v243
    %v245 = vpop.f32.mrb[0].mxu0
    %v246 = vadd.f32 %v120, %v245
    %v247 = vpop.f32.mrb[0].mxu0
    %v248 = vadd.f32 %v116, %v247
    %v249 = vpop.f32.mrb[0].mxu0
    %v250 = vadd.f32 %v120, %v249
    %251 = vmatprep.mubr.bf16.mxu0 0
    %252 = vmatmul.mubr.bf16.gmra.mrb[0].mxu0 %v189
    %v253 = vpop.f32.mrb[0].mxu0
    %v254 = vadd.f32 %v116, %v253
    %v255 = vpop.f32.mrb[0].mxu0
    %v256 = vadd.f32 %v120, %v255
    %v257 = vpop.f32.mrb[0].mxu0
    %v258 = vadd.f32 %v116, %v257
    %v259 = vpop.f32.mrb[0].mxu0
    %v260 = vadd.f32 %v120, %v259
    %261 = vmatprep.mubr.bf16.mxu0 0
    %262 = vmatmul.mubr.bf16.gmra.mrb[0].mxu0 %v192
    %v263 = vpop.f32.mrb[0].mxu0
    %v264 = vadd.f32 %v116, %v263
    %v265 = vpop.f32.mrb[0].mxu0
    %v266 = vadd.f32 %v120, %v265
    %v267 = vpop.f32.mrb[0].mxu0
    %v268 = vadd.f32 %v116, %v267
    %v269 = vpop.f32.mrb[0].mxu0
    %v270 = vadd.f32 %v120, %v269
    %271 = vmatprep.mubr.bf16.mxu0 0
    %272 = vmatmul.mubr.bf16.gmra.mrb[0].mxu0 %v195
    %v273 = vpop.f32.mrb[0].mxu0
    %v274 = vadd.f32 %v116, %v273
    %v275 = vpop.f32.mrb[0].mxu0
    %v276 = vadd.f32 %v120, %v275
    %v277 = vpop.f32.mrb[0].mxu0
    %v278 = vadd.f32 %v116, %v277
    %v279 = vpop.f32.mrb[0].mxu0
    %v280 = vadd.f32 %v120, %v279
    %281 = vmatprep.mubr.bf16.mxu0 0
    %282 = vmatmul.mubr.bf16.gmra.mrb[0].mxu0 %v198
    %v283 = vpop.f32.mrb[0].mxu0
    %v284 = vadd.f32 %v116, %v283
    %v285 = vpop.f32.mrb[0].mxu0
    %v286 = vadd.f32 %v120, %v285
    %v287 = vpop.f32.mrb[0].mxu0
    %v288 = vadd.f32 %v116, %v287
    %v289 = vpop.f32.mrb[0].mxu0
    %v290 = vadd.f32 %v120, %v289
    %291 = vmatprep.mubr.bf16.mxu0 0
    %292 = vmatmul.mubr.bf16.gmra.mrb[0].mxu0 %v201
    %v293 = vpop.f32.mrb[0].mxu0
    %v294 = vadd.f32 %v116, %v293
    %v295 = vpop.f32.mrb[0].mxu0
    %v296 = vadd.f32 %v120, %v295
    %v297 = vpop.f32.mrb[0].mxu0
    %v298 = vadd.f32 %v116, %v297
    %v299 = vpop.f32.mrb[0].mxu0
    %v300 = vadd.f32 %v120, %v299
    %301 = vmatprep.mubr.bf16.mxu0 0
    %302 = vmatmul.mubr.bf16.gmra.mrb[0].mxu0 %v204
    %v303 = vpop.f32.mrb[0].mxu0
    %v304 = vadd.f32 %v116, %v303
    %v305 = vpop.f32.mrb[0].mxu0
    %v306 = vadd.f32 %v120, %v305
    %v307 = vpop.f32.mrb[0].mxu0
    %v308 = vadd.f32 %v116, %v307
    %v309 = vpop.f32.mrb[0].mxu0
    %v310 = vadd.f32 %v120, %v309
    %311 = vmatprep.mubr.bf16.mxu0 0
    %312 = vmatmul.mubr.bf16.gmra.mrb[0].mxu0 %v207
    %v313 = vpop.f32.mrb[0].mxu0
    %v314 = vadd.f32 %v116, %v313
    %v315 = vpop.f32.mrb[0].mxu0
    %v316 = vadd.f32 %v120, %v315
    %v317 = vpop.f32.mrb[0].mxu0
    %v318 = vadd.f32 %v116, %v317
    %v319 = vpop.f32.mrb[0].mxu0
    %v320 = vadd.f32 %v120, %v319
    %321 = vdwg.mxu0
    %322 = vmatprep.subr.bf16.mxu0 0
    %323 = vmatpush1.bf16.msra.mxu0 %v180
    %324 = vmatprep.subr.bf16.mxu0 0
    %325 = vmatpush1.bf16.msra.mxu0 0
    %326 = vmatprep.subr.bf16.mxu0 0
    %327 = vmatpush1.bf16.msra.mxu0 0
    %328 = vmatprep.subr.bf16.mxu0 0
    %329 = vmatpush1.bf16.msra.mxu0 0
    %330 = vmatprep.subr.bf16.mxu0 0
    %331 = vmatpush1.bf16.msra.mxu0 0
    %332 = vmatprep.subr.bf16.mxu0 0
    %333 = vmatpush1.bf16.msra.mxu0 0
    %334 = vmatprep.subr.bf16.mxu0 0
    %335 = vmatpush1.bf16.msra.mxu0 0
    %336 = vmatprep.subr.bf16.mxu0 0
    %337 = vmatpush1.bf16.msra.mxu0 0
    %338 = vmatprep.subr.bf16.mxu0 0
    %339 = vmatpush1.bf16.msra.mxu0 0
    %340 = vmatprep.subr.bf16.mxu0 0
    %341 = vmatpush1.bf16.msra.mxu0 0
    %342 = vmatprep.subr.bf16.mxu0 0
    %343 = vmatpush1.bf16.msra.mxu0 0
    %344 = vmatprep.subr.bf16.mxu0 0
    %345 = vmatpush1.bf16.msra.mxu0 0
    %346 = vmatprep.subr.bf16.mxu0 0
    %347 = vmatpush1.bf16.msra.mxu0 0
    %348 = vmatprep.subr.bf16.mxu0 0
    %349 = vmatpush1.bf16.msra.mxu0 0
    %350 = vmatprep.subr.bf16.mxu0 0
    %351 = vmatpush1.bf16.msra.mxu0 0
    %352 = vmatprep.subr.bf16.mxu0 0
    %353 = vmatpush1.bf16.msra.mxu0 0
    %354 = vmatprep.mubr.bf16.mxu0 0
    %355 = vmatmul.mubr.bf16.gmra.mrb[0].mxu0 %v186
    %v356 = vpop.f32.mrb[0].mxu0
    %v357 = vadd.f32 %v124, %v356
    %v358 = vpop.f32.mrb[0].mxu0
    %v359 = vpop.f32.mrb[0].mxu0
    %v360 = vadd.f32 %v124, %v359
    %v361 = vpop.f32.mrb[0].mxu0
    %362 = vmatprep.mubr.bf16.mxu0 0
    %363 = vmatmul.mubr.bf16.gmra.mrb[0].mxu0 %v189
    %v364 = vpop.f32.mrb[0].mxu0
    %v365 = vadd.f32 %v124, %v364
    %v366 = vpop.f32.mrb[0].mxu0
    %v367 = vpop.f32.mrb[0].mxu0
    %v368 = vadd.f32 %v124, %v367
    %v369 = vpop.f32.mrb[0].mxu0
    %370 = vmatprep.mubr.bf16.mxu0 0
    %371 = vmatmul.mubr.bf16.gmra.mrb[0].mxu0 %v192
    %v372 = vpop.f32.mrb[0].mxu0
    %v373 = vadd.f32 %v124, %v372
    %v374 = vpop.f32.mrb[0].mxu0
    %v375 = vpop.f32.mrb[0].mxu0
    %v376 = vadd.f32 %v124, %v375
    %v377 = vpop.f32.mrb[0].mxu0
    %378 = vmatprep.mubr.bf16.mxu0 0
    %379 = vmatmul.mubr.bf16.gmra.mrb[0].mxu0 %v195
    %v380 = vpop.f32.mrb[0].mxu0
    %v381 = vadd.f32 %v124, %v380
    %v382 = vpop.f32.mrb[0].mxu0
    %v383 = vpop.f32.mrb[0].mxu0
    %v384 = vadd.f32 %v124, %v383
    %v385 = vpop.f32.mrb[0].mxu0
    %386 = vmatprep.mubr.bf16.mxu0 0
    %387 = vmatmul.mubr.bf16.gmra.mrb[0].mxu0 %v198
    %v388 = vpop.f32.mrb[0].mxu0
    %v389 = vadd.f32 %v124, %v388
    %v390 = vpop.f32.mrb[0].mxu0
    %v391 = vpop.f32.mrb[0].mxu0
    %v392 = vadd.f32 %v124, %v391
    %v393 = vpop.f32.mrb[0].mxu0
    %394 = vmatprep.mubr.bf16.mxu0 0
    %395 = vmatmul.mubr.bf16.gmra.mrb[0].mxu0 %v201
    %v396 = vpop.f32.mrb[0].mxu0
    %v397 = vadd.f32 %v124, %v396
    %v398 = vpop.f32.mrb[0].mxu0
    %v399 = vpop.f32.mrb[0].mxu0
    %v400 = vadd.f32 %v124, %v399
    %v401 = vpop.f32.mrb[0].mxu0
    %402 = vmatprep.mubr.bf16.mxu0 0
    %403 = vmatmul.mubr.bf16.gmra.mrb[0].mxu0 %v204
    %v404 = vpop.f32.mrb[0].mxu0
    %v405 = vadd.f32 %v124, %v404
    %v406 = vpop.f32.mrb[0].mxu0
    %v407 = vpop.f32.mrb[0].mxu0
    %v408 = vadd.f32 %v124, %v407
    %v409 = vpop.f32.mrb[0].mxu0
    %410 = vmatprep.mubr.bf16.mxu0 0
    %411 = vmatmul.mubr.bf16.gmra.mrb[0].mxu0 %v207
    %v412 = vpop.f32.mrb[0].mxu0
    %v413 = vadd.f32 %v124, %v412
    %v414 = vpop.f32.mrb[0].mxu0
    %v415 = vpop.f32.mrb[0].mxu0
    %v416 = vadd.f32 %v124, %v415
    %v417 = vpop.f32.mrb[0].mxu0
    %418 = vdwg.mxu0
    %419 = vst [vmem:[#allocation3] sm:$0xff] %v244
    %420 = vst [vmem:[#allocation3 + $0x8] sm:$0xff] %v246
    %421 = vst [vmem:[#allocation3 + $0x10] sm:$0xff] %v357
    %422 = vst [vmem:[#allocation3 + $0x18] sm:$0xff] %v248
    %423 = vst [vmem:[#allocation3 + $0x20] sm:$0xff] %v250
    %424 = vst [vmem:[#allocation3 + $0x28] sm:$0xff] %v360
    %425 = vst [vmem:[#allocation3 + $0x30] sm:$0xff] %v254
    %426 = vst [vmem:[#allocation3 + $0x38] sm:$0xff] %v256
    %427 = vst [vmem:[#allocation3 + $0x40] sm:$0xff] %v365
    %428 = vst [vmem:[#allocation3 + $0x48] sm:$0xff] %v258
    %429 = vst [vmem:[#allocation3 + $0x50] sm:$0xff] %v260
    %430 = vst [vmem:[#allocation3 + $0x58] sm:$0xff] %v368
    %431 = vst [vmem:[#allocation3 + $0x60] sm:$0xff] %v264
    %432 = vst [vmem:[#allocation3 + $0x68] sm:$0xff] %v266
    %433 = vst [vmem:[#allocation3 + $0x70] sm:$0xff] %v373
    %434 = vst [vmem:[#allocation3 + $0x78] sm:$0xff] %v268
    %435 = vst [vmem:[#allocation3 + $0x80] sm:$0xff] %v270
    %436 = vst [vmem:[#allocation3 + $0x88] sm:$0xff] %v376
    %437 = vst [vmem:[#allocation3 + $0x90] sm:$0xff] %v274
    %438 = vst [vmem:[#allocation3 + $0x98] sm:$0xff] %v276
    %439 = vst [vmem:[#allocation3 + $0xa0] sm:$0xff] %v381
    %440 = vst [vmem:[#allocation3 + $0xa8] sm:$0xff] %v278
    %441 = vst [vmem:[#allocation3 + $0xb0] sm:$0xff] %v280
    %442 = vst [vmem:[#allocation3 + $0xb8] sm:$0xff] %v384
    %443 = vst [vmem:[#allocation3 + $0xc0] sm:$0xff] %v284
    %444 = vst [vmem:[#allocation3 + $0xc8] sm:$0xff] %v286
    %445 = vst [vmem:[#allocation3 + $0xd0] sm:$0xff] %v389
    %446 = vst [vmem:[#allocation3 + $0xd8] sm:$0xff] %v288
    %447 = vst [vmem:[#allocation3 + $0xe0] sm:$0xff] %v290
    %448 = vst [vmem:[#allocation3 + $0xe8] sm:$0xff] %v392
    %449 = vst [vmem:[#allocation3 + $0xf0] sm:$0xff] %v294
    %450 = vst [vmem:[#allocation3 + $0xf8] sm:$0xff] %v296
    %451 = vst [vmem:[#allocation3 + $0x100] sm:$0xff] %v397
    %452 = vst [vmem:[#allocation3 + $0x108] sm:$0xff] %v298
    %453 = vst [vmem:[#allocation3 + $0x110] sm:$0xff] %v300
    %454 = vst [vmem:[#allocation3 + $0x118] sm:$0xff] %v400
    %455 = vst [vmem:[#allocation3 + $0x120] sm:$0xff] %v304
    %456 = vst [vmem:[#allocation3 + $0x128] sm:$0xff] %v306
    %457 = vst [vmem:[#allocation3 + $0x130] sm:$0xff] %v405
    %458 = vst [vmem:[#allocation3 + $0x138] sm:$0xff] %v308
    %459 = vst [vmem:[#allocation3 + $0x140] sm:$0xff] %v310
    %460 = vst [vmem:[#allocation3 + $0x148] sm:$0xff] %v408
    %461 = vst [vmem:[#allocation3 + $0x150] sm:$0xff] %v314
    %462 = vst [vmem:[#allocation3 + $0x158] sm:$0xff] %v316
    %463 = vst [vmem:[#allocation3 + $0x160] sm:$0xff] %v413
    %464 = vst [vmem:[#allocation3 + $0x168] sm:$0xff] %v318
    %465 = vst [vmem:[#allocation3 + $0x170] sm:$0xff] %v320
    %466 = vst [vmem:[#allocation3 + $0x178] sm:$0xff] %v416
    %v467 = vld [vmem:[#allocation9] sm:$0xff]
    %v468 = vld [vmem:[#allocation9 + $0x8] sm:$0xf]
    %v469 = vld [vmem:[#allocation9 + $0xc] sm:$0xff]
    %v470 = vld [vmem:[#allocation9 + $0x14] sm:$0xf]
    %v471 = vld [vmem:[#allocation9 + $0x18] sm:$0xff]
    %v472 = vld [vmem:[#allocation9 + $0x20] sm:$0xf]
    %v473 = vld [vmem:[#allocation9 + $0x24] sm:$0xff]
    %v474 = vld [vmem:[#allocation9 + $0x2c] sm:$0xf]
    %v475 = vld [vmem:[#allocation9 + $0x30] sm:$0xff]
    %v476 = vld [vmem:[#allocation9 + $0x38] sm:$0xf]
    %v477 = vld [vmem:[#allocation9 + $0x3c] sm:$0xff]
    %v478 = vld [vmem:[#allocation9 + $0x44] sm:$0xf]
    %v479 = vld [vmem:[#allocation9 + $0x48] sm:$0xff]
    %v480 = vld [vmem:[#allocation9 + $0x50] sm:$0xf]
    %v481 = vld [vmem:[#allocation9 + $0x54] sm:$0xff]
    %v482 = vld [vmem:[#allocation9 + $0x5c] sm:$0xf]
    %v483 = vld [vmem:[#allocation9 + $0x60] sm:$0xff]
    %v484 = vld [vmem:[#allocation9 + $0x68] sm:$0xf]
    %v485 = vld [vmem:[#allocation9 + $0x6c] sm:$0xff]
    %v486 = vld [vmem:[#allocation9 + $0x74] sm:$0xf]
    %v487 = vld [vmem:[#allocation9 + $0x78] sm:$0xff]
    %v488 = vld [vmem:[#allocation9 + $0x80] sm:$0xf]
    %v489 = vld [vmem:[#allocation9 + $0x84] sm:$0xff]
    %v490 = vld [vmem:[#allocation9 + $0x8c] sm:$0xf]
    %v491 = vld [vmem:[#allocation9 + $0x90] sm:$0xff]
    %v492 = vld [vmem:[#allocation9 + $0x98] sm:$0xf]
    %v493 = vld [vmem:[#allocation9 + $0x9c] sm:$0xff]
    %v494 = vld [vmem:[#allocation9 + $0xa4] sm:$0xf]
    %v495 = vld [vmem:[#allocation9 + $0xa8] sm:$0xff]
    %v496 = vld [vmem:[#allocation9 + $0xb0] sm:$0xf]
    %v497 = vld [vmem:[#allocation9 + $0xb4] sm:$0xff]
    %v498 = vld [vmem:[#allocation9 + $0xbc] sm:$0xf]
    %v499 = vld [vmem:[#allocation12] sm:$0x1]
    %v500 = vld [vmem:[#allocation2] sm:$0xff]
    %v501 = vld [vmem:[#allocation3] ss:$8 sm:$0x7]
    %s502 = scalar_lea.vmem [#allocation3], 48
    %v503 = vld [vmem:[%s502] ss:$8 sm:$0x7]
    %s504 = scalar_lea.vmem [#allocation3], 96
    %v505 = vld [vmem:[%s504] ss:$8 sm:$0x7]
    %s506 = scalar_lea.vmem [#allocation3], 144
    %v507 = vld [vmem:[%s506] ss:$8 sm:$0x7]
    %s508 = scalar_lea.vmem [#allocation3], 192
    %v509 = vld [vmem:[%s508] ss:$8 sm:$0x7]
    %s510 = scalar_lea.vmem [#allocation3], 240
    %v511 = vld [vmem:[%s510] ss:$8 sm:$0x7]
    %s512 = scalar_lea.vmem [#allocation3], 288
    %v513 = vld [vmem:[%s512] ss:$8 sm:$0x7]
    %s514 = scalar_lea.vmem [#allocation3], 336
    %v515 = vld [vmem:[%s514] ss:$8 sm:$0x7]
    %v516 = vpack.c.bf16 %v500, %v500
    %v549 = vunpack.c.l.b16 %v467
    %v550 = vunpack.c.h.b16 %v467
    %v551 = vunpack.c.l.b16 %v468
    %v552 = vunpack.c.l.b16 %v469
    %v553 = vunpack.c.h.b16 %v469
    %v554 = vunpack.c.l.b16 %v470
    %v555 = vunpack.c.l.b16 %v471
    %v556 = vunpack.c.h.b16 %v471
    %v557 = vunpack.c.l.b16 %v472
    %v558 = vunpack.c.l.b16 %v473
    %v559 = vunpack.c.h.b16 %v473
    %v560 = vunpack.c.l.b16 %v474
    %v561 = vunpack.c.l.b16 %v475
    %v562 = vunpack.c.h.b16 %v475
    %v563 = vunpack.c.l.b16 %v476
    %v564 = vunpack.c.l.b16 %v477
    %v565 = vunpack.c.h.b16 %v477
    %v566 = vunpack.c.l.b16 %v478
    %v567 = vunpack.c.l.b16 %v479
    %v568 = vunpack.c.h.b16 %v479
    %v569 = vunpack.c.l.b16 %v480
    %v570 = vunpack.c.l.b16 %v481
    %v571 = vunpack.c.h.b16 %v481
    %v572 = vunpack.c.l.b16 %v482
    %v573 = vunpack.c.l.b16 %v483
    %v574 = vunpack.c.h.b16 %v483
    %v575 = vunpack.c.l.b16 %v484
    %v576 = vunpack.c.l.b16 %v485
    %v577 = vunpack.c.h.b16 %v485
    %v578 = vunpack.c.l.b16 %v486
    %v579 = vunpack.c.l.b16 %v487
    %v580 = vunpack.c.h.b16 %v487
    %v581 = vunpack.c.l.b16 %v488
    %v582 = vunpack.c.l.b16 %v489
    %v583 = vunpack.c.h.b16 %v489
    %v584 = vunpack.c.l.b16 %v490
    %v585 = vunpack.c.l.b16 %v491
    %v586 = vunpack.c.h.b16 %v491
    %v587 = vunpack.c.l.b16 %v492
    %v588 = vunpack.c.l.b16 %v493
    %v589 = vunpack.c.h.b16 %v493
    %v590 = vunpack.c.l.b16 %v494
    %v591 = vunpack.c.l.b16 %v495
    %v592 = vunpack.c.h.b16 %v495
    %v593 = vunpack.c.l.b16 %v496
    %v594 = vunpack.c.l.b16 %v497
    %v595 = vunpack.c.h.b16 %v497
    %v596 = vunpack.c.l.b16 %v498
    %v597 = vpack.c.b16 %v552, %v549
    %v598 = vpack.c.b16 %v553, %v550
    %v599 = vpack.c.b16 %v554, %v551
    %v600 = vpack.c.b16 %v558, %v555
    %v601 = vpack.c.b16 %v559, %v556
    %v602 = vpack.c.b16 %v560, %v557
    %v603 = vpack.c.b16 %v564, %v561
    %v604 = vpack.c.b16 %v565, %v562
    %v605 = vpack.c.b16 %v566, %v563
    %v606 = vpack.c.b16 %v570, %v567
    %v607 = vpack.c.b16 %v571, %v568
    %v608 = vpack.c.b16 %v572, %v569
    %v609 = vpack.c.b16 %v576, %v573
    %v610 = vpack.c.b16 %v577, %v574
    %v611 = vpack.c.b16 %v578, %v575
    %v612 = vpack.c.b16 %v582, %v579
    %v613 = vpack.c.b16 %v583, %v580
    %v614 = vpack.c.b16 %v584, %v581
    %v615 = vpack.c.b16 %v588, %v585
    %v616 = vpack.c.b16 %v589, %v586
    %v617 = vpack.c.b16 %v590, %v587
    %v618 = vpack.c.b16 %v594, %v591
    %v619 = vpack.c.b16 %v595, %v592
    %v620 = vpack.c.b16 %v596, %v593
    %645 = vmatprep.subr.bf16.mxu0 %v598
    %646 = vmatpush1.bf16.msra.mxu0 %v597
    %647 = vmatprep.subr.bf16.mxu0 %v601
    %648 = vmatpush1.bf16.msra.mxu0 %v600
    %649 = vmatprep.subr.bf16.mxu0 %v604
    %650 = vmatpush1.bf16.msra.mxu0 %v603
    %651 = vmatprep.subr.bf16.mxu0 %v607
    %652 = vmatpush1.bf16.msra.mxu0 %v606
    %653 = vmatprep.subr.bf16.mxu0 %v610
    %654 = vmatpush1.bf16.msra.mxu0 %v609
    %655 = vmatprep.subr.bf16.mxu0 %v613
    %656 = vmatpush1.bf16.msra.mxu0 %v612
    %657 = vmatprep.subr.bf16.mxu0 %v616
    %658 = vmatpush1.bf16.msra.mxu0 %v615
    %659 = vmatprep.subr.bf16.mxu0 %v619
    %660 = vmatpush1.bf16.msra.mxu0 %v618
    %661 = vmatprep.subr.bf16.mxu0 0
    %662 = vmatpush1.bf16.msra.mxu0 0
    %663 = vmatprep.subr.bf16.mxu0 0
    %664 = vmatpush1.bf16.msra.mxu0 0
    %665 = vmatprep.subr.bf16.mxu0 0
    %666 = vmatpush1.bf16.msra.mxu0 0
    %667 = vmatprep.subr.bf16.mxu0 0
    %668 = vmatpush1.bf16.msra.mxu0 0
    %669 = vmatprep.subr.bf16.mxu0 0
    %670 = vmatpush1.bf16.msra.mxu0 0
    %671 = vmatprep.subr.bf16.mxu0 0
    %672 = vmatpush1.bf16.msra.mxu0 0
    %673 = vmatprep.subr.bf16.mxu0 0
    %674 = vmatpush1.bf16.msra.mxu0 0
    %675 = vmatprep.subr.bf16.mxu0 0
    %676 = vmatpush1.bf16.msra.mxu0 0
    %677 = vmatprep.mubr.bf16.mxu0 0
    %678 = vmatmul.mubr.bf16.gmra.mrb[0].mxu0 %v516
    %v679 = vpop.f32.mrb[0].mxu0
    %v680 = vadd.f32 0.0, %v679
    %v681 = vpop.f32.mrb[0].mxu0
    %v682 = vadd.f32 0.0, %v681
    %v683 = vpop.f32.mrb[0].mxu0
    %v684 = vpop.f32.mrb[0].mxu0
    %685 = vdwg.mxu0
    %686 = vmatprep.subr.bf16.mxu0 0
    %687 = vmatpush1.bf16.msra.mxu0 %v599
    %688 = vmatprep.subr.bf16.mxu0 0
    %689 = vmatpush1.bf16.msra.mxu0 %v602
    %690 = vmatprep.subr.bf16.mxu0 0
    %691 = vmatpush1.bf16.msra.mxu0 %v605
    %692 = vmatprep.subr.bf16.mxu0 0
    %693 = vmatpush1.bf16.msra.mxu0 %v608
    %694 = vmatprep.subr.bf16.mxu0 0
    %695 = vmatpush1.bf16.msra.mxu0 %v611
    %696 = vmatprep.subr.bf16.mxu0 0
    %697 = vmatpush1.bf16.msra.mxu0 %v614
    %698 = vmatprep.subr.bf16.mxu0 0
    %699 = vmatpush1.bf16.msra.mxu0 %v617
    %700 = vmatprep.subr.bf16.mxu0 0
    %701 = vmatpush1.bf16.msra.mxu0 %v620
    %702 = vmatprep.subr.bf16.mxu0 0
    %703 = vmatpush1.bf16.msra.mxu0 0
    %704 = vmatprep.subr.bf16.mxu0 0
    %705 = vmatpush1.bf16.msra.mxu0 0
    %706 = vmatprep.subr.bf16.mxu0 0
    %707 = vmatpush1.bf16.msra.mxu0 0
    %708 = vmatprep.subr.bf16.mxu0 0
    %709 = vmatpush1.bf16.msra.mxu0 0
    %710 = vmatprep.subr.bf16.mxu0 0
    %711 = vmatpush1.bf16.msra.mxu0 0
    %712 = vmatprep.subr.bf16.mxu0 0
    %713 = vmatpush1.bf16.msra.mxu0 0
    %714 = vmatprep.subr.bf16.mxu0 0
    %715 = vmatpush1.bf16.msra.mxu0 0
    %716 = vmatprep.subr.bf16.mxu0 0
    %717 = vmatpush1.bf16.msra.mxu0 0
    %718 = vmatprep.mubr.bf16.mxu0 0
    %719 = vmatmul.mubr.bf16.gmra.mrb[0].mxu0 %v516
    %v720 = vpop.f32.mrb[0].mxu0
    %v721 = vadd.f32 0.0, %v720
    %v722 = vpop.f32.mrb[0].mxu0
    %v723 = vpop.f32.mrb[0].mxu0
    %v724 = vpop.f32.mrb[0].mxu0
    %725 = vdwg.mxu0
    %v727 = vcombine.high %v680, %v680
    %v729 = vunpack.c.l.s4 1966171168
    %v730 = vunpack.c.0.s8 %v729
    %v731 = vlaneseq
    %v732 = vshrl.u32 %v731, 7
    %v733 = vsub.s32 %v730, %v732
    %v734 = vrot.slane %v680, %v733
    %v736 = vunpack.c.l.s4 1966171168
    %v737 = vunpack.c.0.s8 %v736
    %v738 = vlaneseq
    %v739 = vshrl.u32 %v738, 7
    %v740 = vsub.s32 %v737, %v739
    %v741 = vrot.slane %v727, %v740
    %v742 = vcombine.high %v734, %v734
    %v743 = vcombine.high %v741, %v741
    %v745 = vunpack.c.l.s4 1966171168
    %v746 = vunpack.c.0.s8 %v745
    %v747 = vlaneseq
    %v748 = vshrl.u32 %v747, 7
    %v749 = vsub.s32 %v746, %v748
    %v750 = vrot.slane %v734, %v749
    %v752 = vunpack.c.l.s4 1966171168
    %v753 = vunpack.c.0.s8 %v752
    %v754 = vlaneseq
    %v755 = vshrl.u32 %v754, 7
    %v756 = vsub.s32 %v753, %v755
    %v757 = vrot.slane %v741, %v756
    %v759 = vunpack.c.l.s4 1966171168
    %v760 = vunpack.c.0.s8 %v759
    %v761 = vlaneseq
    %v762 = vshrl.u32 %v761, 7
    %v763 = vsub.s32 %v760, %v762
    %v764 = vrot.slane %v742, %v763
    %v766 = vunpack.c.l.s4 1966171168
    %v767 = vunpack.c.0.s8 %v766
    %v768 = vlaneseq
    %v769 = vshrl.u32 %v768, 7
    %v770 = vsub.s32 %v767, %v769
    %v771 = vrot.slane %v743, %v770
    %v772 = vcombine.high %v750, %v750
    %v773 = vcombine.high %v757, %v757
    %v774 = vcombine.high %v764, %v764
    %v775 = vcombine.high %v771, %v771
    %v784 = vadd.f32 %v501, %v750
    %v785 = vadd.f32 %v503, %v764
    %v786 = vadd.f32 %v505, %v772
    %v787 = vadd.f32 %v507, %v774
    %v788 = vadd.f32 %v509, %v757
    %v789 = vadd.f32 %v511, %v771
    %v790 = vadd.f32 %v513, %v773
    %v791 = vadd.f32 %v515, %v775
    %v792 = vxor.u32 %v784, 2147483648
    %v793 = vxor.u32 %v785, 2147483648
    %v794 = vxor.u32 %v786, 2147483648
    %v795 = vxor.u32 %v787, 2147483648
    %v796 = vxor.u32 %v788, 2147483648
    %v797 = vxor.u32 %v789, 2147483648
    %v798 = vxor.u32 %v790, 2147483648
    %v799 = vxor.u32 %v791, 2147483648
    %v800 = vmul.f32 %v792, 1.442695
    %v801 = vpow.pop %v800
    %v802 = vmul.f32 %v793, 1.442695
    %v803 = vpow.pop %v802
    %v804 = vmul.f32 %v794, 1.442695
    %v805 = vpow.pop %v804
    %v806 = vmul.f32 %v795, 1.442695
    %v807 = vpow.pop %v806
    %v808 = vmul.f32 %v796, 1.442695
    %v809 = vpow.pop %v808
    %v810 = vmul.f32 %v797, 1.442695
    %v811 = vpow.pop %v810
    %v812 = vmul.f32 %v798, 1.442695
    %v813 = vpow.pop %v812
    %v814 = vmul.f32 %v799, 1.442695
    %v815 = vpow.pop %v814
    %v816 = vadd.f32 %v801, 1.0
    %v817 = vadd.f32 %v803, 1.0
    %v818 = vadd.f32 %v805, 1.0
    %v819 = vadd.f32 %v807, 1.0
    %v820 = vadd.f32 %v809, 1.0
    %v821 = vadd.f32 %v811, 1.0
    %v822 = vadd.f32 %v813, 1.0
    %v823 = vadd.f32 %v815, 1.0
    %v824 = vrcp.pop %v816
    %v825 = vmul.f32 1.0, %v824
    %v826 = vrcp.pop %v817
    %v827 = vmul.f32 1.0, %v826
    %v828 = vrcp.pop %v818
    %v829 = vmul.f32 1.0, %v828
    %v830 = vrcp.pop %v819
    %v831 = vmul.f32 1.0, %v830
    %v832 = vrcp.pop %v820
    %v833 = vmul.f32 1.0, %v832
    %v834 = vrcp.pop %v821
    %v835 = vmul.f32 1.0, %v834
    %v836 = vrcp.pop %v822
    %v837 = vmul.f32 1.0, %v836
    %v838 = vrcp.pop %v823
    %v839 = vmul.f32 1.0, %v838
    %v848 = vrot.slane %v501, 1
    %v849 = vrot.slane %v503, 1
    %v850 = vrot.slane %v505, 1
    %v851 = vrot.slane %v507, 1
    %v852 = vrot.slane %v509, 1
    %v853 = vrot.slane %v511, 1
    %v854 = vrot.slane %v513, 1
    %v855 = vrot.slane %v515, 1
    %v865 = vcombine.high %v682, %v682
    %v867 = vunpack.c.l.s4 1966171168
    %v868 = vunpack.c.0.s8 %v867
    %v869 = vlaneseq
    %v870 = vshrl.u32 %v869, 7
    %v871 = vsub.s32 %v868, %v870
    %v872 = vrot.slane %v682, %v871
    %v874 = vunpack.c.l.s4 1966171168
    %v875 = vunpack.c.0.s8 %v874
    %v876 = vlaneseq
    %v877 = vshrl.u32 %v876, 7
    %v878 = vsub.s32 %v875, %v877
    %v879 = vrot.slane %v865, %v878
    %v880 = vcombine.high %v872, %v872
    %v881 = vcombine.high %v879, %v879
    %v883 = vunpack.c.l.s4 1966171168
    %v884 = vunpack.c.0.s8 %v883
    %v885 = vlaneseq
    %v886 = vshrl.u32 %v885, 7
    %v887 = vsub.s32 %v884, %v886
    %v888 = vrot.slane %v872, %v887
    %v890 = vunpack.c.l.s4 1966171168
    %v891 = vunpack.c.0.s8 %v890
    %v892 = vlaneseq
    %v893 = vshrl.u32 %v892, 7
    %v894 = vsub.s32 %v891, %v893
    %v895 = vrot.slane %v879, %v894
    %v897 = vunpack.c.l.s4 1966171168
    %v898 = vunpack.c.0.s8 %v897
    %v899 = vlaneseq
    %v900 = vshrl.u32 %v899, 7
    %v901 = vsub.s32 %v898, %v900
    %v902 = vrot.slane %v880, %v901
    %v904 = vunpack.c.l.s4 1966171168
    %v905 = vunpack.c.0.s8 %v904
    %v906 = vlaneseq
    %v907 = vshrl.u32 %v906, 7
    %v908 = vsub.s32 %v905, %v907
    %v909 = vrot.slane %v881, %v908
    %v910 = vcombine.high %v888, %v888
    %v911 = vcombine.high %v895, %v895
    %v912 = vcombine.high %v902, %v902
    %v913 = vcombine.high %v909, %v909
    %v922 = vadd.f32 %v848, %v888
    %v923 = vadd.f32 %v849, %v902
    %v924 = vadd.f32 %v850, %v910
    %v925 = vadd.f32 %v851, %v912
    %v926 = vadd.f32 %v852, %v895
    %v927 = vadd.f32 %v853, %v909
    %v928 = vadd.f32 %v854, %v911
    %v929 = vadd.f32 %v855, %v913
    %v930 = vxor.u32 %v922, 2147483648
    %v931 = vxor.u32 %v923, 2147483648
    %v932 = vxor.u32 %v924, 2147483648
    %v933 = vxor.u32 %v925, 2147483648
    %v934 = vxor.u32 %v926, 2147483648
    %v935 = vxor.u32 %v927, 2147483648
    %v936 = vxor.u32 %v928, 2147483648
    %v937 = vxor.u32 %v929, 2147483648
    %v938 = vmul.f32 %v930, 1.442695
    %v939 = vpow.pop %v938
    %v940 = vmul.f32 %v931, 1.442695
    %v941 = vpow.pop %v940
    %v942 = vmul.f32 %v932, 1.442695
    %v943 = vpow.pop %v942
    %v944 = vmul.f32 %v933, 1.442695
    %v945 = vpow.pop %v944
    %v946 = vmul.f32 %v934, 1.442695
    %v947 = vpow.pop %v946
    %v948 = vmul.f32 %v935, 1.442695
    %v949 = vpow.pop %v948
    %v950 = vmul.f32 %v936, 1.442695
    %v951 = vpow.pop %v950
    %v952 = vmul.f32 %v937, 1.442695
    %v953 = vpow.pop %v952
    %v954 = vadd.f32 %v939, 1.0
    %v955 = vadd.f32 %v941, 1.0
    %v956 = vadd.f32 %v943, 1.0
    %v957 = vadd.f32 %v945, 1.0
    %v958 = vadd.f32 %v947, 1.0
    %v959 = vadd.f32 %v949, 1.0
    %v960 = vadd.f32 %v951, 1.0
    %v961 = vadd.f32 %v953, 1.0
    %v962 = vrcp.pop %v954
    %v963 = vmul.f32 1.0, %v962
    %v964 = vrcp.pop %v955
    %v965 = vmul.f32 1.0, %v964
    %v966 = vrcp.pop %v956
    %v967 = vmul.f32 1.0, %v966
    %v968 = vrcp.pop %v957
    %v969 = vmul.f32 1.0, %v968
    %v970 = vrcp.pop %v958
    %v971 = vmul.f32 1.0, %v970
    %v972 = vrcp.pop %v959
    %v973 = vmul.f32 1.0, %v972
    %v974 = vrcp.pop %v960
    %v975 = vmul.f32 1.0, %v974
    %v976 = vrcp.pop %v961
    %v977 = vmul.f32 1.0, %v976
    %v979 = vlaneseq
    %v980 = vshrl.u32 %v979, 7
    %v981 = vsub.s32 0, %v980
    %v982 = vrot.slane %v499, %v981
    %v984 = vadd.f32 %v721, %v982
    %v986 = vcombine.high %v984, %v984
    %v988 = vunpack.c.l.s4 1966171168
    %v989 = vunpack.c.0.s8 %v988
    %v990 = vlaneseq
    %v991 = vshrl.u32 %v990, 7
    %v992 = vsub.s32 %v989, %v991
    %v993 = vrot.slane %v984, %v992
    %v995 = vunpack.c.l.s4 1966171168
    %v996 = vunpack.c.0.s8 %v995
    %v997 = vlaneseq
    %v998 = vshrl.u32 %v997, 7
    %v999 = vsub.s32 %v996, %v998
    %v1000 = vrot.slane %v986, %v999
    %v1001 = vcombine.high %v993, %v993
    %v1002 = vcombine.high %v1000, %v1000
    %v1004 = vunpack.c.l.s4 1966171168
    %v1005 = vunpack.c.0.s8 %v1004
    %v1006 = vlaneseq
    %v1007 = vshrl.u32 %v1006, 7
    %v1008 = vsub.s32 %v1005, %v1007
    %v1009 = vrot.slane %v993, %v1008
    %v1011 = vunpack.c.l.s4 1966171168
    %v1012 = vunpack.c.0.s8 %v1011
    %v1013 = vlaneseq
    %v1014 = vshrl.u32 %v1013, 7
    %v1015 = vsub.s32 %v1012, %v1014
    %v1016 = vrot.slane %v1000, %v1015
    %v1018 = vunpack.c.l.s4 1966171168
    %v1019 = vunpack.c.0.s8 %v1018
    %v1020 = vlaneseq
    %v1021 = vshrl.u32 %v1020, 7
    %v1022 = vsub.s32 %v1019, %v1021
    %v1023 = vrot.slane %v1001, %v1022
    %v1025 = vunpack.c.l.s4 1966171168
    %v1026 = vunpack.c.0.s8 %v1025
    %v1027 = vlaneseq
    %v1028 = vshrl.u32 %v1027, 7
    %v1029 = vsub.s32 %v1026, %v1028
    %v1030 = vrot.slane %v1002, %v1029
    %v1031 = vcombine.high %v1009, %v1009
    %v1032 = vcombine.high %v1016, %v1016
    %v1033 = vcombine.high %v1023, %v1023
    %v1034 = vcombine.high %v1030, %v1030
    %v1043 = vmul.f32 %v825, %v1009
    %v1044 = vmul.f32 %v827, %v1023
    %v1045 = vmul.f32 %v829, %v1031
    %v1046 = vmul.f32 %v831, %v1033
    %v1047 = vmul.f32 %v833, %v1016
    %v1048 = vmul.f32 %v835, %v1030
    %v1049 = vmul.f32 %v837, %v1032
    %v1050 = vmul.f32 %v839, %v1034
    %v1051 = vrot.slane %v501, 2
    %v1052 = vrot.slane %v503, 2
    %v1053 = vrot.slane %v505, 2
    %v1054 = vrot.slane %v507, 2
    %v1055 = vrot.slane %v509, 2
    %v1056 = vrot.slane %v511, 2
    %v1057 = vrot.slane %v513, 2
    %v1058 = vrot.slane %v515, 2
    %v1067 = vadd.f32 %v1051, %v1043
    %v1068 = vadd.f32 %v1052, %v1044
    %v1069 = vadd.f32 %v1053, %v1045
    %v1070 = vadd.f32 %v1054, %v1046
    %v1071 = vadd.f32 %v1055, %v1047
    %v1072 = vadd.f32 %v1056, %v1048
    %v1073 = vadd.f32 %v1057, %v1049
    %v1074 = vadd.f32 %v1058, %v1050
    %v1075 = vtanh.pop %v1067
    %v1076 = vtanh.pop %v1068
    %v1077 = vtanh.pop %v1069
    %v1078 = vtanh.pop %v1070
    %v1079 = vtanh.pop %v1071
    %v1080 = vtanh.pop %v1072
    %v1081 = vtanh.pop %v1073
    %v1082 = vtanh.pop %v1074
    %v1083 = vsub.f32 1.0, %v963
    %v1084 = vsub.f32 1.0, %v965
    %v1085 = vsub.f32 1.0, %v967
    %v1086 = vsub.f32 1.0, %v969
    %v1087 = vsub.f32 1.0, %v971
    %v1088 = vsub.f32 1.0, %v973
    %v1089 = vsub.f32 1.0, %v975
    %v1090 = vsub.f32 1.0, %v977
    %v1091 = vmul.f32 %v1083, %v1075
    %v1092 = vmul.f32 %v1084, %v1076
    %v1093 = vmul.f32 %v1085, %v1077
    %v1094 = vmul.f32 %v1086, %v1078
    %v1095 = vmul.f32 %v1087, %v1079
    %v1096 = vmul.f32 %v1088, %v1080
    %v1097 = vmul.f32 %v1089, %v1081
    %v1098 = vmul.f32 %v1090, %v1082
    %v1100 = vcombine.high %v500, %v500
    %v1102 = vunpack.c.l.s4 1966171168
    %v1103 = vunpack.c.0.s8 %v1102
    %v1104 = vlaneseq
    %v1105 = vshrl.u32 %v1104, 7
    %v1106 = vsub.s32 %v1103, %v1105
    %v1107 = vrot.slane %v500, %v1106
    %v1109 = vunpack.c.l.s4 1966171168
    %v1110 = vunpack.c.0.s8 %v1109
    %v1111 = vlaneseq
    %v1112 = vshrl.u32 %v1111, 7
    %v1113 = vsub.s32 %v1110, %v1112
    %v1114 = vrot.slane %v1100, %v1113
    %v1115 = vcombine.high %v1107, %v1107
    %v1116 = vcombine.high %v1114, %v1114
    %v1118 = vunpack.c.l.s4 1966171168
    %v1119 = vunpack.c.0.s8 %v1118
    %v1120 = vlaneseq
    %v1121 = vshrl.u32 %v1120, 7
    %v1122 = vsub.s32 %v1119, %v1121
    %v1123 = vrot.slane %v1107, %v1122
    %v1125 = vunpack.c.l.s4 1966171168
    %v1126 = vunpack.c.0.s8 %v1125
    %v1127 = vlaneseq
    %v1128 = vshrl.u32 %v1127, 7
    %v1129 = vsub.s32 %v1126, %v1128
    %v1130 = vrot.slane %v1114, %v1129
    %v1132 = vunpack.c.l.s4 1966171168
    %v1133 = vunpack.c.0.s8 %v1132
    %v1134 = vlaneseq
    %v1135 = vshrl.u32 %v1134, 7
    %v1136 = vsub.s32 %v1133, %v1135
    %v1137 = vrot.slane %v1115, %v1136
    %v1139 = vunpack.c.l.s4 1966171168
    %v1140 = vunpack.c.0.s8 %v1139
    %v1141 = vlaneseq
    %v1142 = vshrl.u32 %v1141, 7
    %v1143 = vsub.s32 %v1140, %v1142
    %v1144 = vrot.slane %v1116, %v1143
    %v1145 = vcombine.high %v1123, %v1123
    %v1146 = vcombine.high %v1130, %v1130
    %v1147 = vcombine.high %v1137, %v1137
    %v1148 = vcombine.high %v1144, %v1144
    %v1157 = vmul.f32 %v963, %v1123
    %v1158 = vmul.f32 %v965, %v1137
    %v1159 = vmul.f32 %v967, %v1145
    %v1160 = vmul.f32 %v969, %v1147
    %v1161 = vmul.f32 %v971, %v1130
    %v1162 = vmul.f32 %v973, %v1144
    %v1163 = vmul.f32 %v975, %v1146
    %v1164 = vmul.f32 %v977, %v1148
    %v1165 = vadd.f32 %v1091, %v1157
    %v1166 = vadd.f32 %v1092, %v1158
    %v1167 = vadd.f32 %v1093, %v1159
    %v1168 = vadd.f32 %v1094, %v1160
    %v1169 = vadd.f32 %v1095, %v1161
    %v1170 = vadd.f32 %v1096, %v1162
    %v1171 = vadd.f32 %v1097, %v1163
    %v1172 = vadd.f32 %v1098, %v1164
    %v1173 = vpack.c.bf16 %v1165, %v1165
    %v1174 = vpack.c.bf16 %v1166, %v1166
    %v1175 = vpack.c.bf16 %v1167, %v1167
    %v1176 = vpack.c.bf16 %v1168, %v1168
    %v1177 = vpack.c.bf16 %v1169, %v1169
    %v1178 = vpack.c.bf16 %v1170, %v1170
    %v1179 = vpack.c.bf16 %v1171, %v1171
    %v1180 = vpack.c.bf16 %v1172, %v1172
    %vm1181 = vcmask 1040384
    %vm1182 = vsmask.f32 256
    %vm1183 = vmand %vm1181, %vm1182
    %v1184 = vld [vmem:[#allocation13] sm:$0x1]
    %v1185 = vsel %vm1183, %v1173, %v1184
    %1186 = vst [vmem:[#allocation13] sm:$0x1] %v1185
    %v1187 = vld [vmem:[#allocation13 + $0x8] sm:$0x1]
    %v1188 = vsel %vm1183, %v1174, %v1187
    %1189 = vst [vmem:[#allocation13 + $0x8] sm:$0x1] %v1188
    %v1190 = vld [vmem:[#allocation13 + $0x10] sm:$0x1]
    %v1191 = vsel %vm1183, %v1175, %v1190
    %1192 = vst [vmem:[#allocation13 + $0x10] sm:$0x1] %v1191
    %v1193 = vld [vmem:[#allocation13 + $0x18] sm:$0x1]
    %v1194 = vsel %vm1183, %v1176, %v1193
    %1195 = vst [vmem:[#allocation13 + $0x18] sm:$0x1] %v1194
    %v1196 = vld [vmem:[#allocation13 + $0x20] sm:$0x1]
    %v1197 = vsel %vm1183, %v1177, %v1196
    %1198 = vst [vmem:[#allocation13 + $0x20] sm:$0x1] %v1197
    %v1199 = vld [vmem:[#allocation13 + $0x28] sm:$0x1]
    %v1200 = vsel %vm1183, %v1178, %v1199
    %1201 = vst [vmem:[#allocation13 + $0x28] sm:$0x1] %v1200
    %v1202 = vld [vmem:[#allocation13 + $0x30] sm:$0x1]
    %v1203 = vsel %vm1183, %v1179, %v1202
    %1204 = vst [vmem:[#allocation13 + $0x30] sm:$0x1] %v1203
    %v1205 = vld [vmem:[#allocation13 + $0x38] sm:$0x1]
    %v1206 = vsel %vm1183, %v1180, %v1205
    %1207 = vst [vmem:[#allocation13 + $0x38] sm:$0x1] %v1206
    %s1208 = scalar_lea.vmem [#allocation3], 1
    %v1209 = vld [vmem:[%s1208] ss:$8 sm:$0x7]
    %s1210 = scalar_lea.vmem [#allocation3], 49
    %v1211 = vld [vmem:[%s1210] ss:$8 sm:$0x7]
    %s1212 = scalar_lea.vmem [#allocation3], 97
    %v1213 = vld [vmem:[%s1212] ss:$8 sm:$0x7]
    %s1214 = scalar_lea.vmem [#allocation3], 145
    %v1215 = vld [vmem:[%s1214] ss:$8 sm:$0x7]
    %s1216 = scalar_lea.vmem [#allocation3], 193
    %v1217 = vld [vmem:[%s1216] ss:$8 sm:$0x7]
    %s1218 = scalar_lea.vmem [#allocation3], 241
    %v1219 = vld [vmem:[%s1218] ss:$8 sm:$0x7]
    %s1220 = scalar_lea.vmem [#allocation3], 289
    %v1221 = vld [vmem:[%s1220] ss:$8 sm:$0x7]
    %s1222 = scalar_lea.vmem [#allocation3], 337
    %v1223 = vld [vmem:[%s1222] ss:$8 sm:$0x7]
    %v1232 = vunpack.c.l.b16 %v1173
    %v1233 = vunpack.c.l.b16 %v1174
    %v1234 = vunpack.c.l.b16 %v1175
    %v1235 = vunpack.c.l.b16 %v1176
    %v1236 = vunpack.c.l.b16 %v1177
    %v1237 = vunpack.c.l.b16 %v1178
    %v1238 = vunpack.c.l.b16 %v1179
    %v1239 = vunpack.c.l.b16 %v1180
    %v1240 = vrot.slane %v1233, 7
    %vm1241 = vcmask 1041409
    %v1242 = vsel %vm1241, %v1240, %v1232
    %v1243 = vrot.slane %v1234, 6
    %vm1244 = vcmask 1042434
    %v1245 = vsel %vm1244, %v1243, %v1242
    %v1246 = vrot.slane %v1235, 5
    %vm1247 = vcmask 1043459
    %v1248 = vsel %vm1247, %v1246, %v1245
    %v1249 = vrot.slane %v1236, 4
    %vm1250 = vcmask 1044484
    %v1251 = vsel %vm1250, %v1249, %v1248
    %v1252 = vrot.slane %v1237, 3
    %vm1253 = vcmask 1045509
    %v1254 = vsel %vm1253, %v1252, %v1251
    %v1255 = vrot.slane %v1238, 2
    %vm1256 = vcmask 1046534
    %v1257 = vsel %vm1256, %v1255, %v1254
    %v1258 = vrot.slane %v1239, 1
    %vm1259 = vcmask 1047559
    %v1260 = vsel %vm1259, %v1258, %v1257
    %v1261 = vpack.c.b16 %v1260, %v1260
    %1263 = vmatprep.subr.bf16.mxu0 %v598
    %1264 = vmatpush1.bf16.msra.mxu0 %v597
    %1265 = vmatprep.subr.bf16.mxu0 %v601
    %1266 = vmatpush1.bf16.msra.mxu0 %v600
    %1267 = vmatprep.subr.bf16.mxu0 %v604
    %1268 = vmatpush1.bf16.msra.mxu0 %v603
    %1269 = vmatprep.subr.bf16.mxu0 %v607
    %1270 = vmatpush1.bf16.msra.mxu0 %v606
    %1271 = vmatprep.subr.bf16.mxu0 %v610
    %1272 = vmatpush1.bf16.msra.mxu0 %v609
    %1273 = vmatprep.subr.bf16.mxu0 %v613
    %1274 = vmatpush1.bf16.msra.mxu0 %v612
    %1275 = vmatprep.subr.bf16.mxu0 %v616
    %1276 = vmatpush1.bf16.msra.mxu0 %v615
    %1277 = vmatprep.subr.bf16.mxu0 %v619
    %1278 = vmatpush1.bf16.msra.mxu0 %v618
    %1279 = vmatprep.subr.bf16.mxu0 0
    %1280 = vmatpush1.bf16.msra.mxu0 0
    %1281 = vmatprep.subr.bf16.mxu0 0
    %1282 = vmatpush1.bf16.msra.mxu0 0
    %1283 = vmatprep.subr.bf16.mxu0 0
    %1284 = vmatpush1.bf16.msra.mxu0 0
    %1285 = vmatprep.subr.bf16.mxu0 0
    %1286 = vmatpush1.bf16.msra.mxu0 0
    %1287 = vmatprep.subr.bf16.mxu0 0
    %1288 = vmatpush1.bf16.msra.mxu0 0
    %1289 = vmatprep.subr.bf16.mxu0 0
    %1290 = vmatpush1.bf16.msra.mxu0 0
    %1291 = vmatprep.subr.bf16.mxu0 0
    %1292 = vmatpush1.bf16.msra.mxu0 0
    %1293 = vmatprep.subr.bf16.mxu0 0
    %1294 = vmatpush1.bf16.msra.mxu0 0
    %1295 = vmatprep.mubr.bf16.mxu0 0
    %1296 = vmatmul.mubr.bf16.gmra.mrb[0].mxu0 %v1261
    %v1297 = vpop.f32.mrb[0].mxu0
    %v1298 = vadd.f32 0.0, %v1297
    %v1299 = vpop.f32.mrb[0].mxu0
    %v1300 = vadd.f32 0.0, %v1299
    %v1301 = vpop.f32.mrb[0].mxu0
    %v1302 = vpop.f32.mrb[0].mxu0
    %1303 = vdwg.mxu0
    %1304 = vmatprep.subr.bf16.mxu0 0
    %1305 = vmatpush1.bf16.msra.mxu0 %v599
    %1306 = vmatprep.subr.bf16.mxu0 0
    %1307 = vmatpush1.bf16.msra.mxu0 %v602
    %1308 = vmatprep.subr.bf16.mxu0 0
    %1309 = vmatpush1.bf16.msra.mxu0 %v605
    %1310 = vmatprep.subr.bf16.mxu0 0
    %1311 = vmatpush1.bf16.msra.mxu0 %v608
    %1312 = vmatprep.subr.bf16.mxu0 0
    %1313 = vmatpush1.bf16.msra.mxu0 %v611
    %1314 = vmatprep.subr.bf16.mxu0 0
    %1315 = vmatpush1.bf16.msra.mxu0 %v614
    %1316 = vmatprep.subr.bf16.mxu0 0
    %1317 = vmatpush1.bf16.msra.mxu0 %v617
    %1318 = vmatprep.subr.bf16.mxu0 0
    %1319 = vmatpush1.bf16.msra.mxu0 %v620
    %1320 = vmatprep.subr.bf16.mxu0 0
    %1321 = vmatpush1.bf16.msra.mxu0 0
    %1322 = vmatprep.subr.bf16.mxu0 0
    %1323 = vmatpush1.bf16.msra.mxu0 0
    %1324 = vmatprep.subr.bf16.mxu0 0
    %1325 = vmatpush1.bf16.msra.mxu0 0
    %1326 = vmatprep.subr.bf16.mxu0 0
    %1327 = vmatpush1.bf16.msra.mxu0 0
    %1328 = vmatprep.subr.bf16.mxu0 0
    %1329 = vmatpush1.bf16.msra.mxu0 0
    %1330 = vmatprep.subr.bf16.mxu0 0
    %1331 = vmatpush1.bf16.msra.mxu0 0
    %1332 = vmatprep.subr.bf16.mxu0 0
    %1333 = vmatpush1.bf16.msra.mxu0 0
    %1334 = vmatprep.subr.bf16.mxu0 0
    %1335 = vmatpush1.bf16.msra.mxu0 0
    %1336 = vmatprep.mubr.bf16.mxu0 0
    %1337 = vmatmul.mubr.bf16.gmra.mrb[0].mxu0 %v1261
    %v1338 = vpop.f32.mrb[0].mxu0
    %v1339 = vadd.f32 0.0, %v1338
    %v1340 = vpop.f32.mrb[0].mxu0
    %v1341 = vpop.f32.mrb[0].mxu0
    %v1342 = vpop.f32.mrb[0].mxu0
    %1343 = vdwg.mxu0
    %v1345 = vcombine.high %v1298, %v1298
    %v1347 = vunpack.c.l.s4 1966171168
    %v1348 = vunpack.c.0.s8 %v1347
    %v1349 = vlaneseq
    %v1350 = vshrl.u32 %v1349, 7
    %v1351 = vsub.s32 %v1348, %v1350
    %v1352 = vrot.slane %v1298, %v1351
    %v1354 = vunpack.c.l.s4 1966171168
    %v1355 = vunpack.c.0.s8 %v1354
    %v1356 = vlaneseq
    %v1357 = vshrl.u32 %v1356, 7
    %v1358 = vsub.s32 %v1355, %v1357
    %v1359 = vrot.slane %v1345, %v1358
    %v1360 = vcombine.high %v1352, %v1352
    %v1361 = vcombine.high %v1359, %v1359
    %v1363 = vunpack.c.l.s4 1966171168
    %v1364 = vunpack.c.0.s8 %v1363
    %v1365 = vlaneseq
    %v1366 = vshrl.u32 %v1365, 7
    %v1367 = vsub.s32 %v1364, %v1366
    %v1368 = vrot.slane %v1352, %v1367
    %v1370 = vunpack.c.l.s4 1966171168
    %v1371 = vunpack.c.0.s8 %v1370
    %v1372 = vlaneseq
    %v1373 = vshrl.u32 %v1372, 7
    %v1374 = vsub.s32 %v1371, %v1373
    %v1375 = vrot.slane %v1359, %v1374
    %v1377 = vunpack.c.l.s4 1966171168
    %v1378 = vunpack.c.0.s8 %v1377
    %v1379 = vlaneseq
    %v1380 = vshrl.u32 %v1379, 7
    %v1381 = vsub.s32 %v1378, %v1380
    %v1382 = vrot.slane %v1360, %v1381
    %v1384 = vunpack.c.l.s4 1966171168
    %v1385 = vunpack.c.0.s8 %v1384
    %v1386 = vlaneseq
    %v1387 = vshrl.u32 %v1386, 7
    %v1388 = vsub.s32 %v1385, %v1387
    %v1389 = vrot.slane %v1361, %v1388
    %v1390 = vcombine.high %v1368, %v1368
    %v1391 = vcombine.high %v1375, %v1375
    %v1392 = vcombine.high %v1382, %v1382
    %v1393 = vcombine.high %v1389, %v1389
    %v1402 = vadd.f32 %v1209, %v1368
    %v1403 = vadd.f32 %v1211, %v1382
    %v1404 = vadd.f32 %v1213, %v1390
    %v1405 = vadd.f32 %v1215, %v1392
    %v1406 = vadd.f32 %v1217, %v1375
    %v1407 = vadd.f32 %v1219, %v1389
    %v1408 = vadd.f32 %v1221, %v1391
    %v1409 = vadd.f32 %v1223, %v1393
    %v1410 = vxor.u32 %v1402, 2147483648
    %v1411 = vxor.u32 %v1403, 2147483648
    %v1412 = vxor.u32 %v1404, 2147483648
    %v1413 = vxor.u32 %v1405, 2147483648
    %v1414 = vxor.u32 %v1406, 2147483648
    %v1415 = vxor.u32 %v1407, 2147483648
    %v1416 = vxor.u32 %v1408, 2147483648
    %v1417 = vxor.u32 %v1409, 2147483648
    %v1418 = vmul.f32 %v1410, 1.442695
    %v1419 = vpow.pop %v1418
    %v1420 = vmul.f32 %v1411, 1.442695
    %v1421 = vpow.pop %v1420
    %v1422 = vmul.f32 %v1412, 1.442695
    %v1423 = vpow.pop %v1422
    %v1424 = vmul.f32 %v1413, 1.442695
    %v1425 = vpow.pop %v1424
    %v1426 = vmul.f32 %v1414, 1.442695
    %v1427 = vpow.pop %v1426
    %v1428 = vmul.f32 %v1415, 1.442695
    %v1429 = vpow.pop %v1428
    %v1430 = vmul.f32 %v1416, 1.442695
    %v1431 = vpow.pop %v1430
    %v1432 = vmul.f32 %v1417, 1.442695
    %v1433 = vpow.pop %v1432
    %v1434 = vadd.f32 %v1419, 1.0
    %v1435 = vadd.f32 %v1421, 1.0
    %v1436 = vadd.f32 %v1423, 1.0
    %v1437 = vadd.f32 %v1425, 1.0
    %v1438 = vadd.f32 %v1427, 1.0
    %v1439 = vadd.f32 %v1429, 1.0
    %v1440 = vadd.f32 %v1431, 1.0
    %v1441 = vadd.f32 %v1433, 1.0
    %v1442 = vrcp.pop %v1434
    %v1443 = vmul.f32 1.0, %v1442
    %v1444 = vrcp.pop %v1435
    %v1445 = vmul.f32 1.0, %v1444
    %v1446 = vrcp.pop %v1436
    %v1447 = vmul.f32 1.0, %v1446
    %v1448 = vrcp.pop %v1437
    %v1449 = vmul.f32 1.0, %v1448
    %v1450 = vrcp.pop %v1438
    %v1451 = vmul.f32 1.0, %v1450
    %v1452 = vrcp.pop %v1439
    %v1453 = vmul.f32 1.0, %v1452
    %v1454 = vrcp.pop %v1440
    %v1455 = vmul.f32 1.0, %v1454
    %v1456 = vrcp.pop %v1441
    %v1457 = vmul.f32 1.0, %v1456
    %v1466 = vrot.slane %v1209, 1
    %v1467 = vrot.slane %v1211, 1
    %v1468 = vrot.slane %v1213, 1
    %v1469 = vrot.slane %v1215, 1
    %v1470 = vrot.slane %v1217, 1
    %v1471 = vrot.slane %v1219, 1
    %v1472 = vrot.slane %v1221, 1
    %v1473 = vrot.slane %v1223, 1
    %v1483 = vcombine.high %v1300, %v1300
    %v1485 = vunpack.c.l.s4 1966171168
    %v1486 = vunpack.c.0.s8 %v1485
    %v1487 = vlaneseq
    %v1488 = vshrl.u32 %v1487, 7
    %v1489 = vsub.s32 %v1486, %v1488
    %v1490 = vrot.slane %v1300, %v1489
    %v1492 = vunpack.c.l.s4 1966171168
    %v1493 = vunpack.c.0.s8 %v1492
    %v1494 = vlaneseq
    %v1495 = vshrl.u32 %v1494, 7
    %v1496 = vsub.s32 %v1493, %v1495
    %v1497 = vrot.slane %v1483, %v1496
    %v1498 = vcombine.high %v1490, %v1490
    %v1499 = vcombine.high %v1497, %v1497
    %v1501 = vunpack.c.l.s4 1966171168
    %v1502 = vunpack.c.0.s8 %v1501
    %v1503 = vlaneseq
    %v1504 = vshrl.u32 %v1503, 7
    %v1505 = vsub.s32 %v1502, %v1504
    %v1506 = vrot.slane %v1490, %v1505
    %v1508 = vunpack.c.l.s4 1966171168
    %v1509 = vunpack.c.0.s8 %v1508
    %v1510 = vlaneseq
    %v1511 = vshrl.u32 %v1510, 7
    %v1512 = vsub.s32 %v1509, %v1511
    %v1513 = vrot.slane %v1497, %v1512
    %v1515 = vunpack.c.l.s4 1966171168
    %v1516 = vunpack.c.0.s8 %v1515
    %v1517 = vlaneseq
    %v1518 = vshrl.u32 %v1517, 7
    %v1519 = vsub.s32 %v1516, %v1518
    %v1520 = vrot.slane %v1498, %v1519
    %v1522 = vunpack.c.l.s4 1966171168
    %v1523 = vunpack.c.0.s8 %v1522
    %v1524 = vlaneseq
    %v1525 = vshrl.u32 %v1524, 7
    %v1526 = vsub.s32 %v1523, %v1525
    %v1527 = vrot.slane %v1499, %v1526
    %v1528 = vcombine.high %v1506, %v1506
    %v1529 = vcombine.high %v1513, %v1513
    %v1530 = vcombine.high %v1520, %v1520
    %v1531 = vcombine.high %v1527, %v1527
    %v1540 = vadd.f32 %v1466, %v1506
    %v1541 = vadd.f32 %v1467, %v1520
    %v1542 = vadd.f32 %v1468, %v1528
    %v1543 = vadd.f32 %v1469, %v1530
    %v1544 = vadd.f32 %v1470, %v1513
    %v1545 = vadd.f32 %v1471, %v1527
    %v1546 = vadd.f32 %v1472, %v1529
    %v1547 = vadd.f32 %v1473, %v1531
    %v1548 = vxor.u32 %v1540, 2147483648
    %v1549 = vxor.u32 %v1541, 2147483648
    %v1550 = vxor.u32 %v1542, 2147483648
    %v1551 = vxor.u32 %v1543, 2147483648
    %v1552 = vxor.u32 %v1544, 2147483648
    %v1553 = vxor.u32 %v1545, 2147483648
    %v1554 = vxor.u32 %v1546, 2147483648
    %v1555 = vxor.u32 %v1547, 2147483648
    %v1556 = vmul.f32 %v1548, 1.442695
    %v1557 = vpow.pop %v1556
    %v1558 = vmul.f32 %v1549, 1.442695
    %v1559 = vpow.pop %v1558
    %v1560 = vmul.f32 %v1550, 1.442695
    %v1561 = vpow.pop %v1560
    %v1562 = vmul.f32 %v1551, 1.442695
    %v1563 = vpow.pop %v1562
    %v1564 = vmul.f32 %v1552, 1.442695
    %v1565 = vpow.pop %v1564
    %v1566 = vmul.f32 %v1553, 1.442695
    %v1567 = vpow.pop %v1566
    %v1568 = vmul.f32 %v1554, 1.442695
    %v1569 = vpow.pop %v1568
    %v1570 = vmul.f32 %v1555, 1.442695
    %v1571 = vpow.pop %v1570
    %v1572 = vadd.f32 %v1557, 1.0
    %v1573 = vadd.f32 %v1559, 1.0
    %v1574 = vadd.f32 %v1561, 1.0
    %v1575 = vadd.f32 %v1563, 1.0
    %v1576 = vadd.f32 %v1565, 1.0
    %v1577 = vadd.f32 %v1567, 1.0
    %v1578 = vadd.f32 %v1569, 1.0
    %v1579 = vadd.f32 %v1571, 1.0
    %v1580 = vrcp.pop %v1572
    %v1581 = vmul.f32 1.0, %v1580
    %v1582 = vrcp.pop %v1573
    %v1583 = vmul.f32 1.0, %v1582
    %v1584 = vrcp.pop %v1574
    %v1585 = vmul.f32 1.0, %v1584
    %v1586 = vrcp.pop %v1575
    %v1587 = vmul.f32 1.0, %v1586
    %v1588 = vrcp.pop %v1576
    %v1589 = vmul.f32 1.0, %v1588
    %v1590 = vrcp.pop %v1577
    %v1591 = vmul.f32 1.0, %v1590
    %v1592 = vrcp.pop %v1578
    %v1593 = vmul.f32 1.0, %v1592
    %v1594 = vrcp.pop %v1579
    %v1595 = vmul.f32 1.0, %v1594
    %v1596 = vadd.f32 %v1339, %v982
    %v1598 = vcombine.high %v1596, %v1596
    %v1600 = vunpack.c.l.s4 1966171168
    %v1601 = vunpack.c.0.s8 %v1600
    %v1602 = vlaneseq
    %v1603 = vshrl.u32 %v1602, 7
    %v1604 = vsub.s32 %v1601, %v1603
    %v1605 = vrot.slane %v1596, %v1604
    %v1607 = vunpack.c.l.s4 1966171168
    %v1608 = vunpack.c.0.s8 %v1607
    %v1609 = vlaneseq
    %v1610 = vshrl.u32 %v1609, 7
    %v1611 = vsub.s32 %v1608, %v1610
    %v1612 = vrot.slane %v1598, %v1611
    %v1613 = vcombine.high %v1605, %v1605
    %v1614 = vcombine.high %v1612, %v1612
    %v1616 = vunpack.c.l.s4 1966171168
    %v1617 = vunpack.c.0.s8 %v1616
    %v1618 = vlaneseq
    %v1619 = vshrl.u32 %v1618, 7
    %v1620 = vsub.s32 %v1617, %v1619
    %v1621 = vrot.slane %v1605, %v1620
    %v1623 = vunpack.c.l.s4 1966171168
    %v1624 = vunpack.c.0.s8 %v1623
    %v1625 = vlaneseq
    %v1626 = vshrl.u32 %v1625, 7
    %v1627 = vsub.s32 %v1624, %v1626
    %v1628 = vrot.slane %v1612, %v1627
    %v1630 = vunpack.c.l.s4 1966171168
    %v1631 = vunpack.c.0.s8 %v1630
    %v1632 = vlaneseq
    %v1633 = vshrl.u32 %v1632, 7
    %v1634 = vsub.s32 %v1631, %v1633
    %v1635 = vrot.slane %v1613, %v1634
    %v1637 = vunpack.c.l.s4 1966171168
    %v1638 = vunpack.c.0.s8 %v1637
    %v1639 = vlaneseq
    %v1640 = vshrl.u32 %v1639, 7
    %v1641 = vsub.s32 %v1638, %v1640
    %v1642 = vrot.slane %v1614, %v1641
    %v1643 = vcombine.high %v1621, %v1621
    %v1644 = vcombine.high %v1628, %v1628
    %v1645 = vcombine.high %v1635, %v1635
    %v1646 = vcombine.high %v1642, %v1642
    %v1655 = vmul.f32 %v1443, %v1621
    %v1656 = vmul.f32 %v1445, %v1635
    %v1657 = vmul.f32 %v1447, %v1643
    %v1658 = vmul.f32 %v1449, %v1645
    %v1659 = vmul.f32 %v1451, %v1628
    %v1660 = vmul.f32 %v1453, %v1642
    %v1661 = vmul.f32 %v1455, %v1644
    %v1662 = vmul.f32 %v1457, %v1646
    %v1663 = vrot.slane %v1209, 2
    %v1664 = vrot.slane %v1211, 2
    %v1665 = vrot.slane %v1213, 2
    %v1666 = vrot.slane %v1215, 2
    %v1667 = vrot.slane %v1217, 2
    %v1668 = vrot.slane %v1219, 2
    %v1669 = vrot.slane %v1221, 2
    %v1670 = vrot.slane %v1223, 2
    %v1679 = vadd.f32 %v1663, %v1655
    %v1680 = vadd.f32 %v1664, %v1656
    %v1681 = vadd.f32 %v1665, %v1657
    %v1682 = vadd.f32 %v1666, %v1658
    %v1683 = vadd.f32 %v1667, %v1659
    %v1684 = vadd.f32 %v1668, %v1660
    %v1685 = vadd.f32 %v1669, %v1661
    %v1686 = vadd.f32 %v1670, %v1662
    %v1687 = vtanh.pop %v1679
    %v1688 = vtanh.pop %v1680
    %v1689 = vtanh.pop %v1681
    %v1690 = vtanh.pop %v1682
    %v1691 = vtanh.pop %v1683
    %v1692 = vtanh.pop %v1684
    %v1693 = vtanh.pop %v1685
    %v1694 = vtanh.pop %v1686
    %v1695 = vsub.f32 1.0, %v1581
    %v1696 = vsub.f32 1.0, %v1583
    %v1697 = vsub.f32 1.0, %v1585
    %v1698 = vsub.f32 1.0, %v1587
    %v1699 = vsub.f32 1.0, %v1589
    %v1700 = vsub.f32 1.0, %v1591
    %v1701 = vsub.f32 1.0, %v1593
    %v1702 = vsub.f32 1.0, %v1595
    %v1703 = vmul.f32 %v1695, %v1687
    %v1704 = vmul.f32 %v1696, %v1688
    %v1705 = vmul.f32 %v1697, %v1689
    %v1706 = vmul.f32 %v1698, %v1690
    %v1707 = vmul.f32 %v1699, %v1691
    %v1708 = vmul.f32 %v1700, %v1692
    %v1709 = vmul.f32 %v1701, %v1693
    %v1710 = vmul.f32 %v1702, %v1694
    %v1711 = vmul.f32 %v1581, %v1165
    %v1712 = vmul.f32 %v1583, %v1166
    %v1713 = vmul.f32 %v1585, %v1167
    %v1714 = vmul.f32 %v1587, %v1168
    %v1715 = vmul.f32 %v1589, %v1169
    %v1716 = vmul.f32 %v1591, %v1170
    %v1717 = vmul.f32 %v1593, %v1171
    %v1718 = vmul.f32 %v1595, %v1172
    %v1719 = vadd.f32 %v1703, %v1711
    %v1720 = vadd.f32 %v1704, %v1712
    %v1721 = vadd.f32 %v1705, %v1713
    %v1722 = vadd.f32 %v1706, %v1714
    %v1723 = vadd.f32 %v1707, %v1715
    %v1724 = vadd.f32 %v1708, %v1716
    %v1725 = vadd.f32 %v1709, %v1717
    %v1726 = vadd.f32 %v1710, %v1718
    %v1727 = vpack.c.bf16 %v1719, %v1719
    %v1728 = vpack.c.bf16 %v1720, %v1720
    %v1729 = vpack.c.bf16 %v1721, %v1721
    %v1730 = vpack.c.bf16 %v1722, %v1722
    %v1731 = vpack.c.bf16 %v1723, %v1723
    %v1732 = vpack.c.bf16 %v1724, %v1724
    %v1733 = vpack.c.bf16 %v1725, %v1725
    %v1734 = vpack.c.bf16 %v1726, %v1726
    %v1743 = vunpack.c.l.b16 %v1727
    %v1744 = vunpack.c.l.b16 %v1728
    %v1745 = vunpack.c.l.b16 %v1729
    %v1746 = vunpack.c.l.b16 %v1730
    %v1747 = vunpack.c.l.b16 %v1731
    %v1748 = vunpack.c.l.b16 %v1732
    %v1749 = vunpack.c.l.b16 %v1733
    %v1750 = vunpack.c.l.b16 %v1734
    %v1751 = vpack.c.b16 %v1743, %v1743
    %v1752 = vpack.c.b16 %v1744, %v1744
    %v1753 = vpack.c.b16 %v1745, %v1745
    %v1754 = vpack.c.b16 %v1746, %v1746
    %v1755 = vpack.c.b16 %v1747, %v1747
    %v1756 = vpack.c.b16 %v1748, %v1748
    %v1757 = vpack.c.b16 %v1749, %v1749
    %v1758 = vpack.c.b16 %v1750, %v1750
    %v1760 = vshll.u32 %v1751, 16
    %v1763 = vshll.u32 %v1752, 16
    %v1766 = vshll.u32 %v1753, 16
    %v1769 = vshll.u32 %v1754, 16
    %v1772 = vshll.u32 %v1755, 16
    %v1775 = vshll.u32 %v1756, 16
    %v1778 = vshll.u32 %v1757, 16
    %v1781 = vshll.u32 %v1758, 16
    %vm1791 = vsmask.f32 7938
    %vm1792 = vmand %vm1181, %vm1791
    %v1793 = vld [vmem:[#allocation13] sm:$0x1]
    %v1794 = vsel %vm1792, %v1760, %v1793
    %1795 = vst [vmem:[#allocation13] sm:$0x1] %v1794
    %v1796 = vld [vmem:[#allocation13 + $0x8] sm:$0x1]
    %v1797 = vsel %vm1792, %v1763, %v1796
    %1798 = vst [vmem:[#allocation13 + $0x8] sm:$0x1] %v1797
    %v1799 = vld [vmem:[#allocation13 + $0x10] sm:$0x1]
    %v1800 = vsel %vm1792, %v1766, %v1799
    %1801 = vst [vmem:[#allocation13 + $0x10] sm:$0x1] %v1800
    %v1802 = vld [vmem:[#allocation13 + $0x18] sm:$0x1]
    %v1803 = vsel %vm1792, %v1769, %v1802
    %1804 = vst [vmem:[#allocation13 + $0x18] sm:$0x1] %v1803
    %v1805 = vld [vmem:[#allocation13 + $0x20] sm:$0x1]
    %v1806 = vsel %vm1792, %v1772, %v1805
    %1807 = vst [vmem:[#allocation13 + $0x20] sm:$0x1] %v1806
    %v1808 = vld [vmem:[#allocation13 + $0x28] sm:$0x1]
    %v1809 = vsel %vm1792, %v1775, %v1808
    %1810 = vst [vmem:[#allocation13 + $0x28] sm:$0x1] %v1809
    %v1811 = vld [vmem:[#allocation13 + $0x30] sm:$0x1]
    %v1812 = vsel %vm1792, %v1778, %v1811
    %1813 = vst [vmem:[#allocation13 + $0x30] sm:$0x1] %v1812
    %v1814 = vld [vmem:[#allocation13 + $0x38] sm:$0x1]
    %v1815 = vsel %vm1792, %v1781, %v1814
    %1816 = vst [vmem:[#allocation13 + $0x38] sm:$0x1] %v1815
    %s1817 = scalar_lea.vmem [#allocation3], 2
    %v1818 = vld [vmem:[%s1817] ss:$8 sm:$0x7]
    %s1819 = scalar_lea.vmem [#allocation3], 50
    %v1820 = vld [vmem:[%s1819] ss:$8 sm:$0x7]
    %s1821 = scalar_lea.vmem [#allocation3], 98
    %v1822 = vld [vmem:[%s1821] ss:$8 sm:$0x7]
    %s1823 = scalar_lea.vmem [#allocation3], 146
    %v1824 = vld [vmem:[%s1823] ss:$8 sm:$0x7]
    %s1825 = scalar_lea.vmem [#allocation3], 194
    %v1826 = vld [vmem:[%s1825] ss:$8 sm:$0x7]
    %s1827 = scalar_lea.vmem [#allocation3], 242
    %v1828 = vld [vmem:[%s1827] ss:$8 sm:$0x7]
    %s1829 = scalar_lea.vmem [#allocation3], 290
    %v1830 = vld [vmem:[%s1829] ss:$8 sm:$0x7]
    %s1831 = scalar_lea.vmem [#allocation3], 338
    %v1832 = vld [vmem:[%s1831] ss:$8 sm:$0x7]
    %v1833 = vrot.slane %v1744, 7
    %v1834 = vsel %vm1241, %v1833, %v1743
    %v1835 = vrot.slane %v1745, 6
    %v1836 = vsel %vm1244, %v1835, %v1834
    %v1837 = vrot.slane %v1746, 5
    %v1838 = vsel %vm1247, %v1837, %v1836
    %v1839 = vrot.slane %v1747, 4
    %v1840 = vsel %vm1250, %v1839, %v1838
    %v1841 = vrot.slane %v1748, 3
    %v1842 = vsel %vm1253, %v1841, %v1840
    %v1843 = vrot.slane %v1749, 2
    %v1844 = vsel %vm1256, %v1843, %v1842
    %v1845 = vrot.slane %v1750, 1
    %v1846 = vsel %vm1259, %v1845, %v1844
    %v1847 = vpack.c.b16 %v1846, %v1846
    %1849 = vmatprep.subr.bf16.mxu0 %v598
    %1850 = vmatpush1.bf16.msra.mxu0 %v597
    %1851 = vmatprep.subr.bf16.mxu0 %v601
    %1852 = vmatpush1.bf16.msra.mxu0 %v600
    %1853 = vmatprep.subr.bf16.mxu0 %v604
    %1854 = vmatpush1.bf16.msra.mxu0 %v603
    %1855 = vmatprep.subr.bf16.mxu0 %v607
    %1856 = vmatpush1.bf16.msra.mxu0 %v606
    %1857 = vmatprep.subr.bf16.mxu0 %v610
    %1858 = vmatpush1.bf16.msra.mxu0 %v609
    %1859 = vmatprep.subr.bf16.mxu0 %v613
    %1860 = vmatpush1.bf16.msra.mxu0 %v612
    %1861 = vmatprep.subr.bf16.mxu0 %v616
    %1862 = vmatpush1.bf16.msra.mxu0 %v615
    %1863 = vmatprep.subr.bf16.mxu0 %v619
    %1864 = vmatpush1.bf16.msra.mxu0 %v618
    %1865 = vmatprep.subr.bf16.mxu0 0
    %1866 = vmatpush1.bf16.msra.mxu0 0
    %1867 = vmatprep.subr.bf16.mxu0 0
    %1868 = vmatpush1.bf16.msra.mxu0 0
    %1869 = vmatprep.subr.bf16.mxu0 0
    %1870 = vmatpush1.bf16.msra.mxu0 0
    %1871 = vmatprep.subr.bf16.mxu0 0
    %1872 = vmatpush1.bf16.msra.mxu0 0
    %1873 = vmatprep.subr.bf16.mxu0 0
    %1874 = vmatpush1.bf16.msra.mxu0 0
    %1875 = vmatprep.subr.bf16.mxu0 0
    %1876 = vmatpush1.bf16.msra.mxu0 0
    %1877 = vmatprep.subr.bf16.mxu0 0
    %1878 = vmatpush1.bf16.msra.mxu0 0
    %1879 = vmatprep.subr.bf16.mxu0 0
    %1880 = vmatpush1.bf16.msra.mxu0 0
    %1881 = vmatprep.mubr.bf16.mxu0 0
    %1882 = vmatmul.mubr.bf16.gmra.mrb[0].mxu0 %v1847
    %v1883 = vpop.f32.mrb[0].mxu0
    %v1884 = vadd.f32 0.0, %v1883
    %v1885 = vpop.f32.mrb[0].mxu0
    %v1886 = vadd.f32 0.0, %v1885
    %v1887 = vpop.f32.mrb[0].mxu0
    %v1888 = vpop.f32.mrb[0].mxu0
    %1889 = vdwg.mxu0
    %1890 = vmatprep.subr.bf16.mxu0 0
    %1891 = vmatpush1.bf16.msra.mxu0 %v599
    %1892 = vmatprep.subr.bf16.mxu0 0
    %1893 = vmatpush1.bf16.msra.mxu0 %v602
    %1894 = vmatprep.subr.bf16.mxu0 0
    %1895 = vmatpush1.bf16.msra.mxu0 %v605
    %1896 = vmatprep.subr.bf16.mxu0 0
    %1897 = vmatpush1.bf16.msra.mxu0 %v608
    %1898 = vmatprep.subr.bf16.mxu0 0
    %1899 = vmatpush1.bf16.msra.mxu0 %v611
    %1900 = vmatprep.subr.bf16.mxu0 0
    %1901 = vmatpush1.bf16.msra.mxu0 %v614
    %1902 = vmatprep.subr.bf16.mxu0 0
    %1903 = vmatpush1.bf16.msra.mxu0 %v617
    %1904 = vmatprep.subr.bf16.mxu0 0
    %1905 = vmatpush1.bf16.msra.mxu0 %v620
    %1906 = vmatprep.subr.bf16.mxu0 0
    %1907 = vmatpush1.bf16.msra.mxu0 0
    %1908 = vmatprep.subr.bf16.mxu0 0
    %1909 = vmatpush1.bf16.msra.mxu0 0
    %1910 = vmatprep.subr.bf16.mxu0 0
    %1911 = vmatpush1.bf16.msra.mxu0 0
    %1912 = vmatprep.subr.bf16.mxu0 0
    %1913 = vmatpush1.bf16.msra.mxu0 0
    %1914 = vmatprep.subr.bf16.mxu0 0
    %1915 = vmatpush1.bf16.msra.mxu0 0
    %1916 = vmatprep.subr.bf16.mxu0 0
    %1917 = vmatpush1.bf16.msra.mxu0 0
    %1918 = vmatprep.subr.bf16.mxu0 0
    %1919 = vmatpush1.bf16.msra.mxu0 0
    %1920 = vmatprep.subr.bf16.mxu0 0
    %1921 = vmatpush1.bf16.msra.mxu0 0
    %1922 = vmatprep.mubr.bf16.mxu0 0
    %1923 = vmatmul.mubr.bf16.gmra.mrb[0].mxu0 %v1847
    %v1924 = vpop.f32.mrb[0].mxu0
    %v1925 = vadd.f32 0.0, %v1924
    %v1926 = vpop.f32.mrb[0].mxu0
    %v1927 = vpop.f32.mrb[0].mxu0
    %v1928 = vpop.f32.mrb[0].mxu0
    %1929 = vdwg.mxu0
    %v1931 = vcombine.high %v1884, %v1884
    %v1933 = vunpack.c.l.s4 1966171168
    %v1934 = vunpack.c.0.s8 %v1933
    %v1935 = vlaneseq
    %v1936 = vshrl.u32 %v1935, 7
    %v1937 = vsub.s32 %v1934, %v1936
    %v1938 = vrot.slane %v1884, %v1937
    %v1940 = vunpack.c.l.s4 1966171168
    %v1941 = vunpack.c.0.s8 %v1940
    %v1942 = vlaneseq
    %v1943 = vshrl.u32 %v1942, 7
    %v1944 = vsub.s32 %v1941, %v1943
    %v1945 = vrot.slane %v1931, %v1944
    %v1946 = vcombine.high %v1938, %v1938
    %v1947 = vcombine.high %v1945, %v1945
    %v1949 = vunpack.c.l.s4 1966171168
    %v1950 = vunpack.c.0.s8 %v1949
    %v1951 = vlaneseq
    %v1952 = vshrl.u32 %v1951, 7
    %v1953 = vsub.s32 %v1950, %v1952
    %v1954 = vrot.slane %v1938, %v1953
    %v1956 = vunpack.c.l.s4 1966171168
    %v1957 = vunpack.c.0.s8 %v1956
    %v1958 = vlaneseq
    %v1959 = vshrl.u32 %v1958, 7
    %v1960 = vsub.s32 %v1957, %v1959
    %v1961 = vrot.slane %v1945, %v1960
    %v1963 = vunpack.c.l.s4 1966171168
    %v1964 = vunpack.c.0.s8 %v1963
    %v1965 = vlaneseq
    %v1966 = vshrl.u32 %v1965, 7
    %v1967 = vsub.s32 %v1964, %v1966
    %v1968 = vrot.slane %v1946, %v1967
    %v1970 = vunpack.c.l.s4 1966171168
    %v1971 = vunpack.c.0.s8 %v1970
    %v1972 = vlaneseq
    %v1973 = vshrl.u32 %v1972, 7
    %v1974 = vsub.s32 %v1971, %v1973
    %v1975 = vrot.slane %v1947, %v1974
    %v1976 = vcombine.high %v1954, %v1954
    %v1977 = vcombine.high %v1961, %v1961
    %v1978 = vcombine.high %v1968, %v1968
    %v1979 = vcombine.high %v1975, %v1975
    %v1988 = vadd.f32 %v1818, %v1954
    %v1989 = vadd.f32 %v1820, %v1968
    %v1990 = vadd.f32 %v1822, %v1976
    %v1991 = vadd.f32 %v1824, %v1978
    %v1992 = vadd.f32 %v1826, %v1961
    %v1993 = vadd.f32 %v1828, %v1975
    %v1994 = vadd.f32 %v1830, %v1977
    %v1995 = vadd.f32 %v1832, %v1979
    %v1996 = vxor.u32 %v1988, 2147483648
    %v1997 = vxor.u32 %v1989, 2147483648
    %v1998 = vxor.u32 %v1990, 2147483648
    %v1999 = vxor.u32 %v1991, 2147483648
    %v2000 = vxor.u32 %v1992, 2147483648
    %v2001 = vxor.u32 %v1993, 2147483648
    %v2002 = vxor.u32 %v1994, 2147483648
    %v2003 = vxor.u32 %v1995, 2147483648
    %v2004 = vmul.f32 %v1996, 1.442695
    %v2005 = vpow.pop %v2004
    %v2006 = vmul.f32 %v1997, 1.442695
    %v2007 = vpow.pop %v2006
    %v2008 = vmul.f32 %v1998, 1.442695
    %v2009 = vpow.pop %v2008
    %v2010 = vmul.f32 %v1999, 1.442695
    %v2011 = vpow.pop %v2010
    %v2012 = vmul.f32 %v2000, 1.442695
    %v2013 = vpow.pop %v2012
    %v2014 = vmul.f32 %v2001, 1.442695
    %v2015 = vpow.pop %v2014
    %v2016 = vmul.f32 %v2002, 1.442695
    %v2017 = vpow.pop %v2016
    %v2018 = vmul.f32 %v2003, 1.442695
    %v2019 = vpow.pop %v2018
    %v2020 = vadd.f32 %v2005, 1.0
    %v2021 = vadd.f32 %v2007, 1.0
    %v2022 = vadd.f32 %v2009, 1.0
    %v2023 = vadd.f32 %v2011, 1.0
    %v2024 = vadd.f32 %v2013, 1.0
    %v2025 = vadd.f32 %v2015, 1.0
    %v2026 = vadd.f32 %v2017, 1.0
    %v2027 = vadd.f32 %v2019, 1.0
    %v2028 = vrcp.pop %v2020
    %v2029 = vmul.f32 1.0, %v2028
    %v2030 = vrcp.pop %v2021
    %v2031 = vmul.f32 1.0, %v2030
    %v2032 = vrcp.pop %v2022
    %v2033 = vmul.f32 1.0, %v2032
    %v2034 = vrcp.pop %v2023
    %v2035 = vmul.f32 1.0, %v2034
    %v2036 = vrcp.pop %v2024
    %v2037 = vmul.f32 1.0, %v2036
    %v2038 = vrcp.pop %v2025
    %v2039 = vmul.f32 1.0, %v2038
    %v2040 = vrcp.pop %v2026
    %v2041 = vmul.f32 1.0, %v2040
    %v2042 = vrcp.pop %v2027
    %v2043 = vmul.f32 1.0, %v2042
    %v2052 = vrot.slane %v1818, 1
    %v2053 = vrot.slane %v1820, 1
    %v2054 = vrot.slane %v1822, 1
    %v2055 = vrot.slane %v1824, 1
    %v2056 = vrot.slane %v1826, 1
    %v2057 = vrot.slane %v1828, 1
    %v2058 = vrot.slane %v1830, 1
    %v2059 = vrot.slane %v1832, 1
    %v2069 = vcombine.high %v1886, %v1886
    %v2071 = vunpack.c.l.s4 1966171168
    %v2072 = vunpack.c.0.s8 %v2071
    %v2073 = vlaneseq
    %v2074 = vshrl.u32 %v2073, 7
    %v2075 = vsub.s32 %v2072, %v2074
    %v2076 = vrot.slane %v1886, %v2075
    %v2078 = vunpack.c.l.s4 1966171168
    %v2079 = vunpack.c.0.s8 %v2078
    %v2080 = vlaneseq
    %v2081 = vshrl.u32 %v2080, 7
    %v2082 = vsub.s32 %v2079, %v2081
    %v2083 = vrot.slane %v2069, %v2082
    %v2084 = vcombine.high %v2076, %v2076
    %v2085 = vcombine.high %v2083, %v2083
    %v2087 = vunpack.c.l.s4 1966171168
    %v2088 = vunpack.c.0.s8 %v2087
    %v2089 = vlaneseq
    %v2090 = vshrl.u32 %v2089, 7
    %v2091 = vsub.s32 %v2088, %v2090
    %v2092 = vrot.slane %v2076, %v2091
    %v2094 = vunpack.c.l.s4 1966171168
    %v2095 = vunpack.c.0.s8 %v2094
    %v2096 = vlaneseq
    %v2097 = vshrl.u32 %v2096, 7
    %v2098 = vsub.s32 %v2095, %v2097
    %v2099 = vrot.slane %v2083, %v2098
    %v2101 = vunpack.c.l.s4 1966171168
    %v2102 = vunpack.c.0.s8 %v2101
    %v2103 = vlaneseq
    %v2104 = vshrl.u32 %v2103, 7
    %v2105 = vsub.s32 %v2102, %v2104
    %v2106 = vrot.slane %v2084, %v2105
    %v2108 = vunpack.c.l.s4 1966171168
    %v2109 = vunpack.c.0.s8 %v2108
    %v2110 = vlaneseq
    %v2111 = vshrl.u32 %v2110, 7
    %v2112 = vsub.s32 %v2109, %v2111
    %v2113 = vrot.slane %v2085, %v2112
    %v2114 = vcombine.high %v2092, %v2092
    %v2115 = vcombine.high %v2099, %v2099
    %v2116 = vcombine.high %v2106, %v2106
    %v2117 = vcombine.high %v2113, %v2113
    %v2126 = vadd.f32 %v2052, %v2092
    %v2127 = vadd.f32 %v2053, %v2106
    %v2128 = vadd.f32 %v2054, %v2114
    %v2129 = vadd.f32 %v2055, %v2116
    %v2130 = vadd.f32 %v2056, %v2099
    %v2131 = vadd.f32 %v2057, %v2113
    %v2132 = vadd.f32 %v2058, %v2115
    %v2133 = vadd.f32 %v2059, %v2117
    %v2134 = vxor.u32 %v2126, 2147483648
    %v2135 = vxor.u32 %v2127, 2147483648
    %v2136 = vxor.u32 %v2128, 2147483648
    %v2137 = vxor.u32 %v2129, 2147483648
    %v2138 = vxor.u32 %v2130, 2147483648
    %v2139 = vxor.u32 %v2131, 2147483648
    %v2140 = vxor.u32 %v2132, 2147483648
    %v2141 = vxor.u32 %v2133, 2147483648
    %v2142 = vmul.f32 %v2134, 1.442695
    %v2143 = vpow.pop %v2142
    %v2144 = vmul.f32 %v2135, 1.442695
    %v2145 = vpow.pop %v2144
    %v2146 = vmul.f32 %v2136, 1.442695
    %v2147 = vpow.pop %v2146
    %v2148 = vmul.f32 %v2137, 1.442695
    %v2149 = vpow.pop %v2148
    %v2150 = vmul.f32 %v2138, 1.442695
    %v2151 = vpow.pop %v2150
    %v2152 = vmul.f32 %v2139, 1.442695
    %v2153 = vpow.pop %v2152
    %v2154 = vmul.f32 %v2140, 1.442695
    %v2155 = vpow.pop %v2154
    %v2156 = vmul.f32 %v2141, 1.442695
    %v2157 = vpow.pop %v2156
    %v2158 = vadd.f32 %v2143, 1.0
    %v2159 = vadd.f32 %v2145, 1.0
    %v2160 = vadd.f32 %v2147, 1.0
    %v2161 = vadd.f32 %v2149, 1.0
    %v2162 = vadd.f32 %v2151, 1.0
    %v2163 = vadd.f32 %v2153, 1.0
    %v2164 = vadd.f32 %v2155, 1.0
    %v2165 = vadd.f32 %v2157, 1.0
    %v2166 = vrcp.pop %v2158
    %v2167 = vmul.f32 1.0, %v2166
    %v2168 = vrcp.pop %v2159
    %v2169 = vmul.f32 1.0, %v2168
    %v2170 = vrcp.pop %v2160
    %v2171 = vmul.f32 1.0, %v2170
    %v2172 = vrcp.pop %v2161
    %v2173 = vmul.f32 1.0, %v2172
    %v2174 = vrcp.pop %v2162
    %v2175 = vmul.f32 1.0, %v2174
    %v2176 = vrcp.pop %v2163
    %v2177 = vmul.f32 1.0, %v2176
    %v2178 = vrcp.pop %v2164
    %v2179 = vmul.f32 1.0, %v2178
    %v2180 = vrcp.pop %v2165
    %v2181 = vmul.f32 1.0, %v2180
    %v2182 = vadd.f32 %v1925, %v982
    %v2184 = vcombine.high %v2182, %v2182
    %v2186 = vunpack.c.l.s4 1966171168
    %v2187 = vunpack.c.0.s8 %v2186
    %v2188 = vlaneseq
    %v2189 = vshrl.u32 %v2188, 7
    %v2190 = vsub.s32 %v2187, %v2189
    %v2191 = vrot.slane %v2182, %v2190
    %v2193 = vunpack.c.l.s4 1966171168
    %v2194 = vunpack.c.0.s8 %v2193
    %v2195 = vlaneseq
    %v2196 = vshrl.u32 %v2195, 7
    %v2197 = vsub.s32 %v2194, %v2196
    %v2198 = vrot.slane %v2184, %v2197
    %v2199 = vcombine.high %v2191, %v2191
    %v2200 = vcombine.high %v2198, %v2198
    %v2202 = vunpack.c.l.s4 1966171168
    %v2203 = vunpack.c.0.s8 %v2202
    %v2204 = vlaneseq
    %v2205 = vshrl.u32 %v2204, 7
    %v2206 = vsub.s32 %v2203, %v2205
    %v2207 = vrot.slane %v2191, %v2206
    %v2209 = vunpack.c.l.s4 1966171168
    %v2210 = vunpack.c.0.s8 %v2209
    %v2211 = vlaneseq
    %v2212 = vshrl.u32 %v2211, 7
    %v2213 = vsub.s32 %v2210, %v2212
    %v2214 = vrot.slane %v2198, %v2213
    %v2216 = vunpack.c.l.s4 1966171168
    %v2217 = vunpack.c.0.s8 %v2216
    %v2218 = vlaneseq
    %v2219 = vshrl.u32 %v2218, 7
    %v2220 = vsub.s32 %v2217, %v2219
    %v2221 = vrot.slane %v2199, %v2220
    %v2223 = vunpack.c.l.s4 1966171168
    %v2224 = vunpack.c.0.s8 %v2223
    %v2225 = vlaneseq
    %v2226 = vshrl.u32 %v2225, 7
    %v2227 = vsub.s32 %v2224, %v2226
    %v2228 = vrot.slane %v2200, %v2227
    %v2229 = vcombine.high %v2207, %v2207
    %v2230 = vcombine.high %v2214, %v2214
    %v2231 = vcombine.high %v2221, %v2221
    %v2232 = vcombine.high %v2228, %v2228
    %v2241 = vmul.f32 %v2029, %v2207
    %v2242 = vmul.f32 %v2031, %v2221
    %v2243 = vmul.f32 %v2033, %v2229
    %v2244 = vmul.f32 %v2035, %v2231
    %v2245 = vmul.f32 %v2037, %v2214
    %v2246 = vmul.f32 %v2039, %v2228
    %v2247 = vmul.f32 %v2041, %v2230
    %v2248 = vmul.f32 %v2043, %v2232
    %v2249 = vrot.slane %v1818, 2
    %v2250 = vrot.slane %v1820, 2
    %v2251 = vrot.slane %v1822, 2
    %v2252 = vrot.slane %v1824, 2
    %v2253 = vrot.slane %v1826, 2
    %v2254 = vrot.slane %v1828, 2
    %v2255 = vrot.slane %v1830, 2
    %v2256 = vrot.slane %v1832, 2
    %v2265 = vadd.f32 %v2249, %v2241
    %v2266 = vadd.f32 %v2250, %v2242
    %v2267 = vadd.f32 %v2251, %v2243
    %v2268 = vadd.f32 %v2252, %v2244
    %v2269 = vadd.f32 %v2253, %v2245
    %v2270 = vadd.f32 %v2254, %v2246
    %v2271 = vadd.f32 %v2255, %v2247
    %v2272 = vadd.f32 %v2256, %v2248
    %v2273 = vtanh.pop %v2265
    %v2274 = vtanh.pop %v2266
    %v2275 = vtanh.pop %v2267
    %v2276 = vtanh.pop %v2268
    %v2277 = vtanh.pop %v2269
    %v2278 = vtanh.pop %v2270
    %v2279 = vtanh.pop %v2271
    %v2280 = vtanh.pop %v2272
    %v2281 = vsub.f32 1.0, %v2167
    %v2282 = vsub.f32 1.0, %v2169
    %v2283 = vsub.f32 1.0, %v2171
    %v2284 = vsub.f32 1.0, %v2173
    %v2285 = vsub.f32 1.0, %v2175
    %v2286 = vsub.f32 1.0, %v2177
    %v2287 = vsub.f32 1.0, %v2179
    %v2288 = vsub.f32 1.0, %v2181
    %v2289 = vmul.f32 %v2281, %v2273
    %v2290 = vmul.f32 %v2282, %v2274
    %v2291 = vmul.f32 %v2283, %v2275
    %v2292 = vmul.f32 %v2284, %v2276
    %v2293 = vmul.f32 %v2285, %v2277
    %v2294 = vmul.f32 %v2286, %v2278
    %v2295 = vmul.f32 %v2287, %v2279
    %v2296 = vmul.f32 %v2288, %v2280
    %v2297 = vmul.f32 %v2167, %v1719
    %v2298 = vmul.f32 %v2169, %v1720
    %v2299 = vmul.f32 %v2171, %v1721
    %v2300 = vmul.f32 %v2173, %v1722
    %v2301 = vmul.f32 %v2175, %v1723
    %v2302 = vmul.f32 %v2177, %v1724
    %v2303 = vmul.f32 %v2179, %v1725
    %v2304 = vmul.f32 %v2181, %v1726
    %v2305 = vadd.f32 %v2289, %v2297
    %v2306 = vadd.f32 %v2290, %v2298
    %v2307 = vadd.f32 %v2291, %v2299
    %v2308 = vadd.f32 %v2292, %v2300
    %v2309 = vadd.f32 %v2293, %v2301
    %v2310 = vadd.f32 %v2294, %v2302
    %v2311 = vadd.f32 %v2295, %v2303
    %v2312 = vadd.f32 %v2296, %v2304
    %v2313 = vpack.c.bf16 %v2305, %v2305
    %v2314 = vpack.c.bf16 %v2306, %v2306
    %v2315 = vpack.c.bf16 %v2307, %v2307
    %v2316 = vpack.c.bf16 %v2308, %v2308
    %v2317 = vpack.c.bf16 %v2309, %v2309
    %v2318 = vpack.c.bf16 %v2310, %v2310
    %v2319 = vpack.c.bf16 %v2311, %v2311
    %v2320 = vpack.c.bf16 %v2312, %v2312
    %v2329 = vunpack.c.l.b16 %v2313
    %v2330 = vunpack.c.l.b16 %v2314
    %v2331 = vunpack.c.l.b16 %v2315
    %v2332 = vunpack.c.l.b16 %v2316
    %v2333 = vunpack.c.l.b16 %v2317
    %v2334 = vunpack.c.l.b16 %v2318
    %v2335 = vunpack.c.l.b16 %v2319
    %v2336 = vunpack.c.l.b16 %v2320
    %v2337 = vpack.c.b16 %v2329, %v2329
    %v2338 = vpack.c.b16 %v2330, %v2330
    %v2339 = vpack.c.b16 %v2331, %v2331
    %v2340 = vpack.c.b16 %v2332, %v2332
    %v2341 = vpack.c.b16 %v2333, %v2333
    %v2342 = vpack.c.b16 %v2334, %v2334
    %v2343 = vpack.c.b16 %v2335, %v2335
    %v2344 = vpack.c.b16 %v2336, %v2336
    %v2345 = vrot.slane %v2337, 7
    %v2346 = vrot.slane %v2338, 7
    %v2347 = vrot.slane %v2339, 7
    %v2348 = vrot.slane %v2340, 7
    %v2349 = vrot.slane %v2341, 7
    %v2350 = vrot.slane %v2342, 7
    %v2351 = vrot.slane %v2343, 7
    %v2352 = vrot.slane %v2344, 7
    %vm2361 = vcmask 1041409
    %vm2362 = vsmask.f32 1280
    %vm2363 = vmand %vm2361, %vm2362
    %v2364 = vld [vmem:[#allocation13] sm:$0x2]
    %v2365 = vsel %vm2363, %v2345, %v2364
    %2366 = vst [vmem:[#allocation13] sm:$0x2] %v2365
    %v2367 = vld [vmem:[#allocation13 + $0x8] sm:$0x2]
    %v2368 = vsel %vm2363, %v2346, %v2367
    %2369 = vst [vmem:[#allocation13 + $0x8] sm:$0x2] %v2368
    %v2370 = vld [vmem:[#allocation13 + $0x10] sm:$0x2]
    %v2371 = vsel %vm2363, %v2347, %v2370
    %2372 = vst [vmem:[#allocation13 + $0x10] sm:$0x2] %v2371
    %v2373 = vld [vmem:[#allocation13 + $0x18] sm:$0x2]
    %v2374 = vsel %vm2363, %v2348, %v2373
    %2375 = vst [vmem:[#allocation13 + $0x18] sm:$0x2] %v2374
    %v2376 = vld [vmem:[#allocation13 + $0x20] sm:$0x2]
    %v2377 = vsel %vm2363, %v2349, %v2376
    %2378 = vst [vmem:[#allocation13 + $0x20] sm:$0x2] %v2377
    %v2379 = vld [vmem:[#allocation13 + $0x28] sm:$0x2]
    %v2380 = vsel %vm2363, %v2350, %v2379
    %2381 = vst [vmem:[#allocation13 + $0x28] sm:$0x2] %v2380
    %v2382 = vld [vmem:[#allocation13 + $0x30] sm:$0x2]
    %v2383 = vsel %vm2363, %v2351, %v2382
    %2384 = vst [vmem:[#allocation13 + $0x30] sm:$0x2] %v2383
    %v2385 = vld [vmem:[#allocation13 + $0x38] sm:$0x2]
    %v2386 = vsel %vm2363, %v2352, %v2385
    %2387 = vst [vmem:[#allocation13 + $0x38] sm:$0x2] %v2386
    %s2388 = scalar_lea.vmem [#allocation3], 3
    %v2389 = vld [vmem:[%s2388] ss:$8 sm:$0x7]
    %s2390 = scalar_lea.vmem [#allocation3], 51
    %v2391 = vld [vmem:[%s2390] ss:$8 sm:$0x7]
    %s2392 = scalar_lea.vmem [#allocation3], 99
    %v2393 = vld [vmem:[%s2392] ss:$8 sm:$0x7]
    %s2394 = scalar_lea.vmem [#allocation3], 147
    %v2395 = vld [vmem:[%s2394] ss:$8 sm:$0x7]
    %s2396 = scalar_lea.vmem [#allocation3], 195
    %v2397 = vld [vmem:[%s2396] ss:$8 sm:$0x7]
    %s2398 = scalar_lea.vmem [#allocation3], 243
    %v2399 = vld [vmem:[%s2398] ss:$8 sm:$0x7]
    %s2400 = scalar_lea.vmem [#allocation3], 291
    %v2401 = vld [vmem:[%s2400] ss:$8 sm:$0x7]
    %s2402 = scalar_lea.vmem [#allocation3], 339
    %v2403 = vld [vmem:[%s2402] ss:$8 sm:$0x7]
    %v2404 = vrot.slane %v2330, 7
    %v2405 = vsel %vm1241, %v2404, %v2329
    %v2406 = vrot.slane %v2331, 6
    %v2407 = vsel %vm1244, %v2406, %v2405
    %v2408 = vrot.slane %v2332, 5
    %v2409 = vsel %vm1247, %v2408, %v2407
    %v2410 = vrot.slane %v2333, 4
    %v2411 = vsel %vm1250, %v2410, %v2409
    %v2412 = vrot.slane %v2334, 3
    %v2413 = vsel %vm1253, %v2412, %v2411
    %v2414 = vrot.slane %v2335, 2
    %v2415 = vsel %vm1256, %v2414, %v2413
    %v2416 = vrot.slane %v2336, 1
    %v2417 = vsel %vm1259, %v2416, %v2415
    %v2418 = vpack.c.b16 %v2417, %v2417
    %2420 = vmatprep.subr.bf16.mxu0 %v598
    %2421 = vmatpush1.bf16.msra.mxu0 %v597
    %2422 = vmatprep.subr.bf16.mxu0 %v601
    %2423 = vmatpush1.bf16.msra.mxu0 %v600
    %2424 = vmatprep.subr.bf16.mxu0 %v604
    %2425 = vmatpush1.bf16.msra.mxu0 %v603
    %2426 = vmatprep.subr.bf16.mxu0 %v607
    %2427 = vmatpush1.bf16.msra.mxu0 %v606
    %2428 = vmatprep.subr.bf16.mxu0 %v610
    %2429 = vmatpush1.bf16.msra.mxu0 %v609
    %2430 = vmatprep.subr.bf16.mxu0 %v613
    %2431 = vmatpush1.bf16.msra.mxu0 %v612
    %2432 = vmatprep.subr.bf16.mxu0 %v616
    %2433 = vmatpush1.bf16.msra.mxu0 %v615
    %2434 = vmatprep.subr.bf16.mxu0 %v619
    %2435 = vmatpush1.bf16.msra.mxu0 %v618
    %2436 = vmatprep.subr.bf16.mxu0 0
    %2437 = vmatpush1.bf16.msra.mxu0 0
    %2438 = vmatprep.subr.bf16.mxu0 0
    %2439 = vmatpush1.bf16.msra.mxu0 0
    %2440 = vmatprep.subr.bf16.mxu0 0
    %2441 = vmatpush1.bf16.msra.mxu0 0
    %2442 = vmatprep.subr.bf16.mxu0 0
    %2443 = vmatpush1.bf16.msra.mxu0 0
    %2444 = vmatprep.subr.bf16.mxu0 0
    %2445 = vmatpush1.bf16.msra.mxu0 0
    %2446 = vmatprep.subr.bf16.mxu0 0
    %2447 = vmatpush1.bf16.msra.mxu0 0
    %2448 = vmatprep.subr.bf16.mxu0 0
    %2449 = vmatpush1.bf16.msra.mxu0 0
    %2450 = vmatprep.subr.bf16.mxu0 0
    %2451 = vmatpush1.bf16.msra.mxu0 0
    %2452 = vmatprep.mubr.bf16.mxu0 0
    %2453 = vmatmul.mubr.bf16.gmra.mrb[0].mxu0 %v2418
    %v2454 = vpop.f32.mrb[0].mxu0
    %v2455 = vadd.f32 0.0, %v2454
    %v2456 = vpop.f32.mrb[0].mxu0
    %v2457 = vadd.f32 0.0, %v2456
    %v2458 = vpop.f32.mrb[0].mxu0
    %v2459 = vpop.f32.mrb[0].mxu0
    %2460 = vdwg.mxu0
    %2461 = vmatprep.subr.bf16.mxu0 0
    %2462 = vmatpush1.bf16.msra.mxu0 %v599
    %2463 = vmatprep.subr.bf16.mxu0 0
    %2464 = vmatpush1.bf16.msra.mxu0 %v602
    %2465 = vmatprep.subr.bf16.mxu0 0
    %2466 = vmatpush1.bf16.msra.mxu0 %v605
    %2467 = vmatprep.subr.bf16.mxu0 0
    %2468 = vmatpush1.bf16.msra.mxu0 %v608
    %2469 = vmatprep.subr.bf16.mxu0 0
    %2470 = vmatpush1.bf16.msra.mxu0 %v611
    %2471 = vmatprep.subr.bf16.mxu0 0
    %2472 = vmatpush1.bf16.msra.mxu0 %v614
    %2473 = vmatprep.subr.bf16.mxu0 0
    %2474 = vmatpush1.bf16.msra.mxu0 %v617
    %2475 = vmatprep.subr.bf16.mxu0 0
    %2476 = vmatpush1.bf16.msra.mxu0 %v620
    %2477 = vmatprep.subr.bf16.mxu0 0
    %2478 = vmatpush1.bf16.msra.mxu0 0
    %2479 = vmatprep.subr.bf16.mxu0 0
    %2480 = vmatpush1.bf16.msra.mxu0 0
    %2481 = vmatprep.subr.bf16.mxu0 0
    %2482 = vmatpush1.bf16.msra.mxu0 0
    %2483 = vmatprep.subr.bf16.mxu0 0
    %2484 = vmatpush1.bf16.msra.mxu0 0
    %2485 = vmatprep.subr.bf16.mxu0 0
    %2486 = vmatpush1.bf16.msra.mxu0 0
    %2487 = vmatprep.subr.bf16.mxu0 0
    %2488 = vmatpush1.bf16.msra.mxu0 0
    %2489 = vmatprep.subr.bf16.mxu0 0
    %2490 = vmatpush1.bf16.msra.mxu0 0
    %2491 = vmatprep.subr.bf16.mxu0 0
    %2492 = vmatpush1.bf16.msra.mxu0 0
    %2493 = vmatprep.mubr.bf16.mxu0 0
    %2494 = vmatmul.mubr.bf16.gmra.mrb[0].mxu0 %v2418
    %v2495 = vpop.f32.mrb[0].mxu0
    %v2496 = vadd.f32 0.0, %v2495
    %v2497 = vpop.f32.mrb[0].mxu0
    %v2498 = vpop.f32.mrb[0].mxu0
    %v2499 = vpop.f32.mrb[0].mxu0
    %2500 = vdwg.mxu0
    %v2502 = vcombine.high %v2455, %v2455
    %v2504 = vunpack.c.l.s4 1966171168
    %v2505 = vunpack.c.0.s8 %v2504
    %v2506 = vlaneseq
    %v2507 = vshrl.u32 %v2506, 7
    %v2508 = vsub.s32 %v2505, %v2507
    %v2509 = vrot.slane %v2455, %v2508
    %v2511 = vunpack.c.l.s4 1966171168
    %v2512 = vunpack.c.0.s8 %v2511
    %v2513 = vlaneseq
    %v2514 = vshrl.u32 %v2513, 7
    %v2515 = vsub.s32 %v2512, %v2514
    %v2516 = vrot.slane %v2502, %v2515
    %v2517 = vcombine.high %v2509, %v2509
    %v2518 = vcombine.high %v2516, %v2516
    %v2520 = vunpack.c.l.s4 1966171168
    %v2521 = vunpack.c.0.s8 %v2520
    %v2522 = vlaneseq
    %v2523 = vshrl.u32 %v2522, 7
    %v2524 = vsub.s32 %v2521, %v2523
    %v2525 = vrot.slane %v2509, %v2524
    %v2527 = vunpack.c.l.s4 1966171168
    %v2528 = vunpack.c.0.s8 %v2527
    %v2529 = vlaneseq
    %v2530 = vshrl.u32 %v2529, 7
    %v2531 = vsub.s32 %v2528, %v2530
    %v2532 = vrot.slane %v2516, %v2531
    %v2534 = vunpack.c.l.s4 1966171168
    %v2535 = vunpack.c.0.s8 %v2534
    %v2536 = vlaneseq
    %v2537 = vshrl.u32 %v2536, 7
    %v2538 = vsub.s32 %v2535, %v2537
    %v2539 = vrot.slane %v2517, %v2538
    %v2541 = vunpack.c.l.s4 1966171168
    %v2542 = vunpack.c.0.s8 %v2541
    %v2543 = vlaneseq
    %v2544 = vshrl.u32 %v2543, 7
    %v2545 = vsub.s32 %v2542, %v2544
    %v2546 = vrot.slane %v2518, %v2545
    %v2547 = vcombine.high %v2525, %v2525
    %v2548 = vcombine.high %v2532, %v2532
    %v2549 = vcombine.high %v2539, %v2539
    %v2550 = vcombine.high %v2546, %v2546
    %v2559 = vadd.f32 %v2389, %v2525
    %v2560 = vadd.f32 %v2391, %v2539
    %v2561 = vadd.f32 %v2393, %v2547
    %v2562 = vadd.f32 %v2395, %v2549
    %v2563 = vadd.f32 %v2397, %v2532
    %v2564 = vadd.f32 %v2399, %v2546
    %v2565 = vadd.f32 %v2401, %v2548
    %v2566 = vadd.f32 %v2403, %v2550
    %v2567 = vxor.u32 %v2559, 2147483648
    %v2568 = vxor.u32 %v2560, 2147483648
    %v2569 = vxor.u32 %v2561, 2147483648
    %v2570 = vxor.u32 %v2562, 2147483648
    %v2571 = vxor.u32 %v2563, 2147483648
    %v2572 = vxor.u32 %v2564, 2147483648
    %v2573 = vxor.u32 %v2565, 2147483648
    %v2574 = vxor.u32 %v2566, 2147483648
    %v2575 = vmul.f32 %v2567, 1.442695
    %v2576 = vpow.pop %v2575
    %v2577 = vmul.f32 %v2568, 1.442695
    %v2578 = vpow.pop %v2577
    %v2579 = vmul.f32 %v2569, 1.442695
    %v2580 = vpow.pop %v2579
    %v2581 = vmul.f32 %v2570, 1.442695
    %v2582 = vpow.pop %v2581
    %v2583 = vmul.f32 %v2571, 1.442695
    %v2584 = vpow.pop %v2583
    %v2585 = vmul.f32 %v2572, 1.442695
    %v2586 = vpow.pop %v2585
    %v2587 = vmul.f32 %v2573, 1.442695
    %v2588 = vpow.pop %v2587
    %v2589 = vmul.f32 %v2574, 1.442695
    %v2590 = vpow.pop %v2589
    %v2591 = vadd.f32 %v2576, 1.0
    %v2592 = vadd.f32 %v2578, 1.0
    %v2593 = vadd.f32 %v2580, 1.0
    %v2594 = vadd.f32 %v2582, 1.0
    %v2595 = vadd.f32 %v2584, 1.0
    %v2596 = vadd.f32 %v2586, 1.0
    %v2597 = vadd.f32 %v2588, 1.0
    %v2598 = vadd.f32 %v2590, 1.0
    %v2599 = vrcp.pop %v2591
    %v2600 = vmul.f32 1.0, %v2599
    %v2601 = vrcp.pop %v2592
    %v2602 = vmul.f32 1.0, %v2601
    %v2603 = vrcp.pop %v2593
    %v2604 = vmul.f32 1.0, %v2603
    %v2605 = vrcp.pop %v2594
    %v2606 = vmul.f32 1.0, %v2605
    %v2607 = vrcp.pop %v2595
    %v2608 = vmul.f32 1.0, %v2607
    %v2609 = vrcp.pop %v2596
    %v2610 = vmul.f32 1.0, %v2609
    %v2611 = vrcp.pop %v2597
    %v2612 = vmul.f32 1.0, %v2611
    %v2613 = vrcp.pop %v2598
    %v2614 = vmul.f32 1.0, %v2613
    %v2623 = vrot.slane %v2389, 1
    %v2624 = vrot.slane %v2391, 1
    %v2625 = vrot.slane %v2393, 1
    %v2626 = vrot.slane %v2395, 1
    %v2627 = vrot.slane %v2397, 1
    %v2628 = vrot.slane %v2399, 1
    %v2629 = vrot.slane %v2401, 1
    %v2630 = vrot.slane %v2403, 1
    %v2640 = vcombine.high %v2457, %v2457
    %v2642 = vunpack.c.l.s4 1966171168
    %v2643 = vunpack.c.0.s8 %v2642
    %v2644 = vlaneseq
    %v2645 = vshrl.u32 %v2644, 7
    %v2646 = vsub.s32 %v2643, %v2645
    %v2647 = vrot.slane %v2457, %v2646
    %v2649 = vunpack.c.l.s4 1966171168
    %v2650 = vunpack.c.0.s8 %v2649
    %v2651 = vlaneseq
    %v2652 = vshrl.u32 %v2651, 7
    %v2653 = vsub.s32 %v2650, %v2652
    %v2654 = vrot.slane %v2640, %v2653
    %v2655 = vcombine.high %v2647, %v2647
    %v2656 = vcombine.high %v2654, %v2654
    %v2658 = vunpack.c.l.s4 1966171168
    %v2659 = vunpack.c.0.s8 %v2658
    %v2660 = vlaneseq
    %v2661 = vshrl.u32 %v2660, 7
    %v2662 = vsub.s32 %v2659, %v2661
    %v2663 = vrot.slane %v2647, %v2662
    %v2665 = vunpack.c.l.s4 1966171168
    %v2666 = vunpack.c.0.s8 %v2665
    %v2667 = vlaneseq
    %v2668 = vshrl.u32 %v2667, 7
    %v2669 = vsub.s32 %v2666, %v2668
    %v2670 = vrot.slane %v2654, %v2669
    %v2672 = vunpack.c.l.s4 1966171168
    %v2673 = vunpack.c.0.s8 %v2672
    %v2674 = vlaneseq
    %v2675 = vshrl.u32 %v2674, 7
    %v2676 = vsub.s32 %v2673, %v2675
    %v2677 = vrot.slane %v2655, %v2676
    %v2679 = vunpack.c.l.s4 1966171168
    %v2680 = vunpack.c.0.s8 %v2679
    %v2681 = vlaneseq
    %v2682 = vshrl.u32 %v2681, 7
    %v2683 = vsub.s32 %v2680, %v2682
    %v2684 = vrot.slane %v2656, %v2683
    %v2685 = vcombine.high %v2663, %v2663
    %v2686 = vcombine.high %v2670, %v2670
    %v2687 = vcombine.high %v2677, %v2677
    %v2688 = vcombine.high %v2684, %v2684
    %v2697 = vadd.f32 %v2623, %v2663
    %v2698 = vadd.f32 %v2624, %v2677
    %v2699 = vadd.f32 %v2625, %v2685
    %v2700 = vadd.f32 %v2626, %v2687
    %v2701 = vadd.f32 %v2627, %v2670
    %v2702 = vadd.f32 %v2628, %v2684
    %v2703 = vadd.f32 %v2629, %v2686
    %v2704 = vadd.f32 %v2630, %v2688
    %v2705 = vxor.u32 %v2697, 2147483648
    %v2706 = vxor.u32 %v2698, 2147483648
    %v2707 = vxor.u32 %v2699, 2147483648
    %v2708 = vxor.u32 %v2700, 2147483648
    %v2709 = vxor.u32 %v2701, 2147483648
    %v2710 = vxor.u32 %v2702, 2147483648
    %v2711 = vxor.u32 %v2703, 2147483648
    %v2712 = vxor.u32 %v2704, 2147483648
    %v2713 = vmul.f32 %v2705, 1.442695
    %v2714 = vpow.pop %v2713
    %v2715 = vmul.f32 %v2706, 1.442695
    %v2716 = vpow.pop %v2715
    %v2717 = vmul.f32 %v2707, 1.442695
    %v2718 = vpow.pop %v2717
    %v2719 = vmul.f32 %v2708, 1.442695
    %v2720 = vpow.pop %v2719
    %v2721 = vmul.f32 %v2709, 1.442695
    %v2722 = vpow.pop %v2721
    %v2723 = vmul.f32 %v2710, 1.442695
    %v2724 = vpow.pop %v2723
    %v2725 = vmul.f32 %v2711, 1.442695
    %v2726 = vpow.pop %v2725
    %v2727 = vmul.f32 %v2712, 1.442695
    %v2728 = vpow.pop %v2727
    %v2729 = vadd.f32 %v2714, 1.0
    %v2730 = vadd.f32 %v2716, 1.0
    %v2731 = vadd.f32 %v2718, 1.0
    %v2732 = vadd.f32 %v2720, 1.0
    %v2733 = vadd.f32 %v2722, 1.0
    %v2734 = vadd.f32 %v2724, 1.0
    %v2735 = vadd.f32 %v2726, 1.0
    %v2736 = vadd.f32 %v2728, 1.0
    %v2737 = vrcp.pop %v2729
    %v2738 = vmul.f32 1.0, %v2737
    %v2739 = vrcp.pop %v2730
    %v2740 = vmul.f32 1.0, %v2739
    %v2741 = vrcp.pop %v2731
    %v2742 = vmul.f32 1.0, %v2741
    %v2743 = vrcp.pop %v2732
    %v2744 = vmul.f32 1.0, %v2743
    %v2745 = vrcp.pop %v2733
    %v2746 = vmul.f32 1.0, %v2745
    %v2747 = vrcp.pop %v2734
    %v2748 = vmul.f32 1.0, %v2747
    %v2749 = vrcp.pop %v2735
    %v2750 = vmul.f32 1.0, %v2749
    %v2751 = vrcp.pop %v2736
    %v2752 = vmul.f32 1.0, %v2751
    %v2753 = vadd.f32 %v2496, %v982
    %v2755 = vcombine.high %v2753, %v2753
    %v2757 = vunpack.c.l.s4 1966171168
    %v2758 = vunpack.c.0.s8 %v2757
    %v2759 = vlaneseq
    %v2760 = vshrl.u32 %v2759, 7
    %v2761 = vsub.s32 %v2758, %v2760
    %v2762 = vrot.slane %v2753, %v2761
    %v2764 = vunpack.c.l.s4 1966171168
    %v2765 = vunpack.c.0.s8 %v2764
    %v2766 = vlaneseq
    %v2767 = vshrl.u32 %v2766, 7
    %v2768 = vsub.s32 %v2765, %v2767
    %v2769 = vrot.slane %v2755, %v2768
    %v2770 = vcombine.high %v2762, %v2762
    %v2771 = vcombine.high %v2769, %v2769
    %v2773 = vunpack.c.l.s4 1966171168
    %v2774 = vunpack.c.0.s8 %v2773
    %v2775 = vlaneseq
    %v2776 = vshrl.u32 %v2775, 7
    %v2777 = vsub.s32 %v2774, %v2776
    %v2778 = vrot.slane %v2762, %v2777
    %v2780 = vunpack.c.l.s4 1966171168
    %v2781 = vunpack.c.0.s8 %v2780
    %v2782 = vlaneseq
    %v2783 = vshrl.u32 %v2782, 7
    %v2784 = vsub.s32 %v2781, %v2783
    %v2785 = vrot.slane %v2769, %v2784
    %v2787 = vunpack.c.l.s4 1966171168
    %v2788 = vunpack.c.0.s8 %v2787
    %v2789 = vlaneseq
    %v2790 = vshrl.u32 %v2789, 7
    %v2791 = vsub.s32 %v2788, %v2790
    %v2792 = vrot.slane %v2770, %v2791
    %v2794 = vunpack.c.l.s4 1966171168
    %v2795 = vunpack.c.0.s8 %v2794
    %v2796 = vlaneseq
    %v2797 = vshrl.u32 %v2796, 7
    %v2798 = vsub.s32 %v2795, %v2797
    %v2799 = vrot.slane %v2771, %v2798
    %v2800 = vcombine.high %v2778, %v2778
    %v2801 = vcombine.high %v2785, %v2785
    %v2802 = vcombine.high %v2792, %v2792
    %v2803 = vcombine.high %v2799, %v2799
    %v2812 = vmul.f32 %v2600, %v2778
    %v2813 = vmul.f32 %v2602, %v2792
    %v2814 = vmul.f32 %v2604, %v2800
    %v2815 = vmul.f32 %v2606, %v2802
    %v2816 = vmul.f32 %v2608, %v2785
    %v2817 = vmul.f32 %v2610, %v2799
    %v2818 = vmul.f32 %v2612, %v2801
    %v2819 = vmul.f32 %v2614, %v2803
    %v2820 = vrot.slane %v2389, 2
    %v2821 = vrot.slane %v2391, 2
    %v2822 = vrot.slane %v2393, 2
    %v2823 = vrot.slane %v2395, 2
    %v2824 = vrot.slane %v2397, 2
    %v2825 = vrot.slane %v2399, 2
    %v2826 = vrot.slane %v2401, 2
    %v2827 = vrot.slane %v2403, 2
    %v2836 = vadd.f32 %v2820, %v2812
    %v2837 = vadd.f32 %v2821, %v2813
    %v2838 = vadd.f32 %v2822, %v2814
    %v2839 = vadd.f32 %v2823, %v2815
    %v2840 = vadd.f32 %v2824, %v2816
    %v2841 = vadd.f32 %v2825, %v2817
    %v2842 = vadd.f32 %v2826, %v2818
    %v2843 = vadd.f32 %v2827, %v2819
    %v2844 = vtanh.pop %v2836
    %v2845 = vtanh.pop %v2837
    %v2846 = vtanh.pop %v2838
    %v2847 = vtanh.pop %v2839
    %v2848 = vtanh.pop %v2840
    %v2849 = vtanh.pop %v2841
    %v2850 = vtanh.pop %v2842
    %v2851 = vtanh.pop %v2843
    %v2852 = vsub.f32 1.0, %v2738
    %v2853 = vsub.f32 1.0, %v2740
    %v2854 = vsub.f32 1.0, %v2742
    %v2855 = vsub.f32 1.0, %v2744
    %v2856 = vsub.f32 1.0, %v2746
    %v2857 = vsub.f32 1.0, %v2748
    %v2858 = vsub.f32 1.0, %v2750
    %v2859 = vsub.f32 1.0, %v2752
    %v2860 = vmul.f32 %v2852, %v2844
    %v2861 = vmul.f32 %v2853, %v2845
    %v2862 = vmul.f32 %v2854, %v2846
    %v2863 = vmul.f32 %v2855, %v2847
    %v2864 = vmul.f32 %v2856, %v2848
    %v2865 = vmul.f32 %v2857, %v2849
    %v2866 = vmul.f32 %v2858, %v2850
    %v2867 = vmul.f32 %v2859, %v2851
    %v2868 = vmul.f32 %v2738, %v2305
    %v2869 = vmul.f32 %v2740, %v2306
    %v2870 = vmul.f32 %v2742, %v2307
    %v2871 = vmul.f32 %v2744, %v2308
    %v2872 = vmul.f32 %v2746, %v2309
    %v2873 = vmul.f32 %v2748, %v2310
    %v2874 = vmul.f32 %v2750, %v2311
    %v2875 = vmul.f32 %v2752, %v2312
    %v2876 = vadd.f32 %v2860, %v2868
    %v2877 = vadd.f32 %v2861, %v2869
    %v2878 = vadd.f32 %v2862, %v2870
    %v2879 = vadd.f32 %v2863, %v2871
    %v2880 = vadd.f32 %v2864, %v2872
    %v2881 = vadd.f32 %v2865, %v2873
    %v2882 = vadd.f32 %v2866, %v2874
    %v2883 = vadd.f32 %v2867, %v2875
    %v2884 = vpack.c.bf16 %v2876, %v2876
    %v2885 = vpack.c.bf16 %v2877, %v2877
    %v2886 = vpack.c.bf16 %v2878, %v2878
    %v2887 = vpack.c.bf16 %v2879, %v2879
    %v2888 = vpack.c.bf16 %v2880, %v2880
    %v2889 = vpack.c.bf16 %v2881, %v2881
    %v2890 = vpack.c.bf16 %v2882, %v2882
    %v2891 = vpack.c.bf16 %v2883, %v2883
    %v2900 = vunpack.c.l.b16 %v2884
    %v2901 = vunpack.c.l.b16 %v2885
    %v2902 = vunpack.c.l.b16 %v2886
    %v2903 = vunpack.c.l.b16 %v2887
    %v2904 = vunpack.c.l.b16 %v2888
    %v2905 = vunpack.c.l.b16 %v2889
    %v2906 = vunpack.c.l.b16 %v2890
    %v2907 = vunpack.c.l.b16 %v2891
    %v2908 = vpack.c.b16 %v2900, %v2900
    %v2909 = vpack.c.b16 %v2901, %v2901
    %v2910 = vpack.c.b16 %v2902, %v2902
    %v2911 = vpack.c.b16 %v2903, %v2903
    %v2912 = vpack.c.b16 %v2904, %v2904
    %v2913 = vpack.c.b16 %v2905, %v2905
    %v2914 = vpack.c.b16 %v2906, %v2906
    %v2915 = vpack.c.b16 %v2907, %v2907
    %v2917 = vshll.u32 %v2908, 16
    %v2919 = vrot.slane %v2917, 7
    %v2921 = vshll.u32 %v2909, 16
    %v2923 = vrot.slane %v2921, 7
    %v2925 = vshll.u32 %v2910, 16
    %v2927 = vrot.slane %v2925, 7
    %v2929 = vshll.u32 %v2911, 16
    %v2931 = vrot.slane %v2929, 7
    %v2933 = vshll.u32 %v2912, 16
    %v2935 = vrot.slane %v2933, 7
    %v2937 = vshll.u32 %v2913, 16
    %v2939 = vrot.slane %v2937, 7
    %v2941 = vshll.u32 %v2914, 16
    %v2943 = vrot.slane %v2941, 7
    %v2945 = vshll.u32 %v2915, 16
    %v2947 = vrot.slane %v2945, 7
    %vm2956 = vsmask.f32 7942
    %vm2957 = vmand %vm2361, %vm2956
    %v2958 = vld [vmem:[#allocation13] sm:$0x2]
    %v2959 = vsel %vm2957, %v2919, %v2958
    %2960 = vst [vmem:[#allocation13] sm:$0x2] %v2959
    %v2961 = vld [vmem:[#allocation13 + $0x8] sm:$0x2]
    %v2962 = vsel %vm2957, %v2923, %v2961
    %2963 = vst [vmem:[#allocation13 + $0x8] sm:$0x2] %v2962
    %v2964 = vld [vmem:[#allocation13 + $0x10] sm:$0x2]
    %v2965 = vsel %vm2957, %v2927, %v2964
    %2966 = vst [vmem:[#allocation13 + $0x10] sm:$0x2] %v2965
    %v2967 = vld [vmem:[#allocation13 + $0x18] sm:$0x2]
    %v2968 = vsel %vm2957, %v2931, %v2967
    %2969 = vst [vmem:[#allocation13 + $0x18] sm:$0x2] %v2968
    %v2970 = vld [vmem:[#allocation13 + $0x20] sm:$0x2]
    %v2971 = vsel %vm2957, %v2935, %v2970
    %2972 = vst [vmem:[#allocation13 + $0x20] sm:$0x2] %v2971
    %v2973 = vld [vmem:[#allocation13 + $0x28] sm:$0x2]
    %v2974 = vsel %vm2957, %v2939, %v2973
    %2975 = vst [vmem:[#allocation13 + $0x28] sm:$0x2] %v2974
    %v2976 = vld [vmem:[#allocation13 + $0x30] sm:$0x2]
    %v2977 = vsel %vm2957, %v2943, %v2976
    %2978 = vst [vmem:[#allocation13 + $0x30] sm:$0x2] %v2977
    %v2979 = vld [vmem:[#allocation13 + $0x38] sm:$0x2]
    %v2980 = vsel %vm2957, %v2947, %v2979
    %2981 = vst [vmem:[#allocation13 + $0x38] sm:$0x2] %v2980
    %s2982 = scalar_lea.vmem [#allocation3], 4
    %v2983 = vld [vmem:[%s2982] ss:$8 sm:$0x7]
    %s2984 = scalar_lea.vmem [#allocation3], 52
    %v2985 = vld [vmem:[%s2984] ss:$8 sm:$0x7]
    %s2986 = scalar_lea.vmem [#allocation3], 100
    %v2987 = vld [vmem:[%s2986] ss:$8 sm:$0x7]
    %s2988 = scalar_lea.vmem [#allocation3], 148
    %v2989 = vld [vmem:[%s2988] ss:$8 sm:$0x7]
    %s2990 = scalar_lea.vmem [#allocation3], 196
    %v2991 = vld [vmem:[%s2990] ss:$8 sm:$0x7]
    %s2992 = scalar_lea.vmem [#allocation3], 244
    %v2993 = vld [vmem:[%s2992] ss:$8 sm:$0x7]
    %s2994 = scalar_lea.vmem [#allocation3], 292
    %v2995 = vld [vmem:[%s2994] ss:$8 sm:$0x7]
    %s2996 = scalar_lea.vmem [#allocation3], 340
    %v2997 = vld [vmem:[%s2996] ss:$8 sm:$0x7]
    %v2998 = vrot.slane %v2901, 7
    %v2999 = vsel %vm1241, %v2998, %v2900
    %v3000 = vrot.slane %v2902, 6
    %v3001 = vsel %vm1244, %v3000, %v2999
    %v3002 = vrot.slane %v2903, 5
    %v3003 = vsel %vm1247, %v3002, %v3001
    %v3004 = vrot.slane %v2904, 4
    %v3005 = vsel %vm1250, %v3004, %v3003
    %v3006 = vrot.slane %v2905, 3
    %v3007 = vsel %vm1253, %v3006, %v3005
    %v3008 = vrot.slane %v2906, 2
    %v3009 = vsel %vm1256, %v3008, %v3007
    %v3010 = vrot.slane %v2907, 1
    %v3011 = vsel %vm1259, %v3010, %v3009
    %v3012 = vpack.c.b16 %v3011, %v3011
    %3014 = vmatprep.subr.bf16.mxu0 %v598
    %3015 = vmatpush1.bf16.msra.mxu0 %v597
    %3016 = vmatprep.subr.bf16.mxu0 %v601
    %3017 = vmatpush1.bf16.msra.mxu0 %v600
    %3018 = vmatprep.subr.bf16.mxu0 %v604
    %3019 = vmatpush1.bf16.msra.mxu0 %v603
    %3020 = vmatprep.subr.bf16.mxu0 %v607
    %3021 = vmatpush1.bf16.msra.mxu0 %v606
    %3022 = vmatprep.subr.bf16.mxu0 %v610
    %3023 = vmatpush1.bf16.msra.mxu0 %v609
    %3024 = vmatprep.subr.bf16.mxu0 %v613
    %3025 = vmatpush1.bf16.msra.mxu0 %v612
    %3026 = vmatprep.subr.bf16.mxu0 %v616
    %3027 = vmatpush1.bf16.msra.mxu0 %v615
    %3028 = vmatprep.subr.bf16.mxu0 %v619
    %3029 = vmatpush1.bf16.msra.mxu0 %v618
    %3030 = vmatprep.subr.bf16.mxu0 0
    %3031 = vmatpush1.bf16.msra.mxu0 0
    %3032 = vmatprep.subr.bf16.mxu0 0
    %3033 = vmatpush1.bf16.msra.mxu0 0
    %3034 = vmatprep.subr.bf16.mxu0 0
    %3035 = vmatpush1.bf16.msra.mxu0 0
    %3036 = vmatprep.subr.bf16.mxu0 0
    %3037 = vmatpush1.bf16.msra.mxu0 0
    %3038 = vmatprep.subr.bf16.mxu0 0
    %3039 = vmatpush1.bf16.msra.mxu0 0
    %3040 = vmatprep.subr.bf16.mxu0 0
    %3041 = vmatpush1.bf16.msra.mxu0 0
    %3042 = vmatprep.subr.bf16.mxu0 0
    %3043 = vmatpush1.bf16.msra.mxu0 0
    %3044 = vmatprep.subr.bf16.mxu0 0
    %3045 = vmatpush1.bf16.msra.mxu0 0
    %3046 = vmatprep.mubr.bf16.mxu0 0
    %3047 = vmatmul.mubr.bf16.gmra.mrb[0].mxu0 %v3012
    %v3048 = vpop.f32.mrb[0].mxu0
    %v3049 = vadd.f32 0.0, %v3048
    %v3050 = vpop.f32.mrb[0].mxu0
    %v3051 = vadd.f32 0.0, %v3050
    %v3052 = vpop.f32.mrb[0].mxu0
    %v3053 = vpop.f32.mrb[0].mxu0
    %3054 = vdwg.mxu0
    %3055 = vmatprep.subr.bf16.mxu0 0
    %3056 = vmatpush1.bf16.msra.mxu0 %v599
    %3057 = vmatprep.subr.bf16.mxu0 0
    %3058 = vmatpush1.bf16.msra.mxu0 %v602
    %3059 = vmatprep.subr.bf16.mxu0 0
    %3060 = vmatpush1.bf16.msra.mxu0 %v605
    %3061 = vmatprep.subr.bf16.mxu0 0
    %3062 = vmatpush1.bf16.msra.mxu0 %v608
    %3063 = vmatprep.subr.bf16.mxu0 0
    %3064 = vmatpush1.bf16.msra.mxu0 %v611
    %3065 = vmatprep.subr.bf16.mxu0 0
    %3066 = vmatpush1.bf16.msra.mxu0 %v614
    %3067 = vmatprep.subr.bf16.mxu0 0
    %3068 = vmatpush1.bf16.msra.mxu0 %v617
    %3069 = vmatprep.subr.bf16.mxu0 0
    %3070 = vmatpush1.bf16.msra.mxu0 %v620
    %3071 = vmatprep.subr.bf16.mxu0 0
    %3072 = vmatpush1.bf16.msra.mxu0 0
    %3073 = vmatprep.subr.bf16.mxu0 0
    %3074 = vmatpush1.bf16.msra.mxu0 0
    %3075 = vmatprep.subr.bf16.mxu0 0
    %3076 = vmatpush1.bf16.msra.mxu0 0
    %3077 = vmatprep.subr.bf16.mxu0 0
    %3078 = vmatpush1.bf16.msra.mxu0 0
    %3079 = vmatprep.subr.bf16.mxu0 0
    %3080 = vmatpush1.bf16.msra.mxu0 0
    %3081 = vmatprep.subr.bf16.mxu0 0
    %3082 = vmatpush1.bf16.msra.mxu0 0
    %3083 = vmatprep.subr.bf16.mxu0 0
    %3084 = vmatpush1.bf16.msra.mxu0 0
    %3085 = vmatprep.subr.bf16.mxu0 0
    %3086 = vmatpush1.bf16.msra.mxu0 0
    %3087 = vmatprep.mubr.bf16.mxu0 0
    %3088 = vmatmul.mubr.bf16.gmra.mrb[0].mxu0 %v3012
    %v3089 = vpop.f32.mrb[0].mxu0
    %v3090 = vadd.f32 0.0, %v3089
    %v3091 = vpop.f32.mrb[0].mxu0
    %v3092 = vpop.f32.mrb[0].mxu0
    %v3093 = vpop.f32.mrb[0].mxu0
    %3094 = vdwg.mxu0
    %v3096 = vcombine.high %v3049, %v3049
    %v3098 = vunpack.c.l.s4 1966171168
    %v3099 = vunpack.c.0.s8 %v3098
    %v3100 = vlaneseq
    %v3101 = vshrl.u32 %v3100, 7
    %v3102 = vsub.s32 %v3099, %v3101
    %v3103 = vrot.slane %v3049, %v3102
    %v3105 = vunpack.c.l.s4 1966171168
    %v3106 = vunpack.c.0.s8 %v3105
    %v3107 = vlaneseq
    %v3108 = vshrl.u32 %v3107, 7
    %v3109 = vsub.s32 %v3106, %v3108
    %v3110 = vrot.slane %v3096, %v3109
    %v3111 = vcombine.high %v3103, %v3103
    %v3112 = vcombine.high %v3110, %v3110
    %v3114 = vunpack.c.l.s4 1966171168
    %v3115 = vunpack.c.0.s8 %v3114
    %v3116 = vlaneseq
    %v3117 = vshrl.u32 %v3116, 7
    %v3118 = vsub.s32 %v3115, %v3117
    %v3119 = vrot.slane %v3103, %v3118
    %v3121 = vunpack.c.l.s4 1966171168
    %v3122 = vunpack.c.0.s8 %v3121
    %v3123 = vlaneseq
    %v3124 = vshrl.u32 %v3123, 7
    %v3125 = vsub.s32 %v3122, %v3124
    %v3126 = vrot.slane %v3110, %v3125
    %v3128 = vunpack.c.l.s4 1966171168
    %v3129 = vunpack.c.0.s8 %v3128
    %v3130 = vlaneseq
    %v3131 = vshrl.u32 %v3130, 7
    %v3132 = vsub.s32 %v3129, %v3131
    %v3133 = vrot.slane %v3111, %v3132
    %v3135 = vunpack.c.l.s4 1966171168
    %v3136 = vunpack.c.0.s8 %v3135
    %v3137 = vlaneseq
    %v3138 = vshrl.u32 %v3137, 7
    %v3139 = vsub.s32 %v3136, %v3138
    %v3140 = vrot.slane %v3112, %v3139
    %v3141 = vcombine.high %v3119, %v3119
    %v3142 = vcombine.high %v3126, %v3126
    %v3143 = vcombine.high %v3133, %v3133
    %v3144 = vcombine.high %v3140, %v3140
    %v3153 = vadd.f32 %v2983, %v3119
    %v3154 = vadd.f32 %v2985, %v3133
    %v3155 = vadd.f32 %v2987, %v3141
    %v3156 = vadd.f32 %v2989, %v3143
    %v3157 = vadd.f32 %v2991, %v3126
    %v3158 = vadd.f32 %v2993, %v3140
    %v3159 = vadd.f32 %v2995, %v3142
    %v3160 = vadd.f32 %v2997, %v3144
    %v3161 = vxor.u32 %v3153, 2147483648
    %v3162 = vxor.u32 %v3154, 2147483648
    %v3163 = vxor.u32 %v3155, 2147483648
    %v3164 = vxor.u32 %v3156, 2147483648
    %v3165 = vxor.u32 %v3157, 2147483648
    %v3166 = vxor.u32 %v3158, 2147483648
    %v3167 = vxor.u32 %v3159, 2147483648
    %v3168 = vxor.u32 %v3160, 2147483648
    %v3169 = vmul.f32 %v3161, 1.442695
    %v3170 = vpow.pop %v3169
    %v3171 = vmul.f32 %v3162, 1.442695
    %v3172 = vpow.pop %v3171
    %v3173 = vmul.f32 %v3163, 1.442695
    %v3174 = vpow.pop %v3173
    %v3175 = vmul.f32 %v3164, 1.442695
    %v3176 = vpow.pop %v3175
    %v3177 = vmul.f32 %v3165, 1.442695
    %v3178 = vpow.pop %v3177
    %v3179 = vmul.f32 %v3166, 1.442695
    %v3180 = vpow.pop %v3179
    %v3181 = vmul.f32 %v3167, 1.442695
    %v3182 = vpow.pop %v3181
    %v3183 = vmul.f32 %v3168, 1.442695
    %v3184 = vpow.pop %v3183
    %v3185 = vadd.f32 %v3170, 1.0
    %v3186 = vadd.f32 %v3172, 1.0
    %v3187 = vadd.f32 %v3174, 1.0
    %v3188 = vadd.f32 %v3176, 1.0
    %v3189 = vadd.f32 %v3178, 1.0
    %v3190 = vadd.f32 %v3180, 1.0
    %v3191 = vadd.f32 %v3182, 1.0
    %v3192 = vadd.f32 %v3184, 1.0
    %v3193 = vrcp.pop %v3185
    %v3194 = vmul.f32 1.0, %v3193
    %v3195 = vrcp.pop %v3186
    %v3196 = vmul.f32 1.0, %v3195
    %v3197 = vrcp.pop %v3187
    %v3198 = vmul.f32 1.0, %v3197
    %v3199 = vrcp.pop %v3188
    %v3200 = vmul.f32 1.0, %v3199
    %v3201 = vrcp.pop %v3189
    %v3202 = vmul.f32 1.0, %v3201
    %v3203 = vrcp.pop %v3190
    %v3204 = vmul.f32 1.0, %v3203
    %v3205 = vrcp.pop %v3191
    %v3206 = vmul.f32 1.0, %v3205
    %v3207 = vrcp.pop %v3192
    %v3208 = vmul.f32 1.0, %v3207
    %v3217 = vrot.slane %v2983, 1
    %v3218 = vrot.slane %v2985, 1
    %v3219 = vrot.slane %v2987, 1
    %v3220 = vrot.slane %v2989, 1
    %v3221 = vrot.slane %v2991, 1
    %v3222 = vrot.slane %v2993, 1
    %v3223 = vrot.slane %v2995, 1
    %v3224 = vrot.slane %v2997, 1
    %v3234 = vcombine.high %v3051, %v3051
    %v3236 = vunpack.c.l.s4 1966171168
    %v3237 = vunpack.c.0.s8 %v3236
    %v3238 = vlaneseq
    %v3239 = vshrl.u32 %v3238, 7
    %v3240 = vsub.s32 %v3237, %v3239
    %v3241 = vrot.slane %v3051, %v3240
    %v3243 = vunpack.c.l.s4 1966171168
    %v3244 = vunpack.c.0.s8 %v3243
    %v3245 = vlaneseq
    %v3246 = vshrl.u32 %v3245, 7
    %v3247 = vsub.s32 %v3244, %v3246
    %v3248 = vrot.slane %v3234, %v3247
    %v3249 = vcombine.high %v3241, %v3241
    %v3250 = vcombine.high %v3248, %v3248
    %v3252 = vunpack.c.l.s4 1966171168
    %v3253 = vunpack.c.0.s8 %v3252
    %v3254 = vlaneseq
    %v3255 = vshrl.u32 %v3254, 7
    %v3256 = vsub.s32 %v3253, %v3255
    %v3257 = vrot.slane %v3241, %v3256
    %v3259 = vunpack.c.l.s4 1966171168
    %v3260 = vunpack.c.0.s8 %v3259
    %v3261 = vlaneseq
    %v3262 = vshrl.u32 %v3261, 7
    %v3263 = vsub.s32 %v3260, %v3262
    %v3264 = vrot.slane %v3248, %v3263
    %v3266 = vunpack.c.l.s4 1966171168
    %v3267 = vunpack.c.0.s8 %v3266
    %v3268 = vlaneseq
    %v3269 = vshrl.u32 %v3268, 7
    %v3270 = vsub.s32 %v3267, %v3269
    %v3271 = vrot.slane %v3249, %v3270
    %v3273 = vunpack.c.l.s4 1966171168
    %v3274 = vunpack.c.0.s8 %v3273
    %v3275 = vlaneseq
    %v3276 = vshrl.u32 %v3275, 7
    %v3277 = vsub.s32 %v3274, %v3276
    %v3278 = vrot.slane %v3250, %v3277
    %v3279 = vcombine.high %v3257, %v3257
    %v3280 = vcombine.high %v3264, %v3264
    %v3281 = vcombine.high %v3271, %v3271
    %v3282 = vcombine.high %v3278, %v3278
    %v3291 = vadd.f32 %v3217, %v3257
    %v3292 = vadd.f32 %v3218, %v3271
    %v3293 = vadd.f32 %v3219, %v3279
    %v3294 = vadd.f32 %v3220, %v3281
    %v3295 = vadd.f32 %v3221, %v3264
    %v3296 = vadd.f32 %v3222, %v3278
    %v3297 = vadd.f32 %v3223, %v3280
    %v3298 = vadd.f32 %v3224, %v3282
    %v3299 = vxor.u32 %v3291, 2147483648
    %v3300 = vxor.u32 %v3292, 2147483648
    %v3301 = vxor.u32 %v3293, 2147483648
    %v3302 = vxor.u32 %v3294, 2147483648
    %v3303 = vxor.u32 %v3295, 2147483648
    %v3304 = vxor.u32 %v3296, 2147483648
    %v3305 = vxor.u32 %v3297, 2147483648
    %v3306 = vxor.u32 %v3298, 2147483648
    %v3307 = vmul.f32 %v3299, 1.442695
    %v3308 = vpow.pop %v3307
    %v3309 = vmul.f32 %v3300, 1.442695
    %v3310 = vpow.pop %v3309
    %v3311 = vmul.f32 %v3301, 1.442695
    %v3312 = vpow.pop %v3311
    %v3313 = vmul.f32 %v3302, 1.442695
    %v3314 = vpow.pop %v3313
    %v3315 = vmul.f32 %v3303, 1.442695
    %v3316 = vpow.pop %v3315
    %v3317 = vmul.f32 %v3304, 1.442695
    %v3318 = vpow.pop %v3317
    %v3319 = vmul.f32 %v3305, 1.442695
    %v3320 = vpow.pop %v3319
    %v3321 = vmul.f32 %v3306, 1.442695
    %v3322 = vpow.pop %v3321
    %v3323 = vadd.f32 %v3308, 1.0
    %v3324 = vadd.f32 %v3310, 1.0
    %v3325 = vadd.f32 %v3312, 1.0
    %v3326 = vadd.f32 %v3314, 1.0
    %v3327 = vadd.f32 %v3316, 1.0
    %v3328 = vadd.f32 %v3318, 1.0
    %v3329 = vadd.f32 %v3320, 1.0
    %v3330 = vadd.f32 %v3322, 1.0
    %v3331 = vrcp.pop %v3323
    %v3332 = vmul.f32 1.0, %v3331
    %v3333 = vrcp.pop %v3324
    %v3334 = vmul.f32 1.0, %v3333
    %v3335 = vrcp.pop %v3325
    %v3336 = vmul.f32 1.0, %v3335
    %v3337 = vrcp.pop %v3326
    %v3338 = vmul.f32 1.0, %v3337
    %v3339 = vrcp.pop %v3327
    %v3340 = vmul.f32 1.0, %v3339
    %v3341 = vrcp.pop %v3328
    %v3342 = vmul.f32 1.0, %v3341
    %v3343 = vrcp.pop %v3329
    %v3344 = vmul.f32 1.0, %v3343
    %v3345 = vrcp.pop %v3330
    %v3346 = vmul.f32 1.0, %v3345
    %v3347 = vadd.f32 %v3090, %v982
    %v3349 = vcombine.high %v3347, %v3347
    %v3351 = vunpack.c.l.s4 1966171168
    %v3352 = vunpack.c.0.s8 %v3351
    %v3353 = vlaneseq
    %v3354 = vshrl.u32 %v3353, 7
    %v3355 = vsub.s32 %v3352, %v3354
    %v3356 = vrot.slane %v3347, %v3355
    %v3358 = vunpack.c.l.s4 1966171168
    %v3359 = vunpack.c.0.s8 %v3358
    %v3360 = vlaneseq
    %v3361 = vshrl.u32 %v3360, 7
    %v3362 = vsub.s32 %v3359, %v3361
    %v3363 = vrot.slane %v3349, %v3362
    %v3364 = vcombine.high %v3356, %v3356
    %v3365 = vcombine.high %v3363, %v3363
    %v3367 = vunpack.c.l.s4 1966171168
    %v3368 = vunpack.c.0.s8 %v3367
    %v3369 = vlaneseq
    %v3370 = vshrl.u32 %v3369, 7
    %v3371 = vsub.s32 %v3368, %v3370
    %v3372 = vrot.slane %v3356, %v3371
    %v3374 = vunpack.c.l.s4 1966171168
    %v3375 = vunpack.c.0.s8 %v3374
    %v3376 = vlaneseq
    %v3377 = vshrl.u32 %v3376, 7
    %v3378 = vsub.s32 %v3375, %v3377
    %v3379 = vrot.slane %v3363, %v3378
    %v3381 = vunpack.c.l.s4 1966171168
    %v3382 = vunpack.c.0.s8 %v3381
    %v3383 = vlaneseq
    %v3384 = vshrl.u32 %v3383, 7
    %v3385 = vsub.s32 %v3382, %v3384
    %v3386 = vrot.slane %v3364, %v3385
    %v3388 = vunpack.c.l.s4 1966171168
    %v3389 = vunpack.c.0.s8 %v3388
    %v3390 = vlaneseq
    %v3391 = vshrl.u32 %v3390, 7
    %v3392 = vsub.s32 %v3389, %v3391
    %v3393 = vrot.slane %v3365, %v3392
    %v3394 = vcombine.high %v3372, %v3372
    %v3395 = vcombine.high %v3379, %v3379
    %v3396 = vcombine.high %v3386, %v3386
    %v3397 = vcombine.high %v3393, %v3393
    %v3406 = vmul.f32 %v3194, %v3372
    %v3407 = vmul.f32 %v3196, %v3386
    %v3408 = vmul.f32 %v3198, %v3394
    %v3409 = vmul.f32 %v3200, %v3396
    %v3410 = vmul.f32 %v3202, %v3379
    %v3411 = vmul.f32 %v3204, %v3393
    %v3412 = vmul.f32 %v3206, %v3395
    %v3413 = vmul.f32 %v3208, %v3397
    %v3414 = vrot.slane %v2983, 2
    %v3415 = vrot.slane %v2985, 2
    %v3416 = vrot.slane %v2987, 2
    %v3417 = vrot.slane %v2989, 2
    %v3418 = vrot.slane %v2991, 2
    %v3419 = vrot.slane %v2993, 2
    %v3420 = vrot.slane %v2995, 2
    %v3421 = vrot.slane %v2997, 2
    %v3430 = vadd.f32 %v3414, %v3406
    %v3431 = vadd.f32 %v3415, %v3407
    %v3432 = vadd.f32 %v3416, %v3408
    %v3433 = vadd.f32 %v3417, %v3409
    %v3434 = vadd.f32 %v3418, %v3410
    %v3435 = vadd.f32 %v3419, %v3411
    %v3436 = vadd.f32 %v3420, %v3412
    %v3437 = vadd.f32 %v3421, %v3413
    %v3438 = vtanh.pop %v3430
    %v3439 = vtanh.pop %v3431
    %v3440 = vtanh.pop %v3432
    %v3441 = vtanh.pop %v3433
    %v3442 = vtanh.pop %v3434
    %v3443 = vtanh.pop %v3435
    %v3444 = vtanh.pop %v3436
    %v3445 = vtanh.pop %v3437
    %v3446 = vsub.f32 1.0, %v3332
    %v3447 = vsub.f32 1.0, %v3334
    %v3448 = vsub.f32 1.0, %v3336
    %v3449 = vsub.f32 1.0, %v3338
    %v3450 = vsub.f32 1.0, %v3340
    %v3451 = vsub.f32 1.0, %v3342
    %v3452 = vsub.f32 1.0, %v3344
    %v3453 = vsub.f32 1.0, %v3346
    %v3454 = vmul.f32 %v3446, %v3438
    %v3455 = vmul.f32 %v3447, %v3439
    %v3456 = vmul.f32 %v3448, %v3440
    %v3457 = vmul.f32 %v3449, %v3441
    %v3458 = vmul.f32 %v3450, %v3442
    %v3459 = vmul.f32 %v3451, %v3443
    %v3460 = vmul.f32 %v3452, %v3444
    %v3461 = vmul.f32 %v3453, %v3445
    %v3462 = vmul.f32 %v3332, %v2876
    %v3463 = vmul.f32 %v3334, %v2877
    %v3464 = vmul.f32 %v3336, %v2878
    %v3465 = vmul.f32 %v3338, %v2879
    %v3466 = vmul.f32 %v3340, %v2880
    %v3467 = vmul.f32 %v3342, %v2881
    %v3468 = vmul.f32 %v3344, %v2882
    %v3469 = vmul.f32 %v3346, %v2883
    %v3470 = vadd.f32 %v3454, %v3462
    %v3471 = vadd.f32 %v3455, %v3463
    %v3472 = vadd.f32 %v3456, %v3464
    %v3473 = vadd.f32 %v3457, %v3465
    %v3474 = vadd.f32 %v3458, %v3466
    %v3475 = vadd.f32 %v3459, %v3467
    %v3476 = vadd.f32 %v3460, %v3468
    %v3477 = vadd.f32 %v3461, %v3469
    %v3478 = vpack.c.bf16 %v3470, %v3470
    %v3479 = vpack.c.bf16 %v3471, %v3471
    %v3480 = vpack.c.bf16 %v3472, %v3472
    %v3481 = vpack.c.bf16 %v3473, %v3473
    %v3482 = vpack.c.bf16 %v3474, %v3474
    %v3483 = vpack.c.bf16 %v3475, %v3475
    %v3484 = vpack.c.bf16 %v3476, %v3476
    %v3485 = vpack.c.bf16 %v3477, %v3477
    %v3494 = vunpack.c.l.b16 %v3478
    %v3495 = vunpack.c.l.b16 %v3479
    %v3496 = vunpack.c.l.b16 %v3480
    %v3497 = vunpack.c.l.b16 %v3481
    %v3498 = vunpack.c.l.b16 %v3482
    %v3499 = vunpack.c.l.b16 %v3483
    %v3500 = vunpack.c.l.b16 %v3484
    %v3501 = vunpack.c.l.b16 %v3485
    %v3502 = vpack.c.b16 %v3494, %v3494
    %v3503 = vpack.c.b16 %v3495, %v3495
    %v3504 = vpack.c.b16 %v3496, %v3496
    %v3505 = vpack.c.b16 %v3497, %v3497
    %v3506 = vpack.c.b16 %v3498, %v3498
    %v3507 = vpack.c.b16 %v3499, %v3499
    %v3508 = vpack.c.b16 %v3500, %v3500
    %v3509 = vpack.c.b16 %v3501, %v3501
    %v3510 = vrot.slane %v3502, 6
    %v3511 = vrot.slane %v3503, 6
    %v3512 = vrot.slane %v3504, 6
    %v3513 = vrot.slane %v3505, 6
    %v3514 = vrot.slane %v3506, 6
    %v3515 = vrot.slane %v3507, 6
    %v3516 = vrot.slane %v3508, 6
    %v3517 = vrot.slane %v3509, 6
    %vm3526 = vcmask 1042434
    %vm3527 = vsmask.f32 2304
    %vm3528 = vmand %vm3526, %vm3527
    %v3529 = vld [vmem:[#allocation13] sm:$0x4]
    %v3530 = vsel %vm3528, %v3510, %v3529
    %3531 = vst [vmem:[#allocation13] sm:$0x4] %v3530
    %v3532 = vld [vmem:[#allocation13 + $0x8] sm:$0x4]
    %v3533 = vsel %vm3528, %v3511, %v3532
    %3534 = vst [vmem:[#allocation13 + $0x8] sm:$0x4] %v3533
    %v3535 = vld [vmem:[#allocation13 + $0x10] sm:$0x4]
    %v3536 = vsel %vm3528, %v3512, %v3535
    %3537 = vst [vmem:[#allocation13 + $0x10] sm:$0x4] %v3536
    %v3538 = vld [vmem:[#allocation13 + $0x18] sm:$0x4]
    %v3539 = vsel %vm3528, %v3513, %v3538
    %3540 = vst [vmem:[#allocation13 + $0x18] sm:$0x4] %v3539
    %v3541 = vld [vmem:[#allocation13 + $0x20] sm:$0x4]
    %v3542 = vsel %vm3528, %v3514, %v3541
    %3543 = vst [vmem:[#allocation13 + $0x20] sm:$0x4] %v3542
    %v3544 = vld [vmem:[#allocation13 + $0x28] sm:$0x4]
    %v3545 = vsel %vm3528, %v3515, %v3544
    %3546 = vst [vmem:[#allocation13 + $0x28] sm:$0x4] %v3545
    %v3547 = vld [vmem:[#allocation13 + $0x30] sm:$0x4]
    %v3548 = vsel %vm3528, %v3516, %v3547
    %3549 = vst [vmem:[#allocation13 + $0x30] sm:$0x4] %v3548
    %v3550 = vld [vmem:[#allocation13 + $0x38] sm:$0x4]
    %v3551 = vsel %vm3528, %v3517, %v3550
    %3552 = vst [vmem:[#allocation13 + $0x38] sm:$0x4] %v3551
    %s3553 = scalar_lea.vmem [#allocation3], 5
    %v3554 = vld [vmem:[%s3553] ss:$8 sm:$0x7]
    %s3555 = scalar_lea.vmem [#allocation3], 53
    %v3556 = vld [vmem:[%s3555] ss:$8 sm:$0x7]
    %s3557 = scalar_lea.vmem [#allocation3], 101
    %v3558 = vld [vmem:[%s3557] ss:$8 sm:$0x7]
    %s3559 = scalar_lea.vmem [#allocation3], 149
    %v3560 = vld [vmem:[%s3559] ss:$8 sm:$0x7]
    %s3561 = scalar_lea.vmem [#allocation3], 197
    %v3562 = vld [vmem:[%s3561] ss:$8 sm:$0x7]
    %s3563 = scalar_lea.vmem [#allocation3], 245
    %v3564 = vld [vmem:[%s3563] ss:$8 sm:$0x7]
    %s3565 = scalar_lea.vmem [#allocation3], 293
    %v3566 = vld [vmem:[%s3565] ss:$8 sm:$0x7]
    %s3567 = scalar_lea.vmem [#allocation3], 341
    %v3568 = vld [vmem:[%s3567] ss:$8 sm:$0x7]
    %v3569 = vrot.slane %v3495, 7
    %v3570 = vsel %vm1241, %v3569, %v3494
    %v3571 = vrot.slane %v3496, 6
    %v3572 = vsel %vm1244, %v3571, %v3570
    %v3573 = vrot.slane %v3497, 5
    %v3574 = vsel %vm1247, %v3573, %v3572
    %v3575 = vrot.slane %v3498, 4
    %v3576 = vsel %vm1250, %v3575, %v3574
    %v3577 = vrot.slane %v3499, 3
    %v3578 = vsel %vm1253, %v3577, %v3576
    %v3579 = vrot.slane %v3500, 2
    %v3580 = vsel %vm1256, %v3579, %v3578
    %v3581 = vrot.slane %v3501, 1
    %v3582 = vsel %vm1259, %v3581, %v3580
    %v3583 = vpack.c.b16 %v3582, %v3582
    %3585 = vmatprep.subr.bf16.mxu0 %v598
    %3586 = vmatpush1.bf16.msra.mxu0 %v597
    %3587 = vmatprep.subr.bf16.mxu0 %v601
    %3588 = vmatpush1.bf16.msra.mxu0 %v600
    %3589 = vmatprep.subr.bf16.mxu0 %v604
    %3590 = vmatpush1.bf16.msra.mxu0 %v603
    %3591 = vmatprep.subr.bf16.mxu0 %v607
    %3592 = vmatpush1.bf16.msra.mxu0 %v606
    %3593 = vmatprep.subr.bf16.mxu0 %v610
    %3594 = vmatpush1.bf16.msra.mxu0 %v609
    %3595 = vmatprep.subr.bf16.mxu0 %v613
    %3596 = vmatpush1.bf16.msra.mxu0 %v612
    %3597 = vmatprep.subr.bf16.mxu0 %v616
    %3598 = vmatpush1.bf16.msra.mxu0 %v615
    %3599 = vmatprep.subr.bf16.mxu0 %v619
    %3600 = vmatpush1.bf16.msra.mxu0 %v618
    %3601 = vmatprep.subr.bf16.mxu0 0
    %3602 = vmatpush1.bf16.msra.mxu0 0
    %3603 = vmatprep.subr.bf16.mxu0 0
    %3604 = vmatpush1.bf16.msra.mxu0 0
    %3605 = vmatprep.subr.bf16.mxu0 0
    %3606 = vmatpush1.bf16.msra.mxu0 0
    %3607 = vmatprep.subr.bf16.mxu0 0
    %3608 = vmatpush1.bf16.msra.mxu0 0
    %3609 = vmatprep.subr.bf16.mxu0 0
    %3610 = vmatpush1.bf16.msra.mxu0 0
    %3611 = vmatprep.subr.bf16.mxu0 0
    %3612 = vmatpush1.bf16.msra.mxu0 0
    %3613 = vmatprep.subr.bf16.mxu0 0
    %3614 = vmatpush1.bf16.msra.mxu0 0
    %3615 = vmatprep.subr.bf16.mxu0 0
    %3616 = vmatpush1.bf16.msra.mxu0 0
    %3617 = vmatprep.mubr.bf16.mxu0 0
    %3618 = vmatmul.mubr.bf16.gmra.mrb[0].mxu0 %v3583
    %v3619 = vpop.f32.mrb[0].mxu0
    %v3620 = vadd.f32 0.0, %v3619
    %v3621 = vpop.f32.mrb[0].mxu0
    %v3622 = vadd.f32 0.0, %v3621
    %v3623 = vpop.f32.mrb[0].mxu0
    %v3624 = vpop.f32.mrb[0].mxu0
    %3625 = vdwg.mxu0
    %3626 = vmatprep.subr.bf16.mxu0 0
    %3627 = vmatpush1.bf16.msra.mxu0 %v599
    %3628 = vmatprep.subr.bf16.mxu0 0
    %3629 = vmatpush1.bf16.msra.mxu0 %v602
    %3630 = vmatprep.subr.bf16.mxu0 0
    %3631 = vmatpush1.bf16.msra.mxu0 %v605
    %3632 = vmatprep.subr.bf16.mxu0 0
    %3633 = vmatpush1.bf16.msra.mxu0 %v608
    %3634 = vmatprep.subr.bf16.mxu0 0
    %3635 = vmatpush1.bf16.msra.mxu0 %v611
    %3636 = vmatprep.subr.bf16.mxu0 0
    %3637 = vmatpush1.bf16.msra.mxu0 %v614
    %3638 = vmatprep.subr.bf16.mxu0 0
    %3639 = vmatpush1.bf16.msra.mxu0 %v617
    %3640 = vmatprep.subr.bf16.mxu0 0
    %3641 = vmatpush1.bf16.msra.mxu0 %v620
    %3642 = vmatprep.subr.bf16.mxu0 0
    %3643 = vmatpush1.bf16.msra.mxu0 0
    %3644 = vmatprep.subr.bf16.mxu0 0
    %3645 = vmatpush1.bf16.msra.mxu0 0
    %3646 = vmatprep.subr.bf16.mxu0 0
    %3647 = vmatpush1.bf16.msra.mxu0 0
    %3648 = vmatprep.subr.bf16.mxu0 0
    %3649 = vmatpush1.bf16.msra.mxu0 0
    %3650 = vmatprep.subr.bf16.mxu0 0
    %3651 = vmatpush1.bf16.msra.mxu0 0
    %3652 = vmatprep.subr.bf16.mxu0 0
    %3653 = vmatpush1.bf16.msra.mxu0 0
    %3654 = vmatprep.subr.bf16.mxu0 0
    %3655 = vmatpush1.bf16.msra.mxu0 0
    %3656 = vmatprep.subr.bf16.mxu0 0
    %3657 = vmatpush1.bf16.msra.mxu0 0
    %3658 = vmatprep.mubr.bf16.mxu0 0
    %3659 = vmatmul.mubr.bf16.gmra.mrb[0].mxu0 %v3583
    %v3660 = vpop.f32.mrb[0].mxu0
    %v3661 = vadd.f32 0.0, %v3660
    %v3662 = vpop.f32.mrb[0].mxu0
    %v3663 = vpop.f32.mrb[0].mxu0
    %v3664 = vpop.f32.mrb[0].mxu0
    %3665 = vdwg.mxu0
    %v3667 = vcombine.high %v3620, %v3620
    %v3669 = vunpack.c.l.s4 1966171168
    %v3670 = vunpack.c.0.s8 %v3669
    %v3671 = vlaneseq
    %v3672 = vshrl.u32 %v3671, 7
    %v3673 = vsub.s32 %v3670, %v3672
    %v3674 = vrot.slane %v3620, %v3673
    %v3676 = vunpack.c.l.s4 1966171168
    %v3677 = vunpack.c.0.s8 %v3676
    %v3678 = vlaneseq
    %v3679 = vshrl.u32 %v3678, 7
    %v3680 = vsub.s32 %v3677, %v3679
    %v3681 = vrot.slane %v3667, %v3680
    %v3682 = vcombine.high %v3674, %v3674
    %v3683 = vcombine.high %v3681, %v3681
    %v3685 = vunpack.c.l.s4 1966171168
    %v3686 = vunpack.c.0.s8 %v3685
    %v3687 = vlaneseq
    %v3688 = vshrl.u32 %v3687, 7
    %v3689 = vsub.s32 %v3686, %v3688
    %v3690 = vrot.slane %v3674, %v3689
    %v3692 = vunpack.c.l.s4 1966171168
    %v3693 = vunpack.c.0.s8 %v3692
    %v3694 = vlaneseq
    %v3695 = vshrl.u32 %v3694, 7
    %v3696 = vsub.s32 %v3693, %v3695
    %v3697 = vrot.slane %v3681, %v3696
    %v3699 = vunpack.c.l.s4 1966171168
    %v3700 = vunpack.c.0.s8 %v3699
    %v3701 = vlaneseq
    %v3702 = vshrl.u32 %v3701, 7
    %v3703 = vsub.s32 %v3700, %v3702
    %v3704 = vrot.slane %v3682, %v3703
    %v3706 = vunpack.c.l.s4 1966171168
    %v3707 = vunpack.c.0.s8 %v3706
    %v3708 = vlaneseq
    %v3709 = vshrl.u32 %v3708, 7
    %v3710 = vsub.s32 %v3707, %v3709
    %v3711 = vrot.slane %v3683, %v3710
    %v3712 = vcombine.high %v3690, %v3690
    %v3713 = vcombine.high %v3697, %v3697
    %v3714 = vcombine.high %v3704, %v3704
    %v3715 = vcombine.high %v3711, %v3711
    %v3724 = vadd.f32 %v3554, %v3690
    %v3725 = vadd.f32 %v3556, %v3704
    %v3726 = vadd.f32 %v3558, %v3712
    %v3727 = vadd.f32 %v3560, %v3714
    %v3728 = vadd.f32 %v3562, %v3697
    %v3729 = vadd.f32 %v3564, %v3711
    %v3730 = vadd.f32 %v3566, %v3713
    %v3731 = vadd.f32 %v3568, %v3715
    %v3732 = vxor.u32 %v3724, 2147483648
    %v3733 = vxor.u32 %v3725, 2147483648
    %v3734 = vxor.u32 %v3726, 2147483648
    %v3735 = vxor.u32 %v3727, 2147483648
    %v3736 = vxor.u32 %v3728, 2147483648
    %v3737 = vxor.u32 %v3729, 2147483648
    %v3738 = vxor.u32 %v3730, 2147483648
    %v3739 = vxor.u32 %v3731, 2147483648
    %v3740 = vmul.f32 %v3732, 1.442695
    %v3741 = vpow.pop %v3740
    %v3742 = vmul.f32 %v3733, 1.442695
    %v3743 = vpow.pop %v3742
    %v3744 = vmul.f32 %v3734, 1.442695
    %v3745 = vpow.pop %v3744
    %v3746 = vmul.f32 %v3735, 1.442695
    %v3747 = vpow.pop %v3746
    %v3748 = vmul.f32 %v3736, 1.442695
    %v3749 = vpow.pop %v3748
    %v3750 = vmul.f32 %v3737, 1.442695
    %v3751 = vpow.pop %v3750
    %v3752 = vmul.f32 %v3738, 1.442695
    %v3753 = vpow.pop %v3752
    %v3754 = vmul.f32 %v3739, 1.442695
    %v3755 = vpow.pop %v3754
    %v3756 = vadd.f32 %v3741, 1.0
    %v3757 = vadd.f32 %v3743, 1.0
    %v3758 = vadd.f32 %v3745, 1.0
    %v3759 = vadd.f32 %v3747, 1.0
    %v3760 = vadd.f32 %v3749, 1.0
    %v3761 = vadd.f32 %v3751, 1.0
    %v3762 = vadd.f32 %v3753, 1.0
    %v3763 = vadd.f32 %v3755, 1.0
    %v3764 = vrcp.pop %v3756
    %v3765 = vmul.f32 1.0, %v3764
    %v3766 = vrcp.pop %v3757
    %v3767 = vmul.f32 1.0, %v3766
    %v3768 = vrcp.pop %v3758
    %v3769 = vmul.f32 1.0, %v3768
    %v3770 = vrcp.pop %v3759
    %v3771 = vmul.f32 1.0, %v3770
    %v3772 = vrcp.pop %v3760
    %v3773 = vmul.f32 1.0, %v3772
    %v3774 = vrcp.pop %v3761
    %v3775 = vmul.f32 1.0, %v3774
    %v3776 = vrcp.pop %v3762
    %v3777 = vmul.f32 1.0, %v3776
    %v3778 = vrcp.pop %v3763
    %v3779 = vmul.f32 1.0, %v3778
    %v3788 = vrot.slane %v3554, 1
    %v3789 = vrot.slane %v3556, 1
    %v3790 = vrot.slane %v3558, 1
    %v3791 = vrot.slane %v3560, 1
    %v3792 = vrot.slane %v3562, 1
    %v3793 = vrot.slane %v3564, 1
    %v3794 = vrot.slane %v3566, 1
    %v3795 = vrot.slane %v3568, 1
    %v3805 = vcombine.high %v3622, %v3622
    %v3807 = vunpack.c.l.s4 1966171168
    %v3808 = vunpack.c.0.s8 %v3807
    %v3809 = vlaneseq
    %v3810 = vshrl.u32 %v3809, 7
    %v3811 = vsub.s32 %v3808, %v3810
    %v3812 = vrot.slane %v3622, %v3811
    %v3814 = vunpack.c.l.s4 1966171168
    %v3815 = vunpack.c.0.s8 %v3814
    %v3816 = vlaneseq
    %v3817 = vshrl.u32 %v3816, 7
    %v3818 = vsub.s32 %v3815, %v3817
    %v3819 = vrot.slane %v3805, %v3818
    %v3820 = vcombine.high %v3812, %v3812
    %v3821 = vcombine.high %v3819, %v3819
    %v3823 = vunpack.c.l.s4 1966171168
    %v3824 = vunpack.c.0.s8 %v3823
    %v3825 = vlaneseq
    %v3826 = vshrl.u32 %v3825, 7
    %v3827 = vsub.s32 %v3824, %v3826
    %v3828 = vrot.slane %v3812, %v3827
    %v3830 = vunpack.c.l.s4 1966171168
    %v3831 = vunpack.c.0.s8 %v3830
    %v3832 = vlaneseq
    %v3833 = vshrl.u32 %v3832, 7
    %v3834 = vsub.s32 %v3831, %v3833
    %v3835 = vrot.slane %v3819, %v3834
    %v3837 = vunpack.c.l.s4 1966171168
    %v3838 = vunpack.c.0.s8 %v3837
    %v3839 = vlaneseq
    %v3840 = vshrl.u32 %v3839, 7
    %v3841 = vsub.s32 %v3838, %v3840
    %v3842 = vrot.slane %v3820, %v3841
    %v3844 = vunpack.c.l.s4 1966171168
    %v3845 = vunpack.c.0.s8 %v3844
    %v3846 = vlaneseq
    %v3847 = vshrl.u32 %v3846, 7
    %v3848 = vsub.s32 %v3845, %v3847
    %v3849 = vrot.slane %v3821, %v3848
    %v3850 = vcombine.high %v3828, %v3828
    %v3851 = vcombine.high %v3835, %v3835
    %v3852 = vcombine.high %v3842, %v3842
    %v3853 = vcombine.high %v3849, %v3849
    %v3862 = vadd.f32 %v3788, %v3828
    %v3863 = vadd.f32 %v3789, %v3842
    %v3864 = vadd.f32 %v3790, %v3850
    %v3865 = vadd.f32 %v3791, %v3852
    %v3866 = vadd.f32 %v3792, %v3835
    %v3867 = vadd.f32 %v3793, %v3849
    %v3868 = vadd.f32 %v3794, %v3851
    %v3869 = vadd.f32 %v3795, %v3853
    %v3870 = vxor.u32 %v3862, 2147483648
    %v3871 = vxor.u32 %v3863, 2147483648
    %v3872 = vxor.u32 %v3864, 2147483648
    %v3873 = vxor.u32 %v3865, 2147483648
    %v3874 = vxor.u32 %v3866, 2147483648
    %v3875 = vxor.u32 %v3867, 2147483648
    %v3876 = vxor.u32 %v3868, 2147483648
    %v3877 = vxor.u32 %v3869, 2147483648
    %v3878 = vmul.f32 %v3870, 1.442695
    %v3879 = vpow.pop %v3878
    %v3880 = vmul.f32 %v3871, 1.442695
    %v3881 = vpow.pop %v3880
    %v3882 = vmul.f32 %v3872, 1.442695
    %v3883 = vpow.pop %v3882
    %v3884 = vmul.f32 %v3873, 1.442695
    %v3885 = vpow.pop %v3884
    %v3886 = vmul.f32 %v3874, 1.442695
    %v3887 = vpow.pop %v3886
    %v3888 = vmul.f32 %v3875, 1.442695
    %v3889 = vpow.pop %v3888
    %v3890 = vmul.f32 %v3876, 1.442695
    %v3891 = vpow.pop %v3890
    %v3892 = vmul.f32 %v3877, 1.442695
    %v3893 = vpow.pop %v3892
    %v3894 = vadd.f32 %v3879, 1.0
    %v3895 = vadd.f32 %v3881, 1.0
    %v3896 = vadd.f32 %v3883, 1.0
    %v3897 = vadd.f32 %v3885, 1.0
    %v3898 = vadd.f32 %v3887, 1.0
    %v3899 = vadd.f32 %v3889, 1.0
    %v3900 = vadd.f32 %v3891, 1.0
    %v3901 = vadd.f32 %v3893, 1.0
    %v3902 = vrcp.pop %v3894
    %v3903 = vmul.f32 1.0, %v3902
    %v3904 = vrcp.pop %v3895
    %v3905 = vmul.f32 1.0, %v3904
    %v3906 = vrcp.pop %v3896
    %v3907 = vmul.f32 1.0, %v3906
    %v3908 = vrcp.pop %v3897
    %v3909 = vmul.f32 1.0, %v3908
    %v3910 = vrcp.pop %v3898
    %v3911 = vmul.f32 1.0, %v3910
    %v3912 = vrcp.pop %v3899
    %v3913 = vmul.f32 1.0, %v3912
    %v3914 = vrcp.pop %v3900
    %v3915 = vmul.f32 1.0, %v3914
    %v3916 = vrcp.pop %v3901
    %v3917 = vmul.f32 1.0, %v3916
    %v3918 = vadd.f32 %v3661, %v982
    %v3920 = vcombine.high %v3918, %v3918
    %v3922 = vunpack.c.l.s4 1966171168
    %v3923 = vunpack.c.0.s8 %v3922
    %v3924 = vlaneseq
    %v3925 = vshrl.u32 %v3924, 7
    %v3926 = vsub.s32 %v3923, %v3925
    %v3927 = vrot.slane %v3918, %v3926
    %v3929 = vunpack.c.l.s4 1966171168
    %v3930 = vunpack.c.0.s8 %v3929
    %v3931 = vlaneseq
    %v3932 = vshrl.u32 %v3931, 7
    %v3933 = vsub.s32 %v3930, %v3932
    %v3934 = vrot.slane %v3920, %v3933
    %v3935 = vcombine.high %v3927, %v3927
    %v3936 = vcombine.high %v3934, %v3934
    %v3938 = vunpack.c.l.s4 1966171168
    %v3939 = vunpack.c.0.s8 %v3938
    %v3940 = vlaneseq
    %v3941 = vshrl.u32 %v3940, 7
    %v3942 = vsub.s32 %v3939, %v3941
    %v3943 = vrot.slane %v3927, %v3942
    %v3945 = vunpack.c.l.s4 1966171168
    %v3946 = vunpack.c.0.s8 %v3945
    %v3947 = vlaneseq
    %v3948 = vshrl.u32 %v3947, 7
    %v3949 = vsub.s32 %v3946, %v3948
    %v3950 = vrot.slane %v3934, %v3949
    %v3952 = vunpack.c.l.s4 1966171168
    %v3953 = vunpack.c.0.s8 %v3952
    %v3954 = vlaneseq
    %v3955 = vshrl.u32 %v3954, 7
    %v3956 = vsub.s32 %v3953, %v3955
    %v3957 = vrot.slane %v3935, %v3956
    %v3959 = vunpack.c.l.s4 1966171168
    %v3960 = vunpack.c.0.s8 %v3959
    %v3961 = vlaneseq
    %v3962 = vshrl.u32 %v3961, 7
    %v3963 = vsub.s32 %v3960, %v3962
    %v3964 = vrot.slane %v3936, %v3963
    %v3965 = vcombine.high %v3943, %v3943
    %v3966 = vcombine.high %v3950, %v3950
    %v3967 = vcombine.high %v3957, %v3957
    %v3968 = vcombine.high %v3964, %v3964
    %v3977 = vmul.f32 %v3765, %v3943
    %v3978 = vmul.f32 %v3767, %v3957
    %v3979 = vmul.f32 %v3769, %v3965
    %v3980 = vmul.f32 %v3771, %v3967
    %v3981 = vmul.f32 %v3773, %v3950
    %v3982 = vmul.f32 %v3775, %v3964
    %v3983 = vmul.f32 %v3777, %v3966
    %v3984 = vmul.f32 %v3779, %v3968
    %v3985 = vrot.slane %v3554, 2
    %v3986 = vrot.slane %v3556, 2
    %v3987 = vrot.slane %v3558, 2
    %v3988 = vrot.slane %v3560, 2
    %v3989 = vrot.slane %v3562, 2
    %v3990 = vrot.slane %v3564, 2
    %v3991 = vrot.slane %v3566, 2
    %v3992 = vrot.slane %v3568, 2
    %v4001 = vadd.f32 %v3985, %v3977
    %v4002 = vadd.f32 %v3986, %v3978
    %v4003 = vadd.f32 %v3987, %v3979
    %v4004 = vadd.f32 %v3988, %v3980
    %v4005 = vadd.f32 %v3989, %v3981
    %v4006 = vadd.f32 %v3990, %v3982
    %v4007 = vadd.f32 %v3991, %v3983
    %v4008 = vadd.f32 %v3992, %v3984
    %v4009 = vtanh.pop %v4001
    %v4010 = vtanh.pop %v4002
    %v4011 = vtanh.pop %v4003
    %v4012 = vtanh.pop %v4004
    %v4013 = vtanh.pop %v4005
    %v4014 = vtanh.pop %v4006
    %v4015 = vtanh.pop %v4007
    %v4016 = vtanh.pop %v4008
    %v4017 = vsub.f32 1.0, %v3903
    %v4018 = vsub.f32 1.0, %v3905
    %v4019 = vsub.f32 1.0, %v3907
    %v4020 = vsub.f32 1.0, %v3909
    %v4021 = vsub.f32 1.0, %v3911
    %v4022 = vsub.f32 1.0, %v3913
    %v4023 = vsub.f32 1.0, %v3915
    %v4024 = vsub.f32 1.0, %v3917
    %v4025 = vmul.f32 %v4017, %v4009
    %v4026 = vmul.f32 %v4018, %v4010
    %v4027 = vmul.f32 %v4019, %v4011
    %v4028 = vmul.f32 %v4020, %v4012
    %v4029 = vmul.f32 %v4021, %v4013
    %v4030 = vmul.f32 %v4022, %v4014
    %v4031 = vmul.f32 %v4023, %v4015
    %v4032 = vmul.f32 %v4024, %v4016
    %v4033 = vmul.f32 %v3903, %v3470
    %v4034 = vmul.f32 %v3905, %v3471
    %v4035 = vmul.f32 %v3907, %v3472
    %v4036 = vmul.f32 %v3909, %v3473
    %v4037 = vmul.f32 %v3911, %v3474
    %v4038 = vmul.f32 %v3913, %v3475
    %v4039 = vmul.f32 %v3915, %v3476
    %v4040 = vmul.f32 %v3917, %v3477
    %v4041 = vadd.f32 %v4025, %v4033
    %v4042 = vadd.f32 %v4026, %v4034
    %v4043 = vadd.f32 %v4027, %v4035
    %v4044 = vadd.f32 %v4028, %v4036
    %v4045 = vadd.f32 %v4029, %v4037
    %v4046 = vadd.f32 %v4030, %v4038
    %v4047 = vadd.f32 %v4031, %v4039
    %v4048 = vadd.f32 %v4032, %v4040
    %v4049 = vpack.c.bf16 %v4041, %v4041
    %v4050 = vpack.c.bf16 %v4042, %v4042
    %v4051 = vpack.c.bf16 %v4043, %v4043
    %v4052 = vpack.c.bf16 %v4044, %v4044
    %v4053 = vpack.c.bf16 %v4045, %v4045
    %v4054 = vpack.c.bf16 %v4046, %v4046
    %v4055 = vpack.c.bf16 %v4047, %v4047
    %v4056 = vpack.c.bf16 %v4048, %v4048
    %v4065 = vunpack.c.l.b16 %v4049
    %v4066 = vunpack.c.l.b16 %v4050
    %v4067 = vunpack.c.l.b16 %v4051
    %v4068 = vunpack.c.l.b16 %v4052
    %v4069 = vunpack.c.l.b16 %v4053
    %v4070 = vunpack.c.l.b16 %v4054
    %v4071 = vunpack.c.l.b16 %v4055
    %v4072 = vunpack.c.l.b16 %v4056
    %v4073 = vpack.c.b16 %v4065, %v4065
    %v4074 = vpack.c.b16 %v4066, %v4066
    %v4075 = vpack.c.b16 %v4067, %v4067
    %v4076 = vpack.c.b16 %v4068, %v4068
    %v4077 = vpack.c.b16 %v4069, %v4069
    %v4078 = vpack.c.b16 %v4070, %v4070
    %v4079 = vpack.c.b16 %v4071, %v4071
    %v4080 = vpack.c.b16 %v4072, %v4072
    %v4082 = vshll.u32 %v4073, 16
    %v4084 = vrot.slane %v4082, 6
    %v4086 = vshll.u32 %v4074, 16
    %v4088 = vrot.slane %v4086, 6
    %v4090 = vshll.u32 %v4075, 16
    %v4092 = vrot.slane %v4090, 6
    %v4094 = vshll.u32 %v4076, 16
    %v4096 = vrot.slane %v4094, 6
    %v4098 = vshll.u32 %v4077, 16
    %v4100 = vrot.slane %v4098, 6
    %v4102 = vshll.u32 %v4078, 16
    %v4104 = vrot.slane %v4102, 6
    %v4106 = vshll.u32 %v4079, 16
    %v4108 = vrot.slane %v4106, 6
    %v4110 = vshll.u32 %v4080, 16
    %v4112 = vrot.slane %v4110, 6
    %vm4121 = vsmask.f32 7946
    %vm4122 = vmand %vm3526, %vm4121
    %v4123 = vld [vmem:[#allocation13] sm:$0x4]
    %v4124 = vsel %vm4122, %v4084, %v4123
    %4125 = vst [vmem:[#allocation13] sm:$0x4] %v4124
    %v4126 = vld [vmem:[#allocation13 + $0x8] sm:$0x4]
    %v4127 = vsel %vm4122, %v4088, %v4126
    %4128 = vst [vmem:[#allocation13 + $0x8] sm:$0x4] %v4127
    %v4129 = vld [vmem:[#allocation13 + $0x10] sm:$0x4]
    %v4130 = vsel %vm4122, %v4092, %v4129
    %4131 = vst [vmem:[#allocation13 + $0x10] sm:$0x4] %v4130
    %v4132 = vld [vmem:[#allocation13 + $0x18] sm:$0x4]
    %v4133 = vsel %vm4122, %v4096, %v4132
    %4134 = vst [vmem:[#allocation13 + $0x18] sm:$0x4] %v4133
    %v4135 = vld [vmem:[#allocation13 + $0x20] sm:$0x4]
    %v4136 = vsel %vm4122, %v4100, %v4135
    %4137 = vst [vmem:[#allocation13 + $0x20] sm:$0x4] %v4136
    %v4138 = vld [vmem:[#allocation13 + $0x28] sm:$0x4]
    %v4139 = vsel %vm4122, %v4104, %v4138
    %4140 = vst [vmem:[#allocation13 + $0x28] sm:$0x4] %v4139
    %v4141 = vld [vmem:[#allocation13 + $0x30] sm:$0x4]
    %v4142 = vsel %vm4122, %v4108, %v4141
    %4143 = vst [vmem:[#allocation13 + $0x30] sm:$0x4] %v4142
    %v4144 = vld [vmem:[#allocation13 + $0x38] sm:$0x4]
    %v4145 = vsel %vm4122, %v4112, %v4144
    %4146 = vst [vmem:[#allocation13 + $0x38] sm:$0x4] %v4145
    %s4147 = scalar_lea.vmem [#allocation3], 6
    %v4148 = vld [vmem:[%s4147] ss:$8 sm:$0x7]
    %s4149 = scalar_lea.vmem [#allocation3], 54
    %v4150 = vld [vmem:[%s4149] ss:$8 sm:$0x7]
    %s4151 = scalar_lea.vmem [#allocation3], 102
    %v4152 = vld [vmem:[%s4151] ss:$8 sm:$0x7]
    %s4153 = scalar_lea.vmem [#allocation3], 150
    %v4154 = vld [vmem:[%s4153] ss:$8 sm:$0x7]
    %s4155 = scalar_lea.vmem [#allocation3], 198
    %v4156 = vld [vmem:[%s4155] ss:$8 sm:$0x7]
    %s4157 = scalar_lea.vmem [#allocation3], 246
    %v4158 = vld [vmem:[%s4157] ss:$8 sm:$0x7]
    %s4159 = scalar_lea.vmem [#allocation3], 294
    %v4160 = vld [vmem:[%s4159] ss:$8 sm:$0x7]
    %s4161 = scalar_lea.vmem [#allocation3], 342
    %v4162 = vld [vmem:[%s4161] ss:$8 sm:$0x7]
    %v4163 = vrot.slane %v4066, 7
    %v4164 = vsel %vm1241, %v4163, %v4065
    %v4165 = vrot.slane %v4067, 6
    %v4166 = vsel %vm1244, %v4165, %v4164
    %v4167 = vrot.slane %v4068, 5
    %v4168 = vsel %vm1247, %v4167, %v4166
    %v4169 = vrot.slane %v4069, 4
    %v4170 = vsel %vm1250, %v4169, %v4168
    %v4171 = vrot.slane %v4070, 3
    %v4172 = vsel %vm1253, %v4171, %v4170
    %v4173 = vrot.slane %v4071, 2
    %v4174 = vsel %vm1256, %v4173, %v4172
    %v4175 = vrot.slane %v4072, 1
    %v4176 = vsel %vm1259, %v4175, %v4174
    %v4177 = vpack.c.b16 %v4176, %v4176
    %4179 = vmatprep.subr.bf16.mxu0 %v598
    %4180 = vmatpush1.bf16.msra.mxu0 %v597
    %4181 = vmatprep.subr.bf16.mxu0 %v601
    %4182 = vmatpush1.bf16.msra.mxu0 %v600
    %4183 = vmatprep.subr.bf16.mxu0 %v604
    %4184 = vmatpush1.bf16.msra.mxu0 %v603
    %4185 = vmatprep.subr.bf16.mxu0 %v607
    %4186 = vmatpush1.bf16.msra.mxu0 %v606
    %4187 = vmatprep.subr.bf16.mxu0 %v610
    %4188 = vmatpush1.bf16.msra.mxu0 %v609
    %4189 = vmatprep.subr.bf16.mxu0 %v613
    %4190 = vmatpush1.bf16.msra.mxu0 %v612
    %4191 = vmatprep.subr.bf16.mxu0 %v616
    %4192 = vmatpush1.bf16.msra.mxu0 %v615
    %4193 = vmatprep.subr.bf16.mxu0 %v619
    %4194 = vmatpush1.bf16.msra.mxu0 %v618
    %4195 = vmatprep.subr.bf16.mxu0 0
    %4196 = vmatpush1.bf16.msra.mxu0 0
    %4197 = vmatprep.subr.bf16.mxu0 0
    %4198 = vmatpush1.bf16.msra.mxu0 0
    %4199 = vmatprep.subr.bf16.mxu0 0
    %4200 = vmatpush1.bf16.msra.mxu0 0
    %4201 = vmatprep.subr.bf16.mxu0 0
    %4202 = vmatpush1.bf16.msra.mxu0 0
    %4203 = vmatprep.subr.bf16.mxu0 0
    %4204 = vmatpush1.bf16.msra.mxu0 0
    %4205 = vmatprep.subr.bf16.mxu0 0
    %4206 = vmatpush1.bf16.msra.mxu0 0
    %4207 = vmatprep.subr.bf16.mxu0 0
    %4208 = vmatpush1.bf16.msra.mxu0 0
    %4209 = vmatprep.subr.bf16.mxu0 0
    %4210 = vmatpush1.bf16.msra.mxu0 0
    %4211 = vmatprep.mubr.bf16.mxu0 0
    %4212 = vmatmul.mubr.bf16.gmra.mrb[0].mxu0 %v4177
    %v4213 = vpop.f32.mrb[0].mxu0
    %v4214 = vadd.f32 0.0, %v4213
    %v4215 = vpop.f32.mrb[0].mxu0
    %v4216 = vadd.f32 0.0, %v4215
    %v4217 = vpop.f32.mrb[0].mxu0
    %v4218 = vpop.f32.mrb[0].mxu0
    %4219 = vdwg.mxu0
    %4220 = vmatprep.subr.bf16.mxu0 0
    %4221 = vmatpush1.bf16.msra.mxu0 %v599
    %4222 = vmatprep.subr.bf16.mxu0 0
    %4223 = vmatpush1.bf16.msra.mxu0 %v602
    %4224 = vmatprep.subr.bf16.mxu0 0
    %4225 = vmatpush1.bf16.msra.mxu0 %v605
    %4226 = vmatprep.subr.bf16.mxu0 0
    %4227 = vmatpush1.bf16.msra.mxu0 %v608
    %4228 = vmatprep.subr.bf16.mxu0 0
    %4229 = vmatpush1.bf16.msra.mxu0 %v611
    %4230 = vmatprep.subr.bf16.mxu0 0
    %4231 = vmatpush1.bf16.msra.mxu0 %v614
    %4232 = vmatprep.subr.bf16.mxu0 0
    %4233 = vmatpush1.bf16.msra.mxu0 %v617
    %4234 = vmatprep.subr.bf16.mxu0 0
    %4235 = vmatpush1.bf16.msra.mxu0 %v620
    %4236 = vmatprep.subr.bf16.mxu0 0
    %4237 = vmatpush1.bf16.msra.mxu0 0
    %4238 = vmatprep.subr.bf16.mxu0 0
    %4239 = vmatpush1.bf16.msra.mxu0 0
    %4240 = vmatprep.subr.bf16.mxu0 0
    %4241 = vmatpush1.bf16.msra.mxu0 0
    %4242 = vmatprep.subr.bf16.mxu0 0
    %4243 = vmatpush1.bf16.msra.mxu0 0
    %4244 = vmatprep.subr.bf16.mxu0 0
    %4245 = vmatpush1.bf16.msra.mxu0 0
    %4246 = vmatprep.subr.bf16.mxu0 0
    %4247 = vmatpush1.bf16.msra.mxu0 0
    %4248 = vmatprep.subr.bf16.mxu0 0
    %4249 = vmatpush1.bf16.msra.mxu0 0
    %4250 = vmatprep.subr.bf16.mxu0 0
    %4251 = vmatpush1.bf16.msra.mxu0 0
    %4252 = vmatprep.mubr.bf16.mxu0 0
    %4253 = vmatmul.mubr.bf16.gmra.mrb[0].mxu0 %v4177
    %v4254 = vpop.f32.mrb[0].mxu0
    %v4255 = vadd.f32 0.0, %v4254
    %v4256 = vpop.f32.mrb[0].mxu0
    %v4257 = vpop.f32.mrb[0].mxu0
    %v4258 = vpop.f32.mrb[0].mxu0
    %4259 = vdwg.mxu0
    %v4261 = vcombine.high %v4214, %v4214
    %v4263 = vunpack.c.l.s4 1966171168
    %v4264 = vunpack.c.0.s8 %v4263
    %v4265 = vlaneseq
    %v4266 = vshrl.u32 %v4265, 7
    %v4267 = vsub.s32 %v4264, %v4266
    %v4268 = vrot.slane %v4214, %v4267
    %v4270 = vunpack.c.l.s4 1966171168
    %v4271 = vunpack.c.0.s8 %v4270
    %v4272 = vlaneseq
    %v4273 = vshrl.u32 %v4272, 7
    %v4274 = vsub.s32 %v4271, %v4273
    %v4275 = vrot.slane %v4261, %v4274
    %v4276 = vcombine.high %v4268, %v4268
    %v4277 = vcombine.high %v4275, %v4275
    %v4279 = vunpack.c.l.s4 1966171168
    %v4280 = vunpack.c.0.s8 %v4279
    %v4281 = vlaneseq
    %v4282 = vshrl.u32 %v4281, 7
    %v4283 = vsub.s32 %v4280, %v4282
    %v4284 = vrot.slane %v4268, %v4283
    %v4286 = vunpack.c.l.s4 1966171168
    %v4287 = vunpack.c.0.s8 %v4286
    %v4288 = vlaneseq
    %v4289 = vshrl.u32 %v4288, 7
    %v4290 = vsub.s32 %v4287, %v4289
    %v4291 = vrot.slane %v4275, %v4290
    %v4293 = vunpack.c.l.s4 1966171168
    %v4294 = vunpack.c.0.s8 %v4293
    %v4295 = vlaneseq
    %v4296 = vshrl.u32 %v4295, 7
    %v4297 = vsub.s32 %v4294, %v4296
    %v4298 = vrot.slane %v4276, %v4297
    %v4300 = vunpack.c.l.s4 1966171168
    %v4301 = vunpack.c.0.s8 %v4300
    %v4302 = vlaneseq
    %v4303 = vshrl.u32 %v4302, 7
    %v4304 = vsub.s32 %v4301, %v4303
    %v4305 = vrot.slane %v4277, %v4304
    %v4306 = vcombine.high %v4284, %v4284
    %v4307 = vcombine.high %v4291, %v4291
    %v4308 = vcombine.high %v4298, %v4298
    %v4309 = vcombine.high %v4305, %v4305
    %v4318 = vadd.f32 %v4148, %v4284
    %v4319 = vadd.f32 %v4150, %v4298
    %v4320 = vadd.f32 %v4152, %v4306
    %v4321 = vadd.f32 %v4154, %v4308
    %v4322 = vadd.f32 %v4156, %v4291
    %v4323 = vadd.f32 %v4158, %v4305
    %v4324 = vadd.f32 %v4160, %v4307
    %v4325 = vadd.f32 %v4162, %v4309
    %v4326 = vxor.u32 %v4318, 2147483648
    %v4327 = vxor.u32 %v4319, 2147483648
    %v4328 = vxor.u32 %v4320, 2147483648
    %v4329 = vxor.u32 %v4321, 2147483648
    %v4330 = vxor.u32 %v4322, 2147483648
    %v4331 = vxor.u32 %v4323, 2147483648
    %v4332 = vxor.u32 %v4324, 2147483648
    %v4333 = vxor.u32 %v4325, 2147483648
    %v4334 = vmul.f32 %v4326, 1.442695
    %v4335 = vpow.pop %v4334
    %v4336 = vmul.f32 %v4327, 1.442695
    %v4337 = vpow.pop %v4336
    %v4338 = vmul.f32 %v4328, 1.442695
    %v4339 = vpow.pop %v4338
    %v4340 = vmul.f32 %v4329, 1.442695
    %v4341 = vpow.pop %v4340
    %v4342 = vmul.f32 %v4330, 1.442695
    %v4343 = vpow.pop %v4342
    %v4344 = vmul.f32 %v4331, 1.442695
    %v4345 = vpow.pop %v4344
    %v4346 = vmul.f32 %v4332, 1.442695
    %v4347 = vpow.pop %v4346
    %v4348 = vmul.f32 %v4333, 1.442695
    %v4349 = vpow.pop %v4348
    %v4350 = vadd.f32 %v4335, 1.0
    %v4351 = vadd.f32 %v4337, 1.0
    %v4352 = vadd.f32 %v4339, 1.0
    %v4353 = vadd.f32 %v4341, 1.0
    %v4354 = vadd.f32 %v4343, 1.0
    %v4355 = vadd.f32 %v4345, 1.0
    %v4356 = vadd.f32 %v4347, 1.0
    %v4357 = vadd.f32 %v4349, 1.0
    %v4358 = vrcp.pop %v4350
    %v4359 = vmul.f32 1.0, %v4358
    %v4360 = vrcp.pop %v4351
    %v4361 = vmul.f32 1.0, %v4360
    %v4362 = vrcp.pop %v4352
    %v4363 = vmul.f32 1.0, %v4362
    %v4364 = vrcp.pop %v4353
    %v4365 = vmul.f32 1.0, %v4364
    %v4366 = vrcp.pop %v4354
    %v4367 = vmul.f32 1.0, %v4366
    %v4368 = vrcp.pop %v4355
    %v4369 = vmul.f32 1.0, %v4368
    %v4370 = vrcp.pop %v4356
    %v4371 = vmul.f32 1.0, %v4370
    %v4372 = vrcp.pop %v4357
    %v4373 = vmul.f32 1.0, %v4372
    %v4382 = vrot.slane %v4148, 1
    %v4383 = vrot.slane %v4150, 1
    %v4384 = vrot.slane %v4152, 1
    %v4385 = vrot.slane %v4154, 1
    %v4386 = vrot.slane %v4156, 1
    %v4387 = vrot.slane %v4158, 1
    %v4388 = vrot.slane %v4160, 1
    %v4389 = vrot.slane %v4162, 1
    %v4399 = vcombine.high %v4216, %v4216
    %v4401 = vunpack.c.l.s4 1966171168
    %v4402 = vunpack.c.0.s8 %v4401
    %v4403 = vlaneseq
    %v4404 = vshrl.u32 %v4403, 7
    %v4405 = vsub.s32 %v4402, %v4404
    %v4406 = vrot.slane %v4216, %v4405
    %v4408 = vunpack.c.l.s4 1966171168
    %v4409 = vunpack.c.0.s8 %v4408
    %v4410 = vlaneseq
    %v4411 = vshrl.u32 %v4410, 7
    %v4412 = vsub.s32 %v4409, %v4411
    %v4413 = vrot.slane %v4399, %v4412
    %v4414 = vcombine.high %v4406, %v4406
    %v4415 = vcombine.high %v4413, %v4413
    %v4417 = vunpack.c.l.s4 1966171168
    %v4418 = vunpack.c.0.s8 %v4417
    %v4419 = vlaneseq
    %v4420 = vshrl.u32 %v4419, 7
    %v4421 = vsub.s32 %v4418, %v4420
    %v4422 = vrot.slane %v4406, %v4421
    %v4424 = vunpack.c.l.s4 1966171168
    %v4425 = vunpack.c.0.s8 %v4424
    %v4426 = vlaneseq
    %v4427 = vshrl.u32 %v4426, 7
    %v4428 = vsub.s32 %v4425, %v4427
    %v4429 = vrot.slane %v4413, %v4428
    %v4431 = vunpack.c.l.s4 1966171168
    %v4432 = vunpack.c.0.s8 %v4431
    %v4433 = vlaneseq
    %v4434 = vshrl.u32 %v4433, 7
    %v4435 = vsub.s32 %v4432, %v4434
    %v4436 = vrot.slane %v4414, %v4435
    %v4438 = vunpack.c.l.s4 1966171168
    %v4439 = vunpack.c.0.s8 %v4438
    %v4440 = vlaneseq
    %v4441 = vshrl.u32 %v4440, 7
    %v4442 = vsub.s32 %v4439, %v4441
    %v4443 = vrot.slane %v4415, %v4442
    %v4444 = vcombine.high %v4422, %v4422
    %v4445 = vcombine.high %v4429, %v4429
    %v4446 = vcombine.high %v4436, %v4436
    %v4447 = vcombine.high %v4443, %v4443
    %v4456 = vadd.f32 %v4382, %v4422
    %v4457 = vadd.f32 %v4383, %v4436
    %v4458 = vadd.f32 %v4384, %v4444
    %v4459 = vadd.f32 %v4385, %v4446
    %v4460 = vadd.f32 %v4386, %v4429
    %v4461 = vadd.f32 %v4387, %v4443
    %v4462 = vadd.f32 %v4388, %v4445
    %v4463 = vadd.f32 %v4389, %v4447
    %v4464 = vxor.u32 %v4456, 2147483648
    %v4465 = vxor.u32 %v4457, 2147483648
    %v4466 = vxor.u32 %v4458, 2147483648
    %v4467 = vxor.u32 %v4459, 2147483648
    %v4468 = vxor.u32 %v4460, 2147483648
    %v4469 = vxor.u32 %v4461, 2147483648
    %v4470 = vxor.u32 %v4462, 2147483648
    %v4471 = vxor.u32 %v4463, 2147483648
    %v4472 = vmul.f32 %v4464, 1.442695
    %v4473 = vpow.pop %v4472
    %v4474 = vmul.f32 %v4465, 1.442695
    %v4475 = vpow.pop %v4474
    %v4476 = vmul.f32 %v4466, 1.442695
    %v4477 = vpow.pop %v4476
    %v4478 = vmul.f32 %v4467, 1.442695
    %v4479 = vpow.pop %v4478
    %v4480 = vmul.f32 %v4468, 1.442695
    %v4481 = vpow.pop %v4480
    %v4482 = vmul.f32 %v4469, 1.442695
    %v4483 = vpow.pop %v4482
    %v4484 = vmul.f32 %v4470, 1.442695
    %v4485 = vpow.pop %v4484
    %v4486 = vmul.f32 %v4471, 1.442695
    %v4487 = vpow.pop %v4486
    %v4488 = vadd.f32 %v4473, 1.0
    %v4489 = vadd.f32 %v4475, 1.0
    %v4490 = vadd.f32 %v4477, 1.0
    %v4491 = vadd.f32 %v4479, 1.0
    %v4492 = vadd.f32 %v4481, 1.0
    %v4493 = vadd.f32 %v4483, 1.0
    %v4494 = vadd.f32 %v4485, 1.0
    %v4495 = vadd.f32 %v4487, 1.0
    %v4496 = vrcp.pop %v4488
    %v4497 = vmul.f32 1.0, %v4496
    %v4498 = vrcp.pop %v4489
    %v4499 = vmul.f32 1.0, %v4498
    %v4500 = vrcp.pop %v4490
    %v4501 = vmul.f32 1.0, %v4500
    %v4502 = vrcp.pop %v4491
    %v4503 = vmul.f32 1.0, %v4502
    %v4504 = vrcp.pop %v4492
    %v4505 = vmul.f32 1.0, %v4504
    %v4506 = vrcp.pop %v4493
    %v4507 = vmul.f32 1.0, %v4506
    %v4508 = vrcp.pop %v4494
    %v4509 = vmul.f32 1.0, %v4508
    %v4510 = vrcp.pop %v4495
    %v4511 = vmul.f32 1.0, %v4510
    %v4512 = vadd.f32 %v4255, %v982
    %v4514 = vcombine.high %v4512, %v4512
    %v4516 = vunpack.c.l.s4 1966171168
    %v4517 = vunpack.c.0.s8 %v4516
    %v4518 = vlaneseq
    %v4519 = vshrl.u32 %v4518, 7
    %v4520 = vsub.s32 %v4517, %v4519
    %v4521 = vrot.slane %v4512, %v4520
    %v4523 = vunpack.c.l.s4 1966171168
    %v4524 = vunpack.c.0.s8 %v4523
    %v4525 = vlaneseq
    %v4526 = vshrl.u32 %v4525, 7
    %v4527 = vsub.s32 %v4524, %v4526
    %v4528 = vrot.slane %v4514, %v4527
    %v4529 = vcombine.high %v4521, %v4521
    %v4530 = vcombine.high %v4528, %v4528
    %v4532 = vunpack.c.l.s4 1966171168
    %v4533 = vunpack.c.0.s8 %v4532
    %v4534 = vlaneseq
    %v4535 = vshrl.u32 %v4534, 7
    %v4536 = vsub.s32 %v4533, %v4535
    %v4537 = vrot.slane %v4521, %v4536
    %v4539 = vunpack.c.l.s4 1966171168
    %v4540 = vunpack.c.0.s8 %v4539
    %v4541 = vlaneseq
    %v4542 = vshrl.u32 %v4541, 7
    %v4543 = vsub.s32 %v4540, %v4542
    %v4544 = vrot.slane %v4528, %v4543
    %v4546 = vunpack.c.l.s4 1966171168
    %v4547 = vunpack.c.0.s8 %v4546
    %v4548 = vlaneseq
    %v4549 = vshrl.u32 %v4548, 7
    %v4550 = vsub.s32 %v4547, %v4549
    %v4551 = vrot.slane %v4529, %v4550
    %v4553 = vunpack.c.l.s4 1966171168
    %v4554 = vunpack.c.0.s8 %v4553
    %v4555 = vlaneseq
    %v4556 = vshrl.u32 %v4555, 7
    %v4557 = vsub.s32 %v4554, %v4556
    %v4558 = vrot.slane %v4530, %v4557
    %v4559 = vcombine.high %v4537, %v4537
    %v4560 = vcombine.high %v4544, %v4544
    %v4561 = vcombine.high %v4551, %v4551
    %v4562 = vcombine.high %v4558, %v4558
    %v4571 = vmul.f32 %v4359, %v4537
    %v4572 = vmul.f32 %v4361, %v4551
    %v4573 = vmul.f32 %v4363, %v4559
    %v4574 = vmul.f32 %v4365, %v4561
    %v4575 = vmul.f32 %v4367, %v4544
    %v4576 = vmul.f32 %v4369, %v4558
    %v4577 = vmul.f32 %v4371, %v4560
    %v4578 = vmul.f32 %v4373, %v4562
    %v4579 = vrot.slane %v4148, 2
    %v4580 = vrot.slane %v4150, 2
    %v4581 = vrot.slane %v4152, 2
    %v4582 = vrot.slane %v4154, 2
    %v4583 = vrot.slane %v4156, 2
    %v4584 = vrot.slane %v4158, 2
    %v4585 = vrot.slane %v4160, 2
    %v4586 = vrot.slane %v4162, 2
    %v4595 = vadd.f32 %v4579, %v4571
    %v4596 = vadd.f32 %v4580, %v4572
    %v4597 = vadd.f32 %v4581, %v4573
    %v4598 = vadd.f32 %v4582, %v4574
    %v4599 = vadd.f32 %v4583, %v4575
    %v4600 = vadd.f32 %v4584, %v4576
    %v4601 = vadd.f32 %v4585, %v4577
    %v4602 = vadd.f32 %v4586, %v4578
    %v4603 = vtanh.pop %v4595
    %v4604 = vtanh.pop %v4596
    %v4605 = vtanh.pop %v4597
    %v4606 = vtanh.pop %v4598
    %v4607 = vtanh.pop %v4599
    %v4608 = vtanh.pop %v4600
    %v4609 = vtanh.pop %v4601
    %v4610 = vtanh.pop %v4602
    %v4611 = vsub.f32 1.0, %v4497
    %v4612 = vsub.f32 1.0, %v4499
    %v4613 = vsub.f32 1.0, %v4501
    %v4614 = vsub.f32 1.0, %v4503
    %v4615 = vsub.f32 1.0, %v4505
    %v4616 = vsub.f32 1.0, %v4507
    %v4617 = vsub.f32 1.0, %v4509
    %v4618 = vsub.f32 1.0, %v4511
    %v4619 = vmul.f32 %v4611, %v4603
    %v4620 = vmul.f32 %v4612, %v4604
    %v4621 = vmul.f32 %v4613, %v4605
    %v4622 = vmul.f32 %v4614, %v4606
    %v4623 = vmul.f32 %v4615, %v4607
    %v4624 = vmul.f32 %v4616, %v4608
    %v4625 = vmul.f32 %v4617, %v4609
    %v4626 = vmul.f32 %v4618, %v4610
    %v4627 = vmul.f32 %v4497, %v4041
    %v4628 = vmul.f32 %v4499, %v4042
    %v4629 = vmul.f32 %v4501, %v4043
    %v4630 = vmul.f32 %v4503, %v4044
    %v4631 = vmul.f32 %v4505, %v4045
    %v4632 = vmul.f32 %v4507, %v4046
    %v4633 = vmul.f32 %v4509, %v4047
    %v4634 = vmul.f32 %v4511, %v4048
    %v4635 = vadd.f32 %v4619, %v4627
    %v4636 = vadd.f32 %v4620, %v4628
    %v4637 = vadd.f32 %v4621, %v4629
    %v4638 = vadd.f32 %v4622, %v4630
    %v4639 = vadd.f32 %v4623, %v4631
    %v4640 = vadd.f32 %v4624, %v4632
    %v4641 = vadd.f32 %v4625, %v4633
    %v4642 = vadd.f32 %v4626, %v4634
    %v4643 = vpack.c.bf16 %v4635, %v4635
    %v4644 = vpack.c.bf16 %v4636, %v4636
    %v4645 = vpack.c.bf16 %v4637, %v4637
    %v4646 = vpack.c.bf16 %v4638, %v4638
    %v4647 = vpack.c.bf16 %v4639, %v4639
    %v4648 = vpack.c.bf16 %v4640, %v4640
    %v4649 = vpack.c.bf16 %v4641, %v4641
    %v4650 = vpack.c.bf16 %v4642, %v4642
    %v4659 = vunpack.c.l.b16 %v4643
    %v4660 = vunpack.c.l.b16 %v4644
    %v4661 = vunpack.c.l.b16 %v4645
    %v4662 = vunpack.c.l.b16 %v4646
    %v4663 = vunpack.c.l.b16 %v4647
    %v4664 = vunpack.c.l.b16 %v4648
    %v4665 = vunpack.c.l.b16 %v4649
    %v4666 = vunpack.c.l.b16 %v4650
    %v4667 = vpack.c.b16 %v4659, %v4659
    %v4668 = vpack.c.b16 %v4660, %v4660
    %v4669 = vpack.c.b16 %v4661, %v4661
    %v4670 = vpack.c.b16 %v4662, %v4662
    %v4671 = vpack.c.b16 %v4663, %v4663
    %v4672 = vpack.c.b16 %v4664, %v4664
    %v4673 = vpack.c.b16 %v4665, %v4665
    %v4674 = vpack.c.b16 %v4666, %v4666
    %v4675 = vrot.slane %v4667, 5
    %v4676 = vrot.slane %v4668, 5
    %v4677 = vrot.slane %v4669, 5
    %v4678 = vrot.slane %v4670, 5
    %v4679 = vrot.slane %v4671, 5
    %v4680 = vrot.slane %v4672, 5
    %v4681 = vrot.slane %v4673, 5
    %v4682 = vrot.slane %v4674, 5
    %vm4691 = vcmask 1043459
    %vm4692 = vsmask.f32 3328
    %vm4693 = vmand %vm4691, %vm4692
    %v4694 = vld [vmem:[#allocation13] sm:$0x8]
    %v4695 = vsel %vm4693, %v4675, %v4694
    %4696 = vst [vmem:[#allocation13] sm:$0x8] %v4695
    %v4697 = vld [vmem:[#allocation13 + $0x8] sm:$0x8]
    %v4698 = vsel %vm4693, %v4676, %v4697
    %4699 = vst [vmem:[#allocation13 + $0x8] sm:$0x8] %v4698
    %v4700 = vld [vmem:[#allocation13 + $0x10] sm:$0x8]
    %v4701 = vsel %vm4693, %v4677, %v4700
    %4702 = vst [vmem:[#allocation13 + $0x10] sm:$0x8] %v4701
    %v4703 = vld [vmem:[#allocation13 + $0x18] sm:$0x8]
    %v4704 = vsel %vm4693, %v4678, %v4703
    %4705 = vst [vmem:[#allocation13 + $0x18] sm:$0x8] %v4704
    %v4706 = vld [vmem:[#allocation13 + $0x20] sm:$0x8]
    %v4707 = vsel %vm4693, %v4679, %v4706
    %4708 = vst [vmem:[#allocation13 + $0x20] sm:$0x8] %v4707
    %v4709 = vld [vmem:[#allocation13 + $0x28] sm:$0x8]
    %v4710 = vsel %vm4693, %v4680, %v4709
    %4711 = vst [vmem:[#allocation13 + $0x28] sm:$0x8] %v4710
    %v4712 = vld [vmem:[#allocation13 + $0x30] sm:$0x8]
    %v4713 = vsel %vm4693, %v4681, %v4712
    %4714 = vst [vmem:[#allocation13 + $0x30] sm:$0x8] %v4713
    %v4715 = vld [vmem:[#allocation13 + $0x38] sm:$0x8]
    %v4716 = vsel %vm4693, %v4682, %v4715
    %4717 = vst [vmem:[#allocation13 + $0x38] sm:$0x8] %v4716
    %s4718 = scalar_lea.vmem [#allocation3], 7
    %v4719 = vld [vmem:[%s4718] ss:$8 sm:$0x7]
    %s4720 = scalar_lea.vmem [#allocation3], 55
    %v4721 = vld [vmem:[%s4720] ss:$8 sm:$0x7]
    %s4722 = scalar_lea.vmem [#allocation3], 103
    %v4723 = vld [vmem:[%s4722] ss:$8 sm:$0x7]
    %s4724 = scalar_lea.vmem [#allocation3], 151
    %v4725 = vld [vmem:[%s4724] ss:$8 sm:$0x7]
    %s4726 = scalar_lea.vmem [#allocation3], 199
    %v4727 = vld [vmem:[%s4726] ss:$8 sm:$0x7]
    %s4728 = scalar_lea.vmem [#allocation3], 247
    %v4729 = vld [vmem:[%s4728] ss:$8 sm:$0x7]
    %s4730 = scalar_lea.vmem [#allocation3], 295
    %v4731 = vld [vmem:[%s4730] ss:$8 sm:$0x7]
    %s4732 = scalar_lea.vmem [#allocation3], 343
    %v4733 = vld [vmem:[%s4732] ss:$8 sm:$0x7]
    %v4734 = vrot.slane %v4660, 7
    %v4735 = vsel %vm1241, %v4734, %v4659
    %v4736 = vrot.slane %v4661, 6
    %v4737 = vsel %vm1244, %v4736, %v4735
    %v4738 = vrot.slane %v4662, 5
    %v4739 = vsel %vm1247, %v4738, %v4737
    %v4740 = vrot.slane %v4663, 4
    %v4741 = vsel %vm1250, %v4740, %v4739
    %v4742 = vrot.slane %v4664, 3
    %v4743 = vsel %vm1253, %v4742, %v4741
    %v4744 = vrot.slane %v4665, 2
    %v4745 = vsel %vm1256, %v4744, %v4743
    %v4746 = vrot.slane %v4666, 1
    %v4747 = vsel %vm1259, %v4746, %v4745
    %v4748 = vpack.c.b16 %v4747, %v4747
    %4750 = vmatprep.subr.bf16.mxu0 %v598
    %4751 = vmatpush1.bf16.msra.mxu0 %v597
    %4752 = vmatprep.subr.bf16.mxu0 %v601
    %4753 = vmatpush1.bf16.msra.mxu0 %v600
    %4754 = vmatprep.subr.bf16.mxu0 %v604
    %4755 = vmatpush1.bf16.msra.mxu0 %v603
    %4756 = vmatprep.subr.bf16.mxu0 %v607
    %4757 = vmatpush1.bf16.msra.mxu0 %v606
    %4758 = vmatprep.subr.bf16.mxu0 %v610
    %4759 = vmatpush1.bf16.msra.mxu0 %v609
    %4760 = vmatprep.subr.bf16.mxu0 %v613
    %4761 = vmatpush1.bf16.msra.mxu0 %v612
    %4762 = vmatprep.subr.bf16.mxu0 %v616
    %4763 = vmatpush1.bf16.msra.mxu0 %v615
    %4764 = vmatprep.subr.bf16.mxu0 %v619
    %4765 = vmatpush1.bf16.msra.mxu0 %v618
    %4766 = vmatprep.subr.bf16.mxu0 0
    %4767 = vmatpush1.bf16.msra.mxu0 0
    %4768 = vmatprep.subr.bf16.mxu0 0
    %4769 = vmatpush1.bf16.msra.mxu0 0
    %4770 = vmatprep.subr.bf16.mxu0 0
    %4771 = vmatpush1.bf16.msra.mxu0 0
    %4772 = vmatprep.subr.bf16.mxu0 0
    %4773 = vmatpush1.bf16.msra.mxu0 0
    %4774 = vmatprep.subr.bf16.mxu0 0
    %4775 = vmatpush1.bf16.msra.mxu0 0
    %4776 = vmatprep.subr.bf16.mxu0 0
    %4777 = vmatpush1.bf16.msra.mxu0 0
    %4778 = vmatprep.subr.bf16.mxu0 0
    %4779 = vmatpush1.bf16.msra.mxu0 0
    %4780 = vmatprep.subr.bf16.mxu0 0
    %4781 = vmatpush1.bf16.msra.mxu0 0
    %4782 = vmatprep.mubr.bf16.mxu0 0
    %4783 = vmatmul.mubr.bf16.gmra.mrb[0].mxu0 %v4748
    %v4784 = vpop.f32.mrb[0].mxu0
    %v4785 = vadd.f32 0.0, %v4784
    %v4786 = vpop.f32.mrb[0].mxu0
    %v4787 = vadd.f32 0.0, %v4786
    %v4788 = vpop.f32.mrb[0].mxu0
    %v4789 = vpop.f32.mrb[0].mxu0
    %4790 = vdwg.mxu0
    %4791 = vmatprep.subr.bf16.mxu0 0
    %4792 = vmatpush1.bf16.msra.mxu0 %v599
    %4793 = vmatprep.subr.bf16.mxu0 0
    %4794 = vmatpush1.bf16.msra.mxu0 %v602
    %4795 = vmatprep.subr.bf16.mxu0 0
    %4796 = vmatpush1.bf16.msra.mxu0 %v605
    %4797 = vmatprep.subr.bf16.mxu0 0
    %4798 = vmatpush1.bf16.msra.mxu0 %v608
    %4799 = vmatprep.subr.bf16.mxu0 0
    %4800 = vmatpush1.bf16.msra.mxu0 %v611
    %4801 = vmatprep.subr.bf16.mxu0 0
    %4802 = vmatpush1.bf16.msra.mxu0 %v614
    %4803 = vmatprep.subr.bf16.mxu0 0
    %4804 = vmatpush1.bf16.msra.mxu0 %v617
    %4805 = vmatprep.subr.bf16.mxu0 0
    %4806 = vmatpush1.bf16.msra.mxu0 %v620
    %4807 = vmatprep.subr.bf16.mxu0 0
    %4808 = vmatpush1.bf16.msra.mxu0 0
    %4809 = vmatprep.subr.bf16.mxu0 0
    %4810 = vmatpush1.bf16.msra.mxu0 0
    %4811 = vmatprep.subr.bf16.mxu0 0
    %4812 = vmatpush1.bf16.msra.mxu0 0
    %4813 = vmatprep.subr.bf16.mxu0 0
    %4814 = vmatpush1.bf16.msra.mxu0 0
    %4815 = vmatprep.subr.bf16.mxu0 0
    %4816 = vmatpush1.bf16.msra.mxu0 0
    %4817 = vmatprep.subr.bf16.mxu0 0
    %4818 = vmatpush1.bf16.msra.mxu0 0
    %4819 = vmatprep.subr.bf16.mxu0 0
    %4820 = vmatpush1.bf16.msra.mxu0 0
    %4821 = vmatprep.subr.bf16.mxu0 0
    %4822 = vmatpush1.bf16.msra.mxu0 0
    %4823 = vmatprep.mubr.bf16.mxu0 0
    %4824 = vmatmul.mubr.bf16.gmra.mrb[0].mxu0 %v4748
    %v4825 = vpop.f32.mrb[0].mxu0
    %v4826 = vadd.f32 0.0, %v4825
    %v4827 = vpop.f32.mrb[0].mxu0
    %v4828 = vpop.f32.mrb[0].mxu0
    %v4829 = vpop.f32.mrb[0].mxu0
    %4830 = vdwg.mxu0
    %v4832 = vcombine.high %v4785, %v4785
    %v4834 = vunpack.c.l.s4 1966171168
    %v4835 = vunpack.c.0.s8 %v4834
    %v4836 = vlaneseq
    %v4837 = vshrl.u32 %v4836, 7
    %v4838 = vsub.s32 %v4835, %v4837
    %v4839 = vrot.slane %v4785, %v4838
    %v4841 = vunpack.c.l.s4 1966171168
    %v4842 = vunpack.c.0.s8 %v4841
    %v4843 = vlaneseq
    %v4844 = vshrl.u32 %v4843, 7
    %v4845 = vsub.s32 %v4842, %v4844
    %v4846 = vrot.slane %v4832, %v4845
    %v4847 = vcombine.high %v4839, %v4839
    %v4848 = vcombine.high %v4846, %v4846
    %v4850 = vunpack.c.l.s4 1966171168
    %v4851 = vunpack.c.0.s8 %v4850
    %v4852 = vlaneseq
    %v4853 = vshrl.u32 %v4852, 7
    %v4854 = vsub.s32 %v4851, %v4853
    %v4855 = vrot.slane %v4839, %v4854
    %v4857 = vunpack.c.l.s4 1966171168
    %v4858 = vunpack.c.0.s8 %v4857
    %v4859 = vlaneseq
    %v4860 = vshrl.u32 %v4859, 7
    %v4861 = vsub.s32 %v4858, %v4860
    %v4862 = vrot.slane %v4846, %v4861
    %v4864 = vunpack.c.l.s4 1966171168
    %v4865 = vunpack.c.0.s8 %v4864
    %v4866 = vlaneseq
    %v4867 = vshrl.u32 %v4866, 7
    %v4868 = vsub.s32 %v4865, %v4867
    %v4869 = vrot.slane %v4847, %v4868
    %v4871 = vunpack.c.l.s4 1966171168
    %v4872 = vunpack.c.0.s8 %v4871
    %v4873 = vlaneseq
    %v4874 = vshrl.u32 %v4873, 7
    %v4875 = vsub.s32 %v4872, %v4874
    %v4876 = vrot.slane %v4848, %v4875
    %v4877 = vcombine.high %v4855, %v4855
    %v4878 = vcombine.high %v4862, %v4862
    %v4879 = vcombine.high %v4869, %v4869
    %v4880 = vcombine.high %v4876, %v4876
    %v4889 = vadd.f32 %v4719, %v4855
    %v4890 = vadd.f32 %v4721, %v4869
    %v4891 = vadd.f32 %v4723, %v4877
    %v4892 = vadd.f32 %v4725, %v4879
    %v4893 = vadd.f32 %v4727, %v4862
    %v4894 = vadd.f32 %v4729, %v4876
    %v4895 = vadd.f32 %v4731, %v4878
    %v4896 = vadd.f32 %v4733, %v4880
    %v4897 = vxor.u32 %v4889, 2147483648
    %v4898 = vxor.u32 %v4890, 2147483648
    %v4899 = vxor.u32 %v4891, 2147483648
    %v4900 = vxor.u32 %v4892, 2147483648
    %v4901 = vxor.u32 %v4893, 2147483648
    %v4902 = vxor.u32 %v4894, 2147483648
    %v4903 = vxor.u32 %v4895, 2147483648
    %v4904 = vxor.u32 %v4896, 2147483648
    %v4905 = vmul.f32 %v4897, 1.442695
    %v4906 = vpow.pop %v4905
    %v4907 = vmul.f32 %v4898, 1.442695
    %v4908 = vpow.pop %v4907
    %v4909 = vmul.f32 %v4899, 1.442695
    %v4910 = vpow.pop %v4909
    %v4911 = vmul.f32 %v4900, 1.442695
    %v4912 = vpow.pop %v4911
    %v4913 = vmul.f32 %v4901, 1.442695
    %v4914 = vpow.pop %v4913
    %v4915 = vmul.f32 %v4902, 1.442695
    %v4916 = vpow.pop %v4915
    %v4917 = vmul.f32 %v4903, 1.442695
    %v4918 = vpow.pop %v4917
    %v4919 = vmul.f32 %v4904, 1.442695
    %v4920 = vpow.pop %v4919
    %v4921 = vadd.f32 %v4906, 1.0
    %v4922 = vadd.f32 %v4908, 1.0
    %v4923 = vadd.f32 %v4910, 1.0
    %v4924 = vadd.f32 %v4912, 1.0
    %v4925 = vadd.f32 %v4914, 1.0
    %v4926 = vadd.f32 %v4916, 1.0
    %v4927 = vadd.f32 %v4918, 1.0
    %v4928 = vadd.f32 %v4920, 1.0
    %v4929 = vrcp.pop %v4921
    %v4930 = vmul.f32 1.0, %v4929
    %v4931 = vrcp.pop %v4922
    %v4932 = vmul.f32 1.0, %v4931
    %v4933 = vrcp.pop %v4923
    %v4934 = vmul.f32 1.0, %v4933
    %v4935 = vrcp.pop %v4924
    %v4936 = vmul.f32 1.0, %v4935
    %v4937 = vrcp.pop %v4925
    %v4938 = vmul.f32 1.0, %v4937
    %v4939 = vrcp.pop %v4926
    %v4940 = vmul.f32 1.0, %v4939
    %v4941 = vrcp.pop %v4927
    %v4942 = vmul.f32 1.0, %v4941
    %v4943 = vrcp.pop %v4928
    %v4944 = vmul.f32 1.0, %v4943
    %v4953 = vrot.slane %v4719, 1
    %v4954 = vrot.slane %v4721, 1
    %v4955 = vrot.slane %v4723, 1
    %v4956 = vrot.slane %v4725, 1
    %v4957 = vrot.slane %v4727, 1
    %v4958 = vrot.slane %v4729, 1
    %v4959 = vrot.slane %v4731, 1
    %v4960 = vrot.slane %v4733, 1
    %v4970 = vcombine.high %v4787, %v4787
    %v4972 = vunpack.c.l.s4 1966171168
    %v4973 = vunpack.c.0.s8 %v4972
    %v4974 = vlaneseq
    %v4975 = vshrl.u32 %v4974, 7
    %v4976 = vsub.s32 %v4973, %v4975
    %v4977 = vrot.slane %v4787, %v4976
    %v4979 = vunpack.c.l.s4 1966171168
    %v4980 = vunpack.c.0.s8 %v4979
    %v4981 = vlaneseq
    %v4982 = vshrl.u32 %v4981, 7
    %v4983 = vsub.s32 %v4980, %v4982
    %v4984 = vrot.slane %v4970, %v4983
    %v4985 = vcombine.high %v4977, %v4977
    %v4986 = vcombine.high %v4984, %v4984
    %v4988 = vunpack.c.l.s4 1966171168
    %v4989 = vunpack.c.0.s8 %v4988
    %v4990 = vlaneseq
    %v4991 = vshrl.u32 %v4990, 7
    %v4992 = vsub.s32 %v4989, %v4991
    %v4993 = vrot.slane %v4977, %v4992
    %v4995 = vunpack.c.l.s4 1966171168
    %v4996 = vunpack.c.0.s8 %v4995
    %v4997 = vlaneseq
    %v4998 = vshrl.u32 %v4997, 7
    %v4999 = vsub.s32 %v4996, %v4998
    %v5000 = vrot.slane %v4984, %v4999
    %v5002 = vunpack.c.l.s4 1966171168
    %v5003 = vunpack.c.0.s8 %v5002
    %v5004 = vlaneseq
    %v5005 = vshrl.u32 %v5004, 7
    %v5006 = vsub.s32 %v5003, %v5005
    %v5007 = vrot.slane %v4985, %v5006
    %v5009 = vunpack.c.l.s4 1966171168
    %v5010 = vunpack.c.0.s8 %v5009
    %v5011 = vlaneseq
    %v5012 = vshrl.u32 %v5011, 7
    %v5013 = vsub.s32 %v5010, %v5012
    %v5014 = vrot.slane %v4986, %v5013
    %v5015 = vcombine.high %v4993, %v4993
    %v5016 = vcombine.high %v5000, %v5000
    %v5017 = vcombine.high %v5007, %v5007
    %v5018 = vcombine.high %v5014, %v5014
    %v5027 = vadd.f32 %v4953, %v4993
    %v5028 = vadd.f32 %v4954, %v5007
    %v5029 = vadd.f32 %v4955, %v5015
    %v5030 = vadd.f32 %v4956, %v5017
    %v5031 = vadd.f32 %v4957, %v5000
    %v5032 = vadd.f32 %v4958, %v5014
    %v5033 = vadd.f32 %v4959, %v5016
    %v5034 = vadd.f32 %v4960, %v5018
    %v5035 = vxor.u32 %v5027, 2147483648
    %v5036 = vxor.u32 %v5028, 2147483648
    %v5037 = vxor.u32 %v5029, 2147483648
    %v5038 = vxor.u32 %v5030, 2147483648
    %v5039 = vxor.u32 %v5031, 2147483648
    %v5040 = vxor.u32 %v5032, 2147483648
    %v5041 = vxor.u32 %v5033, 2147483648
    %v5042 = vxor.u32 %v5034, 2147483648
    %v5043 = vmul.f32 %v5035, 1.442695
    %v5044 = vpow.pop %v5043
    %v5045 = vmul.f32 %v5036, 1.442695
    %v5046 = vpow.pop %v5045
    %v5047 = vmul.f32 %v5037, 1.442695
    %v5048 = vpow.pop %v5047
    %v5049 = vmul.f32 %v5038, 1.442695
    %v5050 = vpow.pop %v5049
    %v5051 = vmul.f32 %v5039, 1.442695
    %v5052 = vpow.pop %v5051
    %v5053 = vmul.f32 %v5040, 1.442695
    %v5054 = vpow.pop %v5053
    %v5055 = vmul.f32 %v5041, 1.442695
    %v5056 = vpow.pop %v5055
    %v5057 = vmul.f32 %v5042, 1.442695
    %v5058 = vpow.pop %v5057
    %v5059 = vadd.f32 %v5044, 1.0
    %v5060 = vadd.f32 %v5046, 1.0
    %v5061 = vadd.f32 %v5048, 1.0
    %v5062 = vadd.f32 %v5050, 1.0
    %v5063 = vadd.f32 %v5052, 1.0
    %v5064 = vadd.f32 %v5054, 1.0
    %v5065 = vadd.f32 %v5056, 1.0
    %v5066 = vadd.f32 %v5058, 1.0
    %v5067 = vrcp.pop %v5059
    %v5068 = vmul.f32 1.0, %v5067
    %v5069 = vrcp.pop %v5060
    %v5070 = vmul.f32 1.0, %v5069
    %v5071 = vrcp.pop %v5061
    %v5072 = vmul.f32 1.0, %v5071
    %v5073 = vrcp.pop %v5062
    %v5074 = vmul.f32 1.0, %v5073
    %v5075 = vrcp.pop %v5063
    %v5076 = vmul.f32 1.0, %v5075
    %v5077 = vrcp.pop %v5064
    %v5078 = vmul.f32 1.0, %v5077
    %v5079 = vrcp.pop %v5065
    %v5080 = vmul.f32 1.0, %v5079
    %v5081 = vrcp.pop %v5066
    %v5082 = vmul.f32 1.0, %v5081
    %v5083 = vadd.f32 %v4826, %v982
    %v5085 = vcombine.high %v5083, %v5083
    %v5087 = vunpack.c.l.s4 1966171168
    %v5088 = vunpack.c.0.s8 %v5087
    %v5089 = vlaneseq
    %v5090 = vshrl.u32 %v5089, 7
    %v5091 = vsub.s32 %v5088, %v5090
    %v5092 = vrot.slane %v5083, %v5091
    %v5094 = vunpack.c.l.s4 1966171168
    %v5095 = vunpack.c.0.s8 %v5094
    %v5096 = vlaneseq
    %v5097 = vshrl.u32 %v5096, 7
    %v5098 = vsub.s32 %v5095, %v5097
    %v5099 = vrot.slane %v5085, %v5098
    %v5100 = vcombine.high %v5092, %v5092
    %v5101 = vcombine.high %v5099, %v5099
    %v5103 = vunpack.c.l.s4 1966171168
    %v5104 = vunpack.c.0.s8 %v5103
    %v5105 = vlaneseq
    %v5106 = vshrl.u32 %v5105, 7
    %v5107 = vsub.s32 %v5104, %v5106
    %v5108 = vrot.slane %v5092, %v5107
    %v5110 = vunpack.c.l.s4 1966171168
    %v5111 = vunpack.c.0.s8 %v5110
    %v5112 = vlaneseq
    %v5113 = vshrl.u32 %v5112, 7
    %v5114 = vsub.s32 %v5111, %v5113
    %v5115 = vrot.slane %v5099, %v5114
    %v5117 = vunpack.c.l.s4 1966171168
    %v5118 = vunpack.c.0.s8 %v5117
    %v5119 = vlaneseq
    %v5120 = vshrl.u32 %v5119, 7
    %v5121 = vsub.s32 %v5118, %v5120
    %v5122 = vrot.slane %v5100, %v5121
    %v5124 = vunpack.c.l.s4 1966171168
    %v5125 = vunpack.c.0.s8 %v5124
    %v5126 = vlaneseq
    %v5127 = vshrl.u32 %v5126, 7
    %v5128 = vsub.s32 %v5125, %v5127
    %v5129 = vrot.slane %v5101, %v5128
    %v5130 = vcombine.high %v5108, %v5108
    %v5131 = vcombine.high %v5115, %v5115
    %v5132 = vcombine.high %v5122, %v5122
    %v5133 = vcombine.high %v5129, %v5129
    %v5142 = vmul.f32 %v4930, %v5108
    %v5143 = vmul.f32 %v4932, %v5122
    %v5144 = vmul.f32 %v4934, %v5130
    %v5145 = vmul.f32 %v4936, %v5132
    %v5146 = vmul.f32 %v4938, %v5115
    %v5147 = vmul.f32 %v4940, %v5129
    %v5148 = vmul.f32 %v4942, %v5131
    %v5149 = vmul.f32 %v4944, %v5133
    %v5150 = vrot.slane %v4719, 2
    %v5151 = vrot.slane %v4721, 2
    %v5152 = vrot.slane %v4723, 2
    %v5153 = vrot.slane %v4725, 2
    %v5154 = vrot.slane %v4727, 2
    %v5155 = vrot.slane %v4729, 2
    %v5156 = vrot.slane %v4731, 2
    %v5157 = vrot.slane %v4733, 2
    %v5166 = vadd.f32 %v5150, %v5142
    %v5167 = vadd.f32 %v5151, %v5143
    %v5168 = vadd.f32 %v5152, %v5144
    %v5169 = vadd.f32 %v5153, %v5145
    %v5170 = vadd.f32 %v5154, %v5146
    %v5171 = vadd.f32 %v5155, %v5147
    %v5172 = vadd.f32 %v5156, %v5148
    %v5173 = vadd.f32 %v5157, %v5149
    %v5174 = vtanh.pop %v5166
    %v5175 = vtanh.pop %v5167
    %v5176 = vtanh.pop %v5168
    %v5177 = vtanh.pop %v5169
    %v5178 = vtanh.pop %v5170
    %v5179 = vtanh.pop %v5171
    %v5180 = vtanh.pop %v5172
    %v5181 = vtanh.pop %v5173
    %v5182 = vsub.f32 1.0, %v5068
    %v5183 = vsub.f32 1.0, %v5070
    %v5184 = vsub.f32 1.0, %v5072
    %v5185 = vsub.f32 1.0, %v5074
    %v5186 = vsub.f32 1.0, %v5076
    %v5187 = vsub.f32 1.0, %v5078
    %v5188 = vsub.f32 1.0, %v5080
    %v5189 = vsub.f32 1.0, %v5082
    %v5190 = vmul.f32 %v5182, %v5174
    %v5191 = vmul.f32 %v5183, %v5175
    %v5192 = vmul.f32 %v5184, %v5176
    %v5193 = vmul.f32 %v5185, %v5177
    %v5194 = vmul.f32 %v5186, %v5178
    %v5195 = vmul.f32 %v5187, %v5179
    %v5196 = vmul.f32 %v5188, %v5180
    %v5197 = vmul.f32 %v5189, %v5181
    %v5198 = vmul.f32 %v5068, %v4635
    %v5199 = vmul.f32 %v5070, %v4636
    %v5200 = vmul.f32 %v5072, %v4637
    %v5201 = vmul.f32 %v5074, %v4638
    %v5202 = vmul.f32 %v5076, %v4639
    %v5203 = vmul.f32 %v5078, %v4640
    %v5204 = vmul.f32 %v5080, %v4641
    %v5205 = vmul.f32 %v5082, %v4642
    %v5206 = vadd.f32 %v5190, %v5198
    %v5207 = vadd.f32 %v5191, %v5199
    %v5208 = vadd.f32 %v5192, %v5200
    %v5209 = vadd.f32 %v5193, %v5201
    %v5210 = vadd.f32 %v5194, %v5202
    %v5211 = vadd.f32 %v5195, %v5203
    %v5212 = vadd.f32 %v5196, %v5204
    %v5213 = vadd.f32 %v5197, %v5205
    %v5214 = vpack.c.bf16 %v5206, %v5206
    %v5215 = vpack.c.bf16 %v5207, %v5207
    %v5216 = vpack.c.bf16 %v5208, %v5208
    %v5217 = vpack.c.bf16 %v5209, %v5209
    %v5218 = vpack.c.bf16 %v5210, %v5210
    %v5219 = vpack.c.bf16 %v5211, %v5211
    %v5220 = vpack.c.bf16 %v5212, %v5212
    %v5221 = vpack.c.bf16 %v5213, %v5213
    %v5230 = vunpack.c.l.b16 %v5214
    %v5231 = vunpack.c.l.b16 %v5215
    %v5232 = vunpack.c.l.b16 %v5216
    %v5233 = vunpack.c.l.b16 %v5217
    %v5234 = vunpack.c.l.b16 %v5218
    %v5235 = vunpack.c.l.b16 %v5219
    %v5236 = vunpack.c.l.b16 %v5220
    %v5237 = vunpack.c.l.b16 %v5221
    %v5238 = vpack.c.b16 %v5230, %v5230
    %v5239 = vpack.c.b16 %v5231, %v5231
    %v5240 = vpack.c.b16 %v5232, %v5232
    %v5241 = vpack.c.b16 %v5233, %v5233
    %v5242 = vpack.c.b16 %v5234, %v5234
    %v5243 = vpack.c.b16 %v5235, %v5235
    %v5244 = vpack.c.b16 %v5236, %v5236
    %v5245 = vpack.c.b16 %v5237, %v5237
    %v5247 = vshll.u32 %v5238, 16
    %v5249 = vrot.slane %v5247, 5
    %v5251 = vshll.u32 %v5239, 16
    %v5253 = vrot.slane %v5251, 5
    %v5255 = vshll.u32 %v5240, 16
    %v5257 = vrot.slane %v5255, 5
    %v5259 = vshll.u32 %v5241, 16
    %v5261 = vrot.slane %v5259, 5
    %v5263 = vshll.u32 %v5242, 16
    %v5265 = vrot.slane %v5263, 5
    %v5267 = vshll.u32 %v5243, 16
    %v5269 = vrot.slane %v5267, 5
    %v5271 = vshll.u32 %v5244, 16
    %v5273 = vrot.slane %v5271, 5
    %v5275 = vshll.u32 %v5245, 16
    %v5277 = vrot.slane %v5275, 5
    %vm5286 = vsmask.f32 7950
    %vm5287 = vmand %vm4691, %vm5286
    %v5288 = vld [vmem:[#allocation13] sm:$0x8]
    %v5289 = vsel %vm5287, %v5249, %v5288
    %5290 = vst [vmem:[#allocation13] sm:$0x8] %v5289
    %v5291 = vld [vmem:[#allocation13 + $0x8] sm:$0x8]
    %v5292 = vsel %vm5287, %v5253, %v5291
    %5293 = vst [vmem:[#allocation13 + $0x8] sm:$0x8] %v5292
    %v5294 = vld [vmem:[#allocation13 + $0x10] sm:$0x8]
    %v5295 = vsel %vm5287, %v5257, %v5294
    %5296 = vst [vmem:[#allocation13 + $0x10] sm:$0x8] %v5295
    %v5297 = vld [vmem:[#allocation13 + $0x18] sm:$0x8]
    %v5298 = vsel %vm5287, %v5261, %v5297
    %5299 = vst [vmem:[#allocation13 + $0x18] sm:$0x8] %v5298
    %v5300 = vld [vmem:[#allocation13 + $0x20] sm:$0x8]
    %v5301 = vsel %vm5287, %v5265, %v5300
    %5302 = vst [vmem:[#allocation13 + $0x20] sm:$0x8] %v5301
    %v5303 = vld [vmem:[#allocation13 + $0x28] sm:$0x8]
    %v5304 = vsel %vm5287, %v5269, %v5303
    %5305 = vst [vmem:[#allocation13 + $0x28] sm:$0x8] %v5304
    %v5306 = vld [vmem:[#allocation13 + $0x30] sm:$0x8]
    %v5307 = vsel %vm5287, %v5273, %v5306
    %5308 = vst [vmem:[#allocation13 + $0x30] sm:$0x8] %v5307
    %v5309 = vld [vmem:[#allocation13 + $0x38] sm:$0x8]
    %v5310 = vsel %vm5287, %v5277, %v5309
    %5311 = vst [vmem:[#allocation13 + $0x38] sm:$0x8] %v5310
    %s5312 = scalar_lea.vmem [#allocation3], 24
    %v5313 = vld [vmem:[%s5312] ss:$8 sm:$0x7]
    %s5314 = scalar_lea.vmem [#allocation3], 72
    %v5315 = vld [vmem:[%s5314] ss:$8 sm:$0x7]
    %s5316 = scalar_lea.vmem [#allocation3], 120
    %v5317 = vld [vmem:[%s5316] ss:$8 sm:$0x7]
    %s5318 = scalar_lea.vmem [#allocation3], 168
    %v5319 = vld [vmem:[%s5318] ss:$8 sm:$0x7]
    %s5320 = scalar_lea.vmem [#allocation3], 216
    %v5321 = vld [vmem:[%s5320] ss:$8 sm:$0x7]
    %s5322 = scalar_lea.vmem [#allocation3], 264
    %v5323 = vld [vmem:[%s5322] ss:$8 sm:$0x7]
    %s5324 = scalar_lea.vmem [#allocation3], 312
    %v5325 = vld [vmem:[%s5324] ss:$8 sm:$0x7]
    %s5326 = scalar_lea.vmem [#allocation3], 360
    %v5327 = vld [vmem:[%s5326] ss:$8 sm:$0x7]
    %v5328 = vrot.slane %v5231, 7
    %v5329 = vsel %vm1241, %v5328, %v5230
    %v5330 = vrot.slane %v5232, 6
    %v5331 = vsel %vm1244, %v5330, %v5329
    %v5332 = vrot.slane %v5233, 5
    %v5333 = vsel %vm1247, %v5332, %v5331
    %v5334 = vrot.slane %v5234, 4
    %v5335 = vsel %vm1250, %v5334, %v5333
    %v5336 = vrot.slane %v5235, 3
    %v5337 = vsel %vm1253, %v5336, %v5335
    %v5338 = vrot.slane %v5236, 2
    %v5339 = vsel %vm1256, %v5338, %v5337
    %v5340 = vrot.slane %v5237, 1
    %v5341 = vsel %vm1259, %v5340, %v5339
    %v5342 = vpack.c.b16 %v5341, %v5341
    %5344 = vmatprep.subr.bf16.mxu0 %v598
    %5345 = vmatpush1.bf16.msra.mxu0 %v597
    %5346 = vmatprep.subr.bf16.mxu0 %v601
    %5347 = vmatpush1.bf16.msra.mxu0 %v600
    %5348 = vmatprep.subr.bf16.mxu0 %v604
    %5349 = vmatpush1.bf16.msra.mxu0 %v603
    %5350 = vmatprep.subr.bf16.mxu0 %v607
    %5351 = vmatpush1.bf16.msra.mxu0 %v606
    %5352 = vmatprep.subr.bf16.mxu0 %v610
    %5353 = vmatpush1.bf16.msra.mxu0 %v609
    %5354 = vmatprep.subr.bf16.mxu0 %v613
    %5355 = vmatpush1.bf16.msra.mxu0 %v612
    %5356 = vmatprep.subr.bf16.mxu0 %v616
    %5357 = vmatpush1.bf16.msra.mxu0 %v615
    %5358 = vmatprep.subr.bf16.mxu0 %v619
    %5359 = vmatpush1.bf16.msra.mxu0 %v618
    %5360 = vmatprep.subr.bf16.mxu0 0
    %5361 = vmatpush1.bf16.msra.mxu0 0
    %5362 = vmatprep.subr.bf16.mxu0 0
    %5363 = vmatpush1.bf16.msra.mxu0 0
    %5364 = vmatprep.subr.bf16.mxu0 0
    %5365 = vmatpush1.bf16.msra.mxu0 0
    %5366 = vmatprep.subr.bf16.mxu0 0
    %5367 = vmatpush1.bf16.msra.mxu0 0
    %5368 = vmatprep.subr.bf16.mxu0 0
    %5369 = vmatpush1.bf16.msra.mxu0 0
    %5370 = vmatprep.subr.bf16.mxu0 0
    %5371 = vmatpush1.bf16.msra.mxu0 0
    %5372 = vmatprep.subr.bf16.mxu0 0
    %5373 = vmatpush1.bf16.msra.mxu0 0
    %5374 = vmatprep.subr.bf16.mxu0 0
    %5375 = vmatpush1.bf16.msra.mxu0 0
    %5376 = vmatprep.mubr.bf16.mxu0 0
    %5377 = vmatmul.mubr.bf16.gmra.mrb[0].mxu0 %v5342
    %v5378 = vpop.f32.mrb[0].mxu0
    %v5379 = vadd.f32 0.0, %v5378
    %v5380 = vpop.f32.mrb[0].mxu0
    %v5381 = vadd.f32 0.0, %v5380
    %v5382 = vpop.f32.mrb[0].mxu0
    %v5383 = vpop.f32.mrb[0].mxu0
    %5384 = vdwg.mxu0
    %5385 = vmatprep.subr.bf16.mxu0 0
    %5386 = vmatpush1.bf16.msra.mxu0 %v599
    %5387 = vmatprep.subr.bf16.mxu0 0
    %5388 = vmatpush1.bf16.msra.mxu0 %v602
    %5389 = vmatprep.subr.bf16.mxu0 0
    %5390 = vmatpush1.bf16.msra.mxu0 %v605
    %5391 = vmatprep.subr.bf16.mxu0 0
    %5392 = vmatpush1.bf16.msra.mxu0 %v608
    %5393 = vmatprep.subr.bf16.mxu0 0
    %5394 = vmatpush1.bf16.msra.mxu0 %v611
    %5395 = vmatprep.subr.bf16.mxu0 0
    %5396 = vmatpush1.bf16.msra.mxu0 %v614
    %5397 = vmatprep.subr.bf16.mxu0 0
    %5398 = vmatpush1.bf16.msra.mxu0 %v617
    %5399 = vmatprep.subr.bf16.mxu0 0
    %5400 = vmatpush1.bf16.msra.mxu0 %v620
    %5401 = vmatprep.subr.bf16.mxu0 0
    %5402 = vmatpush1.bf16.msra.mxu0 0
    %5403 = vmatprep.subr.bf16.mxu0 0
    %5404 = vmatpush1.bf16.msra.mxu0 0
    %5405 = vmatprep.subr.bf16.mxu0 0
    %5406 = vmatpush1.bf16.msra.mxu0 0
    %5407 = vmatprep.subr.bf16.mxu0 0
    %5408 = vmatpush1.bf16.msra.mxu0 0
    %5409 = vmatprep.subr.bf16.mxu0 0
    %5410 = vmatpush1.bf16.msra.mxu0 0
    %5411 = vmatprep.subr.bf16.mxu0 0
    %5412 = vmatpush1.bf16.msra.mxu0 0
    %5413 = vmatprep.subr.bf16.mxu0 0
    %5414 = vmatpush1.bf16.msra.mxu0 0
    %5415 = vmatprep.subr.bf16.mxu0 0
    %5416 = vmatpush1.bf16.msra.mxu0 0
    %5417 = vmatprep.mubr.bf16.mxu0 0
    %5418 = vmatmul.mubr.bf16.gmra.mrb[0].mxu0 %v5342
    %v5419 = vpop.f32.mrb[0].mxu0
    %v5420 = vadd.f32 0.0, %v5419
    %v5421 = vpop.f32.mrb[0].mxu0
    %v5422 = vpop.f32.mrb[0].mxu0
    %v5423 = vpop.f32.mrb[0].mxu0
    %5424 = vdwg.mxu0
    %v5426 = vcombine.high %v5379, %v5379
    %v5428 = vunpack.c.l.s4 1966171168
    %v5429 = vunpack.c.0.s8 %v5428
    %v5430 = vlaneseq
    %v5431 = vshrl.u32 %v5430, 7
    %v5432 = vsub.s32 %v5429, %v5431
    %v5433 = vrot.slane %v5379, %v5432
    %v5435 = vunpack.c.l.s4 1966171168
    %v5436 = vunpack.c.0.s8 %v5435
    %v5437 = vlaneseq
    %v5438 = vshrl.u32 %v5437, 7
    %v5439 = vsub.s32 %v5436, %v5438
    %v5440 = vrot.slane %v5426, %v5439
    %v5441 = vcombine.high %v5433, %v5433
    %v5442 = vcombine.high %v5440, %v5440
    %v5444 = vunpack.c.l.s4 1966171168
    %v5445 = vunpack.c.0.s8 %v5444
    %v5446 = vlaneseq
    %v5447 = vshrl.u32 %v5446, 7
    %v5448 = vsub.s32 %v5445, %v5447
    %v5449 = vrot.slane %v5433, %v5448
    %v5451 = vunpack.c.l.s4 1966171168
    %v5452 = vunpack.c.0.s8 %v5451
    %v5453 = vlaneseq
    %v5454 = vshrl.u32 %v5453, 7
    %v5455 = vsub.s32 %v5452, %v5454
    %v5456 = vrot.slane %v5440, %v5455
    %v5458 = vunpack.c.l.s4 1966171168
    %v5459 = vunpack.c.0.s8 %v5458
    %v5460 = vlaneseq
    %v5461 = vshrl.u32 %v5460, 7
    %v5462 = vsub.s32 %v5459, %v5461
    %v5463 = vrot.slane %v5441, %v5462
    %v5465 = vunpack.c.l.s4 1966171168
    %v5466 = vunpack.c.0.s8 %v5465
    %v5467 = vlaneseq
    %v5468 = vshrl.u32 %v5467, 7
    %v5469 = vsub.s32 %v5466, %v5468
    %v5470 = vrot.slane %v5442, %v5469
    %v5471 = vcombine.high %v5449, %v5449
    %v5472 = vcombine.high %v5456, %v5456
    %v5473 = vcombine.high %v5463, %v5463
    %v5474 = vcombine.high %v5470, %v5470
    %v5483 = vadd.f32 %v5313, %v5449
    %v5484 = vadd.f32 %v5315, %v5463
    %v5485 = vadd.f32 %v5317, %v5471
    %v5486 = vadd.f32 %v5319, %v5473
    %v5487 = vadd.f32 %v5321, %v5456
    %v5488 = vadd.f32 %v5323, %v5470
    %v5489 = vadd.f32 %v5325, %v5472
    %v5490 = vadd.f32 %v5327, %v5474
    %v5491 = vxor.u32 %v5483, 2147483648
    %v5492 = vxor.u32 %v5484, 2147483648
    %v5493 = vxor.u32 %v5485, 2147483648
    %v5494 = vxor.u32 %v5486, 2147483648
    %v5495 = vxor.u32 %v5487, 2147483648
    %v5496 = vxor.u32 %v5488, 2147483648
    %v5497 = vxor.u32 %v5489, 2147483648
    %v5498 = vxor.u32 %v5490, 2147483648
    %v5499 = vmul.f32 %v5491, 1.442695
    %v5500 = vpow.pop %v5499
    %v5501 = vmul.f32 %v5492, 1.442695
    %v5502 = vpow.pop %v5501
    %v5503 = vmul.f32 %v5493, 1.442695
    %v5504 = vpow.pop %v5503
    %v5505 = vmul.f32 %v5494, 1.442695
    %v5506 = vpow.pop %v5505
    %v5507 = vmul.f32 %v5495, 1.442695
    %v5508 = vpow.pop %v5507
    %v5509 = vmul.f32 %v5496, 1.442695
    %v5510 = vpow.pop %v5509
    %v5511 = vmul.f32 %v5497, 1.442695
    %v5512 = vpow.pop %v5511
    %v5513 = vmul.f32 %v5498, 1.442695
    %v5514 = vpow.pop %v5513
    %v5515 = vadd.f32 %v5500, 1.0
    %v5516 = vadd.f32 %v5502, 1.0
    %v5517 = vadd.f32 %v5504, 1.0
    %v5518 = vadd.f32 %v5506, 1.0
    %v5519 = vadd.f32 %v5508, 1.0
    %v5520 = vadd.f32 %v5510, 1.0
    %v5521 = vadd.f32 %v5512, 1.0
    %v5522 = vadd.f32 %v5514, 1.0
    %v5523 = vrcp.pop %v5515
    %v5524 = vmul.f32 1.0, %v5523
    %v5525 = vrcp.pop %v5516
    %v5526 = vmul.f32 1.0, %v5525
    %v5527 = vrcp.pop %v5517
    %v5528 = vmul.f32 1.0, %v5527
    %v5529 = vrcp.pop %v5518
    %v5530 = vmul.f32 1.0, %v5529
    %v5531 = vrcp.pop %v5519
    %v5532 = vmul.f32 1.0, %v5531
    %v5533 = vrcp.pop %v5520
    %v5534 = vmul.f32 1.0, %v5533
    %v5535 = vrcp.pop %v5521
    %v5536 = vmul.f32 1.0, %v5535
    %v5537 = vrcp.pop %v5522
    %v5538 = vmul.f32 1.0, %v5537
    %v5547 = vrot.slane %v5313, 1
    %v5548 = vrot.slane %v5315, 1
    %v5549 = vrot.slane %v5317, 1
    %v5550 = vrot.slane %v5319, 1
    %v5551 = vrot.slane %v5321, 1
    %v5552 = vrot.slane %v5323, 1
    %v5553 = vrot.slane %v5325, 1
    %v5554 = vrot.slane %v5327, 1
    %v5564 = vcombine.high %v5381, %v5381
    %v5566 = vunpack.c.l.s4 1966171168
    %v5567 = vunpack.c.0.s8 %v5566
    %v5568 = vlaneseq
    %v5569 = vshrl.u32 %v5568, 7
    %v5570 = vsub.s32 %v5567, %v5569
    %v5571 = vrot.slane %v5381, %v5570
    %v5573 = vunpack.c.l.s4 1966171168
    %v5574 = vunpack.c.0.s8 %v5573
    %v5575 = vlaneseq
    %v5576 = vshrl.u32 %v5575, 7
    %v5577 = vsub.s32 %v5574, %v5576
    %v5578 = vrot.slane %v5564, %v5577
    %v5579 = vcombine.high %v5571, %v5571
    %v5580 = vcombine.high %v5578, %v5578
    %v5582 = vunpack.c.l.s4 1966171168
    %v5583 = vunpack.c.0.s8 %v5582
    %v5584 = vlaneseq
    %v5585 = vshrl.u32 %v5584, 7
    %v5586 = vsub.s32 %v5583, %v5585
    %v5587 = vrot.slane %v5571, %v5586
    %v5589 = vunpack.c.l.s4 1966171168
    %v5590 = vunpack.c.0.s8 %v5589
    %v5591 = vlaneseq
    %v5592 = vshrl.u32 %v5591, 7
    %v5593 = vsub.s32 %v5590, %v5592
    %v5594 = vrot.slane %v5578, %v5593
    %v5596 = vunpack.c.l.s4 1966171168
    %v5597 = vunpack.c.0.s8 %v5596
    %v5598 = vlaneseq
    %v5599 = vshrl.u32 %v5598, 7
    %v5600 = vsub.s32 %v5597, %v5599
    %v5601 = vrot.slane %v5579, %v5600
    %v5603 = vunpack.c.l.s4 1966171168
    %v5604 = vunpack.c.0.s8 %v5603
    %v5605 = vlaneseq
    %v5606 = vshrl.u32 %v5605, 7
    %v5607 = vsub.s32 %v5604, %v5606
    %v5608 = vrot.slane %v5580, %v5607
    %v5609 = vcombine.high %v5587, %v5587
    %v5610 = vcombine.high %v5594, %v5594
    %v5611 = vcombine.high %v5601, %v5601
    %v5612 = vcombine.high %v5608, %v5608
    %v5621 = vadd.f32 %v5547, %v5587
    %v5622 = vadd.f32 %v5548, %v5601
    %v5623 = vadd.f32 %v5549, %v5609
    %v5624 = vadd.f32 %v5550, %v5611
    %v5625 = vadd.f32 %v5551, %v5594
    %v5626 = vadd.f32 %v5552, %v5608
    %v5627 = vadd.f32 %v5553, %v5610
    %v5628 = vadd.f32 %v5554, %v5612
    %v5629 = vxor.u32 %v5621, 2147483648
    %v5630 = vxor.u32 %v5622, 2147483648
    %v5631 = vxor.u32 %v5623, 2147483648
    %v5632 = vxor.u32 %v5624, 2147483648
    %v5633 = vxor.u32 %v5625, 2147483648
    %v5634 = vxor.u32 %v5626, 2147483648
    %v5635 = vxor.u32 %v5627, 2147483648
    %v5636 = vxor.u32 %v5628, 2147483648
    %v5637 = vmul.f32 %v5629, 1.442695
    %v5638 = vpow.pop %v5637
    %v5639 = vmul.f32 %v5630, 1.442695
    %v5640 = vpow.pop %v5639
    %v5641 = vmul.f32 %v5631, 1.442695
    %v5642 = vpow.pop %v5641
    %v5643 = vmul.f32 %v5632, 1.442695
    %v5644 = vpow.pop %v5643
    %v5645 = vmul.f32 %v5633, 1.442695
    %v5646 = vpow.pop %v5645
    %v5647 = vmul.f32 %v5634, 1.442695
    %v5648 = vpow.pop %v5647
    %v5649 = vmul.f32 %v5635, 1.442695
    %v5650 = vpow.pop %v5649
    %v5651 = vmul.f32 %v5636, 1.442695
    %v5652 = vpow.pop %v5651
    %v5653 = vadd.f32 %v5638, 1.0
    %v5654 = vadd.f32 %v5640, 1.0
    %v5655 = vadd.f32 %v5642, 1.0
    %v5656 = vadd.f32 %v5644, 1.0
    %v5657 = vadd.f32 %v5646, 1.0
    %v5658 = vadd.f32 %v5648, 1.0
    %v5659 = vadd.f32 %v5650, 1.0
    %v5660 = vadd.f32 %v5652, 1.0
    %v5661 = vrcp.pop %v5653
    %v5662 = vmul.f32 1.0, %v5661
    %v5663 = vrcp.pop %v5654
    %v5664 = vmul.f32 1.0, %v5663
    %v5665 = vrcp.pop %v5655
    %v5666 = vmul.f32 1.0, %v5665
    %v5667 = vrcp.pop %v5656
    %v5668 = vmul.f32 1.0, %v5667
    %v5669 = vrcp.pop %v5657
    %v5670 = vmul.f32 1.0, %v5669
    %v5671 = vrcp.pop %v5658
    %v5672 = vmul.f32 1.0, %v5671
    %v5673 = vrcp.pop %v5659
    %v5674 = vmul.f32 1.0, %v5673
    %v5675 = vrcp.pop %v5660
    %v5676 = vmul.f32 1.0, %v5675
    %v5677 = vadd.f32 %v5420, %v982
    %v5679 = vcombine.high %v5677, %v5677
    %v5681 = vunpack.c.l.s4 1966171168
    %v5682 = vunpack.c.0.s8 %v5681
    %v5683 = vlaneseq
    %v5684 = vshrl.u32 %v5683, 7
    %v5685 = vsub.s32 %v5682, %v5684
    %v5686 = vrot.slane %v5677, %v5685
    %v5688 = vunpack.c.l.s4 1966171168
    %v5689 = vunpack.c.0.s8 %v5688
    %v5690 = vlaneseq
    %v5691 = vshrl.u32 %v5690, 7
    %v5692 = vsub.s32 %v5689, %v5691
    %v5693 = vrot.slane %v5679, %v5692
    %v5694 = vcombine.high %v5686, %v5686
    %v5695 = vcombine.high %v5693, %v5693
    %v5697 = vunpack.c.l.s4 1966171168
    %v5698 = vunpack.c.0.s8 %v5697
    %v5699 = vlaneseq
    %v5700 = vshrl.u32 %v5699, 7
    %v5701 = vsub.s32 %v5698, %v5700
    %v5702 = vrot.slane %v5686, %v5701
    %v5704 = vunpack.c.l.s4 1966171168
    %v5705 = vunpack.c.0.s8 %v5704
    %v5706 = vlaneseq
    %v5707 = vshrl.u32 %v5706, 7
    %v5708 = vsub.s32 %v5705, %v5707
    %v5709 = vrot.slane %v5693, %v5708
    %v5711 = vunpack.c.l.s4 1966171168
    %v5712 = vunpack.c.0.s8 %v5711
    %v5713 = vlaneseq
    %v5714 = vshrl.u32 %v5713, 7
    %v5715 = vsub.s32 %v5712, %v5714
    %v5716 = vrot.slane %v5694, %v5715
    %v5718 = vunpack.c.l.s4 1966171168
    %v5719 = vunpack.c.0.s8 %v5718
    %v5720 = vlaneseq
    %v5721 = vshrl.u32 %v5720, 7
    %v5722 = vsub.s32 %v5719, %v5721
    %v5723 = vrot.slane %v5695, %v5722
    %v5724 = vcombine.high %v5702, %v5702
    %v5725 = vcombine.high %v5709, %v5709
    %v5726 = vcombine.high %v5716, %v5716
    %v5727 = vcombine.high %v5723, %v5723
    %v5736 = vmul.f32 %v5524, %v5702
    %v5737 = vmul.f32 %v5526, %v5716
    %v5738 = vmul.f32 %v5528, %v5724
    %v5739 = vmul.f32 %v5530, %v5726
    %v5740 = vmul.f32 %v5532, %v5709
    %v5741 = vmul.f32 %v5534, %v5723
    %v5742 = vmul.f32 %v5536, %v5725
    %v5743 = vmul.f32 %v5538, %v5727
    %v5744 = vrot.slane %v5313, 2
    %v5745 = vrot.slane %v5315, 2
    %v5746 = vrot.slane %v5317, 2
    %v5747 = vrot.slane %v5319, 2
    %v5748 = vrot.slane %v5321, 2
    %v5749 = vrot.slane %v5323, 2
    %v5750 = vrot.slane %v5325, 2
    %v5751 = vrot.slane %v5327, 2
    %v5760 = vadd.f32 %v5744, %v5736
    %v5761 = vadd.f32 %v5745, %v5737
    %v5762 = vadd.f32 %v5746, %v5738
    %v5763 = vadd.f32 %v5747, %v5739
    %v5764 = vadd.f32 %v5748, %v5740
    %v5765 = vadd.f32 %v5749, %v5741
    %v5766 = vadd.f32 %v5750, %v5742
    %v5767 = vadd.f32 %v5751, %v5743
    %v5768 = vtanh.pop %v5760
    %v5769 = vtanh.pop %v5761
    %v5770 = vtanh.pop %v5762
    %v5771 = vtanh.pop %v5763
    %v5772 = vtanh.pop %v5764
    %v5773 = vtanh.pop %v5765
    %v5774 = vtanh.pop %v5766
    %v5775 = vtanh.pop %v5767
    %v5776 = vsub.f32 1.0, %v5662
    %v5777 = vsub.f32 1.0, %v5664
    %v5778 = vsub.f32 1.0, %v5666
    %v5779 = vsub.f32 1.0, %v5668
    %v5780 = vsub.f32 1.0, %v5670
    %v5781 = vsub.f32 1.0, %v5672
    %v5782 = vsub.f32 1.0, %v5674
    %v5783 = vsub.f32 1.0, %v5676
    %v5784 = vmul.f32 %v5776, %v5768
    %v5785 = vmul.f32 %v5777, %v5769
    %v5786 = vmul.f32 %v5778, %v5770
    %v5787 = vmul.f32 %v5779, %v5771
    %v5788 = vmul.f32 %v5780, %v5772
    %v5789 = vmul.f32 %v5781, %v5773
    %v5790 = vmul.f32 %v5782, %v5774
    %v5791 = vmul.f32 %v5783, %v5775
    %v5792 = vmul.f32 %v5662, %v5206
    %v5793 = vmul.f32 %v5664, %v5207
    %v5794 = vmul.f32 %v5666, %v5208
    %v5795 = vmul.f32 %v5668, %v5209
    %v5796 = vmul.f32 %v5670, %v5210
    %v5797 = vmul.f32 %v5672, %v5211
    %v5798 = vmul.f32 %v5674, %v5212
    %v5799 = vmul.f32 %v5676, %v5213
    %v5800 = vadd.f32 %v5784, %v5792
    %v5801 = vadd.f32 %v5785, %v5793
    %v5802 = vadd.f32 %v5786, %v5794
    %v5803 = vadd.f32 %v5787, %v5795
    %v5804 = vadd.f32 %v5788, %v5796
    %v5805 = vadd.f32 %v5789, %v5797
    %v5806 = vadd.f32 %v5790, %v5798
    %v5807 = vadd.f32 %v5791, %v5799
    %v5808 = vpack.c.bf16 %v5800, %v5800
    %v5809 = vpack.c.bf16 %v5801, %v5801
    %v5810 = vpack.c.bf16 %v5802, %v5802
    %v5811 = vpack.c.bf16 %v5803, %v5803
    %v5812 = vpack.c.bf16 %v5804, %v5804
    %v5813 = vpack.c.bf16 %v5805, %v5805
    %v5814 = vpack.c.bf16 %v5806, %v5806
    %v5815 = vpack.c.bf16 %v5807, %v5807
    %v5816 = vld [vmem:[#allocation13 + $0x4] sm:$0x1]
    %v5817 = vsel %vm1183, %v5808, %v5816
    %5818 = vst [vmem:[#allocation13 + $0x4] sm:$0x1] %v5817
    %v5819 = vld [vmem:[#allocation13 + $0xc] sm:$0x1]
    %v5820 = vsel %vm1183, %v5809, %v5819
    %5821 = vst [vmem:[#allocation13 + $0xc] sm:$0x1] %v5820
    %v5822 = vld [vmem:[#allocation13 + $0x14] sm:$0x1]
    %v5823 = vsel %vm1183, %v5810, %v5822
    %5824 = vst [vmem:[#allocation13 + $0x14] sm:$0x1] %v5823
    %v5825 = vld [vmem:[#allocation13 + $0x1c] sm:$0x1]
    %v5826 = vsel %vm1183, %v5811, %v5825
    %5827 = vst [vmem:[#allocation13 + $0x1c] sm:$0x1] %v5826
    %v5828 = vld [vmem:[#allocation13 + $0x24] sm:$0x1]
    %v5829 = vsel %vm1183, %v5812, %v5828
    %5830 = vst [vmem:[#allocation13 + $0x24] sm:$0x1] %v5829
    %v5831 = vld [vmem:[#allocation13 + $0x2c] sm:$0x1]
    %v5832 = vsel %vm1183, %v5813, %v5831
    %5833 = vst [vmem:[#allocation13 + $0x2c] sm:$0x1] %v5832
    %v5834 = vld [vmem:[#allocation13 + $0x34] sm:$0x1]
    %v5835 = vsel %vm1183, %v5814, %v5834
    %5836 = vst [vmem:[#allocation13 + $0x34] sm:$0x1] %v5835
    %v5837 = vld [vmem:[#allocation13 + $0x3c] sm:$0x1]
    %v5838 = vsel %vm1183, %v5815, %v5837
    %5839 = vst [vmem:[#allocation13 + $0x3c] sm:$0x1] %v5838
    %s5840 = scalar_lea.vmem [#allocation3], 25
    %v5841 = vld [vmem:[%s5840] ss:$8 sm:$0x7]
    %s5842 = scalar_lea.vmem [#allocation3], 73
    %v5843 = vld [vmem:[%s5842] ss:$8 sm:$0x7]
    %s5844 = scalar_lea.vmem [#allocation3], 121
    %v5845 = vld [vmem:[%s5844] ss:$8 sm:$0x7]
    %s5846 = scalar_lea.vmem [#allocation3], 169
    %v5847 = vld [vmem:[%s5846] ss:$8 sm:$0x7]
    %s5848 = scalar_lea.vmem [#allocation3], 217
    %v5849 = vld [vmem:[%s5848] ss:$8 sm:$0x7]
    %s5850 = scalar_lea.vmem [#allocation3], 265
    %v5851 = vld [vmem:[%s5850] ss:$8 sm:$0x7]
    %s5852 = scalar_lea.vmem [#allocation3], 313
    %v5853 = vld [vmem:[%s5852] ss:$8 sm:$0x7]
    %s5854 = scalar_lea.vmem [#allocation3], 361
    %v5855 = vld [vmem:[%s5854] ss:$8 sm:$0x7]
    %v5864 = vunpack.c.l.b16 %v5808
    %v5865 = vunpack.c.l.b16 %v5809
    %v5866 = vunpack.c.l.b16 %v5810
    %v5867 = vunpack.c.l.b16 %v5811
    %v5868 = vunpack.c.l.b16 %v5812
    %v5869 = vunpack.c.l.b16 %v5813
    %v5870 = vunpack.c.l.b16 %v5814
    %v5871 = vunpack.c.l.b16 %v5815
    %v5872 = vrot.slane %v5865, 7
    %v5873 = vsel %vm1241, %v5872, %v5864
    %v5874 = vrot.slane %v5866, 6
    %v5875 = vsel %vm1244, %v5874, %v5873
    %v5876 = vrot.slane %v5867, 5
    %v5877 = vsel %vm1247, %v5876, %v5875
    %v5878 = vrot.slane %v5868, 4
    %v5879 = vsel %vm1250, %v5878, %v5877
    %v5880 = vrot.slane %v5869, 3
    %v5881 = vsel %vm1253, %v5880, %v5879
    %v5882 = vrot.slane %v5870, 2
    %v5883 = vsel %vm1256, %v5882, %v5881
    %v5884 = vrot.slane %v5871, 1
    %v5885 = vsel %vm1259, %v5884, %v5883
    %v5886 = vpack.c.b16 %v5885, %v5885
    %5888 = vmatprep.subr.bf16.mxu0 %v598
    %5889 = vmatpush1.bf16.msra.mxu0 %v597
    %5890 = vmatprep.subr.bf16.mxu0 %v601
    %5891 = vmatpush1.bf16.msra.mxu0 %v600
    %5892 = vmatprep.subr.bf16.mxu0 %v604
    %5893 = vmatpush1.bf16.msra.mxu0 %v603
    %5894 = vmatprep.subr.bf16.mxu0 %v607
    %5895 = vmatpush1.bf16.msra.mxu0 %v606
    %5896 = vmatprep.subr.bf16.mxu0 %v610
    %5897 = vmatpush1.bf16.msra.mxu0 %v609
    %5898 = vmatprep.subr.bf16.mxu0 %v613
    %5899 = vmatpush1.bf16.msra.mxu0 %v612
    %5900 = vmatprep.subr.bf16.mxu0 %v616
    %5901 = vmatpush1.bf16.msra.mxu0 %v615
    %5902 = vmatprep.subr.bf16.mxu0 %v619
    %5903 = vmatpush1.bf16.msra.mxu0 %v618
    %5904 = vmatprep.subr.bf16.mxu0 0
    %5905 = vmatpush1.bf16.msra.mxu0 0
    %5906 = vmatprep.subr.bf16.mxu0 0
    %5907 = vmatpush1.bf16.msra.mxu0 0
    %5908 = vmatprep.subr.bf16.mxu0 0
    %5909 = vmatpush1.bf16.msra.mxu0 0
    %5910 = vmatprep.subr.bf16.mxu0 0
    %5911 = vmatpush1.bf16.msra.mxu0 0
    %5912 = vmatprep.subr.bf16.mxu0 0
    %5913 = vmatpush1.bf16.msra.mxu0 0
    %5914 = vmatprep.subr.bf16.mxu0 0
    %5915 = vmatpush1.bf16.msra.mxu0 0
    %5916 = vmatprep.subr.bf16.mxu0 0
    %5917 = vmatpush1.bf16.msra.mxu0 0
    %5918 = vmatprep.subr.bf16.mxu0 0
    %5919 = vmatpush1.bf16.msra.mxu0 0
    %5920 = vmatprep.mubr.bf16.mxu0 0
    %5921 = vmatmul.mubr.bf16.gmra.mrb[0].mxu0 %v5886
    %v5922 = vpop.f32.mrb[0].mxu0
    %v5923 = vadd.f32 0.0, %v5922
    %v5924 = vpop.f32.mrb[0].mxu0
    %v5925 = vadd.f32 0.0, %v5924
    %v5926 = vpop.f32.mrb[0].mxu0
    %v5927 = vpop.f32.mrb[0].mxu0
    %5928 = vdwg.mxu0
    %5929 = vmatprep.subr.bf16.mxu0 0
    %5930 = vmatpush1.bf16.msra.mxu0 %v599
    %5931 = vmatprep.subr.bf16.mxu0 0
    %5932 = vmatpush1.bf16.msra.mxu0 %v602
    %5933 = vmatprep.subr.bf16.mxu0 0
    %5934 = vmatpush1.bf16.msra.mxu0 %v605
    %5935 = vmatprep.subr.bf16.mxu0 0
    %5936 = vmatpush1.bf16.msra.mxu0 %v608
    %5937 = vmatprep.subr.bf16.mxu0 0
    %5938 = vmatpush1.bf16.msra.mxu0 %v611
    %5939 = vmatprep.subr.bf16.mxu0 0
    %5940 = vmatpush1.bf16.msra.mxu0 %v614
    %5941 = vmatprep.subr.bf16.mxu0 0
    %5942 = vmatpush1.bf16.msra.mxu0 %v617
    %5943 = vmatprep.subr.bf16.mxu0 0
    %5944 = vmatpush1.bf16.msra.mxu0 %v620
    %5945 = vmatprep.subr.bf16.mxu0 0
    %5946 = vmatpush1.bf16.msra.mxu0 0
    %5947 = vmatprep.subr.bf16.mxu0 0
    %5948 = vmatpush1.bf16.msra.mxu0 0
    %5949 = vmatprep.subr.bf16.mxu0 0
    %5950 = vmatpush1.bf16.msra.mxu0 0
    %5951 = vmatprep.subr.bf16.mxu0 0
    %5952 = vmatpush1.bf16.msra.mxu0 0
    %5953 = vmatprep.subr.bf16.mxu0 0
    %5954 = vmatpush1.bf16.msra.mxu0 0
    %5955 = vmatprep.subr.bf16.mxu0 0
    %5956 = vmatpush1.bf16.msra.mxu0 0
    %5957 = vmatprep.subr.bf16.mxu0 0
    %5958 = vmatpush1.bf16.msra.mxu0 0
    %5959 = vmatprep.subr.bf16.mxu0 0
    %5960 = vmatpush1.bf16.msra.mxu0 0
    %5961 = vmatprep.mubr.bf16.mxu0 0
    %5962 = vmatmul.mubr.bf16.gmra.mrb[0].mxu0 %v5886
    %v5963 = vpop.f32.mrb[0].mxu0
    %v5964 = vadd.f32 0.0, %v5963
    %v5965 = vpop.f32.mrb[0].mxu0
    %v5966 = vpop.f32.mrb[0].mxu0
    %v5967 = vpop.f32.mrb[0].mxu0
    %5968 = vdwg.mxu0
    %v5970 = vcombine.high %v5923, %v5923
    %v5972 = vunpack.c.l.s4 1966171168
    %v5973 = vunpack.c.0.s8 %v5972
    %v5974 = vlaneseq
    %v5975 = vshrl.u32 %v5974, 7
    %v5976 = vsub.s32 %v5973, %v5975
    %v5977 = vrot.slane %v5923, %v5976
    %v5979 = vunpack.c.l.s4 1966171168
    %v5980 = vunpack.c.0.s8 %v5979
    %v5981 = vlaneseq
    %v5982 = vshrl.u32 %v5981, 7
    %v5983 = vsub.s32 %v5980, %v5982
    %v5984 = vrot.slane %v5970, %v5983
    %v5985 = vcombine.high %v5977, %v5977
    %v5986 = vcombine.high %v5984, %v5984
    %v5988 = vunpack.c.l.s4 1966171168
    %v5989 = vunpack.c.0.s8 %v5988
    %v5990 = vlaneseq
    %v5991 = vshrl.u32 %v5990, 7
    %v5992 = vsub.s32 %v5989, %v5991
    %v5993 = vrot.slane %v5977, %v5992
    %v5995 = vunpack.c.l.s4 1966171168
    %v5996 = vunpack.c.0.s8 %v5995
    %v5997 = vlaneseq
    %v5998 = vshrl.u32 %v5997, 7
    %v5999 = vsub.s32 %v5996, %v5998
    %v6000 = vrot.slane %v5984, %v5999
    %v6002 = vunpack.c.l.s4 1966171168
    %v6003 = vunpack.c.0.s8 %v6002
    %v6004 = vlaneseq
    %v6005 = vshrl.u32 %v6004, 7
    %v6006 = vsub.s32 %v6003, %v6005
    %v6007 = vrot.slane %v5985, %v6006
    %v6009 = vunpack.c.l.s4 1966171168
    %v6010 = vunpack.c.0.s8 %v6009
    %v6011 = vlaneseq
    %v6012 = vshrl.u32 %v6011, 7
    %v6013 = vsub.s32 %v6010, %v6012
    %v6014 = vrot.slane %v5986, %v6013
    %v6015 = vcombine.high %v5993, %v5993
    %v6016 = vcombine.high %v6000, %v6000
    %v6017 = vcombine.high %v6007, %v6007
    %v6018 = vcombine.high %v6014, %v6014
    %v6027 = vadd.f32 %v5841, %v5993
    %v6028 = vadd.f32 %v5843, %v6007
    %v6029 = vadd.f32 %v5845, %v6015
    %v6030 = vadd.f32 %v5847, %v6017
    %v6031 = vadd.f32 %v5849, %v6000
    %v6032 = vadd.f32 %v5851, %v6014
    %v6033 = vadd.f32 %v5853, %v6016
    %v6034 = vadd.f32 %v5855, %v6018
    %v6035 = vxor.u32 %v6027, 2147483648
    %v6036 = vxor.u32 %v6028, 2147483648
    %v6037 = vxor.u32 %v6029, 2147483648
    %v6038 = vxor.u32 %v6030, 2147483648
    %v6039 = vxor.u32 %v6031, 2147483648
    %v6040 = vxor.u32 %v6032, 2147483648
    %v6041 = vxor.u32 %v6033, 2147483648
    %v6042 = vxor.u32 %v6034, 2147483648
    %v6043 = vmul.f32 %v6035, 1.442695
    %v6044 = vpow.pop %v6043
    %v6045 = vmul.f32 %v6036, 1.442695
    %v6046 = vpow.pop %v6045
    %v6047 = vmul.f32 %v6037, 1.442695
    %v6048 = vpow.pop %v6047
    %v6049 = vmul.f32 %v6038, 1.442695
    %v6050 = vpow.pop %v6049
    %v6051 = vmul.f32 %v6039, 1.442695
    %v6052 = vpow.pop %v6051
    %v6053 = vmul.f32 %v6040, 1.442695
    %v6054 = vpow.pop %v6053
    %v6055 = vmul.f32 %v6041, 1.442695
    %v6056 = vpow.pop %v6055
    %v6057 = vmul.f32 %v6042, 1.442695
    %v6058 = vpow.pop %v6057
    %v6059 = vadd.f32 %v6044, 1.0
    %v6060 = vadd.f32 %v6046, 1.0
    %v6061 = vadd.f32 %v6048, 1.0
    %v6062 = vadd.f32 %v6050, 1.0
    %v6063 = vadd.f32 %v6052, 1.0
    %v6064 = vadd.f32 %v6054, 1.0
    %v6065 = vadd.f32 %v6056, 1.0
    %v6066 = vadd.f32 %v6058, 1.0
    %v6067 = vrcp.pop %v6059
    %v6068 = vmul.f32 1.0, %v6067
    %v6069 = vrcp.pop %v6060
    %v6070 = vmul.f32 1.0, %v6069
    %v6071 = vrcp.pop %v6061
    %v6072 = vmul.f32 1.0, %v6071
    %v6073 = vrcp.pop %v6062
    %v6074 = vmul.f32 1.0, %v6073
    %v6075 = vrcp.pop %v6063
    %v6076 = vmul.f32 1.0, %v6075
    %v6077 = vrcp.pop %v6064
    %v6078 = vmul.f32 1.0, %v6077
    %v6079 = vrcp.pop %v6065
    %v6080 = vmul.f32 1.0, %v6079
    %v6081 = vrcp.pop %v6066
    %v6082 = vmul.f32 1.0, %v6081
    %v6091 = vrot.slane %v5841, 1
    %v6092 = vrot.slane %v5843, 1
    %v6093 = vrot.slane %v5845, 1
    %v6094 = vrot.slane %v5847, 1
    %v6095 = vrot.slane %v5849, 1
    %v6096 = vrot.slane %v5851, 1
    %v6097 = vrot.slane %v5853, 1
    %v6098 = vrot.slane %v5855, 1
    %v6108 = vcombine.high %v5925, %v5925
    %v6110 = vunpack.c.l.s4 1966171168
    %v6111 = vunpack.c.0.s8 %v6110
    %v6112 = vlaneseq
    %v6113 = vshrl.u32 %v6112, 7
    %v6114 = vsub.s32 %v6111, %v6113
    %v6115 = vrot.slane %v5925, %v6114
    %v6117 = vunpack.c.l.s4 1966171168
    %v6118 = vunpack.c.0.s8 %v6117
    %v6119 = vlaneseq
    %v6120 = vshrl.u32 %v6119, 7
    %v6121 = vsub.s32 %v6118, %v6120
    %v6122 = vrot.slane %v6108, %v6121
    %v6123 = vcombine.high %v6115, %v6115
    %v6124 = vcombine.high %v6122, %v6122
    %v6126 = vunpack.c.l.s4 1966171168
    %v6127 = vunpack.c.0.s8 %v6126
    %v6128 = vlaneseq
    %v6129 = vshrl.u32 %v6128, 7
    %v6130 = vsub.s32 %v6127, %v6129
    %v6131 = vrot.slane %v6115, %v6130
    %v6133 = vunpack.c.l.s4 1966171168
    %v6134 = vunpack.c.0.s8 %v6133
    %v6135 = vlaneseq
    %v6136 = vshrl.u32 %v6135, 7
    %v6137 = vsub.s32 %v6134, %v6136
    %v6138 = vrot.slane %v6122, %v6137
    %v6140 = vunpack.c.l.s4 1966171168
    %v6141 = vunpack.c.0.s8 %v6140
    %v6142 = vlaneseq
    %v6143 = vshrl.u32 %v6142, 7
    %v6144 = vsub.s32 %v6141, %v6143
    %v6145 = vrot.slane %v6123, %v6144
    %v6147 = vunpack.c.l.s4 1966171168
    %v6148 = vunpack.c.0.s8 %v6147
    %v6149 = vlaneseq
    %v6150 = vshrl.u32 %v6149, 7
    %v6151 = vsub.s32 %v6148, %v6150
    %v6152 = vrot.slane %v6124, %v6151
    %v6153 = vcombine.high %v6131, %v6131
    %v6154 = vcombine.high %v6138, %v6138
    %v6155 = vcombine.high %v6145, %v6145
    %v6156 = vcombine.high %v6152, %v6152
    %v6165 = vadd.f32 %v6091, %v6131
    %v6166 = vadd.f32 %v6092, %v6145
    %v6167 = vadd.f32 %v6093, %v6153
    %v6168 = vadd.f32 %v6094, %v6155
    %v6169 = vadd.f32 %v6095, %v6138
    %v6170 = vadd.f32 %v6096, %v6152
    %v6171 = vadd.f32 %v6097, %v6154
    %v6172 = vadd.f32 %v6098, %v6156
    %v6173 = vxor.u32 %v6165, 2147483648
    %v6174 = vxor.u32 %v6166, 2147483648
    %v6175 = vxor.u32 %v6167, 2147483648
    %v6176 = vxor.u32 %v6168, 2147483648
    %v6177 = vxor.u32 %v6169, 2147483648
    %v6178 = vxor.u32 %v6170, 2147483648
    %v6179 = vxor.u32 %v6171, 2147483648
    %v6180 = vxor.u32 %v6172, 2147483648
    %v6181 = vmul.f32 %v6173, 1.442695
    %v6182 = vpow.pop %v6181
    %v6183 = vmul.f32 %v6174, 1.442695
    %v6184 = vpow.pop %v6183
    %v6185 = vmul.f32 %v6175, 1.442695
    %v6186 = vpow.pop %v6185
    %v6187 = vmul.f32 %v6176, 1.442695
    %v6188 = vpow.pop %v6187
    %v6189 = vmul.f32 %v6177, 1.442695
    %v6190 = vpow.pop %v6189
    %v6191 = vmul.f32 %v6178, 1.442695
    %v6192 = vpow.pop %v6191
    %v6193 = vmul.f32 %v6179, 1.442695
    %v6194 = vpow.pop %v6193
    %v6195 = vmul.f32 %v6180, 1.442695
    %v6196 = vpow.pop %v6195
    %v6197 = vadd.f32 %v6182, 1.0
    %v6198 = vadd.f32 %v6184, 1.0
    %v6199 = vadd.f32 %v6186, 1.0
    %v6200 = vadd.f32 %v6188, 1.0
    %v6201 = vadd.f32 %v6190, 1.0
    %v6202 = vadd.f32 %v6192, 1.0
    %v6203 = vadd.f32 %v6194, 1.0
    %v6204 = vadd.f32 %v6196, 1.0
    %v6205 = vrcp.pop %v6197
    %v6206 = vmul.f32 1.0, %v6205
    %v6207 = vrcp.pop %v6198
    %v6208 = vmul.f32 1.0, %v6207
    %v6209 = vrcp.pop %v6199
    %v6210 = vmul.f32 1.0, %v6209
    %v6211 = vrcp.pop %v6200
    %v6212 = vmul.f32 1.0, %v6211
    %v6213 = vrcp.pop %v6201
    %v6214 = vmul.f32 1.0, %v6213
    %v6215 = vrcp.pop %v6202
    %v6216 = vmul.f32 1.0, %v6215
    %v6217 = vrcp.pop %v6203
    %v6218 = vmul.f32 1.0, %v6217
    %v6219 = vrcp.pop %v6204
    %v6220 = vmul.f32 1.0, %v6219
    %v6221 = vadd.f32 %v5964, %v982
    %v6223 = vcombine.high %v6221, %v6221
    %v6225 = vunpack.c.l.s4 1966171168
    %v6226 = vunpack.c.0.s8 %v6225
    %v6227 = vlaneseq
    %v6228 = vshrl.u32 %v6227, 7
    %v6229 = vsub.s32 %v6226, %v6228
    %v6230 = vrot.slane %v6221, %v6229
    %v6232 = vunpack.c.l.s4 1966171168
    %v6233 = vunpack.c.0.s8 %v6232
    %v6234 = vlaneseq
    %v6235 = vshrl.u32 %v6234, 7
    %v6236 = vsub.s32 %v6233, %v6235
    %v6237 = vrot.slane %v6223, %v6236
    %v6238 = vcombine.high %v6230, %v6230
    %v6239 = vcombine.high %v6237, %v6237
    %v6241 = vunpack.c.l.s4 1966171168
    %v6242 = vunpack.c.0.s8 %v6241
    %v6243 = vlaneseq
    %v6244 = vshrl.u32 %v6243, 7
    %v6245 = vsub.s32 %v6242, %v6244
    %v6246 = vrot.slane %v6230, %v6245
    %v6248 = vunpack.c.l.s4 1966171168
    %v6249 = vunpack.c.0.s8 %v6248
    %v6250 = vlaneseq
    %v6251 = vshrl.u32 %v6250, 7
    %v6252 = vsub.s32 %v6249, %v6251
    %v6253 = vrot.slane %v6237, %v6252
    %v6255 = vunpack.c.l.s4 1966171168
    %v6256 = vunpack.c.0.s8 %v6255
    %v6257 = vlaneseq
    %v6258 = vshrl.u32 %v6257, 7
    %v6259 = vsub.s32 %v6256, %v6258
    %v6260 = vrot.slane %v6238, %v6259
    %v6262 = vunpack.c.l.s4 1966171168
    %v6263 = vunpack.c.0.s8 %v6262
    %v6264 = vlaneseq
    %v6265 = vshrl.u32 %v6264, 7
    %v6266 = vsub.s32 %v6263, %v6265
    %v6267 = vrot.slane %v6239, %v6266
    %v6268 = vcombine.high %v6246, %v6246
    %v6269 = vcombine.high %v6253, %v6253
    %v6270 = vcombine.high %v6260, %v6260
    %v6271 = vcombine.high %v6267, %v6267
    %v6280 = vmul.f32 %v6068, %v6246
    %v6281 = vmul.f32 %v6070, %v6260
    %v6282 = vmul.f32 %v6072, %v6268
    %v6283 = vmul.f32 %v6074, %v6270
    %v6284 = vmul.f32 %v6076, %v6253
    %v6285 = vmul.f32 %v6078, %v6267
    %v6286 = vmul.f32 %v6080, %v6269
    %v6287 = vmul.f32 %v6082, %v6271
    %v6288 = vrot.slane %v5841, 2
    %v6289 = vrot.slane %v5843, 2
    %v6290 = vrot.slane %v5845, 2
    %v6291 = vrot.slane %v5847, 2
    %v6292 = vrot.slane %v5849, 2
    %v6293 = vrot.slane %v5851, 2
    %v6294 = vrot.slane %v5853, 2
    %v6295 = vrot.slane %v5855, 2
    %v6304 = vadd.f32 %v6288, %v6280
    %v6305 = vadd.f32 %v6289, %v6281
    %v6306 = vadd.f32 %v6290, %v6282
    %v6307 = vadd.f32 %v6291, %v6283
    %v6308 = vadd.f32 %v6292, %v6284
    %v6309 = vadd.f32 %v6293, %v6285
    %v6310 = vadd.f32 %v6294, %v6286
    %v6311 = vadd.f32 %v6295, %v6287
    %v6312 = vtanh.pop %v6304
    %v6313 = vtanh.pop %v6305
    %v6314 = vtanh.pop %v6306
    %v6315 = vtanh.pop %v6307
    %v6316 = vtanh.pop %v6308
    %v6317 = vtanh.pop %v6309
    %v6318 = vtanh.pop %v6310
    %v6319 = vtanh.pop %v6311
    %v6320 = vsub.f32 1.0, %v6206
    %v6321 = vsub.f32 1.0, %v6208
    %v6322 = vsub.f32 1.0, %v6210
    %v6323 = vsub.f32 1.0, %v6212
    %v6324 = vsub.f32 1.0, %v6214
    %v6325 = vsub.f32 1.0, %v6216
    %v6326 = vsub.f32 1.0, %v6218
    %v6327 = vsub.f32 1.0, %v6220
    %v6328 = vmul.f32 %v6320, %v6312
    %v6329 = vmul.f32 %v6321, %v6313
    %v6330 = vmul.f32 %v6322, %v6314
    %v6331 = vmul.f32 %v6323, %v6315
    %v6332 = vmul.f32 %v6324, %v6316
    %v6333 = vmul.f32 %v6325, %v6317
    %v6334 = vmul.f32 %v6326, %v6318
    %v6335 = vmul.f32 %v6327, %v6319
    %v6336 = vmul.f32 %v6206, %v5800
    %v6337 = vmul.f32 %v6208, %v5801
    %v6338 = vmul.f32 %v6210, %v5802
    %v6339 = vmul.f32 %v6212, %v5803
    %v6340 = vmul.f32 %v6214, %v5804
    %v6341 = vmul.f32 %v6216, %v5805
    %v6342 = vmul.f32 %v6218, %v5806
    %v6343 = vmul.f32 %v6220, %v5807
    %v6344 = vadd.f32 %v6328, %v6336
    %v6345 = vadd.f32 %v6329, %v6337
    %v6346 = vadd.f32 %v6330, %v6338
    %v6347 = vadd.f32 %v6331, %v6339
    %v6348 = vadd.f32 %v6332, %v6340
    %v6349 = vadd.f32 %v6333, %v6341
    %v6350 = vadd.f32 %v6334, %v6342
    %v6351 = vadd.f32 %v6335, %v6343
    %v6352 = vpack.c.bf16 %v6344, %v6344
    %v6353 = vpack.c.bf16 %v6345, %v6345
    %v6354 = vpack.c.bf16 %v6346, %v6346
    %v6355 = vpack.c.bf16 %v6347, %v6347
    %v6356 = vpack.c.bf16 %v6348, %v6348
    %v6357 = vpack.c.bf16 %v6349, %v6349
    %v6358 = vpack.c.bf16 %v6350, %v6350
    %v6359 = vpack.c.bf16 %v6351, %v6351
    %v6368 = vunpack.c.l.b16 %v6352
    %v6369 = vunpack.c.l.b16 %v6353
    %v6370 = vunpack.c.l.b16 %v6354
    %v6371 = vunpack.c.l.b16 %v6355
    %v6372 = vunpack.c.l.b16 %v6356
    %v6373 = vunpack.c.l.b16 %v6357
    %v6374 = vunpack.c.l.b16 %v6358
    %v6375 = vunpack.c.l.b16 %v6359
    %v6376 = vpack.c.b16 %v6368, %v6368
    %v6377 = vpack.c.b16 %v6369, %v6369
    %v6378 = vpack.c.b16 %v6370, %v6370
    %v6379 = vpack.c.b16 %v6371, %v6371
    %v6380 = vpack.c.b16 %v6372, %v6372
    %v6381 = vpack.c.b16 %v6373, %v6373
    %v6382 = vpack.c.b16 %v6374, %v6374
    %v6383 = vpack.c.b16 %v6375, %v6375
    %v6385 = vshll.u32 %v6376, 16
    %v6388 = vshll.u32 %v6377, 16
    %v6391 = vshll.u32 %v6378, 16
    %v6394 = vshll.u32 %v6379, 16
    %v6397 = vshll.u32 %v6380, 16
    %v6400 = vshll.u32 %v6381, 16
    %v6403 = vshll.u32 %v6382, 16
    %v6406 = vshll.u32 %v6383, 16
    %v6416 = vld [vmem:[#allocation13 + $0x4] sm:$0x1]
    %v6417 = vsel %vm1792, %v6385, %v6416
    %6418 = vst [vmem:[#allocation13 + $0x4] sm:$0x1] %v6417
    %v6419 = vld [vmem:[#allocation13 + $0xc] sm:$0x1]
    %v6420 = vsel %vm1792, %v6388, %v6419
    %6421 = vst [vmem:[#allocation13 + $0xc] sm:$0x1] %v6420
    %v6422 = vld [vmem:[#allocation13 + $0x14] sm:$0x1]
    %v6423 = vsel %vm1792, %v6391, %v6422
    %6424 = vst [vmem:[#allocation13 + $0x14] sm:$0x1] %v6423
    %v6425 = vld [vmem:[#allocation13 + $0x1c] sm:$0x1]
    %v6426 = vsel %vm1792, %v6394, %v6425
    %6427 = vst [vmem:[#allocation13 + $0x1c] sm:$0x1] %v6426
    %v6428 = vld [vmem:[#allocation13 + $0x24] sm:$0x1]
    %v6429 = vsel %vm1792, %v6397, %v6428
    %6430 = vst [vmem:[#allocation13 + $0x24] sm:$0x1] %v6429
    %v6431 = vld [vmem:[#allocation13 + $0x2c] sm:$0x1]
    %v6432 = vsel %vm1792, %v6400, %v6431
    %6433 = vst [vmem:[#allocation13 + $0x2c] sm:$0x1] %v6432
    %v6434 = vld [vmem:[#allocation13 + $0x34] sm:$0x1]
    %v6435 = vsel %vm1792, %v6403, %v6434
    %6436 = vst [vmem:[#allocation13 + $0x34] sm:$0x1] %v6435
    %v6437 = vld [vmem:[#allocation13 + $0x3c] sm:$0x1]
    %v6438 = vsel %vm1792, %v6406, %v6437
    %6439 = vst [vmem:[#allocation13 + $0x3c] sm:$0x1] %v6438
    %s6440 = scalar_lea.vmem [#allocation3], 26
    %v6441 = vld [vmem:[%s6440] ss:$8 sm:$0x7]
    %s6442 = scalar_lea.vmem [#allocation3], 74
    %v6443 = vld [vmem:[%s6442] ss:$8 sm:$0x7]
    %s6444 = scalar_lea.vmem [#allocation3], 122
    %v6445 = vld [vmem:[%s6444] ss:$8 sm:$0x7]
    %s6446 = scalar_lea.vmem [#allocation3], 170
    %v6447 = vld [vmem:[%s6446] ss:$8 sm:$0x7]
    %s6448 = scalar_lea.vmem [#allocation3], 218
    %v6449 = vld [vmem:[%s6448] ss:$8 sm:$0x7]
    %s6450 = scalar_lea.vmem [#allocation3], 266
    %v6451 = vld [vmem:[%s6450] ss:$8 sm:$0x7]
    %s6452 = scalar_lea.vmem [#allocation3], 314
    %v6453 = vld [vmem:[%s6452] ss:$8 sm:$0x7]
    %s6454 = scalar_lea.vmem [#allocation3], 362
    %v6455 = vld [vmem:[%s6454] ss:$8 sm:$0x7]
    %v6456 = vrot.slane %v6369, 7
    %v6457 = vsel %vm1241, %v6456, %v6368
    %v6458 = vrot.slane %v6370, 6
    %v6459 = vsel %vm1244, %v6458, %v6457
    %v6460 = vrot.slane %v6371, 5
    %v6461 = vsel %vm1247, %v6460, %v6459
    %v6462 = vrot.slane %v6372, 4
    %v6463 = vsel %vm1250, %v6462, %v6461
    %v6464 = vrot.slane %v6373, 3
    %v6465 = vsel %vm1253, %v6464, %v6463
    %v6466 = vrot.slane %v6374, 2
    %v6467 = vsel %vm1256, %v6466, %v6465
    %v6468 = vrot.slane %v6375, 1
    %v6469 = vsel %vm1259, %v6468, %v6467
    %v6470 = vpack.c.b16 %v6469, %v6469
    %6472 = vmatprep.subr.bf16.mxu0 %v598
    %6473 = vmatpush1.bf16.msra.mxu0 %v597
    %6474 = vmatprep.subr.bf16.mxu0 %v601
    %6475 = vmatpush1.bf16.msra.mxu0 %v600
    %6476 = vmatprep.subr.bf16.mxu0 %v604
    %6477 = vmatpush1.bf16.msra.mxu0 %v603
    %6478 = vmatprep.subr.bf16.mxu0 %v607
    %6479 = vmatpush1.bf16.msra.mxu0 %v606
    %6480 = vmatprep.subr.bf16.mxu0 %v610
    %6481 = vmatpush1.bf16.msra.mxu0 %v609
    %6482 = vmatprep.subr.bf16.mxu0 %v613
    %6483 = vmatpush1.bf16.msra.mxu0 %v612
    %6484 = vmatprep.subr.bf16.mxu0 %v616
    %6485 = vmatpush1.bf16.msra.mxu0 %v615
    %6486 = vmatprep.subr.bf16.mxu0 %v619
    %6487 = vmatpush1.bf16.msra.mxu0 %v618
    %6488 = vmatprep.subr.bf16.mxu0 0
    %6489 = vmatpush1.bf16.msra.mxu0 0
    %6490 = vmatprep.subr.bf16.mxu0 0
    %6491 = vmatpush1.bf16.msra.mxu0 0
    %6492 = vmatprep.subr.bf16.mxu0 0
    %6493 = vmatpush1.bf16.msra.mxu0 0
    %6494 = vmatprep.subr.bf16.mxu0 0
    %6495 = vmatpush1.bf16.msra.mxu0 0
    %6496 = vmatprep.subr.bf16.mxu0 0
    %6497 = vmatpush1.bf16.msra.mxu0 0
    %6498 = vmatprep.subr.bf16.mxu0 0
    %6499 = vmatpush1.bf16.msra.mxu0 0
    %6500 = vmatprep.subr.bf16.mxu0 0
    %6501 = vmatpush1.bf16.msra.mxu0 0
    %6502 = vmatprep.subr.bf16.mxu0 0
    %6503 = vmatpush1.bf16.msra.mxu0 0
    %6504 = vmatprep.mubr.bf16.mxu0 0
    %6505 = vmatmul.mubr.bf16.gmra.mrb[0].mxu0 %v6470
    %v6506 = vpop.f32.mrb[0].mxu0
    %v6507 = vadd.f32 0.0, %v6506
    %v6508 = vpop.f32.mrb[0].mxu0
    %v6509 = vadd.f32 0.0, %v6508
    %v6510 = vpop.f32.mrb[0].mxu0
    %v6511 = vpop.f32.mrb[0].mxu0
    %6512 = vdwg.mxu0
    %6513 = vmatprep.subr.bf16.mxu0 0
    %6514 = vmatpush1.bf16.msra.mxu0 %v599
    %6515 = vmatprep.subr.bf16.mxu0 0
    %6516 = vmatpush1.bf16.msra.mxu0 %v602
    %6517 = vmatprep.subr.bf16.mxu0 0
    %6518 = vmatpush1.bf16.msra.mxu0 %v605
    %6519 = vmatprep.subr.bf16.mxu0 0
    %6520 = vmatpush1.bf16.msra.mxu0 %v608
    %6521 = vmatprep.subr.bf16.mxu0 0
    %6522 = vmatpush1.bf16.msra.mxu0 %v611
    %6523 = vmatprep.subr.bf16.mxu0 0
    %6524 = vmatpush1.bf16.msra.mxu0 %v614
    %6525 = vmatprep.subr.bf16.mxu0 0
    %6526 = vmatpush1.bf16.msra.mxu0 %v617
    %6527 = vmatprep.subr.bf16.mxu0 0
    %6528 = vmatpush1.bf16.msra.mxu0 %v620
    %6529 = vmatprep.subr.bf16.mxu0 0
    %6530 = vmatpush1.bf16.msra.mxu0 0
    %6531 = vmatprep.subr.bf16.mxu0 0
    %6532 = vmatpush1.bf16.msra.mxu0 0
    %6533 = vmatprep.subr.bf16.mxu0 0
    %6534 = vmatpush1.bf16.msra.mxu0 0
    %6535 = vmatprep.subr.bf16.mxu0 0
    %6536 = vmatpush1.bf16.msra.mxu0 0
    %6537 = vmatprep.subr.bf16.mxu0 0
    %6538 = vmatpush1.bf16.msra.mxu0 0
    %6539 = vmatprep.subr.bf16.mxu0 0
    %6540 = vmatpush1.bf16.msra.mxu0 0
    %6541 = vmatprep.subr.bf16.mxu0 0
    %6542 = vmatpush1.bf16.msra.mxu0 0
    %6543 = vmatprep.subr.bf16.mxu0 0
    %6544 = vmatpush1.bf16.msra.mxu0 0
    %6545 = vmatprep.mubr.bf16.mxu0 0
    %6546 = vmatmul.mubr.bf16.gmra.mrb[0].mxu0 %v6470
    %v6547 = vpop.f32.mrb[0].mxu0
    %v6548 = vadd.f32 0.0, %v6547
    %v6549 = vpop.f32.mrb[0].mxu0
    %v6550 = vpop.f32.mrb[0].mxu0
    %v6551 = vpop.f32.mrb[0].mxu0
    %6552 = vdwg.mxu0
    %v6554 = vcombine.high %v6507, %v6507
    %v6556 = vunpack.c.l.s4 1966171168
    %v6557 = vunpack.c.0.s8 %v6556
    %v6558 = vlaneseq
    %v6559 = vshrl.u32 %v6558, 7
    %v6560 = vsub.s32 %v6557, %v6559
    %v6561 = vrot.slane %v6507, %v6560
    %v6563 = vunpack.c.l.s4 1966171168
    %v6564 = vunpack.c.0.s8 %v6563
    %v6565 = vlaneseq
    %v6566 = vshrl.u32 %v6565, 7
    %v6567 = vsub.s32 %v6564, %v6566
    %v6568 = vrot.slane %v6554, %v6567
    %v6569 = vcombine.high %v6561, %v6561
    %v6570 = vcombine.high %v6568, %v6568
    %v6572 = vunpack.c.l.s4 1966171168
    %v6573 = vunpack.c.0.s8 %v6572
    %v6574 = vlaneseq
    %v6575 = vshrl.u32 %v6574, 7
    %v6576 = vsub.s32 %v6573, %v6575
    %v6577 = vrot.slane %v6561, %v6576
    %v6579 = vunpack.c.l.s4 1966171168
    %v6580 = vunpack.c.0.s8 %v6579
    %v6581 = vlaneseq
    %v6582 = vshrl.u32 %v6581, 7
    %v6583 = vsub.s32 %v6580, %v6582
    %v6584 = vrot.slane %v6568, %v6583
    %v6586 = vunpack.c.l.s4 1966171168
    %v6587 = vunpack.c.0.s8 %v6586
    %v6588 = vlaneseq
    %v6589 = vshrl.u32 %v6588, 7
    %v6590 = vsub.s32 %v6587, %v6589
    %v6591 = vrot.slane %v6569, %v6590
    %v6593 = vunpack.c.l.s4 1966171168
    %v6594 = vunpack.c.0.s8 %v6593
    %v6595 = vlaneseq
    %v6596 = vshrl.u32 %v6595, 7
    %v6597 = vsub.s32 %v6594, %v6596
    %v6598 = vrot.slane %v6570, %v6597
    %v6599 = vcombine.high %v6577, %v6577
    %v6600 = vcombine.high %v6584, %v6584
    %v6601 = vcombine.high %v6591, %v6591
    %v6602 = vcombine.high %v6598, %v6598
    %v6611 = vadd.f32 %v6441, %v6577
    %v6612 = vadd.f32 %v6443, %v6591
    %v6613 = vadd.f32 %v6445, %v6599
    %v6614 = vadd.f32 %v6447, %v6601
    %v6615 = vadd.f32 %v6449, %v6584
    %v6616 = vadd.f32 %v6451, %v6598
    %v6617 = vadd.f32 %v6453, %v6600
    %v6618 = vadd.f32 %v6455, %v6602
    %v6619 = vxor.u32 %v6611, 2147483648
    %v6620 = vxor.u32 %v6612, 2147483648
    %v6621 = vxor.u32 %v6613, 2147483648
    %v6622 = vxor.u32 %v6614, 2147483648
    %v6623 = vxor.u32 %v6615, 2147483648
    %v6624 = vxor.u32 %v6616, 2147483648
    %v6625 = vxor.u32 %v6617, 2147483648
    %v6626 = vxor.u32 %v6618, 2147483648
    %v6627 = vmul.f32 %v6619, 1.442695
    %v6628 = vpow.pop %v6627
    %v6629 = vmul.f32 %v6620, 1.442695
    %v6630 = vpow.pop %v6629
    %v6631 = vmul.f32 %v6621, 1.442695
    %v6632 = vpow.pop %v6631
    %v6633 = vmul.f32 %v6622, 1.442695
    %v6634 = vpow.pop %v6633
    %v6635 = vmul.f32 %v6623, 1.442695
    %v6636 = vpow.pop %v6635
    %v6637 = vmul.f32 %v6624, 1.442695
    %v6638 = vpow.pop %v6637
    %v6639 = vmul.f32 %v6625, 1.442695
    %v6640 = vpow.pop %v6639
    %v6641 = vmul.f32 %v6626, 1.442695
    %v6642 = vpow.pop %v6641
    %v6643 = vadd.f32 %v6628, 1.0
    %v6644 = vadd.f32 %v6630, 1.0
    %v6645 = vadd.f32 %v6632, 1.0
    %v6646 = vadd.f32 %v6634, 1.0
    %v6647 = vadd.f32 %v6636, 1.0
    %v6648 = vadd.f32 %v6638, 1.0
    %v6649 = vadd.f32 %v6640, 1.0
    %v6650 = vadd.f32 %v6642, 1.0
    %v6651 = vrcp.pop %v6643
    %v6652 = vmul.f32 1.0, %v6651
    %v6653 = vrcp.pop %v6644
    %v6654 = vmul.f32 1.0, %v6653
    %v6655 = vrcp.pop %v6645
    %v6656 = vmul.f32 1.0, %v6655
    %v6657 = vrcp.pop %v6646
    %v6658 = vmul.f32 1.0, %v6657
    %v6659 = vrcp.pop %v6647
    %v6660 = vmul.f32 1.0, %v6659
    %v6661 = vrcp.pop %v6648
    %v6662 = vmul.f32 1.0, %v6661
    %v6663 = vrcp.pop %v6649
    %v6664 = vmul.f32 1.0, %v6663
    %v6665 = vrcp.pop %v6650
    %v6666 = vmul.f32 1.0, %v6665
    %v6675 = vrot.slane %v6441, 1
    %v6676 = vrot.slane %v6443, 1
    %v6677 = vrot.slane %v6445, 1
    %v6678 = vrot.slane %v6447, 1
    %v6679 = vrot.slane %v6449, 1
    %v6680 = vrot.slane %v6451, 1
    %v6681 = vrot.slane %v6453, 1
    %v6682 = vrot.slane %v6455, 1
    %v6692 = vcombine.high %v6509, %v6509
    %v6694 = vunpack.c.l.s4 1966171168
    %v6695 = vunpack.c.0.s8 %v6694
    %v6696 = vlaneseq
    %v6697 = vshrl.u32 %v6696, 7
    %v6698 = vsub.s32 %v6695, %v6697
    %v6699 = vrot.slane %v6509, %v6698
    %v6701 = vunpack.c.l.s4 1966171168
    %v6702 = vunpack.c.0.s8 %v6701
    %v6703 = vlaneseq
    %v6704 = vshrl.u32 %v6703, 7
    %v6705 = vsub.s32 %v6702, %v6704
    %v6706 = vrot.slane %v6692, %v6705
    %v6707 = vcombine.high %v6699, %v6699
    %v6708 = vcombine.high %v6706, %v6706
    %v6710 = vunpack.c.l.s4 1966171168
    %v6711 = vunpack.c.0.s8 %v6710
    %v6712 = vlaneseq
    %v6713 = vshrl.u32 %v6712, 7
    %v6714 = vsub.s32 %v6711, %v6713
    %v6715 = vrot.slane %v6699, %v6714
    %v6717 = vunpack.c.l.s4 1966171168
    %v6718 = vunpack.c.0.s8 %v6717
    %v6719 = vlaneseq
    %v6720 = vshrl.u32 %v6719, 7
    %v6721 = vsub.s32 %v6718, %v6720
    %v6722 = vrot.slane %v6706, %v6721
    %v6724 = vunpack.c.l.s4 1966171168
    %v6725 = vunpack.c.0.s8 %v6724
    %v6726 = vlaneseq
    %v6727 = vshrl.u32 %v6726, 7
    %v6728 = vsub.s32 %v6725, %v6727
    %v6729 = vrot.slane %v6707, %v6728
    %v6731 = vunpack.c.l.s4 1966171168
    %v6732 = vunpack.c.0.s8 %v6731
    %v6733 = vlaneseq
    %v6734 = vshrl.u32 %v6733, 7
    %v6735 = vsub.s32 %v6732, %v6734
    %v6736 = vrot.slane %v6708, %v6735
    %v6737 = vcombine.high %v6715, %v6715
    %v6738 = vcombine.high %v6722, %v6722
    %v6739 = vcombine.high %v6729, %v6729
    %v6740 = vcombine.high %v6736, %v6736
    %v6749 = vadd.f32 %v6675, %v6715
    %v6750 = vadd.f32 %v6676, %v6729
    %v6751 = vadd.f32 %v6677, %v6737
    %v6752 = vadd.f32 %v6678, %v6739
    %v6753 = vadd.f32 %v6679, %v6722
    %v6754 = vadd.f32 %v6680, %v6736
    %v6755 = vadd.f32 %v6681, %v6738
    %v6756 = vadd.f32 %v6682, %v6740
    %v6757 = vxor.u32 %v6749, 2147483648
    %v6758 = vxor.u32 %v6750, 2147483648
    %v6759 = vxor.u32 %v6751, 2147483648
    %v6760 = vxor.u32 %v6752, 2147483648
    %v6761 = vxor.u32 %v6753, 2147483648
    %v6762 = vxor.u32 %v6754, 2147483648
    %v6763 = vxor.u32 %v6755, 2147483648
    %v6764 = vxor.u32 %v6756, 2147483648
    %v6765 = vmul.f32 %v6757, 1.442695
    %v6766 = vpow.pop %v6765
    %v6767 = vmul.f32 %v6758, 1.442695
    %v6768 = vpow.pop %v6767
    %v6769 = vmul.f32 %v6759, 1.442695
    %v6770 = vpow.pop %v6769
    %v6771 = vmul.f32 %v6760, 1.442695
    %v6772 = vpow.pop %v6771
    %v6773 = vmul.f32 %v6761, 1.442695
    %v6774 = vpow.pop %v6773
    %v6775 = vmul.f32 %v6762, 1.442695
    %v6776 = vpow.pop %v6775
    %v6777 = vmul.f32 %v6763, 1.442695
    %v6778 = vpow.pop %v6777
    %v6779 = vmul.f32 %v6764, 1.442695
    %v6780 = vpow.pop %v6779
    %v6781 = vadd.f32 %v6766, 1.0
    %v6782 = vadd.f32 %v6768, 1.0
    %v6783 = vadd.f32 %v6770, 1.0
    %v6784 = vadd.f32 %v6772, 1.0
    %v6785 = vadd.f32 %v6774, 1.0
    %v6786 = vadd.f32 %v6776, 1.0
    %v6787 = vadd.f32 %v6778, 1.0
    %v6788 = vadd.f32 %v6780, 1.0
    %v6789 = vrcp.pop %v6781
    %v6790 = vmul.f32 1.0, %v6789
    %v6791 = vrcp.pop %v6782
    %v6792 = vmul.f32 1.0, %v6791
    %v6793 = vrcp.pop %v6783
    %v6794 = vmul.f32 1.0, %v6793
    %v6795 = vrcp.pop %v6784
    %v6796 = vmul.f32 1.0, %v6795
    %v6797 = vrcp.pop %v6785
    %v6798 = vmul.f32 1.0, %v6797
    %v6799 = vrcp.pop %v6786
    %v6800 = vmul.f32 1.0, %v6799
    %v6801 = vrcp.pop %v6787
    %v6802 = vmul.f32 1.0, %v6801
    %v6803 = vrcp.pop %v6788
    %v6804 = vmul.f32 1.0, %v6803
    %v6805 = vadd.f32 %v6548, %v982
    %v6807 = vcombine.high %v6805, %v6805
    %v6809 = vunpack.c.l.s4 1966171168
    %v6810 = vunpack.c.0.s8 %v6809
    %v6811 = vlaneseq
    %v6812 = vshrl.u32 %v6811, 7
    %v6813 = vsub.s32 %v6810, %v6812
    %v6814 = vrot.slane %v6805, %v6813
    %v6816 = vunpack.c.l.s4 1966171168
    %v6817 = vunpack.c.0.s8 %v6816
    %v6818 = vlaneseq
    %v6819 = vshrl.u32 %v6818, 7
    %v6820 = vsub.s32 %v6817, %v6819
    %v6821 = vrot.slane %v6807, %v6820
    %v6822 = vcombine.high %v6814, %v6814
    %v6823 = vcombine.high %v6821, %v6821
    %v6825 = vunpack.c.l.s4 1966171168
    %v6826 = vunpack.c.0.s8 %v6825
    %v6827 = vlaneseq
    %v6828 = vshrl.u32 %v6827, 7
    %v6829 = vsub.s32 %v6826, %v6828
    %v6830 = vrot.slane %v6814, %v6829
    %v6832 = vunpack.c.l.s4 1966171168
    %v6833 = vunpack.c.0.s8 %v6832
    %v6834 = vlaneseq
    %v6835 = vshrl.u32 %v6834, 7
    %v6836 = vsub.s32 %v6833, %v6835
    %v6837 = vrot.slane %v6821, %v6836
    %v6839 = vunpack.c.l.s4 1966171168
    %v6840 = vunpack.c.0.s8 %v6839
    %v6841 = vlaneseq
    %v6842 = vshrl.u32 %v6841, 7
    %v6843 = vsub.s32 %v6840, %v6842
    %v6844 = vrot.slane %v6822, %v6843
    %v6846 = vunpack.c.l.s4 1966171168
    %v6847 = vunpack.c.0.s8 %v6846
    %v6848 = vlaneseq
    %v6849 = vshrl.u32 %v6848, 7
    %v6850 = vsub.s32 %v6847, %v6849
    %v6851 = vrot.slane %v6823, %v6850
    %v6852 = vcombine.high %v6830, %v6830
    %v6853 = vcombine.high %v6837, %v6837
    %v6854 = vcombine.high %v6844, %v6844
    %v6855 = vcombine.high %v6851, %v6851
    %v6864 = vmul.f32 %v6652, %v6830
    %v6865 = vmul.f32 %v6654, %v6844
    %v6866 = vmul.f32 %v6656, %v6852
    %v6867 = vmul.f32 %v6658, %v6854
    %v6868 = vmul.f32 %v6660, %v6837
    %v6869 = vmul.f32 %v6662, %v6851
    %v6870 = vmul.f32 %v6664, %v6853
    %v6871 = vmul.f32 %v6666, %v6855
    %v6872 = vrot.slane %v6441, 2
    %v6873 = vrot.slane %v6443, 2
    %v6874 = vrot.slane %v6445, 2
    %v6875 = vrot.slane %v6447, 2
    %v6876 = vrot.slane %v6449, 2
    %v6877 = vrot.slane %v6451, 2
    %v6878 = vrot.slane %v6453, 2
    %v6879 = vrot.slane %v6455, 2
    %v6888 = vadd.f32 %v6872, %v6864
    %v6889 = vadd.f32 %v6873, %v6865
    %v6890 = vadd.f32 %v6874, %v6866
    %v6891 = vadd.f32 %v6875, %v6867
    %v6892 = vadd.f32 %v6876, %v6868
    %v6893 = vadd.f32 %v6877, %v6869
    %v6894 = vadd.f32 %v6878, %v6870
    %v6895 = vadd.f32 %v6879, %v6871
    %v6896 = vtanh.pop %v6888
    %v6897 = vtanh.pop %v6889
    %v6898 = vtanh.pop %v6890
    %v6899 = vtanh.pop %v6891
    %v6900 = vtanh.pop %v6892
    %v6901 = vtanh.pop %v6893
    %v6902 = vtanh.pop %v6894
    %v6903 = vtanh.pop %v6895
    %v6904 = vsub.f32 1.0, %v6790
    %v6905 = vsub.f32 1.0, %v6792
    %v6906 = vsub.f32 1.0, %v6794
    %v6907 = vsub.f32 1.0, %v6796
    %v6908 = vsub.f32 1.0, %v6798
    %v6909 = vsub.f32 1.0, %v6800
    %v6910 = vsub.f32 1.0, %v6802
    %v6911 = vsub.f32 1.0, %v6804
    %v6912 = vmul.f32 %v6904, %v6896
    %v6913 = vmul.f32 %v6905, %v6897
    %v6914 = vmul.f32 %v6906, %v6898
    %v6915 = vmul.f32 %v6907, %v6899
    %v6916 = vmul.f32 %v6908, %v6900
    %v6917 = vmul.f32 %v6909, %v6901
    %v6918 = vmul.f32 %v6910, %v6902
    %v6919 = vmul.f32 %v6911, %v6903
    %v6920 = vmul.f32 %v6790, %v6344
    %v6921 = vmul.f32 %v6792, %v6345
    %v6922 = vmul.f32 %v6794, %v6346
    %v6923 = vmul.f32 %v6796, %v6347
    %v6924 = vmul.f32 %v6798, %v6348
    %v6925 = vmul.f32 %v6800, %v6349
    %v6926 = vmul.f32 %v6802, %v6350
    %v6927 = vmul.f32 %v6804, %v6351
    %v6928 = vadd.f32 %v6912, %v6920
    %v6929 = vadd.f32 %v6913, %v6921
    %v6930 = vadd.f32 %v6914, %v6922
    %v6931 = vadd.f32 %v6915, %v6923
    %v6932 = vadd.f32 %v6916, %v6924
    %v6933 = vadd.f32 %v6917, %v6925
    %v6934 = vadd.f32 %v6918, %v6926
    %v6935 = vadd.f32 %v6919, %v6927
    %v6936 = vpack.c.bf16 %v6928, %v6928
    %v6937 = vpack.c.bf16 %v6929, %v6929
    %v6938 = vpack.c.bf16 %v6930, %v6930
    %v6939 = vpack.c.bf16 %v6931, %v6931
    %v6940 = vpack.c.bf16 %v6932, %v6932
    %v6941 = vpack.c.bf16 %v6933, %v6933
    %v6942 = vpack.c.bf16 %v6934, %v6934
    %v6943 = vpack.c.bf16 %v6935, %v6935
    %v6952 = vunpack.c.l.b16 %v6936
    %v6953 = vunpack.c.l.b16 %v6937
    %v6954 = vunpack.c.l.b16 %v6938
    %v6955 = vunpack.c.l.b16 %v6939
    %v6956 = vunpack.c.l.b16 %v6940
    %v6957 = vunpack.c.l.b16 %v6941
    %v6958 = vunpack.c.l.b16 %v6942
    %v6959 = vunpack.c.l.b16 %v6943
    %v6960 = vpack.c.b16 %v6952, %v6952
    %v6961 = vpack.c.b16 %v6953, %v6953
    %v6962 = vpack.c.b16 %v6954, %v6954
    %v6963 = vpack.c.b16 %v6955, %v6955
    %v6964 = vpack.c.b16 %v6956, %v6956
    %v6965 = vpack.c.b16 %v6957, %v6957
    %v6966 = vpack.c.b16 %v6958, %v6958
    %v6967 = vpack.c.b16 %v6959, %v6959
    %v6968 = vrot.slane %v6960, 7
    %v6969 = vrot.slane %v6961, 7
    %v6970 = vrot.slane %v6962, 7
    %v6971 = vrot.slane %v6963, 7
    %v6972 = vrot.slane %v6964, 7
    %v6973 = vrot.slane %v6965, 7
    %v6974 = vrot.slane %v6966, 7
    %v6975 = vrot.slane %v6967, 7
    %v6984 = vld [vmem:[#allocation13 + $0x4] sm:$0x2]
    %v6985 = vsel %vm2363, %v6968, %v6984
    %6986 = vst [vmem:[#allocation13 + $0x4] sm:$0x2] %v6985
    %v6987 = vld [vmem:[#allocation13 + $0xc] sm:$0x2]
    %v6988 = vsel %vm2363, %v6969, %v6987
    %6989 = vst [vmem:[#allocation13 + $0xc] sm:$0x2] %v6988
    %v6990 = vld [vmem:[#allocation13 + $0x14] sm:$0x2]
    %v6991 = vsel %vm2363, %v6970, %v6990
    %6992 = vst [vmem:[#allocation13 + $0x14] sm:$0x2] %v6991
    %v6993 = vld [vmem:[#allocation13 + $0x1c] sm:$0x2]
    %v6994 = vsel %vm2363, %v6971, %v6993
    %6995 = vst [vmem:[#allocation13 + $0x1c] sm:$0x2] %v6994
    %v6996 = vld [vmem:[#allocation13 + $0x24] sm:$0x2]
    %v6997 = vsel %vm2363, %v6972, %v6996
    %6998 = vst [vmem:[#allocation13 + $0x24] sm:$0x2] %v6997
    %v6999 = vld [vmem:[#allocation13 + $0x2c] sm:$0x2]
    %v7000 = vsel %vm2363, %v6973, %v6999
    %7001 = vst [vmem:[#allocation13 + $0x2c] sm:$0x2] %v7000
    %v7002 = vld [vmem:[#allocation13 + $0x34] sm:$0x2]
    %v7003 = vsel %vm2363, %v6974, %v7002
    %7004 = vst [vmem:[#allocation13 + $0x34] sm:$0x2] %v7003
    %v7005 = vld [vmem:[#allocation13 + $0x3c] sm:$0x2]
    %v7006 = vsel %vm2363, %v6975, %v7005
    %7007 = vst [vmem:[#allocation13 + $0x3c] sm:$0x2] %v7006
    %s7008 = scalar_lea.vmem [#allocation3], 27
    %v7009 = vld [vmem:[%s7008] ss:$8 sm:$0x7]
    %s7010 = scalar_lea.vmem [#allocation3], 75
    %v7011 = vld [vmem:[%s7010] ss:$8 sm:$0x7]
    %s7012 = scalar_lea.vmem [#allocation3], 123
    %v7013 = vld [vmem:[%s7012] ss:$8 sm:$0x7]
    %s7014 = scalar_lea.vmem [#allocation3], 171
    %v7015 = vld [vmem:[%s7014] ss:$8 sm:$0x7]
    %s7016 = scalar_lea.vmem [#allocation3], 219
    %v7017 = vld [vmem:[%s7016] ss:$8 sm:$0x7]
    %s7018 = scalar_lea.vmem [#allocation3], 267
    %v7019 = vld [vmem:[%s7018] ss:$8 sm:$0x7]
    %s7020 = scalar_lea.vmem [#allocation3], 315
    %v7021 = vld [vmem:[%s7020] ss:$8 sm:$0x7]
    %s7022 = scalar_lea.vmem [#allocation3], 363
    %v7023 = vld [vmem:[%s7022] ss:$8 sm:$0x7]
    %v7024 = vrot.slane %v6953, 7
    %v7025 = vsel %vm1241, %v7024, %v6952
    %v7026 = vrot.slane %v6954, 6
    %v7027 = vsel %vm1244, %v7026, %v7025
    %v7028 = vrot.slane %v6955, 5
    %v7029 = vsel %vm1247, %v7028, %v7027
    %v7030 = vrot.slane %v6956, 4
    %v7031 = vsel %vm1250, %v7030, %v7029
    %v7032 = vrot.slane %v6957, 3
    %v7033 = vsel %vm1253, %v7032, %v7031
    %v7034 = vrot.slane %v6958, 2
    %v7035 = vsel %vm1256, %v7034, %v7033
    %v7036 = vrot.slane %v6959, 1
    %v7037 = vsel %vm1259, %v7036, %v7035
    %v7038 = vpack.c.b16 %v7037, %v7037
    %7040 = vmatprep.subr.bf16.mxu0 %v598
    %7041 = vmatpush1.bf16.msra.mxu0 %v597
    %7042 = vmatprep.subr.bf16.mxu0 %v601
    %7043 = vmatpush1.bf16.msra.mxu0 %v600
    %7044 = vmatprep.subr.bf16.mxu0 %v604
    %7045 = vmatpush1.bf16.msra.mxu0 %v603
    %7046 = vmatprep.subr.bf16.mxu0 %v607
    %7047 = vmatpush1.bf16.msra.mxu0 %v606
    %7048 = vmatprep.subr.bf16.mxu0 %v610
    %7049 = vmatpush1.bf16.msra.mxu0 %v609
    %7050 = vmatprep.subr.bf16.mxu0 %v613
    %7051 = vmatpush1.bf16.msra.mxu0 %v612
    %7052 = vmatprep.subr.bf16.mxu0 %v616
    %7053 = vmatpush1.bf16.msra.mxu0 %v615
    %7054 = vmatprep.subr.bf16.mxu0 %v619
    %7055 = vmatpush1.bf16.msra.mxu0 %v618
    %7056 = vmatprep.subr.bf16.mxu0 0
    %7057 = vmatpush1.bf16.msra.mxu0 0
    %7058 = vmatprep.subr.bf16.mxu0 0
    %7059 = vmatpush1.bf16.msra.mxu0 0
    %7060 = vmatprep.subr.bf16.mxu0 0
    %7061 = vmatpush1.bf16.msra.mxu0 0
    %7062 = vmatprep.subr.bf16.mxu0 0
    %7063 = vmatpush1.bf16.msra.mxu0 0
    %7064 = vmatprep.subr.bf16.mxu0 0
    %7065 = vmatpush1.bf16.msra.mxu0 0
    %7066 = vmatprep.subr.bf16.mxu0 0
    %7067 = vmatpush1.bf16.msra.mxu0 0
    %7068 = vmatprep.subr.bf16.mxu0 0
    %7069 = vmatpush1.bf16.msra.mxu0 0
    %7070 = vmatprep.subr.bf16.mxu0 0
    %7071 = vmatpush1.bf16.msra.mxu0 0
    %7072 = vmatprep.mubr.bf16.mxu0 0
    %7073 = vmatmul.mubr.bf16.gmra.mrb[0].mxu0 %v7038
    %v7074 = vpop.f32.mrb[0].mxu0
    %v7075 = vadd.f32 0.0, %v7074
    %v7076 = vpop.f32.mrb[0].mxu0
    %v7077 = vadd.f32 0.0, %v7076
    %v7078 = vpop.f32.mrb[0].mxu0
    %v7079 = vpop.f32.mrb[0].mxu0
    %7080 = vdwg.mxu0
    %7081 = vmatprep.subr.bf16.mxu0 0
    %7082 = vmatpush1.bf16.msra.mxu0 %v599
    %7083 = vmatprep.subr.bf16.mxu0 0
    %7084 = vmatpush1.bf16.msra.mxu0 %v602
    %7085 = vmatprep.subr.bf16.mxu0 0
    %7086 = vmatpush1.bf16.msra.mxu0 %v605
    %7087 = vmatprep.subr.bf16.mxu0 0
    %7088 = vmatpush1.bf16.msra.mxu0 %v608
    %7089 = vmatprep.subr.bf16.mxu0 0
    %7090 = vmatpush1.bf16.msra.mxu0 %v611
    %7091 = vmatprep.subr.bf16.mxu0 0
    %7092 = vmatpush1.bf16.msra.mxu0 %v614
    %7093 = vmatprep.subr.bf16.mxu0 0
    %7094 = vmatpush1.bf16.msra.mxu0 %v617
    %7095 = vmatprep.subr.bf16.mxu0 0
    %7096 = vmatpush1.bf16.msra.mxu0 %v620
    %7097 = vmatprep.subr.bf16.mxu0 0
    %7098 = vmatpush1.bf16.msra.mxu0 0
    %7099 = vmatprep.subr.bf16.mxu0 0
    %7100 = vmatpush1.bf16.msra.mxu0 0
    %7101 = vmatprep.subr.bf16.mxu0 0
    %7102 = vmatpush1.bf16.msra.mxu0 0
    %7103 = vmatprep.subr.bf16.mxu0 0
    %7104 = vmatpush1.bf16.msra.mxu0 0
    %7105 = vmatprep.subr.bf16.mxu0 0
    %7106 = vmatpush1.bf16.msra.mxu0 0
    %7107 = vmatprep.subr.bf16.mxu0 0
    %7108 = vmatpush1.bf16.msra.mxu0 0
    %7109 = vmatprep.subr.bf16.mxu0 0
    %7110 = vmatpush1.bf16.msra.mxu0 0
    %7111 = vmatprep.subr.bf16.mxu0 0
    %7112 = vmatpush1.bf16.msra.mxu0 0
    %7113 = vmatprep.mubr.bf16.mxu0 0
    %7114 = vmatmul.mubr.bf16.gmra.mrb[0].mxu0 %v7038
    %v7115 = vpop.f32.mrb[0].mxu0
    %v7116 = vadd.f32 0.0, %v7115
    %v7117 = vpop.f32.mrb[0].mxu0
    %v7118 = vpop.f32.mrb[0].mxu0
    %v7119 = vpop.f32.mrb[0].mxu0
    %7120 = vdwg.mxu0
    %v7122 = vcombine.high %v7075, %v7075
    %v7124 = vunpack.c.l.s4 1966171168
    %v7125 = vunpack.c.0.s8 %v7124
    %v7126 = vlaneseq
    %v7127 = vshrl.u32 %v7126, 7
    %v7128 = vsub.s32 %v7125, %v7127
    %v7129 = vrot.slane %v7075, %v7128
    %v7131 = vunpack.c.l.s4 1966171168
    %v7132 = vunpack.c.0.s8 %v7131
    %v7133 = vlaneseq
    %v7134 = vshrl.u32 %v7133, 7
    %v7135 = vsub.s32 %v7132, %v7134
    %v7136 = vrot.slane %v7122, %v7135
    %v7137 = vcombine.high %v7129, %v7129
    %v7138 = vcombine.high %v7136, %v7136
    %v7140 = vunpack.c.l.s4 1966171168
    %v7141 = vunpack.c.0.s8 %v7140
    %v7142 = vlaneseq
    %v7143 = vshrl.u32 %v7142, 7
    %v7144 = vsub.s32 %v7141, %v7143
    %v7145 = vrot.slane %v7129, %v7144
    %v7147 = vunpack.c.l.s4 1966171168
    %v7148 = vunpack.c.0.s8 %v7147
    %v7149 = vlaneseq
    %v7150 = vshrl.u32 %v7149, 7
    %v7151 = vsub.s32 %v7148, %v7150
    %v7152 = vrot.slane %v7136, %v7151
    %v7154 = vunpack.c.l.s4 1966171168
    %v7155 = vunpack.c.0.s8 %v7154
    %v7156 = vlaneseq
    %v7157 = vshrl.u32 %v7156, 7
    %v7158 = vsub.s32 %v7155, %v7157
    %v7159 = vrot.slane %v7137, %v7158
    %v7161 = vunpack.c.l.s4 1966171168
    %v7162 = vunpack.c.0.s8 %v7161
    %v7163 = vlaneseq
    %v7164 = vshrl.u32 %v7163, 7
    %v7165 = vsub.s32 %v7162, %v7164
    %v7166 = vrot.slane %v7138, %v7165
    %v7167 = vcombine.high %v7145, %v7145
    %v7168 = vcombine.high %v7152, %v7152
    %v7169 = vcombine.high %v7159, %v7159
    %v7170 = vcombine.high %v7166, %v7166
    %v7179 = vadd.f32 %v7009, %v7145
    %v7180 = vadd.f32 %v7011, %v7159
    %v7181 = vadd.f32 %v7013, %v7167
    %v7182 = vadd.f32 %v7015, %v7169
    %v7183 = vadd.f32 %v7017, %v7152
    %v7184 = vadd.f32 %v7019, %v7166
    %v7185 = vadd.f32 %v7021, %v7168
    %v7186 = vadd.f32 %v7023, %v7170
    %v7187 = vxor.u32 %v7179, 2147483648
    %v7188 = vxor.u32 %v7180, 2147483648
    %v7189 = vxor.u32 %v7181, 2147483648
    %v7190 = vxor.u32 %v7182, 2147483648
    %v7191 = vxor.u32 %v7183, 2147483648
    %v7192 = vxor.u32 %v7184, 2147483648
    %v7193 = vxor.u32 %v7185, 2147483648
    %v7194 = vxor.u32 %v7186, 2147483648
    %v7195 = vmul.f32 %v7187, 1.442695
    %v7196 = vpow.pop %v7195
    %v7197 = vmul.f32 %v7188, 1.442695
    %v7198 = vpow.pop %v7197
    %v7199 = vmul.f32 %v7189, 1.442695
    %v7200 = vpow.pop %v7199
    %v7201 = vmul.f32 %v7190, 1.442695
    %v7202 = vpow.pop %v7201
    %v7203 = vmul.f32 %v7191, 1.442695
    %v7204 = vpow.pop %v7203
    %v7205 = vmul.f32 %v7192, 1.442695
    %v7206 = vpow.pop %v7205
    %v7207 = vmul.f32 %v7193, 1.442695
    %v7208 = vpow.pop %v7207
    %v7209 = vmul.f32 %v7194, 1.442695
    %v7210 = vpow.pop %v7209
    %v7211 = vadd.f32 %v7196, 1.0
    %v7212 = vadd.f32 %v7198, 1.0
    %v7213 = vadd.f32 %v7200, 1.0
    %v7214 = vadd.f32 %v7202, 1.0
    %v7215 = vadd.f32 %v7204, 1.0
    %v7216 = vadd.f32 %v7206, 1.0
    %v7217 = vadd.f32 %v7208, 1.0
    %v7218 = vadd.f32 %v7210, 1.0
    %v7219 = vrcp.pop %v7211
    %v7220 = vmul.f32 1.0, %v7219
    %v7221 = vrcp.pop %v7212
    %v7222 = vmul.f32 1.0, %v7221
    %v7223 = vrcp.pop %v7213
    %v7224 = vmul.f32 1.0, %v7223
    %v7225 = vrcp.pop %v7214
    %v7226 = vmul.f32 1.0, %v7225
    %v7227 = vrcp.pop %v7215
    %v7228 = vmul.f32 1.0, %v7227
    %v7229 = vrcp.pop %v7216
    %v7230 = vmul.f32 1.0, %v7229
    %v7231 = vrcp.pop %v7217
    %v7232 = vmul.f32 1.0, %v7231
    %v7233 = vrcp.pop %v7218
    %v7234 = vmul.f32 1.0, %v7233
    %v7243 = vrot.slane %v7009, 1
    %v7244 = vrot.slane %v7011, 1
    %v7245 = vrot.slane %v7013, 1
    %v7246 = vrot.slane %v7015, 1
    %v7247 = vrot.slane %v7017, 1
    %v7248 = vrot.slane %v7019, 1
    %v7249 = vrot.slane %v7021, 1
    %v7250 = vrot.slane %v7023, 1
    %v7260 = vcombine.high %v7077, %v7077
    %v7262 = vunpack.c.l.s4 1966171168
    %v7263 = vunpack.c.0.s8 %v7262
    %v7264 = vlaneseq
    %v7265 = vshrl.u32 %v7264, 7
    %v7266 = vsub.s32 %v7263, %v7265
    %v7267 = vrot.slane %v7077, %v7266
    %v7269 = vunpack.c.l.s4 1966171168
    %v7270 = vunpack.c.0.s8 %v7269
    %v7271 = vlaneseq
    %v7272 = vshrl.u32 %v7271, 7
    %v7273 = vsub.s32 %v7270, %v7272
    %v7274 = vrot.slane %v7260, %v7273
    %v7275 = vcombine.high %v7267, %v7267
    %v7276 = vcombine.high %v7274, %v7274
    %v7278 = vunpack.c.l.s4 1966171168
    %v7279 = vunpack.c.0.s8 %v7278
    %v7280 = vlaneseq
    %v7281 = vshrl.u32 %v7280, 7
    %v7282 = vsub.s32 %v7279, %v7281
    %v7283 = vrot.slane %v7267, %v7282
    %v7285 = vunpack.c.l.s4 1966171168
    %v7286 = vunpack.c.0.s8 %v7285
    %v7287 = vlaneseq
    %v7288 = vshrl.u32 %v7287, 7
    %v7289 = vsub.s32 %v7286, %v7288
    %v7290 = vrot.slane %v7274, %v7289
    %v7292 = vunpack.c.l.s4 1966171168
    %v7293 = vunpack.c.0.s8 %v7292
    %v7294 = vlaneseq
    %v7295 = vshrl.u32 %v7294, 7
    %v7296 = vsub.s32 %v7293, %v7295
    %v7297 = vrot.slane %v7275, %v7296
    %v7299 = vunpack.c.l.s4 1966171168
    %v7300 = vunpack.c.0.s8 %v7299
    %v7301 = vlaneseq
    %v7302 = vshrl.u32 %v7301, 7
    %v7303 = vsub.s32 %v7300, %v7302
    %v7304 = vrot.slane %v7276, %v7303
    %v7305 = vcombine.high %v7283, %v7283
    %v7306 = vcombine.high %v7290, %v7290
    %v7307 = vcombine.high %v7297, %v7297
    %v7308 = vcombine.high %v7304, %v7304
    %v7317 = vadd.f32 %v7243, %v7283
    %v7318 = vadd.f32 %v7244, %v7297
    %v7319 = vadd.f32 %v7245, %v7305
    %v7320 = vadd.f32 %v7246, %v7307
    %v7321 = vadd.f32 %v7247, %v7290
    %v7322 = vadd.f32 %v7248, %v7304
    %v7323 = vadd.f32 %v7249, %v7306
    %v7324 = vadd.f32 %v7250, %v7308
    %v7325 = vxor.u32 %v7317, 2147483648
    %v7326 = vxor.u32 %v7318, 2147483648
    %v7327 = vxor.u32 %v7319, 2147483648
    %v7328 = vxor.u32 %v7320, 2147483648
    %v7329 = vxor.u32 %v7321, 2147483648
    %v7330 = vxor.u32 %v7322, 2147483648
    %v7331 = vxor.u32 %v7323, 2147483648
    %v7332 = vxor.u32 %v7324, 2147483648
    %v7333 = vmul.f32 %v7325, 1.442695
    %v7334 = vpow.pop %v7333
    %v7335 = vmul.f32 %v7326, 1.442695
    %v7336 = vpow.pop %v7335
    %v7337 = vmul.f32 %v7327, 1.442695
    %v7338 = vpow.pop %v7337
    %v7339 = vmul.f32 %v7328, 1.442695
    %v7340 = vpow.pop %v7339
    %v7341 = vmul.f32 %v7329, 1.442695
    %v7342 = vpow.pop %v7341
    %v7343 = vmul.f32 %v7330, 1.442695
    %v7344 = vpow.pop %v7343
    %v7345 = vmul.f32 %v7331, 1.442695
    %v7346 = vpow.pop %v7345
    %v7347 = vmul.f32 %v7332, 1.442695
    %v7348 = vpow.pop %v7347
    %v7349 = vadd.f32 %v7334, 1.0
    %v7350 = vadd.f32 %v7336, 1.0
    %v7351 = vadd.f32 %v7338, 1.0
    %v7352 = vadd.f32 %v7340, 1.0
    %v7353 = vadd.f32 %v7342, 1.0
    %v7354 = vadd.f32 %v7344, 1.0
    %v7355 = vadd.f32 %v7346, 1.0
    %v7356 = vadd.f32 %v7348, 1.0
    %v7357 = vrcp.pop %v7349
    %v7358 = vmul.f32 1.0, %v7357
    %v7359 = vrcp.pop %v7350
    %v7360 = vmul.f32 1.0, %v7359
    %v7361 = vrcp.pop %v7351
    %v7362 = vmul.f32 1.0, %v7361
    %v7363 = vrcp.pop %v7352
    %v7364 = vmul.f32 1.0, %v7363
    %v7365 = vrcp.pop %v7353
    %v7366 = vmul.f32 1.0, %v7365
    %v7367 = vrcp.pop %v7354
    %v7368 = vmul.f32 1.0, %v7367
    %v7369 = vrcp.pop %v7355
    %v7370 = vmul.f32 1.0, %v7369
    %v7371 = vrcp.pop %v7356
    %v7372 = vmul.f32 1.0, %v7371
    %v7373 = vadd.f32 %v7116, %v982
    %v7375 = vcombine.high %v7373, %v7373
    %v7377 = vunpack.c.l.s4 1966171168
    %v7378 = vunpack.c.0.s8 %v7377
    %v7379 = vlaneseq
    %v7380 = vshrl.u32 %v7379, 7
    %v7381 = vsub.s32 %v7378, %v7380
    %v7382 = vrot.slane %v7373, %v7381
    %v7384 = vunpack.c.l.s4 1966171168
    %v7385 = vunpack.c.0.s8 %v7384
    %v7386 = vlaneseq
    %v7387 = vshrl.u32 %v7386, 7
    %v7388 = vsub.s32 %v7385, %v7387
    %v7389 = vrot.slane %v7375, %v7388
    %v7390 = vcombine.high %v7382, %v7382
    %v7391 = vcombine.high %v7389, %v7389
    %v7393 = vunpack.c.l.s4 1966171168
    %v7394 = vunpack.c.0.s8 %v7393
    %v7395 = vlaneseq
    %v7396 = vshrl.u32 %v7395, 7
    %v7397 = vsub.s32 %v7394, %v7396
    %v7398 = vrot.slane %v7382, %v7397
    %v7400 = vunpack.c.l.s4 1966171168
    %v7401 = vunpack.c.0.s8 %v7400
    %v7402 = vlaneseq
    %v7403 = vshrl.u32 %v7402, 7
    %v7404 = vsub.s32 %v7401, %v7403
    %v7405 = vrot.slane %v7389, %v7404
    %v7407 = vunpack.c.l.s4 1966171168
    %v7408 = vunpack.c.0.s8 %v7407
    %v7409 = vlaneseq
    %v7410 = vshrl.u32 %v7409, 7
    %v7411 = vsub.s32 %v7408, %v7410
    %v7412 = vrot.slane %v7390, %v7411
    %v7414 = vunpack.c.l.s4 1966171168
    %v7415 = vunpack.c.0.s8 %v7414
    %v7416 = vlaneseq
    %v7417 = vshrl.u32 %v7416, 7
    %v7418 = vsub.s32 %v7415, %v7417
    %v7419 = vrot.slane %v7391, %v7418
    %v7420 = vcombine.high %v7398, %v7398
    %v7421 = vcombine.high %v7405, %v7405
    %v7422 = vcombine.high %v7412, %v7412
    %v7423 = vcombine.high %v7419, %v7419
    %v7432 = vmul.f32 %v7220, %v7398
    %v7433 = vmul.f32 %v7222, %v7412
    %v7434 = vmul.f32 %v7224, %v7420
    %v7435 = vmul.f32 %v7226, %v7422
    %v7436 = vmul.f32 %v7228, %v7405
    %v7437 = vmul.f32 %v7230, %v7419
    %v7438 = vmul.f32 %v7232, %v7421
    %v7439 = vmul.f32 %v7234, %v7423
    %v7440 = vrot.slane %v7009, 2
    %v7441 = vrot.slane %v7011, 2
    %v7442 = vrot.slane %v7013, 2
    %v7443 = vrot.slane %v7015, 2
    %v7444 = vrot.slane %v7017, 2
    %v7445 = vrot.slane %v7019, 2
    %v7446 = vrot.slane %v7021, 2
    %v7447 = vrot.slane %v7023, 2
    %v7456 = vadd.f32 %v7440, %v7432
    %v7457 = vadd.f32 %v7441, %v7433
    %v7458 = vadd.f32 %v7442, %v7434
    %v7459 = vadd.f32 %v7443, %v7435
    %v7460 = vadd.f32 %v7444, %v7436
    %v7461 = vadd.f32 %v7445, %v7437
    %v7462 = vadd.f32 %v7446, %v7438
    %v7463 = vadd.f32 %v7447, %v7439
    %v7464 = vtanh.pop %v7456
    %v7465 = vtanh.pop %v7457
    %v7466 = vtanh.pop %v7458
    %v7467 = vtanh.pop %v7459
    %v7468 = vtanh.pop %v7460
    %v7469 = vtanh.pop %v7461
    %v7470 = vtanh.pop %v7462
    %v7471 = vtanh.pop %v7463
    %v7472 = vsub.f32 1.0, %v7358
    %v7473 = vsub.f32 1.0, %v7360
    %v7474 = vsub.f32 1.0, %v7362
    %v7475 = vsub.f32 1.0, %v7364
    %v7476 = vsub.f32 1.0, %v7366
    %v7477 = vsub.f32 1.0, %v7368
    %v7478 = vsub.f32 1.0, %v7370
    %v7479 = vsub.f32 1.0, %v7372
    %v7480 = vmul.f32 %v7472, %v7464
    %v7481 = vmul.f32 %v7473, %v7465
    %v7482 = vmul.f32 %v7474, %v7466
    %v7483 = vmul.f32 %v7475, %v7467
    %v7484 = vmul.f32 %v7476, %v7468
    %v7485 = vmul.f32 %v7477, %v7469
    %v7486 = vmul.f32 %v7478, %v7470
    %v7487 = vmul.f32 %v7479, %v7471
    %v7488 = vmul.f32 %v7358, %v6928
    %v7489 = vmul.f32 %v7360, %v6929
    %v7490 = vmul.f32 %v7362, %v6930
    %v7491 = vmul.f32 %v7364, %v6931
    %v7492 = vmul.f32 %v7366, %v6932
    %v7493 = vmul.f32 %v7368, %v6933
    %v7494 = vmul.f32 %v7370, %v6934
    %v7495 = vmul.f32 %v7372, %v6935
    %v7496 = vadd.f32 %v7480, %v7488
    %v7497 = vadd.f32 %v7481, %v7489
    %v7498 = vadd.f32 %v7482, %v7490
    %v7499 = vadd.f32 %v7483, %v7491
    %v7500 = vadd.f32 %v7484, %v7492
    %v7501 = vadd.f32 %v7485, %v7493
    %v7502 = vadd.f32 %v7486, %v7494
    %v7503 = vadd.f32 %v7487, %v7495
    %v7504 = vpack.c.bf16 %v7496, %v7496
    %v7505 = vpack.c.bf16 %v7497, %v7497
    %v7506 = vpack.c.bf16 %v7498, %v7498
    %v7507 = vpack.c.bf16 %v7499, %v7499
    %v7508 = vpack.c.bf16 %v7500, %v7500
    %v7509 = vpack.c.bf16 %v7501, %v7501
    %v7510 = vpack.c.bf16 %v7502, %v7502
    %v7511 = vpack.c.bf16 %v7503, %v7503
    %v7520 = vunpack.c.l.b16 %v7504
    %v7521 = vunpack.c.l.b16 %v7505
    %v7522 = vunpack.c.l.b16 %v7506
    %v7523 = vunpack.c.l.b16 %v7507
    %v7524 = vunpack.c.l.b16 %v7508
    %v7525 = vunpack.c.l.b16 %v7509
    %v7526 = vunpack.c.l.b16 %v7510
    %v7527 = vunpack.c.l.b16 %v7511
    %v7528 = vpack.c.b16 %v7520, %v7520
    %v7529 = vpack.c.b16 %v7521, %v7521
    %v7530 = vpack.c.b16 %v7522, %v7522
    %v7531 = vpack.c.b16 %v7523, %v7523
    %v7532 = vpack.c.b16 %v7524, %v7524
    %v7533 = vpack.c.b16 %v7525, %v7525
    %v7534 = vpack.c.b16 %v7526, %v7526
    %v7535 = vpack.c.b16 %v7527, %v7527
    %v7537 = vshll.u32 %v7528, 16
    %v7539 = vrot.slane %v7537, 7
    %v7541 = vshll.u32 %v7529, 16
    %v7543 = vrot.slane %v7541, 7
    %v7545 = vshll.u32 %v7530, 16
    %v7547 = vrot.slane %v7545, 7
    %v7549 = vshll.u32 %v7531, 16
    %v7551 = vrot.slane %v7549, 7
    %v7553 = vshll.u32 %v7532, 16
    %v7555 = vrot.slane %v7553, 7
    %v7557 = vshll.u32 %v7533, 16
    %v7559 = vrot.slane %v7557, 7
    %v7561 = vshll.u32 %v7534, 16
    %v7563 = vrot.slane %v7561, 7
    %v7565 = vshll.u32 %v7535, 16
    %v7567 = vrot.slane %v7565, 7
    %v7576 = vld [vmem:[#allocation13 + $0x4] sm:$0x2]
    %v7577 = vsel %vm2957, %v7539, %v7576
    %7578 = vst [vmem:[#allocation13 + $0x4] sm:$0x2] %v7577
    %v7579 = vld [vmem:[#allocation13 + $0xc] sm:$0x2]
    %v7580 = vsel %vm2957, %v7543, %v7579
    %7581 = vst [vmem:[#allocation13 + $0xc] sm:$0x2] %v7580
    %v7582 = vld [vmem:[#allocation13 + $0x14] sm:$0x2]
    %v7583 = vsel %vm2957, %v7547, %v7582
    %7584 = vst [vmem:[#allocation13 + $0x14] sm:$0x2] %v7583
    %v7585 = vld [vmem:[#allocation13 + $0x1c] sm:$0x2]
    %v7586 = vsel %vm2957, %v7551, %v7585
    %7587 = vst [vmem:[#allocation13 + $0x1c] sm:$0x2] %v7586
    %v7588 = vld [vmem:[#allocation13 + $0x24] sm:$0x2]
    %v7589 = vsel %vm2957, %v7555, %v7588
    %7590 = vst [vmem:[#allocation13 + $0x24] sm:$0x2] %v7589
    %v7591 = vld [vmem:[#allocation13 + $0x2c] sm:$0x2]
    %v7592 = vsel %vm2957, %v7559, %v7591
    %7593 = vst [vmem:[#allocation13 + $0x2c] sm:$0x2] %v7592
    %v7594 = vld [vmem:[#allocation13 + $0x34] sm:$0x2]
    %v7595 = vsel %vm2957, %v7563, %v7594
    %7596 = vst [vmem:[#allocation13 + $0x34] sm:$0x2] %v7595
    %v7597 = vld [vmem:[#allocation13 + $0x3c] sm:$0x2]
    %v7598 = vsel %vm2957, %v7567, %v7597
    %7599 = vst [vmem:[#allocation13 + $0x3c] sm:$0x2] %v7598
    %s7600 = scalar_lea.vmem [#allocation3], 28
    %v7601 = vld [vmem:[%s7600] ss:$8 sm:$0x7]
    %s7602 = scalar_lea.vmem [#allocation3], 76
    %v7603 = vld [vmem:[%s7602] ss:$8 sm:$0x7]
    %s7604 = scalar_lea.vmem [#allocation3], 124
    %v7605 = vld [vmem:[%s7604] ss:$8 sm:$0x7]
    %s7606 = scalar_lea.vmem [#allocation3], 172
    %v7607 = vld [vmem:[%s7606] ss:$8 sm:$0x7]
    %s7608 = scalar_lea.vmem [#allocation3], 220
    %v7609 = vld [vmem:[%s7608] ss:$8 sm:$0x7]
    %s7610 = scalar_lea.vmem [#allocation3], 268
    %v7611 = vld [vmem:[%s7610] ss:$8 sm:$0x7]
    %s7612 = scalar_lea.vmem [#allocation3], 316
    %v7613 = vld [vmem:[%s7612] ss:$8 sm:$0x7]
    %s7614 = scalar_lea.vmem [#allocation3], 364
    %v7615 = vld [vmem:[%s7614] ss:$8 sm:$0x7]
    %v7616 = vrot.slane %v7521, 7
    %v7617 = vsel %vm1241, %v7616, %v7520
    %v7618 = vrot.slane %v7522, 6
    %v7619 = vsel %vm1244, %v7618, %v7617
    %v7620 = vrot.slane %v7523, 5
    %v7621 = vsel %vm1247, %v7620, %v7619
    %v7622 = vrot.slane %v7524, 4
    %v7623 = vsel %vm1250, %v7622, %v7621
    %v7624 = vrot.slane %v7525, 3
    %v7625 = vsel %vm1253, %v7624, %v7623
    %v7626 = vrot.slane %v7526, 2
    %v7627 = vsel %vm1256, %v7626, %v7625
    %v7628 = vrot.slane %v7527, 1
    %v7629 = vsel %vm1259, %v7628, %v7627
    %v7630 = vpack.c.b16 %v7629, %v7629
    %7632 = vmatprep.subr.bf16.mxu0 %v598
    %7633 = vmatpush1.bf16.msra.mxu0 %v597
    %7634 = vmatprep.subr.bf16.mxu0 %v601
    %7635 = vmatpush1.bf16.msra.mxu0 %v600
    %7636 = vmatprep.subr.bf16.mxu0 %v604
    %7637 = vmatpush1.bf16.msra.mxu0 %v603
    %7638 = vmatprep.subr.bf16.mxu0 %v607
    %7639 = vmatpush1.bf16.msra.mxu0 %v606
    %7640 = vmatprep.subr.bf16.mxu0 %v610
    %7641 = vmatpush1.bf16.msra.mxu0 %v609
    %7642 = vmatprep.subr.bf16.mxu0 %v613
    %7643 = vmatpush1.bf16.msra.mxu0 %v612
    %7644 = vmatprep.subr.bf16.mxu0 %v616
    %7645 = vmatpush1.bf16.msra.mxu0 %v615
    %7646 = vmatprep.subr.bf16.mxu0 %v619
    %7647 = vmatpush1.bf16.msra.mxu0 %v618
    %7648 = vmatprep.subr.bf16.mxu0 0
    %7649 = vmatpush1.bf16.msra.mxu0 0
    %7650 = vmatprep.subr.bf16.mxu0 0
    %7651 = vmatpush1.bf16.msra.mxu0 0
    %7652 = vmatprep.subr.bf16.mxu0 0
    %7653 = vmatpush1.bf16.msra.mxu0 0
    %7654 = vmatprep.subr.bf16.mxu0 0
    %7655 = vmatpush1.bf16.msra.mxu0 0
    %7656 = vmatprep.subr.bf16.mxu0 0
    %7657 = vmatpush1.bf16.msra.mxu0 0
    %7658 = vmatprep.subr.bf16.mxu0 0
    %7659 = vmatpush1.bf16.msra.mxu0 0
    %7660 = vmatprep.subr.bf16.mxu0 0
    %7661 = vmatpush1.bf16.msra.mxu0 0
    %7662 = vmatprep.subr.bf16.mxu0 0
    %7663 = vmatpush1.bf16.msra.mxu0 0
    %7664 = vmatprep.mubr.bf16.mxu0 0
    %7665 = vmatmul.mubr.bf16.gmra.mrb[0].mxu0 %v7630
    %v7666 = vpop.f32.mrb[0].mxu0
    %v7667 = vadd.f32 0.0, %v7666
    %v7668 = vpop.f32.mrb[0].mxu0
    %v7669 = vadd.f32 0.0, %v7668
    %v7670 = vpop.f32.mrb[0].mxu0
    %v7671 = vpop.f32.mrb[0].mxu0
    %7672 = vdwg.mxu0
    %7673 = vmatprep.subr.bf16.mxu0 0
    %7674 = vmatpush1.bf16.msra.mxu0 %v599
    %7675 = vmatprep.subr.bf16.mxu0 0
    %7676 = vmatpush1.bf16.msra.mxu0 %v602
    %7677 = vmatprep.subr.bf16.mxu0 0
    %7678 = vmatpush1.bf16.msra.mxu0 %v605
    %7679 = vmatprep.subr.bf16.mxu0 0
    %7680 = vmatpush1.bf16.msra.mxu0 %v608
    %7681 = vmatprep.subr.bf16.mxu0 0
    %7682 = vmatpush1.bf16.msra.mxu0 %v611
    %7683 = vmatprep.subr.bf16.mxu0 0
    %7684 = vmatpush1.bf16.msra.mxu0 %v614
    %7685 = vmatprep.subr.bf16.mxu0 0
    %7686 = vmatpush1.bf16.msra.mxu0 %v617
    %7687 = vmatprep.subr.bf16.mxu0 0
    %7688 = vmatpush1.bf16.msra.mxu0 %v620
    %7689 = vmatprep.subr.bf16.mxu0 0
    %7690 = vmatpush1.bf16.msra.mxu0 0
    %7691 = vmatprep.subr.bf16.mxu0 0
    %7692 = vmatpush1.bf16.msra.mxu0 0
    %7693 = vmatprep.subr.bf16.mxu0 0
    %7694 = vmatpush1.bf16.msra.mxu0 0
    %7695 = vmatprep.subr.bf16.mxu0 0
    %7696 = vmatpush1.bf16.msra.mxu0 0
    %7697 = vmatprep.subr.bf16.mxu0 0
    %7698 = vmatpush1.bf16.msra.mxu0 0
    %7699 = vmatprep.subr.bf16.mxu0 0
    %7700 = vmatpush1.bf16.msra.mxu0 0
    %7701 = vmatprep.subr.bf16.mxu0 0
    %7702 = vmatpush1.bf16.msra.mxu0 0
    %7703 = vmatprep.subr.bf16.mxu0 0
    %7704 = vmatpush1.bf16.msra.mxu0 0
    %7705 = vmatprep.mubr.bf16.mxu0 0
    %7706 = vmatmul.mubr.bf16.gmra.mrb[0].mxu0 %v7630
    %v7707 = vpop.f32.mrb[0].mxu0
    %v7708 = vadd.f32 0.0, %v7707
    %v7709 = vpop.f32.mrb[0].mxu0
    %v7710 = vpop.f32.mrb[0].mxu0
    %v7711 = vpop.f32.mrb[0].mxu0
    %7712 = vdwg.mxu0
    %v7714 = vcombine.high %v7667, %v7667
    %v7716 = vunpack.c.l.s4 1966171168
    %v7717 = vunpack.c.0.s8 %v7716
    %v7718 = vlaneseq
    %v7719 = vshrl.u32 %v7718, 7
    %v7720 = vsub.s32 %v7717, %v7719
    %v7721 = vrot.slane %v7667, %v7720
    %v7723 = vunpack.c.l.s4 1966171168
    %v7724 = vunpack.c.0.s8 %v7723
    %v7725 = vlaneseq
    %v7726 = vshrl.u32 %v7725, 7
    %v7727 = vsub.s32 %v7724, %v7726
    %v7728 = vrot.slane %v7714, %v7727
    %v7729 = vcombine.high %v7721, %v7721
    %v7730 = vcombine.high %v7728, %v7728
    %v7732 = vunpack.c.l.s4 1966171168
    %v7733 = vunpack.c.0.s8 %v7732
    %v7734 = vlaneseq
    %v7735 = vshrl.u32 %v7734, 7
    %v7736 = vsub.s32 %v7733, %v7735
    %v7737 = vrot.slane %v7721, %v7736
    %v7739 = vunpack.c.l.s4 1966171168
    %v7740 = vunpack.c.0.s8 %v7739
    %v7741 = vlaneseq
    %v7742 = vshrl.u32 %v7741, 7
    %v7743 = vsub.s32 %v7740, %v7742
    %v7744 = vrot.slane %v7728, %v7743
    %v7746 = vunpack.c.l.s4 1966171168
    %v7747 = vunpack.c.0.s8 %v7746
    %v7748 = vlaneseq
    %v7749 = vshrl.u32 %v7748, 7
    %v7750 = vsub.s32 %v7747, %v7749
    %v7751 = vrot.slane %v7729, %v7750
    %v7753 = vunpack.c.l.s4 1966171168
    %v7754 = vunpack.c.0.s8 %v7753
    %v7755 = vlaneseq
    %v7756 = vshrl.u32 %v7755, 7
    %v7757 = vsub.s32 %v7754, %v7756
    %v7758 = vrot.slane %v7730, %v7757
    %v7759 = vcombine.high %v7737, %v7737
    %v7760 = vcombine.high %v7744, %v7744
    %v7761 = vcombine.high %v7751, %v7751
    %v7762 = vcombine.high %v7758, %v7758
    %v7771 = vadd.f32 %v7601, %v7737
    %v7772 = vadd.f32 %v7603, %v7751
    %v7773 = vadd.f32 %v7605, %v7759
    %v7774 = vadd.f32 %v7607, %v7761
    %v7775 = vadd.f32 %v7609, %v7744
    %v7776 = vadd.f32 %v7611, %v7758
    %v7777 = vadd.f32 %v7613, %v7760
    %v7778 = vadd.f32 %v7615, %v7762
    %v7779 = vxor.u32 %v7771, 2147483648
    %v7780 = vxor.u32 %v7772, 2147483648
    %v7781 = vxor.u32 %v7773, 2147483648
    %v7782 = vxor.u32 %v7774, 2147483648
    %v7783 = vxor.u32 %v7775, 2147483648
    %v7784 = vxor.u32 %v7776, 2147483648
    %v7785 = vxor.u32 %v7777, 2147483648
    %v7786 = vxor.u32 %v7778, 2147483648
    %v7787 = vmul.f32 %v7779, 1.442695
    %v7788 = vpow.pop %v7787
    %v7789 = vmul.f32 %v7780, 1.442695
    %v7790 = vpow.pop %v7789
    %v7791 = vmul.f32 %v7781, 1.442695
    %v7792 = vpow.pop %v7791
    %v7793 = vmul.f32 %v7782, 1.442695
    %v7794 = vpow.pop %v7793
    %v7795 = vmul.f32 %v7783, 1.442695
    %v7796 = vpow.pop %v7795
    %v7797 = vmul.f32 %v7784, 1.442695
    %v7798 = vpow.pop %v7797
    %v7799 = vmul.f32 %v7785, 1.442695
    %v7800 = vpow.pop %v7799
    %v7801 = vmul.f32 %v7786, 1.442695
    %v7802 = vpow.pop %v7801
    %v7803 = vadd.f32 %v7788, 1.0
    %v7804 = vadd.f32 %v7790, 1.0
    %v7805 = vadd.f32 %v7792, 1.0
    %v7806 = vadd.f32 %v7794, 1.0
    %v7807 = vadd.f32 %v7796, 1.0
    %v7808 = vadd.f32 %v7798, 1.0
    %v7809 = vadd.f32 %v7800, 1.0
    %v7810 = vadd.f32 %v7802, 1.0
    %v7811 = vrcp.pop %v7803
    %v7812 = vmul.f32 1.0, %v7811
    %v7813 = vrcp.pop %v7804
    %v7814 = vmul.f32 1.0, %v7813
    %v7815 = vrcp.pop %v7805
    %v7816 = vmul.f32 1.0, %v7815
    %v7817 = vrcp.pop %v7806
    %v7818 = vmul.f32 1.0, %v7817
    %v7819 = vrcp.pop %v7807
    %v7820 = vmul.f32 1.0, %v7819
    %v7821 = vrcp.pop %v7808
    %v7822 = vmul.f32 1.0, %v7821
    %v7823 = vrcp.pop %v7809
    %v7824 = vmul.f32 1.0, %v7823
    %v7825 = vrcp.pop %v7810
    %v7826 = vmul.f32 1.0, %v7825
    %v7835 = vrot.slane %v7601, 1
    %v7836 = vrot.slane %v7603, 1
    %v7837 = vrot.slane %v7605, 1
    %v7838 = vrot.slane %v7607, 1
    %v7839 = vrot.slane %v7609, 1
    %v7840 = vrot.slane %v7611, 1
    %v7841 = vrot.slane %v7613, 1
    %v7842 = vrot.slane %v7615, 1
    %v7852 = vcombine.high %v7669, %v7669
    %v7854 = vunpack.c.l.s4 1966171168
    %v7855 = vunpack.c.0.s8 %v7854
    %v7856 = vlaneseq
    %v7857 = vshrl.u32 %v7856, 7
    %v7858 = vsub.s32 %v7855, %v7857
    %v7859 = vrot.slane %v7669, %v7858
    %v7861 = vunpack.c.l.s4 1966171168
    %v7862 = vunpack.c.0.s8 %v7861
    %v7863 = vlaneseq
    %v7864 = vshrl.u32 %v7863, 7
    %v7865 = vsub.s32 %v7862, %v7864
    %v7866 = vrot.slane %v7852, %v7865
    %v7867 = vcombine.high %v7859, %v7859
    %v7868 = vcombine.high %v7866, %v7866
    %v7870 = vunpack.c.l.s4 1966171168
    %v7871 = vunpack.c.0.s8 %v7870
    %v7872 = vlaneseq
    %v7873 = vshrl.u32 %v7872, 7
    %v7874 = vsub.s32 %v7871, %v7873
    %v7875 = vrot.slane %v7859, %v7874
    %v7877 = vunpack.c.l.s4 1966171168
    %v7878 = vunpack.c.0.s8 %v7877
    %v7879 = vlaneseq
    %v7880 = vshrl.u32 %v7879, 7
    %v7881 = vsub.s32 %v7878, %v7880
    %v7882 = vrot.slane %v7866, %v7881
    %v7884 = vunpack.c.l.s4 1966171168
    %v7885 = vunpack.c.0.s8 %v7884
    %v7886 = vlaneseq
    %v7887 = vshrl.u32 %v7886, 7
    %v7888 = vsub.s32 %v7885, %v7887
    %v7889 = vrot.slane %v7867, %v7888
    %v7891 = vunpack.c.l.s4 1966171168
    %v7892 = vunpack.c.0.s8 %v7891
    %v7893 = vlaneseq
    %v7894 = vshrl.u32 %v7893, 7
    %v7895 = vsub.s32 %v7892, %v7894
    %v7896 = vrot.slane %v7868, %v7895
    %v7897 = vcombine.high %v7875, %v7875
    %v7898 = vcombine.high %v7882, %v7882
    %v7899 = vcombine.high %v7889, %v7889
    %v7900 = vcombine.high %v7896, %v7896
    %v7909 = vadd.f32 %v7835, %v7875
    %v7910 = vadd.f32 %v7836, %v7889
    %v7911 = vadd.f32 %v7837, %v7897
    %v7912 = vadd.f32 %v7838, %v7899
    %v7913 = vadd.f32 %v7839, %v7882
    %v7914 = vadd.f32 %v7840, %v7896
    %v7915 = vadd.f32 %v7841, %v7898
    %v7916 = vadd.f32 %v7842, %v7900
    %v7917 = vxor.u32 %v7909, 2147483648
    %v7918 = vxor.u32 %v7910, 2147483648
    %v7919 = vxor.u32 %v7911, 2147483648
    %v7920 = vxor.u32 %v7912, 2147483648
    %v7921 = vxor.u32 %v7913, 2147483648
    %v7922 = vxor.u32 %v7914, 2147483648
    %v7923 = vxor.u32 %v7915, 2147483648
    %v7924 = vxor.u32 %v7916, 2147483648
    %v7925 = vmul.f32 %v7917, 1.442695
    %v7926 = vpow.pop %v7925
    %v7927 = vmul.f32 %v7918, 1.442695
    %v7928 = vpow.pop %v7927
    %v7929 = vmul.f32 %v7919, 1.442695
    %v7930 = vpow.pop %v7929
    %v7931 = vmul.f32 %v7920, 1.442695
    %v7932 = vpow.pop %v7931
    %v7933 = vmul.f32 %v7921, 1.442695
    %v7934 = vpow.pop %v7933
    %v7935 = vmul.f32 %v7922, 1.442695
    %v7936 = vpow.pop %v7935
    %v7937 = vmul.f32 %v7923, 1.442695
    %v7938 = vpow.pop %v7937
    %v7939 = vmul.f32 %v7924, 1.442695
    %v7940 = vpow.pop %v7939
    %v7941 = vadd.f32 %v7926, 1.0
    %v7942 = vadd.f32 %v7928, 1.0
    %v7943 = vadd.f32 %v7930, 1.0
    %v7944 = vadd.f32 %v7932, 1.0
    %v7945 = vadd.f32 %v7934, 1.0
    %v7946 = vadd.f32 %v7936, 1.0
    %v7947 = vadd.f32 %v7938, 1.0
    %v7948 = vadd.f32 %v7940, 1.0
    %v7949 = vrcp.pop %v7941
    %v7950 = vmul.f32 1.0, %v7949
    %v7951 = vrcp.pop %v7942
    %v7952 = vmul.f32 1.0, %v7951
    %v7953 = vrcp.pop %v7943
    %v7954 = vmul.f32 1.0, %v7953
    %v7955 = vrcp.pop %v7944
    %v7956 = vmul.f32 1.0, %v7955
    %v7957 = vrcp.pop %v7945
    %v7958 = vmul.f32 1.0, %v7957
    %v7959 = vrcp.pop %v7946
    %v7960 = vmul.f32 1.0, %v7959
    %v7961 = vrcp.pop %v7947
    %v7962 = vmul.f32 1.0, %v7961
    %v7963 = vrcp.pop %v7948
    %v7964 = vmul.f32 1.0, %v7963
    %v7965 = vadd.f32 %v7708, %v982
    %v7967 = vcombine.high %v7965, %v7965
    %v7969 = vunpack.c.l.s4 1966171168
    %v7970 = vunpack.c.0.s8 %v7969
    %v7971 = vlaneseq
    %v7972 = vshrl.u32 %v7971, 7
    %v7973 = vsub.s32 %v7970, %v7972
    %v7974 = vrot.slane %v7965, %v7973
    %v7976 = vunpack.c.l.s4 1966171168
    %v7977 = vunpack.c.0.s8 %v7976
    %v7978 = vlaneseq
    %v7979 = vshrl.u32 %v7978, 7
    %v7980 = vsub.s32 %v7977, %v7979
    %v7981 = vrot.slane %v7967, %v7980
    %v7982 = vcombine.high %v7974, %v7974
    %v7983 = vcombine.high %v7981, %v7981
    %v7985 = vunpack.c.l.s4 1966171168
    %v7986 = vunpack.c.0.s8 %v7985
    %v7987 = vlaneseq
    %v7988 = vshrl.u32 %v7987, 7
    %v7989 = vsub.s32 %v7986, %v7988
    %v7990 = vrot.slane %v7974, %v7989
    %v7992 = vunpack.c.l.s4 1966171168
    %v7993 = vunpack.c.0.s8 %v7992
    %v7994 = vlaneseq
    %v7995 = vshrl.u32 %v7994, 7
    %v7996 = vsub.s32 %v7993, %v7995
    %v7997 = vrot.slane %v7981, %v7996
    %v7999 = vunpack.c.l.s4 1966171168
    %v8000 = vunpack.c.0.s8 %v7999
    %v8001 = vlaneseq
    %v8002 = vshrl.u32 %v8001, 7
    %v8003 = vsub.s32 %v8000, %v8002
    %v8004 = vrot.slane %v7982, %v8003
    %v8006 = vunpack.c.l.s4 1966171168
    %v8007 = vunpack.c.0.s8 %v8006
    %v8008 = vlaneseq
    %v8009 = vshrl.u32 %v8008, 7
    %v8010 = vsub.s32 %v8007, %v8009
    %v8011 = vrot.slane %v7983, %v8010
    %v8012 = vcombine.high %v7990, %v7990
    %v8013 = vcombine.high %v7997, %v7997
    %v8014 = vcombine.high %v8004, %v8004
    %v8015 = vcombine.high %v8011, %v8011
    %v8024 = vmul.f32 %v7812, %v7990
    %v8025 = vmul.f32 %v7814, %v8004
    %v8026 = vmul.f32 %v7816, %v8012
    %v8027 = vmul.f32 %v7818, %v8014
    %v8028 = vmul.f32 %v7820, %v7997
    %v8029 = vmul.f32 %v7822, %v8011
    %v8030 = vmul.f32 %v7824, %v8013
    %v8031 = vmul.f32 %v7826, %v8015
    %v8032 = vrot.slane %v7601, 2
    %v8033 = vrot.slane %v7603, 2
    %v8034 = vrot.slane %v7605, 2
    %v8035 = vrot.slane %v7607, 2
    %v8036 = vrot.slane %v7609, 2
    %v8037 = vrot.slane %v7611, 2
    %v8038 = vrot.slane %v7613, 2
    %v8039 = vrot.slane %v7615, 2
    %v8048 = vadd.f32 %v8032, %v8024
    %v8049 = vadd.f32 %v8033, %v8025
    %v8050 = vadd.f32 %v8034, %v8026
    %v8051 = vadd.f32 %v8035, %v8027
    %v8052 = vadd.f32 %v8036, %v8028
    %v8053 = vadd.f32 %v8037, %v8029
    %v8054 = vadd.f32 %v8038, %v8030
    %v8055 = vadd.f32 %v8039, %v8031
    %v8056 = vtanh.pop %v8048
    %v8057 = vtanh.pop %v8049
    %v8058 = vtanh.pop %v8050
    %v8059 = vtanh.pop %v8051
    %v8060 = vtanh.pop %v8052
    %v8061 = vtanh.pop %v8053
    %v8062 = vtanh.pop %v8054
    %v8063 = vtanh.pop %v8055
    %v8064 = vsub.f32 1.0, %v7950
    %v8065 = vsub.f32 1.0, %v7952
    %v8066 = vsub.f32 1.0, %v7954
    %v8067 = vsub.f32 1.0, %v7956
    %v8068 = vsub.f32 1.0, %v7958
    %v8069 = vsub.f32 1.0, %v7960
    %v8070 = vsub.f32 1.0, %v7962
    %v8071 = vsub.f32 1.0, %v7964
    %v8072 = vmul.f32 %v8064, %v8056
    %v8073 = vmul.f32 %v8065, %v8057
    %v8074 = vmul.f32 %v8066, %v8058
    %v8075 = vmul.f32 %v8067, %v8059
    %v8076 = vmul.f32 %v8068, %v8060
    %v8077 = vmul.f32 %v8069, %v8061
    %v8078 = vmul.f32 %v8070, %v8062
    %v8079 = vmul.f32 %v8071, %v8063
    %v8080 = vmul.f32 %v7950, %v7496
    %v8081 = vmul.f32 %v7952, %v7497
    %v8082 = vmul.f32 %v7954, %v7498
    %v8083 = vmul.f32 %v7956, %v7499
    %v8084 = vmul.f32 %v7958, %v7500
    %v8085 = vmul.f32 %v7960, %v7501
    %v8086 = vmul.f32 %v7962, %v7502
    %v8087 = vmul.f32 %v7964, %v7503
    %v8088 = vadd.f32 %v8072, %v8080
    %v8089 = vadd.f32 %v8073, %v8081
    %v8090 = vadd.f32 %v8074, %v8082
    %v8091 = vadd.f32 %v8075, %v8083
    %v8092 = vadd.f32 %v8076, %v8084
    %v8093 = vadd.f32 %v8077, %v8085
    %v8094 = vadd.f32 %v8078, %v8086
    %v8095 = vadd.f32 %v8079, %v8087
    %v8096 = vpack.c.bf16 %v8088, %v8088
    %v8097 = vpack.c.bf16 %v8089, %v8089
    %v8098 = vpack.c.bf16 %v8090, %v8090
    %v8099 = vpack.c.bf16 %v8091, %v8091
    %v8100 = vpack.c.bf16 %v8092, %v8092
    %v8101 = vpack.c.bf16 %v8093, %v8093
    %v8102 = vpack.c.bf16 %v8094, %v8094
    %v8103 = vpack.c.bf16 %v8095, %v8095
    %v8112 = vunpack.c.l.b16 %v8096
    %v8113 = vunpack.c.l.b16 %v8097
    %v8114 = vunpack.c.l.b16 %v8098
    %v8115 = vunpack.c.l.b16 %v8099
    %v8116 = vunpack.c.l.b16 %v8100
    %v8117 = vunpack.c.l.b16 %v8101
    %v8118 = vunpack.c.l.b16 %v8102
    %v8119 = vunpack.c.l.b16 %v8103
    %v8120 = vpack.c.b16 %v8112, %v8112
    %v8121 = vpack.c.b16 %v8113, %v8113
    %v8122 = vpack.c.b16 %v8114, %v8114
    %v8123 = vpack.c.b16 %v8115, %v8115
    %v8124 = vpack.c.b16 %v8116, %v8116
    %v8125 = vpack.c.b16 %v8117, %v8117
    %v8126 = vpack.c.b16 %v8118, %v8118
    %v8127 = vpack.c.b16 %v8119, %v8119
    %v8128 = vrot.slane %v8120, 6
    %v8129 = vrot.slane %v8121, 6
    %v8130 = vrot.slane %v8122, 6
    %v8131 = vrot.slane %v8123, 6
    %v8132 = vrot.slane %v8124, 6
    %v8133 = vrot.slane %v8125, 6
    %v8134 = vrot.slane %v8126, 6
    %v8135 = vrot.slane %v8127, 6
    %v8144 = vld [vmem:[#allocation13 + $0x4] sm:$0x4]
    %v8145 = vsel %vm3528, %v8128, %v8144
    %8146 = vst [vmem:[#allocation13 + $0x4] sm:$0x4] %v8145
    %v8147 = vld [vmem:[#allocation13 + $0xc] sm:$0x4]
    %v8148 = vsel %vm3528, %v8129, %v8147
    %8149 = vst [vmem:[#allocation13 + $0xc] sm:$0x4] %v8148
    %v8150 = vld [vmem:[#allocation13 + $0x14] sm:$0x4]
    %v8151 = vsel %vm3528, %v8130, %v8150
    %8152 = vst [vmem:[#allocation13 + $0x14] sm:$0x4] %v8151
    %v8153 = vld [vmem:[#allocation13 + $0x1c] sm:$0x4]
    %v8154 = vsel %vm3528, %v8131, %v8153
    %8155 = vst [vmem:[#allocation13 + $0x1c] sm:$0x4] %v8154
    %v8156 = vld [vmem:[#allocation13 + $0x24] sm:$0x4]
    %v8157 = vsel %vm3528, %v8132, %v8156
    %8158 = vst [vmem:[#allocation13 + $0x24] sm:$0x4] %v8157
    %v8159 = vld [vmem:[#allocation13 + $0x2c] sm:$0x4]
    %v8160 = vsel %vm3528, %v8133, %v8159
    %8161 = vst [vmem:[#allocation13 + $0x2c] sm:$0x4] %v8160
    %v8162 = vld [vmem:[#allocation13 + $0x34] sm:$0x4]
    %v8163 = vsel %vm3528, %v8134, %v8162
    %8164 = vst [vmem:[#allocation13 + $0x34] sm:$0x4] %v8163
    %v8165 = vld [vmem:[#allocation13 + $0x3c] sm:$0x4]
    %v8166 = vsel %vm3528, %v8135, %v8165
    %8167 = vst [vmem:[#allocation13 + $0x3c] sm:$0x4] %v8166
    %s8168 = scalar_lea.vmem [#allocation3], 29
    %v8169 = vld [vmem:[%s8168] ss:$8 sm:$0x7]
    %s8170 = scalar_lea.vmem [#allocation3], 77
    %v8171 = vld [vmem:[%s8170] ss:$8 sm:$0x7]
    %s8172 = scalar_lea.vmem [#allocation3], 125
    %v8173 = vld [vmem:[%s8172] ss:$8 sm:$0x7]
    %s8174 = scalar_lea.vmem [#allocation3], 173
    %v8175 = vld [vmem:[%s8174] ss:$8 sm:$0x7]
    %s8176 = scalar_lea.vmem [#allocation3], 221
    %v8177 = vld [vmem:[%s8176] ss:$8 sm:$0x7]
    %s8178 = scalar_lea.vmem [#allocation3], 269
    %v8179 = vld [vmem:[%s8178] ss:$8 sm:$0x7]
    %s8180 = scalar_lea.vmem [#allocation3], 317
    %v8181 = vld [vmem:[%s8180] ss:$8 sm:$0x7]
    %s8182 = scalar_lea.vmem [#allocation3], 365
    %v8183 = vld [vmem:[%s8182] ss:$8 sm:$0x7]
    %v8184 = vrot.slane %v8113, 7
    %v8185 = vsel %vm1241, %v8184, %v8112
    %v8186 = vrot.slane %v8114, 6
    %v8187 = vsel %vm1244, %v8186, %v8185
    %v8188 = vrot.slane %v8115, 5
    %v8189 = vsel %vm1247, %v8188, %v8187
    %v8190 = vrot.slane %v8116, 4
    %v8191 = vsel %vm1250, %v8190, %v8189
    %v8192 = vrot.slane %v8117, 3
    %v8193 = vsel %vm1253, %v8192, %v8191
    %v8194 = vrot.slane %v8118, 2
    %v8195 = vsel %vm1256, %v8194, %v8193
    %v8196 = vrot.slane %v8119, 1
    %v8197 = vsel %vm1259, %v8196, %v8195
    %v8198 = vpack.c.b16 %v8197, %v8197
    %8200 = vmatprep.subr.bf16.mxu0 %v598
    %8201 = vmatpush1.bf16.msra.mxu0 %v597
    %8202 = vmatprep.subr.bf16.mxu0 %v601
    %8203 = vmatpush1.bf16.msra.mxu0 %v600
    %8204 = vmatprep.subr.bf16.mxu0 %v604
    %8205 = vmatpush1.bf16.msra.mxu0 %v603
    %8206 = vmatprep.subr.bf16.mxu0 %v607
    %8207 = vmatpush1.bf16.msra.mxu0 %v606
    %8208 = vmatprep.subr.bf16.mxu0 %v610
    %8209 = vmatpush1.bf16.msra.mxu0 %v609
    %8210 = vmatprep.subr.bf16.mxu0 %v613
    %8211 = vmatpush1.bf16.msra.mxu0 %v612
    %8212 = vmatprep.subr.bf16.mxu0 %v616
    %8213 = vmatpush1.bf16.msra.mxu0 %v615
    %8214 = vmatprep.subr.bf16.mxu0 %v619
    %8215 = vmatpush1.bf16.msra.mxu0 %v618
    %8216 = vmatprep.subr.bf16.mxu0 0
    %8217 = vmatpush1.bf16.msra.mxu0 0
    %8218 = vmatprep.subr.bf16.mxu0 0
    %8219 = vmatpush1.bf16.msra.mxu0 0
    %8220 = vmatprep.subr.bf16.mxu0 0
    %8221 = vmatpush1.bf16.msra.mxu0 0
    %8222 = vmatprep.subr.bf16.mxu0 0
    %8223 = vmatpush1.bf16.msra.mxu0 0
    %8224 = vmatprep.subr.bf16.mxu0 0
    %8225 = vmatpush1.bf16.msra.mxu0 0
    %8226 = vmatprep.subr.bf16.mxu0 0
    %8227 = vmatpush1.bf16.msra.mxu0 0
    %8228 = vmatprep.subr.bf16.mxu0 0
    %8229 = vmatpush1.bf16.msra.mxu0 0
    %8230 = vmatprep.subr.bf16.mxu0 0
    %8231 = vmatpush1.bf16.msra.mxu0 0
    %8232 = vmatprep.mubr.bf16.mxu0 0
    %8233 = vmatmul.mubr.bf16.gmra.mrb[0].mxu0 %v8198
    %v8234 = vpop.f32.mrb[0].mxu0
    %v8235 = vadd.f32 0.0, %v8234
    %v8236 = vpop.f32.mrb[0].mxu0
    %v8237 = vadd.f32 0.0, %v8236
    %v8238 = vpop.f32.mrb[0].mxu0
    %v8239 = vpop.f32.mrb[0].mxu0
    %8240 = vdwg.mxu0
    %8241 = vmatprep.subr.bf16.mxu0 0
    %8242 = vmatpush1.bf16.msra.mxu0 %v599
    %8243 = vmatprep.subr.bf16.mxu0 0
    %8244 = vmatpush1.bf16.msra.mxu0 %v602
    %8245 = vmatprep.subr.bf16.mxu0 0
    %8246 = vmatpush1.bf16.msra.mxu0 %v605
    %8247 = vmatprep.subr.bf16.mxu0 0
    %8248 = vmatpush1.bf16.msra.mxu0 %v608
    %8249 = vmatprep.subr.bf16.mxu0 0
    %8250 = vmatpush1.bf16.msra.mxu0 %v611
    %8251 = vmatprep.subr.bf16.mxu0 0
    %8252 = vmatpush1.bf16.msra.mxu0 %v614
    %8253 = vmatprep.subr.bf16.mxu0 0
    %8254 = vmatpush1.bf16.msra.mxu0 %v617
    %8255 = vmatprep.subr.bf16.mxu0 0
    %8256 = vmatpush1.bf16.msra.mxu0 %v620
    %8257 = vmatprep.subr.bf16.mxu0 0
    %8258 = vmatpush1.bf16.msra.mxu0 0
    %8259 = vmatprep.subr.bf16.mxu0 0
    %8260 = vmatpush1.bf16.msra.mxu0 0
    %8261 = vmatprep.subr.bf16.mxu0 0
    %8262 = vmatpush1.bf16.msra.mxu0 0
    %8263 = vmatprep.subr.bf16.mxu0 0
    %8264 = vmatpush1.bf16.msra.mxu0 0
    %8265 = vmatprep.subr.bf16.mxu0 0
    %8266 = vmatpush1.bf16.msra.mxu0 0
    %8267 = vmatprep.subr.bf16.mxu0 0
    %8268 = vmatpush1.bf16.msra.mxu0 0
    %8269 = vmatprep.subr.bf16.mxu0 0
    %8270 = vmatpush1.bf16.msra.mxu0 0
    %8271 = vmatprep.subr.bf16.mxu0 0
    %8272 = vmatpush1.bf16.msra.mxu0 0
    %8273 = vmatprep.mubr.bf16.mxu0 0
    %8274 = vmatmul.mubr.bf16.gmra.mrb[0].mxu0 %v8198
    %v8275 = vpop.f32.mrb[0].mxu0
    %v8276 = vadd.f32 0.0, %v8275
    %v8277 = vpop.f32.mrb[0].mxu0
    %v8278 = vpop.f32.mrb[0].mxu0
    %v8279 = vpop.f32.mrb[0].mxu0
    %8280 = vdwg.mxu0
    %v8282 = vcombine.high %v8235, %v8235
    %v8284 = vunpack.c.l.s4 1966171168
    %v8285 = vunpack.c.0.s8 %v8284
    %v8286 = vlaneseq
    %v8287 = vshrl.u32 %v8286, 7
    %v8288 = vsub.s32 %v8285, %v8287
    %v8289 = vrot.slane %v8235, %v8288
    %v8291 = vunpack.c.l.s4 1966171168
    %v8292 = vunpack.c.0.s8 %v8291
    %v8293 = vlaneseq
    %v8294 = vshrl.u32 %v8293, 7
    %v8295 = vsub.s32 %v8292, %v8294
    %v8296 = vrot.slane %v8282, %v8295
    %v8297 = vcombine.high %v8289, %v8289
    %v8298 = vcombine.high %v8296, %v8296
    %v8300 = vunpack.c.l.s4 1966171168
    %v8301 = vunpack.c.0.s8 %v8300
    %v8302 = vlaneseq
    %v8303 = vshrl.u32 %v8302, 7
    %v8304 = vsub.s32 %v8301, %v8303
    %v8305 = vrot.slane %v8289, %v8304
    %v8307 = vunpack.c.l.s4 1966171168
    %v8308 = vunpack.c.0.s8 %v8307
    %v8309 = vlaneseq
    %v8310 = vshrl.u32 %v8309, 7
    %v8311 = vsub.s32 %v8308, %v8310
    %v8312 = vrot.slane %v8296, %v8311
    %v8314 = vunpack.c.l.s4 1966171168
    %v8315 = vunpack.c.0.s8 %v8314
    %v8316 = vlaneseq
    %v8317 = vshrl.u32 %v8316, 7
    %v8318 = vsub.s32 %v8315, %v8317
    %v8319 = vrot.slane %v8297, %v8318
    %v8321 = vunpack.c.l.s4 1966171168
    %v8322 = vunpack.c.0.s8 %v8321
    %v8323 = vlaneseq
    %v8324 = vshrl.u32 %v8323, 7
    %v8325 = vsub.s32 %v8322, %v8324
    %v8326 = vrot.slane %v8298, %v8325
    %v8327 = vcombine.high %v8305, %v8305
    %v8328 = vcombine.high %v8312, %v8312
    %v8329 = vcombine.high %v8319, %v8319
    %v8330 = vcombine.high %v8326, %v8326
    %v8339 = vadd.f32 %v8169, %v8305
    %v8340 = vadd.f32 %v8171, %v8319
    %v8341 = vadd.f32 %v8173, %v8327
    %v8342 = vadd.f32 %v8175, %v8329
    %v8343 = vadd.f32 %v8177, %v8312
    %v8344 = vadd.f32 %v8179, %v8326
    %v8345 = vadd.f32 %v8181, %v8328
    %v8346 = vadd.f32 %v8183, %v8330
    %v8347 = vxor.u32 %v8339, 2147483648
    %v8348 = vxor.u32 %v8340, 2147483648
    %v8349 = vxor.u32 %v8341, 2147483648
    %v8350 = vxor.u32 %v8342, 2147483648
    %v8351 = vxor.u32 %v8343, 2147483648
    %v8352 = vxor.u32 %v8344, 2147483648
    %v8353 = vxor.u32 %v8345, 2147483648
    %v8354 = vxor.u32 %v8346, 2147483648
    %v8355 = vmul.f32 %v8347, 1.442695
    %v8356 = vpow.pop %v8355
    %v8357 = vmul.f32 %v8348, 1.442695
    %v8358 = vpow.pop %v8357
    %v8359 = vmul.f32 %v8349, 1.442695
    %v8360 = vpow.pop %v8359
    %v8361 = vmul.f32 %v8350, 1.442695
    %v8362 = vpow.pop %v8361
    %v8363 = vmul.f32 %v8351, 1.442695
    %v8364 = vpow.pop %v8363
    %v8365 = vmul.f32 %v8352, 1.442695
    %v8366 = vpow.pop %v8365
    %v8367 = vmul.f32 %v8353, 1.442695
    %v8368 = vpow.pop %v8367
    %v8369 = vmul.f32 %v8354, 1.442695
    %v8370 = vpow.pop %v8369
    %v8371 = vadd.f32 %v8356, 1.0
    %v8372 = vadd.f32 %v8358, 1.0
    %v8373 = vadd.f32 %v8360, 1.0
    %v8374 = vadd.f32 %v8362, 1.0
    %v8375 = vadd.f32 %v8364, 1.0
    %v8376 = vadd.f32 %v8366, 1.0
    %v8377 = vadd.f32 %v8368, 1.0
    %v8378 = vadd.f32 %v8370, 1.0
    %v8379 = vrcp.pop %v8371
    %v8380 = vmul.f32 1.0, %v8379
    %v8381 = vrcp.pop %v8372
    %v8382 = vmul.f32 1.0, %v8381
    %v8383 = vrcp.pop %v8373
    %v8384 = vmul.f32 1.0, %v8383
    %v8385 = vrcp.pop %v8374
    %v8386 = vmul.f32 1.0, %v8385
    %v8387 = vrcp.pop %v8375
    %v8388 = vmul.f32 1.0, %v8387
    %v8389 = vrcp.pop %v8376
    %v8390 = vmul.f32 1.0, %v8389
    %v8391 = vrcp.pop %v8377
    %v8392 = vmul.f32 1.0, %v8391
    %v8393 = vrcp.pop %v8378
    %v8394 = vmul.f32 1.0, %v8393
    %v8403 = vrot.slane %v8169, 1
    %v8404 = vrot.slane %v8171, 1
    %v8405 = vrot.slane %v8173, 1
    %v8406 = vrot.slane %v8175, 1
    %v8407 = vrot.slane %v8177, 1
    %v8408 = vrot.slane %v8179, 1
    %v8409 = vrot.slane %v8181, 1
    %v8410 = vrot.slane %v8183, 1
    %v8420 = vcombine.high %v8237, %v8237
    %v8422 = vunpack.c.l.s4 1966171168
    %v8423 = vunpack.c.0.s8 %v8422
    %v8424 = vlaneseq
    %v8425 = vshrl.u32 %v8424, 7
    %v8426 = vsub.s32 %v8423, %v8425
    %v8427 = vrot.slane %v8237, %v8426
    %v8429 = vunpack.c.l.s4 1966171168
    %v8430 = vunpack.c.0.s8 %v8429
    %v8431 = vlaneseq
    %v8432 = vshrl.u32 %v8431, 7
    %v8433 = vsub.s32 %v8430, %v8432
    %v8434 = vrot.slane %v8420, %v8433
    %v8435 = vcombine.high %v8427, %v8427
    %v8436 = vcombine.high %v8434, %v8434
    %v8438 = vunpack.c.l.s4 1966171168
    %v8439 = vunpack.c.0.s8 %v8438
    %v8440 = vlaneseq
    %v8441 = vshrl.u32 %v8440, 7
    %v8442 = vsub.s32 %v8439, %v8441
    %v8443 = vrot.slane %v8427, %v8442
    %v8445 = vunpack.c.l.s4 1966171168
    %v8446 = vunpack.c.0.s8 %v8445
    %v8447 = vlaneseq
    %v8448 = vshrl.u32 %v8447, 7
    %v8449 = vsub.s32 %v8446, %v8448
    %v8450 = vrot.slane %v8434, %v8449
    %v8452 = vunpack.c.l.s4 1966171168
    %v8453 = vunpack.c.0.s8 %v8452
    %v8454 = vlaneseq
    %v8455 = vshrl.u32 %v8454, 7
    %v8456 = vsub.s32 %v8453, %v8455
    %v8457 = vrot.slane %v8435, %v8456
    %v8459 = vunpack.c.l.s4 1966171168
    %v8460 = vunpack.c.0.s8 %v8459
    %v8461 = vlaneseq
    %v8462 = vshrl.u32 %v8461, 7
    %v8463 = vsub.s32 %v8460, %v8462
    %v8464 = vrot.slane %v8436, %v8463
    %v8465 = vcombine.high %v8443, %v8443
    %v8466 = vcombine.high %v8450, %v8450
    %v8467 = vcombine.high %v8457, %v8457
    %v8468 = vcombine.high %v8464, %v8464
    %v8477 = vadd.f32 %v8403, %v8443
    %v8478 = vadd.f32 %v8404, %v8457
    %v8479 = vadd.f32 %v8405, %v8465
    %v8480 = vadd.f32 %v8406, %v8467
    %v8481 = vadd.f32 %v8407, %v8450
    %v8482 = vadd.f32 %v8408, %v8464
    %v8483 = vadd.f32 %v8409, %v8466
    %v8484 = vadd.f32 %v8410, %v8468
    %v8485 = vxor.u32 %v8477, 2147483648
    %v8486 = vxor.u32 %v8478, 2147483648
    %v8487 = vxor.u32 %v8479, 2147483648
    %v8488 = vxor.u32 %v8480, 2147483648
    %v8489 = vxor.u32 %v8481, 2147483648
    %v8490 = vxor.u32 %v8482, 2147483648
    %v8491 = vxor.u32 %v8483, 2147483648
    %v8492 = vxor.u32 %v8484, 2147483648
    %v8493 = vmul.f32 %v8485, 1.442695
    %v8494 = vpow.pop %v8493
    %v8495 = vmul.f32 %v8486, 1.442695
    %v8496 = vpow.pop %v8495
    %v8497 = vmul.f32 %v8487, 1.442695
    %v8498 = vpow.pop %v8497
    %v8499 = vmul.f32 %v8488, 1.442695
    %v8500 = vpow.pop %v8499
    %v8501 = vmul.f32 %v8489, 1.442695
    %v8502 = vpow.pop %v8501
    %v8503 = vmul.f32 %v8490, 1.442695
    %v8504 = vpow.pop %v8503
    %v8505 = vmul.f32 %v8491, 1.442695
    %v8506 = vpow.pop %v8505
    %v8507 = vmul.f32 %v8492, 1.442695
    %v8508 = vpow.pop %v8507
    %v8509 = vadd.f32 %v8494, 1.0
    %v8510 = vadd.f32 %v8496, 1.0
    %v8511 = vadd.f32 %v8498, 1.0
    %v8512 = vadd.f32 %v8500, 1.0
    %v8513 = vadd.f32 %v8502, 1.0
    %v8514 = vadd.f32 %v8504, 1.0
    %v8515 = vadd.f32 %v8506, 1.0
    %v8516 = vadd.f32 %v8508, 1.0
    %v8517 = vrcp.pop %v8509
    %v8518 = vmul.f32 1.0, %v8517
    %v8519 = vrcp.pop %v8510
    %v8520 = vmul.f32 1.0, %v8519
    %v8521 = vrcp.pop %v8511
    %v8522 = vmul.f32 1.0, %v8521
    %v8523 = vrcp.pop %v8512
    %v8524 = vmul.f32 1.0, %v8523
    %v8525 = vrcp.pop %v8513
    %v8526 = vmul.f32 1.0, %v8525
    %v8527 = vrcp.pop %v8514
    %v8528 = vmul.f32 1.0, %v8527
    %v8529 = vrcp.pop %v8515
    %v8530 = vmul.f32 1.0, %v8529
    %v8531 = vrcp.pop %v8516
    %v8532 = vmul.f32 1.0, %v8531
    %v8533 = vadd.f32 %v8276, %v982
    %v8535 = vcombine.high %v8533, %v8533
    %v8537 = vunpack.c.l.s4 1966171168
    %v8538 = vunpack.c.0.s8 %v8537
    %v8539 = vlaneseq
    %v8540 = vshrl.u32 %v8539, 7
    %v8541 = vsub.s32 %v8538, %v8540
    %v8542 = vrot.slane %v8533, %v8541
    %v8544 = vunpack.c.l.s4 1966171168
    %v8545 = vunpack.c.0.s8 %v8544
    %v8546 = vlaneseq
    %v8547 = vshrl.u32 %v8546, 7
    %v8548 = vsub.s32 %v8545, %v8547
    %v8549 = vrot.slane %v8535, %v8548
    %v8550 = vcombine.high %v8542, %v8542
    %v8551 = vcombine.high %v8549, %v8549
    %v8553 = vunpack.c.l.s4 1966171168
    %v8554 = vunpack.c.0.s8 %v8553
    %v8555 = vlaneseq
    %v8556 = vshrl.u32 %v8555, 7
    %v8557 = vsub.s32 %v8554, %v8556
    %v8558 = vrot.slane %v8542, %v8557
    %v8560 = vunpack.c.l.s4 1966171168
    %v8561 = vunpack.c.0.s8 %v8560
    %v8562 = vlaneseq
    %v8563 = vshrl.u32 %v8562, 7
    %v8564 = vsub.s32 %v8561, %v8563
    %v8565 = vrot.slane %v8549, %v8564
    %v8567 = vunpack.c.l.s4 1966171168
    %v8568 = vunpack.c.0.s8 %v8567
    %v8569 = vlaneseq
    %v8570 = vshrl.u32 %v8569, 7
    %v8571 = vsub.s32 %v8568, %v8570
    %v8572 = vrot.slane %v8550, %v8571
    %v8574 = vunpack.c.l.s4 1966171168
    %v8575 = vunpack.c.0.s8 %v8574
    %v8576 = vlaneseq
    %v8577 = vshrl.u32 %v8576, 7
    %v8578 = vsub.s32 %v8575, %v8577
    %v8579 = vrot.slane %v8551, %v8578
    %v8580 = vcombine.high %v8558, %v8558
    %v8581 = vcombine.high %v8565, %v8565
    %v8582 = vcombine.high %v8572, %v8572
    %v8583 = vcombine.high %v8579, %v8579
    %v8592 = vmul.f32 %v8380, %v8558
    %v8593 = vmul.f32 %v8382, %v8572
    %v8594 = vmul.f32 %v8384, %v8580
    %v8595 = vmul.f32 %v8386, %v8582
    %v8596 = vmul.f32 %v8388, %v8565
    %v8597 = vmul.f32 %v8390, %v8579
    %v8598 = vmul.f32 %v8392, %v8581
    %v8599 = vmul.f32 %v8394, %v8583
    %v8600 = vrot.slane %v8169, 2
    %v8601 = vrot.slane %v8171, 2
    %v8602 = vrot.slane %v8173, 2
    %v8603 = vrot.slane %v8175, 2
    %v8604 = vrot.slane %v8177, 2
    %v8605 = vrot.slane %v8179, 2
    %v8606 = vrot.slane %v8181, 2
    %v8607 = vrot.slane %v8183, 2
    %v8616 = vadd.f32 %v8600, %v8592
    %v8617 = vadd.f32 %v8601, %v8593
    %v8618 = vadd.f32 %v8602, %v8594
    %v8619 = vadd.f32 %v8603, %v8595
    %v8620 = vadd.f32 %v8604, %v8596
    %v8621 = vadd.f32 %v8605, %v8597
    %v8622 = vadd.f32 %v8606, %v8598
    %v8623 = vadd.f32 %v8607, %v8599
    %v8624 = vtanh.pop %v8616
    %v8625 = vtanh.pop %v8617
    %v8626 = vtanh.pop %v8618
    %v8627 = vtanh.pop %v8619
    %v8628 = vtanh.pop %v8620
    %v8629 = vtanh.pop %v8621
    %v8630 = vtanh.pop %v8622
    %v8631 = vtanh.pop %v8623
    %v8632 = vsub.f32 1.0, %v8518
    %v8633 = vsub.f32 1.0, %v8520
    %v8634 = vsub.f32 1.0, %v8522
    %v8635 = vsub.f32 1.0, %v8524
    %v8636 = vsub.f32 1.0, %v8526
    %v8637 = vsub.f32 1.0, %v8528
    %v8638 = vsub.f32 1.0, %v8530
    %v8639 = vsub.f32 1.0, %v8532
    %v8640 = vmul.f32 %v8632, %v8624
    %v8641 = vmul.f32 %v8633, %v8625
    %v8642 = vmul.f32 %v8634, %v8626
    %v8643 = vmul.f32 %v8635, %v8627
    %v8644 = vmul.f32 %v8636, %v8628
    %v8645 = vmul.f32 %v8637, %v8629
    %v8646 = vmul.f32 %v8638, %v8630
    %v8647 = vmul.f32 %v8639, %v8631
    %v8648 = vmul.f32 %v8518, %v8088
    %v8649 = vmul.f32 %v8520, %v8089
    %v8650 = vmul.f32 %v8522, %v8090
    %v8651 = vmul.f32 %v8524, %v8091
    %v8652 = vmul.f32 %v8526, %v8092
    %v8653 = vmul.f32 %v8528, %v8093
    %v8654 = vmul.f32 %v8530, %v8094
    %v8655 = vmul.f32 %v8532, %v8095
    %v8656 = vadd.f32 %v8640, %v8648
    %v8657 = vadd.f32 %v8641, %v8649
    %v8658 = vadd.f32 %v8642, %v8650
    %v8659 = vadd.f32 %v8643, %v8651
    %v8660 = vadd.f32 %v8644, %v8652
    %v8661 = vadd.f32 %v8645, %v8653
    %v8662 = vadd.f32 %v8646, %v8654
    %v8663 = vadd.f32 %v8647, %v8655
    %v8664 = vpack.c.bf16 %v8656, %v8656
    %v8665 = vpack.c.bf16 %v8657, %v8657
    %v8666 = vpack.c.bf16 %v8658, %v8658
    %v8667 = vpack.c.bf16 %v8659, %v8659
    %v8668 = vpack.c.bf16 %v8660, %v8660
    %v8669 = vpack.c.bf16 %v8661, %v8661
    %v8670 = vpack.c.bf16 %v8662, %v8662
    %v8671 = vpack.c.bf16 %v8663, %v8663
    %v8680 = vunpack.c.l.b16 %v8664
    %v8681 = vunpack.c.l.b16 %v8665
    %v8682 = vunpack.c.l.b16 %v8666
    %v8683 = vunpack.c.l.b16 %v8667
    %v8684 = vunpack.c.l.b16 %v8668
    %v8685 = vunpack.c.l.b16 %v8669
    %v8686 = vunpack.c.l.b16 %v8670
    %v8687 = vunpack.c.l.b16 %v8671
    %v8688 = vpack.c.b16 %v8680, %v8680
    %v8689 = vpack.c.b16 %v8681, %v8681
    %v8690 = vpack.c.b16 %v8682, %v8682
    %v8691 = vpack.c.b16 %v8683, %v8683
    %v8692 = vpack.c.b16 %v8684, %v8684
    %v8693 = vpack.c.b16 %v8685, %v8685
    %v8694 = vpack.c.b16 %v8686, %v8686
    %v8695 = vpack.c.b16 %v8687, %v8687
    %v8697 = vshll.u32 %v8688, 16
    %v8699 = vrot.slane %v8697, 6
    %v8701 = vshll.u32 %v8689, 16
    %v8703 = vrot.slane %v8701, 6
    %v8705 = vshll.u32 %v8690, 16
    %v8707 = vrot.slane %v8705, 6
    %v8709 = vshll.u32 %v8691, 16
    %v8711 = vrot.slane %v8709, 6
    %v8713 = vshll.u32 %v8692, 16
    %v8715 = vrot.slane %v8713, 6
    %v8717 = vshll.u32 %v8693, 16
    %v8719 = vrot.slane %v8717, 6
    %v8721 = vshll.u32 %v8694, 16
    %v8723 = vrot.slane %v8721, 6
    %v8725 = vshll.u32 %v8695, 16
    %v8727 = vrot.slane %v8725, 6
    %v8736 = vld [vmem:[#allocation13 + $0x4] sm:$0x4]
    %v8737 = vsel %vm4122, %v8699, %v8736
    %8738 = vst [vmem:[#allocation13 + $0x4] sm:$0x4] %v8737
    %v8739 = vld [vmem:[#allocation13 + $0xc] sm:$0x4]
    %v8740 = vsel %vm4122, %v8703, %v8739
    %8741 = vst [vmem:[#allocation13 + $0xc] sm:$0x4] %v8740
    %v8742 = vld [vmem:[#allocation13 + $0x14] sm:$0x4]
    %v8743 = vsel %vm4122, %v8707, %v8742
    %8744 = vst [vmem:[#allocation13 + $0x14] sm:$0x4] %v8743
    %v8745 = vld [vmem:[#allocation13 + $0x1c] sm:$0x4]
    %v8746 = vsel %vm4122, %v8711, %v8745
    %8747 = vst [vmem:[#allocation13 + $0x1c] sm:$0x4] %v8746
    %v8748 = vld [vmem:[#allocation13 + $0x24] sm:$0x4]
    %v8749 = vsel %vm4122, %v8715, %v8748
    %8750 = vst [vmem:[#allocation13 + $0x24] sm:$0x4] %v8749
    %v8751 = vld [vmem:[#allocation13 + $0x2c] sm:$0x4]
    %v8752 = vsel %vm4122, %v8719, %v8751
    %8753 = vst [vmem:[#allocation13 + $0x2c] sm:$0x4] %v8752
    %v8754 = vld [vmem:[#allocation13 + $0x34] sm:$0x4]
    %v8755 = vsel %vm4122, %v8723, %v8754
    %8756 = vst [vmem:[#allocation13 + $0x34] sm:$0x4] %v8755
    %v8757 = vld [vmem:[#allocation13 + $0x3c] sm:$0x4]
    %v8758 = vsel %vm4122, %v8727, %v8757
    %8759 = vst [vmem:[#allocation13 + $0x3c] sm:$0x4] %v8758
    %s8760 = scalar_lea.vmem [#allocation3], 30
    %v8761 = vld [vmem:[%s8760] ss:$8 sm:$0x7]
    %s8762 = scalar_lea.vmem [#allocation3], 78
    %v8763 = vld [vmem:[%s8762] ss:$8 sm:$0x7]
    %s8764 = scalar_lea.vmem [#allocation3], 126
    %v8765 = vld [vmem:[%s8764] ss:$8 sm:$0x7]
    %s8766 = scalar_lea.vmem [#allocation3], 174
    %v8767 = vld [vmem:[%s8766] ss:$8 sm:$0x7]
    %s8768 = scalar_lea.vmem [#allocation3], 222
    %v8769 = vld [vmem:[%s8768] ss:$8 sm:$0x7]
    %s8770 = scalar_lea.vmem [#allocation3], 270
    %v8771 = vld [vmem:[%s8770] ss:$8 sm:$0x7]
    %s8772 = scalar_lea.vmem [#allocation3], 318
    %v8773 = vld [vmem:[%s8772] ss:$8 sm:$0x7]
    %s8774 = scalar_lea.vmem [#allocation3], 366
    %v8775 = vld [vmem:[%s8774] ss:$8 sm:$0x7]
    %v8776 = vrot.slane %v8681, 7
    %v8777 = vsel %vm1241, %v8776, %v8680
    %v8778 = vrot.slane %v8682, 6
    %v8779 = vsel %vm1244, %v8778, %v8777
    %v8780 = vrot.slane %v8683, 5
    %v8781 = vsel %vm1247, %v8780, %v8779
    %v8782 = vrot.slane %v8684, 4
    %v8783 = vsel %vm1250, %v8782, %v8781
    %v8784 = vrot.slane %v8685, 3
    %v8785 = vsel %vm1253, %v8784, %v8783
    %v8786 = vrot.slane %v8686, 2
    %v8787 = vsel %vm1256, %v8786, %v8785
    %v8788 = vrot.slane %v8687, 1
    %v8789 = vsel %vm1259, %v8788, %v8787
    %v8790 = vpack.c.b16 %v8789, %v8789
    %8792 = vmatprep.subr.bf16.mxu0 %v598
    %8793 = vmatpush1.bf16.msra.mxu0 %v597
    %8794 = vmatprep.subr.bf16.mxu0 %v601
    %8795 = vmatpush1.bf16.msra.mxu0 %v600
    %8796 = vmatprep.subr.bf16.mxu0 %v604
    %8797 = vmatpush1.bf16.msra.mxu0 %v603
    %8798 = vmatprep.subr.bf16.mxu0 %v607
    %8799 = vmatpush1.bf16.msra.mxu0 %v606
    %8800 = vmatprep.subr.bf16.mxu0 %v610
    %8801 = vmatpush1.bf16.msra.mxu0 %v609
    %8802 = vmatprep.subr.bf16.mxu0 %v613
    %8803 = vmatpush1.bf16.msra.mxu0 %v612
    %8804 = vmatprep.subr.bf16.mxu0 %v616
    %8805 = vmatpush1.bf16.msra.mxu0 %v615
    %8806 = vmatprep.subr.bf16.mxu0 %v619
    %8807 = vmatpush1.bf16.msra.mxu0 %v618
    %8808 = vmatprep.subr.bf16.mxu0 0
    %8809 = vmatpush1.bf16.msra.mxu0 0
    %8810 = vmatprep.subr.bf16.mxu0 0
    %8811 = vmatpush1.bf16.msra.mxu0 0
    %8812 = vmatprep.subr.bf16.mxu0 0
    %8813 = vmatpush1.bf16.msra.mxu0 0
    %8814 = vmatprep.subr.bf16.mxu0 0
    %8815 = vmatpush1.bf16.msra.mxu0 0
    %8816 = vmatprep.subr.bf16.mxu0 0
    %8817 = vmatpush1.bf16.msra.mxu0 0
    %8818 = vmatprep.subr.bf16.mxu0 0
    %8819 = vmatpush1.bf16.msra.mxu0 0
    %8820 = vmatprep.subr.bf16.mxu0 0
    %8821 = vmatpush1.bf16.msra.mxu0 0
    %8822 = vmatprep.subr.bf16.mxu0 0
    %8823 = vmatpush1.bf16.msra.mxu0 0
    %8824 = vmatprep.mubr.bf16.mxu0 0
    %8825 = vmatmul.mubr.bf16.gmra.mrb[0].mxu0 %v8790
    %v8826 = vpop.f32.mrb[0].mxu0
    %v8827 = vadd.f32 0.0, %v8826
    %v8828 = vpop.f32.mrb[0].mxu0
    %v8829 = vadd.f32 0.0, %v8828
    %v8830 = vpop.f32.mrb[0].mxu0
    %v8831 = vpop.f32.mrb[0].mxu0
    %8832 = vdwg.mxu0
    %8833 = vmatprep.subr.bf16.mxu0 0
    %8834 = vmatpush1.bf16.msra.mxu0 %v599
    %8835 = vmatprep.subr.bf16.mxu0 0
    %8836 = vmatpush1.bf16.msra.mxu0 %v602
    %8837 = vmatprep.subr.bf16.mxu0 0
    %8838 = vmatpush1.bf16.msra.mxu0 %v605
    %8839 = vmatprep.subr.bf16.mxu0 0
    %8840 = vmatpush1.bf16.msra.mxu0 %v608
    %8841 = vmatprep.subr.bf16.mxu0 0
    %8842 = vmatpush1.bf16.msra.mxu0 %v611
    %8843 = vmatprep.subr.bf16.mxu0 0
    %8844 = vmatpush1.bf16.msra.mxu0 %v614
    %8845 = vmatprep.subr.bf16.mxu0 0
    %8846 = vmatpush1.bf16.msra.mxu0 %v617
    %8847 = vmatprep.subr.bf16.mxu0 0
    %8848 = vmatpush1.bf16.msra.mxu0 %v620
    %8849 = vmatprep.subr.bf16.mxu0 0
    %8850 = vmatpush1.bf16.msra.mxu0 0
    %8851 = vmatprep.subr.bf16.mxu0 0
    %8852 = vmatpush1.bf16.msra.mxu0 0
    %8853 = vmatprep.subr.bf16.mxu0 0
    %8854 = vmatpush1.bf16.msra.mxu0 0
    %8855 = vmatprep.subr.bf16.mxu0 0
    %8856 = vmatpush1.bf16.msra.mxu0 0
    %8857 = vmatprep.subr.bf16.mxu0 0
    %8858 = vmatpush1.bf16.msra.mxu0 0
    %8859 = vmatprep.subr.bf16.mxu0 0
    %8860 = vmatpush1.bf16.msra.mxu0 0
    %8861 = vmatprep.subr.bf16.mxu0 0
    %8862 = vmatpush1.bf16.msra.mxu0 0
    %8863 = vmatprep.subr.bf16.mxu0 0
    %8864 = vmatpush1.bf16.msra.mxu0 0
    %8865 = vmatprep.mubr.bf16.mxu0 0
    %8866 = vmatmul.mubr.bf16.gmra.mrb[0].mxu0 %v8790
    %v8867 = vpop.f32.mrb[0].mxu0
    %v8868 = vadd.f32 0.0, %v8867
    %v8869 = vpop.f32.mrb[0].mxu0
    %v8870 = vpop.f32.mrb[0].mxu0
    %v8871 = vpop.f32.mrb[0].mxu0
    %8872 = vdwg.mxu0
    %v8874 = vcombine.high %v8827, %v8827
    %v8876 = vunpack.c.l.s4 1966171168
    %v8877 = vunpack.c.0.s8 %v8876
    %v8878 = vlaneseq
    %v8879 = vshrl.u32 %v8878, 7
    %v8880 = vsub.s32 %v8877, %v8879
    %v8881 = vrot.slane %v8827, %v8880
    %v8883 = vunpack.c.l.s4 1966171168
    %v8884 = vunpack.c.0.s8 %v8883
    %v8885 = vlaneseq
    %v8886 = vshrl.u32 %v8885, 7
    %v8887 = vsub.s32 %v8884, %v8886
    %v8888 = vrot.slane %v8874, %v8887
    %v8889 = vcombine.high %v8881, %v8881
    %v8890 = vcombine.high %v8888, %v8888
    %v8892 = vunpack.c.l.s4 1966171168
    %v8893 = vunpack.c.0.s8 %v8892
    %v8894 = vlaneseq
    %v8895 = vshrl.u32 %v8894, 7
    %v8896 = vsub.s32 %v8893, %v8895
    %v8897 = vrot.slane %v8881, %v8896
    %v8899 = vunpack.c.l.s4 1966171168
    %v8900 = vunpack.c.0.s8 %v8899
    %v8901 = vlaneseq
    %v8902 = vshrl.u32 %v8901, 7
    %v8903 = vsub.s32 %v8900, %v8902
    %v8904 = vrot.slane %v8888, %v8903
    %v8906 = vunpack.c.l.s4 1966171168
    %v8907 = vunpack.c.0.s8 %v8906
    %v8908 = vlaneseq
    %v8909 = vshrl.u32 %v8908, 7
    %v8910 = vsub.s32 %v8907, %v8909
    %v8911 = vrot.slane %v8889, %v8910
    %v8913 = vunpack.c.l.s4 1966171168
    %v8914 = vunpack.c.0.s8 %v8913
    %v8915 = vlaneseq
    %v8916 = vshrl.u32 %v8915, 7
    %v8917 = vsub.s32 %v8914, %v8916
    %v8918 = vrot.slane %v8890, %v8917
    %v8919 = vcombine.high %v8897, %v8897
    %v8920 = vcombine.high %v8904, %v8904
    %v8921 = vcombine.high %v8911, %v8911
    %v8922 = vcombine.high %v8918, %v8918
    %v8931 = vadd.f32 %v8761, %v8897
    %v8932 = vadd.f32 %v8763, %v8911
    %v8933 = vadd.f32 %v8765, %v8919
    %v8934 = vadd.f32 %v8767, %v8921
    %v8935 = vadd.f32 %v8769, %v8904
    %v8936 = vadd.f32 %v8771, %v8918
    %v8937 = vadd.f32 %v8773, %v8920
    %v8938 = vadd.f32 %v8775, %v8922
    %v8939 = vxor.u32 %v8931, 2147483648
    %v8940 = vxor.u32 %v8932, 2147483648
    %v8941 = vxor.u32 %v8933, 2147483648
    %v8942 = vxor.u32 %v8934, 2147483648
    %v8943 = vxor.u32 %v8935, 2147483648
    %v8944 = vxor.u32 %v8936, 2147483648
    %v8945 = vxor.u32 %v8937, 2147483648
    %v8946 = vxor.u32 %v8938, 2147483648
    %v8947 = vmul.f32 %v8939, 1.442695
    %v8948 = vpow.pop %v8947
    %v8949 = vmul.f32 %v8940, 1.442695
    %v8950 = vpow.pop %v8949
    %v8951 = vmul.f32 %v8941, 1.442695
    %v8952 = vpow.pop %v8951
    %v8953 = vmul.f32 %v8942, 1.442695
    %v8954 = vpow.pop %v8953
    %v8955 = vmul.f32 %v8943, 1.442695
    %v8956 = vpow.pop %v8955
    %v8957 = vmul.f32 %v8944, 1.442695
    %v8958 = vpow.pop %v8957
    %v8959 = vmul.f32 %v8945, 1.442695
    %v8960 = vpow.pop %v8959
    %v8961 = vmul.f32 %v8946, 1.442695
    %v8962 = vpow.pop %v8961
    %v8963 = vadd.f32 %v8948, 1.0
    %v8964 = vadd.f32 %v8950, 1.0
    %v8965 = vadd.f32 %v8952, 1.0
    %v8966 = vadd.f32 %v8954, 1.0
    %v8967 = vadd.f32 %v8956, 1.0
    %v8968 = vadd.f32 %v8958, 1.0
    %v8969 = vadd.f32 %v8960, 1.0
    %v8970 = vadd.f32 %v8962, 1.0
    %v8971 = vrcp.pop %v8963
    %v8972 = vmul.f32 1.0, %v8971
    %v8973 = vrcp.pop %v8964
    %v8974 = vmul.f32 1.0, %v8973
    %v8975 = vrcp.pop %v8965
    %v8976 = vmul.f32 1.0, %v8975
    %v8977 = vrcp.pop %v8966
    %v8978 = vmul.f32 1.0, %v8977
    %v8979 = vrcp.pop %v8967
    %v8980 = vmul.f32 1.0, %v8979
    %v8981 = vrcp.pop %v8968
    %v8982 = vmul.f32 1.0, %v8981
    %v8983 = vrcp.pop %v8969
    %v8984 = vmul.f32 1.0, %v8983
    %v8985 = vrcp.pop %v8970
    %v8986 = vmul.f32 1.0, %v8985
    %v8995 = vrot.slane %v8761, 1
    %v8996 = vrot.slane %v8763, 1
    %v8997 = vrot.slane %v8765, 1
    %v8998 = vrot.slane %v8767, 1
    %v8999 = vrot.slane %v8769, 1
    %v9000 = vrot.slane %v8771, 1
    %v9001 = vrot.slane %v8773, 1
    %v9002 = vrot.slane %v8775, 1
    %v9012 = vcombine.high %v8829, %v8829
    %v9014 = vunpack.c.l.s4 1966171168
    %v9015 = vunpack.c.0.s8 %v9014
    %v9016 = vlaneseq
    %v9017 = vshrl.u32 %v9016, 7
    %v9018 = vsub.s32 %v9015, %v9017
    %v9019 = vrot.slane %v8829, %v9018
    %v9021 = vunpack.c.l.s4 1966171168
    %v9022 = vunpack.c.0.s8 %v9021
    %v9023 = vlaneseq
    %v9024 = vshrl.u32 %v9023, 7
    %v9025 = vsub.s32 %v9022, %v9024
    %v9026 = vrot.slane %v9012, %v9025
    %v9027 = vcombine.high %v9019, %v9019
    %v9028 = vcombine.high %v9026, %v9026
    %v9030 = vunpack.c.l.s4 1966171168
    %v9031 = vunpack.c.0.s8 %v9030
    %v9032 = vlaneseq
    %v9033 = vshrl.u32 %v9032, 7
    %v9034 = vsub.s32 %v9031, %v9033
    %v9035 = vrot.slane %v9019, %v9034
    %v9037 = vunpack.c.l.s4 1966171168
    %v9038 = vunpack.c.0.s8 %v9037
    %v9039 = vlaneseq
    %v9040 = vshrl.u32 %v9039, 7
    %v9041 = vsub.s32 %v9038, %v9040
    %v9042 = vrot.slane %v9026, %v9041
    %v9044 = vunpack.c.l.s4 1966171168
    %v9045 = vunpack.c.0.s8 %v9044
    %v9046 = vlaneseq
    %v9047 = vshrl.u32 %v9046, 7
    %v9048 = vsub.s32 %v9045, %v9047
    %v9049 = vrot.slane %v9027, %v9048
    %v9051 = vunpack.c.l.s4 1966171168
    %v9052 = vunpack.c.0.s8 %v9051
    %v9053 = vlaneseq
    %v9054 = vshrl.u32 %v9053, 7
    %v9055 = vsub.s32 %v9052, %v9054
    %v9056 = vrot.slane %v9028, %v9055
    %v9057 = vcombine.high %v9035, %v9035
    %v9058 = vcombine.high %v9042, %v9042
    %v9059 = vcombine.high %v9049, %v9049
    %v9060 = vcombine.high %v9056, %v9056
    %v9069 = vadd.f32 %v8995, %v9035
    %v9070 = vadd.f32 %v8996, %v9049
    %v9071 = vadd.f32 %v8997, %v9057
    %v9072 = vadd.f32 %v8998, %v9059
    %v9073 = vadd.f32 %v8999, %v9042
    %v9074 = vadd.f32 %v9000, %v9056
    %v9075 = vadd.f32 %v9001, %v9058
    %v9076 = vadd.f32 %v9002, %v9060
    %v9077 = vxor.u32 %v9069, 2147483648
    %v9078 = vxor.u32 %v9070, 2147483648
    %v9079 = vxor.u32 %v9071, 2147483648
    %v9080 = vxor.u32 %v9072, 2147483648
    %v9081 = vxor.u32 %v9073, 2147483648
    %v9082 = vxor.u32 %v9074, 2147483648
    %v9083 = vxor.u32 %v9075, 2147483648
    %v9084 = vxor.u32 %v9076, 2147483648
    %v9085 = vmul.f32 %v9077, 1.442695
    %v9086 = vpow.pop %v9085
    %v9087 = vmul.f32 %v9078, 1.442695
    %v9088 = vpow.pop %v9087
    %v9089 = vmul.f32 %v9079, 1.442695
    %v9090 = vpow.pop %v9089
    %v9091 = vmul.f32 %v9080, 1.442695
    %v9092 = vpow.pop %v9091
    %v9093 = vmul.f32 %v9081, 1.442695
    %v9094 = vpow.pop %v9093
    %v9095 = vmul.f32 %v9082, 1.442695
    %v9096 = vpow.pop %v9095
    %v9097 = vmul.f32 %v9083, 1.442695
    %v9098 = vpow.pop %v9097
    %v9099 = vmul.f32 %v9084, 1.442695
    %v9100 = vpow.pop %v9099
    %v9101 = vadd.f32 %v9086, 1.0
    %v9102 = vadd.f32 %v9088, 1.0
    %v9103 = vadd.f32 %v9090, 1.0
    %v9104 = vadd.f32 %v9092, 1.0
    %v9105 = vadd.f32 %v9094, 1.0
    %v9106 = vadd.f32 %v9096, 1.0
    %v9107 = vadd.f32 %v9098, 1.0
    %v9108 = vadd.f32 %v9100, 1.0
    %v9109 = vrcp.pop %v9101
    %v9110 = vmul.f32 1.0, %v9109
    %v9111 = vrcp.pop %v9102
    %v9112 = vmul.f32 1.0, %v9111
    %v9113 = vrcp.pop %v9103
    %v9114 = vmul.f32 1.0, %v9113
    %v9115 = vrcp.pop %v9104
    %v9116 = vmul.f32 1.0, %v9115
    %v9117 = vrcp.pop %v9105
    %v9118 = vmul.f32 1.0, %v9117
    %v9119 = vrcp.pop %v9106
    %v9120 = vmul.f32 1.0, %v9119
    %v9121 = vrcp.pop %v9107
    %v9122 = vmul.f32 1.0, %v9121
    %v9123 = vrcp.pop %v9108
    %v9124 = vmul.f32 1.0, %v9123
    %v9125 = vadd.f32 %v8868, %v982
    %v9127 = vcombine.high %v9125, %v9125
    %v9129 = vunpack.c.l.s4 1966171168
    %v9130 = vunpack.c.0.s8 %v9129
    %v9131 = vlaneseq
    %v9132 = vshrl.u32 %v9131, 7
    %v9133 = vsub.s32 %v9130, %v9132
    %v9134 = vrot.slane %v9125, %v9133
    %v9136 = vunpack.c.l.s4 1966171168
    %v9137 = vunpack.c.0.s8 %v9136
    %v9138 = vlaneseq
    %v9139 = vshrl.u32 %v9138, 7
    %v9140 = vsub.s32 %v9137, %v9139
    %v9141 = vrot.slane %v9127, %v9140
    %v9142 = vcombine.high %v9134, %v9134
    %v9143 = vcombine.high %v9141, %v9141
    %v9145 = vunpack.c.l.s4 1966171168
    %v9146 = vunpack.c.0.s8 %v9145
    %v9147 = vlaneseq
    %v9148 = vshrl.u32 %v9147, 7
    %v9149 = vsub.s32 %v9146, %v9148
    %v9150 = vrot.slane %v9134, %v9149
    %v9152 = vunpack.c.l.s4 1966171168
    %v9153 = vunpack.c.0.s8 %v9152
    %v9154 = vlaneseq
    %v9155 = vshrl.u32 %v9154, 7
    %v9156 = vsub.s32 %v9153, %v9155
    %v9157 = vrot.slane %v9141, %v9156
    %v9159 = vunpack.c.l.s4 1966171168
    %v9160 = vunpack.c.0.s8 %v9159
    %v9161 = vlaneseq
    %v9162 = vshrl.u32 %v9161, 7
    %v9163 = vsub.s32 %v9160, %v9162
    %v9164 = vrot.slane %v9142, %v9163
    %v9166 = vunpack.c.l.s4 1966171168
    %v9167 = vunpack.c.0.s8 %v9166
    %v9168 = vlaneseq
    %v9169 = vshrl.u32 %v9168, 7
    %v9170 = vsub.s32 %v9167, %v9169
    %v9171 = vrot.slane %v9143, %v9170
    %v9172 = vcombine.high %v9150, %v9150
    %v9173 = vcombine.high %v9157, %v9157
    %v9174 = vcombine.high %v9164, %v9164
    %v9175 = vcombine.high %v9171, %v9171
    %v9184 = vmul.f32 %v8972, %v9150
    %v9185 = vmul.f32 %v8974, %v9164
    %v9186 = vmul.f32 %v8976, %v9172
    %v9187 = vmul.f32 %v8978, %v9174
    %v9188 = vmul.f32 %v8980, %v9157
    %v9189 = vmul.f32 %v8982, %v9171
    %v9190 = vmul.f32 %v8984, %v9173
    %v9191 = vmul.f32 %v8986, %v9175
    %v9192 = vrot.slane %v8761, 2
    %v9193 = vrot.slane %v8763, 2
    %v9194 = vrot.slane %v8765, 2
    %v9195 = vrot.slane %v8767, 2
    %v9196 = vrot.slane %v8769, 2
    %v9197 = vrot.slane %v8771, 2
    %v9198 = vrot.slane %v8773, 2
    %v9199 = vrot.slane %v8775, 2
    %v9208 = vadd.f32 %v9192, %v9184
    %v9209 = vadd.f32 %v9193, %v9185
    %v9210 = vadd.f32 %v9194, %v9186
    %v9211 = vadd.f32 %v9195, %v9187
    %v9212 = vadd.f32 %v9196, %v9188
    %v9213 = vadd.f32 %v9197, %v9189
    %v9214 = vadd.f32 %v9198, %v9190
    %v9215 = vadd.f32 %v9199, %v9191
    %v9216 = vtanh.pop %v9208
    %v9217 = vtanh.pop %v9209
    %v9218 = vtanh.pop %v9210
    %v9219 = vtanh.pop %v9211
    %v9220 = vtanh.pop %v9212
    %v9221 = vtanh.pop %v9213
    %v9222 = vtanh.pop %v9214
    %v9223 = vtanh.pop %v9215
    %v9224 = vsub.f32 1.0, %v9110
    %v9225 = vsub.f32 1.0, %v9112
    %v9226 = vsub.f32 1.0, %v9114
    %v9227 = vsub.f32 1.0, %v9116
    %v9228 = vsub.f32 1.0, %v9118
    %v9229 = vsub.f32 1.0, %v9120
    %v9230 = vsub.f32 1.0, %v9122
    %v9231 = vsub.f32 1.0, %v9124
    %v9232 = vmul.f32 %v9224, %v9216
    %v9233 = vmul.f32 %v9225, %v9217
    %v9234 = vmul.f32 %v9226, %v9218
    %v9235 = vmul.f32 %v9227, %v9219
    %v9236 = vmul.f32 %v9228, %v9220
    %v9237 = vmul.f32 %v9229, %v9221
    %v9238 = vmul.f32 %v9230, %v9222
    %v9239 = vmul.f32 %v9231, %v9223
    %v9240 = vmul.f32 %v9110, %v8656
    %v9241 = vmul.f32 %v9112, %v8657
    %v9242 = vmul.f32 %v9114, %v8658
    %v9243 = vmul.f32 %v9116, %v8659
    %v9244 = vmul.f32 %v9118, %v8660
    %v9245 = vmul.f32 %v9120, %v8661
    %v9246 = vmul.f32 %v9122, %v8662
    %v9247 = vmul.f32 %v9124, %v8663
    %v9248 = vadd.f32 %v9232, %v9240
    %v9249 = vadd.f32 %v9233, %v9241
    %v9250 = vadd.f32 %v9234, %v9242
    %v9251 = vadd.f32 %v9235, %v9243
    %v9252 = vadd.f32 %v9236, %v9244
    %v9253 = vadd.f32 %v9237, %v9245
    %v9254 = vadd.f32 %v9238, %v9246
    %v9255 = vadd.f32 %v9239, %v9247
    %v9256 = vpack.c.bf16 %v9248, %v9248
    %v9257 = vpack.c.bf16 %v9249, %v9249
    %v9258 = vpack.c.bf16 %v9250, %v9250
    %v9259 = vpack.c.bf16 %v9251, %v9251
    %v9260 = vpack.c.bf16 %v9252, %v9252
    %v9261 = vpack.c.bf16 %v9253, %v9253
    %v9262 = vpack.c.bf16 %v9254, %v9254
    %v9263 = vpack.c.bf16 %v9255, %v9255
    %v9272 = vunpack.c.l.b16 %v9256
    %v9273 = vunpack.c.l.b16 %v9257
    %v9274 = vunpack.c.l.b16 %v9258
    %v9275 = vunpack.c.l.b16 %v9259
    %v9276 = vunpack.c.l.b16 %v9260
    %v9277 = vunpack.c.l.b16 %v9261
    %v9278 = vunpack.c.l.b16 %v9262
    %v9279 = vunpack.c.l.b16 %v9263
    %v9280 = vpack.c.b16 %v9272, %v9272
    %v9281 = vpack.c.b16 %v9273, %v9273
    %v9282 = vpack.c.b16 %v9274, %v9274
    %v9283 = vpack.c.b16 %v9275, %v9275
    %v9284 = vpack.c.b16 %v9276, %v9276
    %v9285 = vpack.c.b16 %v9277, %v9277
    %v9286 = vpack.c.b16 %v9278, %v9278
    %v9287 = vpack.c.b16 %v9279, %v9279
    %v9288 = vrot.slane %v9280, 5
    %v9289 = vrot.slane %v9281, 5
    %v9290 = vrot.slane %v9282, 5
    %v9291 = vrot.slane %v9283, 5
    %v9292 = vrot.slane %v9284, 5
    %v9293 = vrot.slane %v9285, 5
    %v9294 = vrot.slane %v9286, 5
    %v9295 = vrot.slane %v9287, 5
    %v9304 = vld [vmem:[#allocation13 + $0x4] sm:$0x8]
    %v9305 = vsel %vm4693, %v9288, %v9304
    %9306 = vst [vmem:[#allocation13 + $0x4] sm:$0x8] %v9305
    %v9307 = vld [vmem:[#allocation13 + $0xc] sm:$0x8]
    %v9308 = vsel %vm4693, %v9289, %v9307
    %9309 = vst [vmem:[#allocation13 + $0xc] sm:$0x8] %v9308
    %v9310 = vld [vmem:[#allocation13 + $0x14] sm:$0x8]
    %v9311 = vsel %vm4693, %v9290, %v9310
    %9312 = vst [vmem:[#allocation13 + $0x14] sm:$0x8] %v9311
    %v9313 = vld [vmem:[#allocation13 + $0x1c] sm:$0x8]
    %v9314 = vsel %vm4693, %v9291, %v9313
    %9315 = vst [vmem:[#allocation13 + $0x1c] sm:$0x8] %v9314
    %v9316 = vld [vmem:[#allocation13 + $0x24] sm:$0x8]
    %v9317 = vsel %vm4693, %v9292, %v9316
    %9318 = vst [vmem:[#allocation13 + $0x24] sm:$0x8] %v9317
    %v9319 = vld [vmem:[#allocation13 + $0x2c] sm:$0x8]
    %v9320 = vsel %vm4693, %v9293, %v9319
    %9321 = vst [vmem:[#allocation13 + $0x2c] sm:$0x8] %v9320
    %v9322 = vld [vmem:[#allocation13 + $0x34] sm:$0x8]
    %v9323 = vsel %vm4693, %v9294, %v9322
    %9324 = vst [vmem:[#allocation13 + $0x34] sm:$0x8] %v9323
    %v9325 = vld [vmem:[#allocation13 + $0x3c] sm:$0x8]
    %v9326 = vsel %vm4693, %v9295, %v9325
    %9327 = vst [vmem:[#allocation13 + $0x3c] sm:$0x8] %v9326
    %s9328 = scalar_lea.vmem [#allocation3], 31
    %v9329 = vld [vmem:[%s9328] ss:$8 sm:$0x7]
    %s9330 = scalar_lea.vmem [#allocation3], 79
    %v9331 = vld [vmem:[%s9330] ss:$8 sm:$0x7]
    %s9332 = scalar_lea.vmem [#allocation3], 127
    %v9333 = vld [vmem:[%s9332] ss:$8 sm:$0x7]
    %s9334 = scalar_lea.vmem [#allocation3], 175
    %v9335 = vld [vmem:[%s9334] ss:$8 sm:$0x7]
    %s9336 = scalar_lea.vmem [#allocation3], 223
    %v9337 = vld [vmem:[%s9336] ss:$8 sm:$0x7]
    %s9338 = scalar_lea.vmem [#allocation3], 271
    %v9339 = vld [vmem:[%s9338] ss:$8 sm:$0x7]
    %s9340 = scalar_lea.vmem [#allocation3], 319
    %v9341 = vld [vmem:[%s9340] ss:$8 sm:$0x7]
    %s9342 = scalar_lea.vmem [#allocation3], 367
    %v9343 = vld [vmem:[%s9342] ss:$8 sm:$0x7]
    %v9344 = vrot.slane %v9273, 7
    %v9345 = vsel %vm1241, %v9344, %v9272
    %v9346 = vrot.slane %v9274, 6
    %v9347 = vsel %vm1244, %v9346, %v9345
    %v9348 = vrot.slane %v9275, 5
    %v9349 = vsel %vm1247, %v9348, %v9347
    %v9350 = vrot.slane %v9276, 4
    %v9351 = vsel %vm1250, %v9350, %v9349
    %v9352 = vrot.slane %v9277, 3
    %v9353 = vsel %vm1253, %v9352, %v9351
    %v9354 = vrot.slane %v9278, 2
    %v9355 = vsel %vm1256, %v9354, %v9353
    %v9356 = vrot.slane %v9279, 1
    %v9357 = vsel %vm1259, %v9356, %v9355
    %v9358 = vpack.c.b16 %v9357, %v9357
    %9360 = vmatprep.subr.bf16.mxu0 %v598
    %9361 = vmatpush1.bf16.msra.mxu0 %v597
    %9362 = vmatprep.subr.bf16.mxu0 %v601
    %9363 = vmatpush1.bf16.msra.mxu0 %v600
    %9364 = vmatprep.subr.bf16.mxu0 %v604
    %9365 = vmatpush1.bf16.msra.mxu0 %v603
    %9366 = vmatprep.subr.bf16.mxu0 %v607
    %9367 = vmatpush1.bf16.msra.mxu0 %v606
    %9368 = vmatprep.subr.bf16.mxu0 %v610
    %9369 = vmatpush1.bf16.msra.mxu0 %v609
    %9370 = vmatprep.subr.bf16.mxu0 %v613
    %9371 = vmatpush1.bf16.msra.mxu0 %v612
    %9372 = vmatprep.subr.bf16.mxu0 %v616
    %9373 = vmatpush1.bf16.msra.mxu0 %v615
    %9374 = vmatprep.subr.bf16.mxu0 %v619
    %9375 = vmatpush1.bf16.msra.mxu0 %v618
    %9376 = vmatprep.subr.bf16.mxu0 0
    %9377 = vmatpush1.bf16.msra.mxu0 0
    %9378 = vmatprep.subr.bf16.mxu0 0
    %9379 = vmatpush1.bf16.msra.mxu0 0
    %9380 = vmatprep.subr.bf16.mxu0 0
    %9381 = vmatpush1.bf16.msra.mxu0 0
    %9382 = vmatprep.subr.bf16.mxu0 0
    %9383 = vmatpush1.bf16.msra.mxu0 0
    %9384 = vmatprep.subr.bf16.mxu0 0
    %9385 = vmatpush1.bf16.msra.mxu0 0
    %9386 = vmatprep.subr.bf16.mxu0 0
    %9387 = vmatpush1.bf16.msra.mxu0 0
    %9388 = vmatprep.subr.bf16.mxu0 0
    %9389 = vmatpush1.bf16.msra.mxu0 0
    %9390 = vmatprep.subr.bf16.mxu0 0
    %9391 = vmatpush1.bf16.msra.mxu0 0
    %9392 = vmatprep.mubr.bf16.mxu0 0
    %9393 = vmatmul.mubr.bf16.gmra.mrb[0].mxu0 %v9358
    %v9394 = vpop.f32.mrb[0].mxu0
    %v9395 = vadd.f32 0.0, %v9394
    %v9396 = vpop.f32.mrb[0].mxu0
    %v9397 = vadd.f32 0.0, %v9396
    %v9398 = vpop.f32.mrb[0].mxu0
    %v9399 = vpop.f32.mrb[0].mxu0
    %9400 = vdwg.mxu0
    %9401 = vmatprep.subr.bf16.mxu0 0
    %9402 = vmatpush1.bf16.msra.mxu0 %v599
    %9403 = vmatprep.subr.bf16.mxu0 0
    %9404 = vmatpush1.bf16.msra.mxu0 %v602
    %9405 = vmatprep.subr.bf16.mxu0 0
    %9406 = vmatpush1.bf16.msra.mxu0 %v605
    %9407 = vmatprep.subr.bf16.mxu0 0
    %9408 = vmatpush1.bf16.msra.mxu0 %v608
    %9409 = vmatprep.subr.bf16.mxu0 0
    %9410 = vmatpush1.bf16.msra.mxu0 %v611
    %9411 = vmatprep.subr.bf16.mxu0 0
    %9412 = vmatpush1.bf16.msra.mxu0 %v614
    %9413 = vmatprep.subr.bf16.mxu0 0
    %9414 = vmatpush1.bf16.msra.mxu0 %v617
    %9415 = vmatprep.subr.bf16.mxu0 0
    %9416 = vmatpush1.bf16.msra.mxu0 %v620
    %9417 = vmatprep.subr.bf16.mxu0 0
    %9418 = vmatpush1.bf16.msra.mxu0 0
    %9419 = vmatprep.subr.bf16.mxu0 0
    %9420 = vmatpush1.bf16.msra.mxu0 0
    %9421 = vmatprep.subr.bf16.mxu0 0
    %9422 = vmatpush1.bf16.msra.mxu0 0
    %9423 = vmatprep.subr.bf16.mxu0 0
    %9424 = vmatpush1.bf16.msra.mxu0 0
    %9425 = vmatprep.subr.bf16.mxu0 0
    %9426 = vmatpush1.bf16.msra.mxu0 0
    %9427 = vmatprep.subr.bf16.mxu0 0
    %9428 = vmatpush1.bf16.msra.mxu0 0
    %9429 = vmatprep.subr.bf16.mxu0 0
    %9430 = vmatpush1.bf16.msra.mxu0 0
    %9431 = vmatprep.subr.bf16.mxu0 0
    %9432 = vmatpush1.bf16.msra.mxu0 0
    %9433 = vmatprep.mubr.bf16.mxu0 0
    %9434 = vmatmul.mubr.bf16.gmra.mrb[0].mxu0 %v9358
    %v9435 = vpop.f32.mrb[0].mxu0
    %v9436 = vadd.f32 0.0, %v9435
    %v9437 = vpop.f32.mrb[0].mxu0
    %v9438 = vpop.f32.mrb[0].mxu0
    %v9439 = vpop.f32.mrb[0].mxu0
    %9440 = vdwg.mxu0
    %v9442 = vcombine.high %v9395, %v9395
    %v9444 = vunpack.c.l.s4 1966171168
    %v9445 = vunpack.c.0.s8 %v9444
    %v9446 = vlaneseq
    %v9447 = vshrl.u32 %v9446, 7
    %v9448 = vsub.s32 %v9445, %v9447
    %v9449 = vrot.slane %v9395, %v9448
    %v9451 = vunpack.c.l.s4 1966171168
    %v9452 = vunpack.c.0.s8 %v9451
    %v9453 = vlaneseq
    %v9454 = vshrl.u32 %v9453, 7
    %v9455 = vsub.s32 %v9452, %v9454
    %v9456 = vrot.slane %v9442, %v9455
    %v9457 = vcombine.high %v9449, %v9449
    %v9458 = vcombine.high %v9456, %v9456
    %v9460 = vunpack.c.l.s4 1966171168
    %v9461 = vunpack.c.0.s8 %v9460
    %v9462 = vlaneseq
    %v9463 = vshrl.u32 %v9462, 7
    %v9464 = vsub.s32 %v9461, %v9463
    %v9465 = vrot.slane %v9449, %v9464
    %v9467 = vunpack.c.l.s4 1966171168
    %v9468 = vunpack.c.0.s8 %v9467
    %v9469 = vlaneseq
    %v9470 = vshrl.u32 %v9469, 7
    %v9471 = vsub.s32 %v9468, %v9470
    %v9472 = vrot.slane %v9456, %v9471
    %v9474 = vunpack.c.l.s4 1966171168
    %v9475 = vunpack.c.0.s8 %v9474
    %v9476 = vlaneseq
    %v9477 = vshrl.u32 %v9476, 7
    %v9478 = vsub.s32 %v9475, %v9477
    %v9479 = vrot.slane %v9457, %v9478
    %v9481 = vunpack.c.l.s4 1966171168
    %v9482 = vunpack.c.0.s8 %v9481
    %v9483 = vlaneseq
    %v9484 = vshrl.u32 %v9483, 7
    %v9485 = vsub.s32 %v9482, %v9484
    %v9486 = vrot.slane %v9458, %v9485
    %v9487 = vcombine.high %v9465, %v9465
    %v9488 = vcombine.high %v9472, %v9472
    %v9489 = vcombine.high %v9479, %v9479
    %v9490 = vcombine.high %v9486, %v9486
    %v9499 = vadd.f32 %v9329, %v9465
    %v9500 = vadd.f32 %v9331, %v9479
    %v9501 = vadd.f32 %v9333, %v9487
    %v9502 = vadd.f32 %v9335, %v9489
    %v9503 = vadd.f32 %v9337, %v9472
    %v9504 = vadd.f32 %v9339, %v9486
    %v9505 = vadd.f32 %v9341, %v9488
    %v9506 = vadd.f32 %v9343, %v9490
    %v9507 = vxor.u32 %v9499, 2147483648
    %v9508 = vxor.u32 %v9500, 2147483648
    %v9509 = vxor.u32 %v9501, 2147483648
    %v9510 = vxor.u32 %v9502, 2147483648
    %v9511 = vxor.u32 %v9503, 2147483648
    %v9512 = vxor.u32 %v9504, 2147483648
    %v9513 = vxor.u32 %v9505, 2147483648
    %v9514 = vxor.u32 %v9506, 2147483648
    %v9515 = vmul.f32 %v9507, 1.442695
    %v9516 = vpow.pop %v9515
    %v9517 = vmul.f32 %v9508, 1.442695
    %v9518 = vpow.pop %v9517
    %v9519 = vmul.f32 %v9509, 1.442695
    %v9520 = vpow.pop %v9519
    %v9521 = vmul.f32 %v9510, 1.442695
    %v9522 = vpow.pop %v9521
    %v9523 = vmul.f32 %v9511, 1.442695
    %v9524 = vpow.pop %v9523
    %v9525 = vmul.f32 %v9512, 1.442695
    %v9526 = vpow.pop %v9525
    %v9527 = vmul.f32 %v9513, 1.442695
    %v9528 = vpow.pop %v9527
    %v9529 = vmul.f32 %v9514, 1.442695
    %v9530 = vpow.pop %v9529
    %v9531 = vadd.f32 %v9516, 1.0
    %v9532 = vadd.f32 %v9518, 1.0
    %v9533 = vadd.f32 %v9520, 1.0
    %v9534 = vadd.f32 %v9522, 1.0
    %v9535 = vadd.f32 %v9524, 1.0
    %v9536 = vadd.f32 %v9526, 1.0
    %v9537 = vadd.f32 %v9528, 1.0
    %v9538 = vadd.f32 %v9530, 1.0
    %v9539 = vrcp.pop %v9531
    %v9540 = vmul.f32 1.0, %v9539
    %v9541 = vrcp.pop %v9532
    %v9542 = vmul.f32 1.0, %v9541
    %v9543 = vrcp.pop %v9533
    %v9544 = vmul.f32 1.0, %v9543
    %v9545 = vrcp.pop %v9534
    %v9546 = vmul.f32 1.0, %v9545
    %v9547 = vrcp.pop %v9535
    %v9548 = vmul.f32 1.0, %v9547
    %v9549 = vrcp.pop %v9536
    %v9550 = vmul.f32 1.0, %v9549
    %v9551 = vrcp.pop %v9537
    %v9552 = vmul.f32 1.0, %v9551
    %v9553 = vrcp.pop %v9538
    %v9554 = vmul.f32 1.0, %v9553
    %v9563 = vrot.slane %v9329, 1
    %v9564 = vrot.slane %v9331, 1
    %v9565 = vrot.slane %v9333, 1
    %v9566 = vrot.slane %v9335, 1
    %v9567 = vrot.slane %v9337, 1
    %v9568 = vrot.slane %v9339, 1
    %v9569 = vrot.slane %v9341, 1
    %v9570 = vrot.slane %v9343, 1
    %v9580 = vcombine.high %v9397, %v9397
    %v9582 = vunpack.c.l.s4 1966171168
    %v9583 = vunpack.c.0.s8 %v9582
    %v9584 = vlaneseq
    %v9585 = vshrl.u32 %v9584, 7
    %v9586 = vsub.s32 %v9583, %v9585
    %v9587 = vrot.slane %v9397, %v9586
    %v9589 = vunpack.c.l.s4 1966171168
    %v9590 = vunpack.c.0.s8 %v9589
    %v9591 = vlaneseq
    %v9592 = vshrl.u32 %v9591, 7
    %v9593 = vsub.s32 %v9590, %v9592
    %v9594 = vrot.slane %v9580, %v9593
    %v9595 = vcombine.high %v9587, %v9587
    %v9596 = vcombine.high %v9594, %v9594
    %v9598 = vunpack.c.l.s4 1966171168
    %v9599 = vunpack.c.0.s8 %v9598
    %v9600 = vlaneseq
    %v9601 = vshrl.u32 %v9600, 7
    %v9602 = vsub.s32 %v9599, %v9601
    %v9603 = vrot.slane %v9587, %v9602
    %v9605 = vunpack.c.l.s4 1966171168
    %v9606 = vunpack.c.0.s8 %v9605
    %v9607 = vlaneseq
    %v9608 = vshrl.u32 %v9607, 7
    %v9609 = vsub.s32 %v9606, %v9608
    %v9610 = vrot.slane %v9594, %v9609
    %v9612 = vunpack.c.l.s4 1966171168
    %v9613 = vunpack.c.0.s8 %v9612
    %v9614 = vlaneseq
    %v9615 = vshrl.u32 %v9614, 7
    %v9616 = vsub.s32 %v9613, %v9615
    %v9617 = vrot.slane %v9595, %v9616
    %v9619 = vunpack.c.l.s4 1966171168
    %v9620 = vunpack.c.0.s8 %v9619
    %v9621 = vlaneseq
    %v9622 = vshrl.u32 %v9621, 7
    %v9623 = vsub.s32 %v9620, %v9622
    %v9624 = vrot.slane %v9596, %v9623
    %v9625 = vcombine.high %v9603, %v9603
    %v9626 = vcombine.high %v9610, %v9610
    %v9627 = vcombine.high %v9617, %v9617
    %v9628 = vcombine.high %v9624, %v9624
    %v9637 = vadd.f32 %v9563, %v9603
    %v9638 = vadd.f32 %v9564, %v9617
    %v9639 = vadd.f32 %v9565, %v9625
    %v9640 = vadd.f32 %v9566, %v9627
    %v9641 = vadd.f32 %v9567, %v9610
    %v9642 = vadd.f32 %v9568, %v9624
    %v9643 = vadd.f32 %v9569, %v9626
    %v9644 = vadd.f32 %v9570, %v9628
    %v9645 = vxor.u32 %v9637, 2147483648
    %v9646 = vxor.u32 %v9638, 2147483648
    %v9647 = vxor.u32 %v9639, 2147483648
    %v9648 = vxor.u32 %v9640, 2147483648
    %v9649 = vxor.u32 %v9641, 2147483648
    %v9650 = vxor.u32 %v9642, 2147483648
    %v9651 = vxor.u32 %v9643, 2147483648
    %v9652 = vxor.u32 %v9644, 2147483648
    %v9653 = vmul.f32 %v9645, 1.442695
    %v9654 = vpow.pop %v9653
    %v9655 = vmul.f32 %v9646, 1.442695
    %v9656 = vpow.pop %v9655
    %v9657 = vmul.f32 %v9647, 1.442695
    %v9658 = vpow.pop %v9657
    %v9659 = vmul.f32 %v9648, 1.442695
    %v9660 = vpow.pop %v9659
    %v9661 = vmul.f32 %v9649, 1.442695
    %v9662 = vpow.pop %v9661
    %v9663 = vmul.f32 %v9650, 1.442695
    %v9664 = vpow.pop %v9663
    %v9665 = vmul.f32 %v9651, 1.442695
    %v9666 = vpow.pop %v9665
    %v9667 = vmul.f32 %v9652, 1.442695
    %v9668 = vpow.pop %v9667
    %v9669 = vadd.f32 %v9654, 1.0
    %v9670 = vadd.f32 %v9656, 1.0
    %v9671 = vadd.f32 %v9658, 1.0
    %v9672 = vadd.f32 %v9660, 1.0
    %v9673 = vadd.f32 %v9662, 1.0
    %v9674 = vadd.f32 %v9664, 1.0
    %v9675 = vadd.f32 %v9666, 1.0
    %v9676 = vadd.f32 %v9668, 1.0
    %v9677 = vrcp.pop %v9669
    %v9678 = vmul.f32 1.0, %v9677
    %v9679 = vrcp.pop %v9670
    %v9680 = vmul.f32 1.0, %v9679
    %v9681 = vrcp.pop %v9671
    %v9682 = vmul.f32 1.0, %v9681
    %v9683 = vrcp.pop %v9672
    %v9684 = vmul.f32 1.0, %v9683
    %v9685 = vrcp.pop %v9673
    %v9686 = vmul.f32 1.0, %v9685
    %v9687 = vrcp.pop %v9674
    %v9688 = vmul.f32 1.0, %v9687
    %v9689 = vrcp.pop %v9675
    %v9690 = vmul.f32 1.0, %v9689
    %v9691 = vrcp.pop %v9676
    %v9692 = vmul.f32 1.0, %v9691
    %v9693 = vadd.f32 %v9436, %v982
    %v9695 = vcombine.high %v9693, %v9693
    %v9697 = vunpack.c.l.s4 1966171168
    %v9698 = vunpack.c.0.s8 %v9697
    %v9699 = vlaneseq
    %v9700 = vshrl.u32 %v9699, 7
    %v9701 = vsub.s32 %v9698, %v9700
    %v9702 = vrot.slane %v9693, %v9701
    %v9704 = vunpack.c.l.s4 1966171168
    %v9705 = vunpack.c.0.s8 %v9704
    %v9706 = vlaneseq
    %v9707 = vshrl.u32 %v9706, 7
    %v9708 = vsub.s32 %v9705, %v9707
    %v9709 = vrot.slane %v9695, %v9708
    %v9710 = vcombine.high %v9702, %v9702
    %v9711 = vcombine.high %v9709, %v9709
    %v9713 = vunpack.c.l.s4 1966171168
    %v9714 = vunpack.c.0.s8 %v9713
    %v9715 = vlaneseq
    %v9716 = vshrl.u32 %v9715, 7
    %v9717 = vsub.s32 %v9714, %v9716
    %v9718 = vrot.slane %v9702, %v9717
    %v9720 = vunpack.c.l.s4 1966171168
    %v9721 = vunpack.c.0.s8 %v9720
    %v9722 = vlaneseq
    %v9723 = vshrl.u32 %v9722, 7
    %v9724 = vsub.s32 %v9721, %v9723
    %v9725 = vrot.slane %v9709, %v9724
    %v9727 = vunpack.c.l.s4 1966171168
    %v9728 = vunpack.c.0.s8 %v9727
    %v9729 = vlaneseq
    %v9730 = vshrl.u32 %v9729, 7
    %v9731 = vsub.s32 %v9728, %v9730
    %v9732 = vrot.slane %v9710, %v9731
    %v9734 = vunpack.c.l.s4 1966171168
    %v9735 = vunpack.c.0.s8 %v9734
    %v9736 = vlaneseq
    %v9737 = vshrl.u32 %v9736, 7
    %v9738 = vsub.s32 %v9735, %v9737
    %v9739 = vrot.slane %v9711, %v9738
    %v9740 = vcombine.high %v9718, %v9718
    %v9741 = vcombine.high %v9725, %v9725
    %v9742 = vcombine.high %v9732, %v9732
    %v9743 = vcombine.high %v9739, %v9739
    %v9752 = vmul.f32 %v9540, %v9718
    %v9753 = vmul.f32 %v9542, %v9732
    %v9754 = vmul.f32 %v9544, %v9740
    %v9755 = vmul.f32 %v9546, %v9742
    %v9756 = vmul.f32 %v9548, %v9725
    %v9757 = vmul.f32 %v9550, %v9739
    %v9758 = vmul.f32 %v9552, %v9741
    %v9759 = vmul.f32 %v9554, %v9743
    %v9760 = vrot.slane %v9329, 2
    %v9761 = vrot.slane %v9331, 2
    %v9762 = vrot.slane %v9333, 2
    %v9763 = vrot.slane %v9335, 2
    %v9764 = vrot.slane %v9337, 2
    %v9765 = vrot.slane %v9339, 2
    %v9766 = vrot.slane %v9341, 2
    %v9767 = vrot.slane %v9343, 2
    %v9776 = vadd.f32 %v9760, %v9752
    %v9777 = vadd.f32 %v9761, %v9753
    %v9778 = vadd.f32 %v9762, %v9754
    %v9779 = vadd.f32 %v9763, %v9755
    %v9780 = vadd.f32 %v9764, %v9756
    %v9781 = vadd.f32 %v9765, %v9757
    %v9782 = vadd.f32 %v9766, %v9758
    %v9783 = vadd.f32 %v9767, %v9759
    %v9784 = vtanh.pop %v9776
    %v9785 = vtanh.pop %v9777
    %v9786 = vtanh.pop %v9778
    %v9787 = vtanh.pop %v9779
    %v9788 = vtanh.pop %v9780
    %v9789 = vtanh.pop %v9781
    %v9790 = vtanh.pop %v9782
    %v9791 = vtanh.pop %v9783
    %v9792 = vsub.f32 1.0, %v9678
    %v9793 = vsub.f32 1.0, %v9680
    %v9794 = vsub.f32 1.0, %v9682
    %v9795 = vsub.f32 1.0, %v9684
    %v9796 = vsub.f32 1.0, %v9686
    %v9797 = vsub.f32 1.0, %v9688
    %v9798 = vsub.f32 1.0, %v9690
    %v9799 = vsub.f32 1.0, %v9692
    %v9800 = vmul.f32 %v9792, %v9784
    %v9801 = vmul.f32 %v9793, %v9785
    %v9802 = vmul.f32 %v9794, %v9786
    %v9803 = vmul.f32 %v9795, %v9787
    %v9804 = vmul.f32 %v9796, %v9788
    %v9805 = vmul.f32 %v9797, %v9789
    %v9806 = vmul.f32 %v9798, %v9790
    %v9807 = vmul.f32 %v9799, %v9791
    %v9808 = vmul.f32 %v9678, %v9248
    %v9809 = vmul.f32 %v9680, %v9249
    %v9810 = vmul.f32 %v9682, %v9250
    %v9811 = vmul.f32 %v9684, %v9251
    %v9812 = vmul.f32 %v9686, %v9252
    %v9813 = vmul.f32 %v9688, %v9253
    %v9814 = vmul.f32 %v9690, %v9254
    %v9815 = vmul.f32 %v9692, %v9255
    %v9816 = vadd.f32 %v9800, %v9808
    %v9817 = vadd.f32 %v9801, %v9809
    %v9818 = vadd.f32 %v9802, %v9810
    %v9819 = vadd.f32 %v9803, %v9811
    %v9820 = vadd.f32 %v9804, %v9812
    %v9821 = vadd.f32 %v9805, %v9813
    %v9822 = vadd.f32 %v9806, %v9814
    %v9823 = vadd.f32 %v9807, %v9815
    %v9824 = vpack.c.bf16 %v9816, %v9816
    %v9825 = vpack.c.bf16 %v9817, %v9817
    %v9826 = vpack.c.bf16 %v9818, %v9818
    %v9827 = vpack.c.bf16 %v9819, %v9819
    %v9828 = vpack.c.bf16 %v9820, %v9820
    %v9829 = vpack.c.bf16 %v9821, %v9821
    %v9830 = vpack.c.bf16 %v9822, %v9822
    %v9831 = vpack.c.bf16 %v9823, %v9823
    %v9840 = vunpack.c.l.b16 %v9824
    %v9841 = vunpack.c.l.b16 %v9825
    %v9842 = vunpack.c.l.b16 %v9826
    %v9843 = vunpack.c.l.b16 %v9827
    %v9844 = vunpack.c.l.b16 %v9828
    %v9845 = vunpack.c.l.b16 %v9829
    %v9846 = vunpack.c.l.b16 %v9830
    %v9847 = vunpack.c.l.b16 %v9831
    %v9848 = vpack.c.b16 %v9840, %v9840
    %v9849 = vpack.c.b16 %v9841, %v9841
    %v9850 = vpack.c.b16 %v9842, %v9842
    %v9851 = vpack.c.b16 %v9843, %v9843
    %v9852 = vpack.c.b16 %v9844, %v9844
    %v9853 = vpack.c.b16 %v9845, %v9845
    %v9854 = vpack.c.b16 %v9846, %v9846
    %v9855 = vpack.c.b16 %v9847, %v9847
    %v9857 = vshll.u32 %v9848, 16
    %v9859 = vrot.slane %v9857, 5
    %v9861 = vshll.u32 %v9849, 16
    %v9863 = vrot.slane %v9861, 5
    %v9865 = vshll.u32 %v9850, 16
    %v9867 = vrot.slane %v9865, 5
    %v9869 = vshll.u32 %v9851, 16
    %v9871 = vrot.slane %v9869, 5
    %v9873 = vshll.u32 %v9852, 16
    %v9875 = vrot.slane %v9873, 5
    %v9877 = vshll.u32 %v9853, 16
    %v9879 = vrot.slane %v9877, 5
    %v9881 = vshll.u32 %v9854, 16
    %v9883 = vrot.slane %v9881, 5
    %v9885 = vshll.u32 %v9855, 16
    %v9887 = vrot.slane %v9885, 5
    %v9896 = vld [vmem:[#allocation13 + $0x4] sm:$0x8]
    %v9897 = vsel %vm5287, %v9859, %v9896
    %9898 = vst [vmem:[#allocation13 + $0x4] sm:$0x8] %v9897
    %v9899 = vld [vmem:[#allocation13 + $0xc] sm:$0x8]
    %v9900 = vsel %vm5287, %v9863, %v9899
    %9901 = vst [vmem:[#allocation13 + $0xc] sm:$0x8] %v9900
    %v9902 = vld [vmem:[#allocation13 + $0x14] sm:$0x8]
    %v9903 = vsel %vm5287, %v9867, %v9902
    %9904 = vst [vmem:[#allocation13 + $0x14] sm:$0x8] %v9903
    %v9905 = vld [vmem:[#allocation13 + $0x1c] sm:$0x8]
    %v9906 = vsel %vm5287, %v9871, %v9905
    %9907 = vst [vmem:[#allocation13 + $0x1c] sm:$0x8] %v9906
    %v9908 = vld [vmem:[#allocation13 + $0x24] sm:$0x8]
    %v9909 = vsel %vm5287, %v9875, %v9908
    %9910 = vst [vmem:[#allocation13 + $0x24] sm:$0x8] %v9909
    %v9911 = vld [vmem:[#allocation13 + $0x2c] sm:$0x8]
    %v9912 = vsel %vm5287, %v9879, %v9911
    %9913 = vst [vmem:[#allocation13 + $0x2c] sm:$0x8] %v9912
    %v9914 = vld [vmem:[#allocation13 + $0x34] sm:$0x8]
    %v9915 = vsel %vm5287, %v9883, %v9914
    %9916 = vst [vmem:[#allocation13 + $0x34] sm:$0x8] %v9915
    %v9917 = vld [vmem:[#allocation13 + $0x3c] sm:$0x8]
    %v9918 = vsel %vm5287, %v9887, %v9917
    %9919 = vst [vmem:[#allocation13 + $0x3c] sm:$0x8] %v9918
    %v9928 = vcombine.low %v9816, %v9817
    %v9929 = vcombine.low %v9818, %v9819
    %v9930 = vcombine.low %v9820, %v9821
    %v9931 = vcombine.low %v9822, %v9823
    %v9933 = vunpack.c.l.s4 1966171168
    %v9934 = vunpack.c.0.s8 %v9933
    %v9935 = vlaneseq
    %v9936 = vshrl.u32 %v9935, 7
    %v9937 = vsub.s32 %v9934, %v9936
    %v9938 = vrot.slane %v9928, %v9937
    %v9940 = vunpack.c.l.s4 1966171168
    %v9941 = vunpack.c.0.s8 %v9940
    %v9942 = vlaneseq
    %v9943 = vshrl.u32 %v9942, 7
    %v9944 = vsub.s32 %v9941, %v9943
    %v9945 = vrot.slane %v9929, %v9944
    %v9947 = vunpack.c.l.s4 1966171168
    %v9948 = vunpack.c.0.s8 %v9947
    %v9949 = vlaneseq
    %v9950 = vshrl.u32 %v9949, 7
    %v9951 = vsub.s32 %v9948, %v9950
    %v9952 = vrot.slane %v9930, %v9951
    %v9954 = vunpack.c.l.s4 1966171168
    %v9955 = vunpack.c.0.s8 %v9954
    %v9956 = vlaneseq
    %v9957 = vshrl.u32 %v9956, 7
    %v9958 = vsub.s32 %v9955, %v9957
    %v9959 = vrot.slane %v9931, %v9958
    %v9960 = vcombine.low %v9938, %v9945
    %v9961 = vcombine.low %v9952, %v9959
    %v9963 = vunpack.c.l.s4 1966171168
    %v9964 = vunpack.c.0.s8 %v9963
    %v9965 = vlaneseq
    %v9966 = vshrl.u32 %v9965, 7
    %v9967 = vsub.s32 %v9964, %v9966
    %v9968 = vrot.slane %v9960, %v9967
    %v9970 = vunpack.c.l.s4 1966171168
    %v9971 = vunpack.c.0.s8 %v9970
    %v9972 = vlaneseq
    %v9973 = vshrl.u32 %v9972, 7
    %v9974 = vsub.s32 %v9971, %v9973
    %v9975 = vrot.slane %v9961, %v9974
    %v9976 = vcombine.low %v9968, %v9975
    %9978 = vst [vmem:[#allocation2] sm:$0xff] %v9976
    // Predicated region
    $region46: #{tpu_custom_call.1} parent=1 // pred_check
      _
    $region47: #{tpu_custom_call.1} parent=1 // pred_check_branch
      %9980 = sbr.rel (0) target = $region49
    $region48: #{tpu_custom_call.1} parent=1 // pred_region
      %s9982 = ssub.s32 1024, 1024
      %9983 = vsyncadd [#allocation6], %s9982
      %s9984 = sshll.u32 [#allocation13], 4
      %s9985 = int_to_ptr.vmem [resolvable:$true] %s9984
      %9990 = dma.vmem_to_hbm [thread:$0]  %s9985, 1024, %s5, [#allocation6], 64, 64, 4
    $region49: #{tpu_custom_call.1} parent=1 // pred_fallthru
      _
    // Predicated region
    $region50: #{tpu_custom_call.1} parent=1 // pred_check
      _
    $region51: #{tpu_custom_call.1} parent=1 // pred_check_branch
      %9992 = sbr.rel (0) target = $region53
    $region52: #{tpu_custom_call.1} parent=1 // pred_region
      %9993 = dma.done [#allocation6], 1024
    $region53: #{tpu_custom_call.1} parent=1 // pred_fallthru
      _
    %9994 = vsyncpa [#allocation5], 1
    %9995 = vsyncpa [#allocation8], 1
    %9996 = vsyncpa [#allocation11], 1
    %9997 = vsyncpa [#allocation6], 1

</llo_original>
